<compile_context>
chip_gen: v6e
topology: v6e:2x2x1
jax: 0.10.0
libtpu: 0.0.40
codegen_flags: <defaults>
</compile_context>

<pallas_src>
import jax
import jax.numpy as jnp
from jax.experimental import pallas as pl
from jax.experimental.pallas import tpu as pltpu

TOPK = 2  # Grapher(topk=2)


def _erf(x):
    # Abramowitz & Stegun 7.1.26 rational approximation (|err| <= 1.5e-7),
    # built only from ops with guaranteed Pallas TPU lowerings (exp, where, abs).
    a1, a2, a3, a4, a5 = 0.254829592, -0.284496736, 1.421413741, -1.453152027, 1.061405429
    p = 0.3275911
    s = jnp.where(x >= 0.0, 1.0, -1.0)
    z = jnp.abs(x)
    t = 1.0 / (1.0 + p * z)
    poly = ((((a5 * t + a4) * t + a3) * t + a2) * t + a1) * t
    return s * (1.0 - poly * jnp.exp(-z * z))


def _gelu_exact(x):
    # nn.GELU() default (erf-based)
    return 0.5 * x * (1.0 + _erf(x * 0.7071067811865476))


def grapher_kernel(x_ref, w1_ref, b1_ref, wg_ref, bg_ref, w2_ref, b2_ref, o_ref):
    BT, C, N = x_ref.shape

    # In-kernel (C, N) -> (N, C) transposes; stack the batch tile so the
    # channel matmuls (fc1, per-neighbor graph-conv weights) run once over (BT*N, C).
    xs = [x_ref[b].astype(jnp.float32).T for b in range(BT)]          # each (N, C)
    x = xs[0] if BT == 1 else jnp.concatenate(xs, axis=0)             # (BT*N, C)

    # fc1: 1x1 conv with eval-mode BN folded in.
    y = jnp.dot(x, w1_ref[...].T, preferred_element_type=jnp.float32) + b1_ref[...]

    # F.normalize(p=2, eps=1e-12): 1/max(||y||, 1e-12) == rsqrt(max(||y||^2, 1e-24)).
    inv_norm = jax.lax.rsqrt(jnp.maximum(jnp.sum(y * y, axis=-1, keepdims=True), 1e-24))
    y_n = y * inv_norm

    # Reassociated graph conv: apply each neighbor's (C, C) weight slice to y
    # once; gather afterwards -> no (N, K*C) concat or wide matmul.
    wgT = wg_ref[...].T                                               # (K*C, C)
    yw = [jnp.dot(y, wgT[k * C:(k + 1) * C], preferred_element_type=jnp.float32)
          for k in range(TOPK)]                                       # each (BT*N, C)

    col = jax.lax.broadcasted_iota(jnp.int32, (N, N), 1)

    for b in range(BT):
        lo, hi = b * N, (b + 1) * N
        yb = y[lo:hi]                                                  # (N, C)
        ynb = y_n[lo:hi]

        # cosine similarity of L2-normalized features
        sim = jnp.dot(ynb, ynb.T, preferred_element_type=jnp.float32)  # (N, N)

        # iterative top-(TOPK+1): drop the first hit (self), gather neighbor rows.
        cur = sim
        weights = []
        gathered = []
        for k in range(TOPK + 1):
            m = jnp.max(cur, axis=-1, keepdims=True)                             # (N, 1)
            idx = jnp.min(jnp.where(cur == m, col, N), axis=-1, keepdims=True)   # first argmax
            onehot = (col == idx)
            if k > 0:  # matches topk_weight[:, :, 1:] / topk_index[:, :, 1:]
                weights.append(m)
                gathered.append(jnp.dot(onehot.astype(jnp.float32), yw[k - 1][lo:hi],
                                        preferred_element_type=jnp.float32))     # (N, C)
            cur = jnp.where(onehot, -jnp.inf, cur)

        # softmax over the K neighbor weights (denominator reciprocal on the EUP).
        wts = jnp.concatenate(weights, axis=-1)                        # (N, K)
        wts = jnp.exp(wts - jnp.max(wts, axis=-1, keepdims=True))
        wts = wts * pl.reciprocal(jnp.sum(wts, axis=-1, keepdims=True), approx=True)

        # graph_conv.nn (BN folded) + exact GELU, then residual with fc1 output.
        g = bg_ref[...] + sum(wts[:, k:k + 1] * gathered[k] for k in range(TOPK))
        g = _gelu_exact(g)
        h = g + yb

        # fc2 (BN folded); store transposed so the output write is lane-dense (C, N).
        z = jnp.dot(h, w2_ref[...].T, preferred_element_type=jnp.float32) + b2_ref[...]
        o_ref[b] = z.T.astype(o_ref.dtype)


def _fold_bn(Wc, bc, scale, shift):
    # (x @ Wc.T + bc) * scale + shift == x @ (scale.T * Wc).T + (bc * scale + shift)
    return Wc * scale.reshape(-1, 1), bc * scale + shift


def grapher_forward(x_nchw, params, *, batch_tile=1):
    (W1, b1, s1, t1, Wg, bg, sg, tg, W2, b2, s2, t2) = params
    W1f, b1f = _fold_bn(W1, b1, s1, t1)
    Wgf, bgf = _fold_bn(Wg, bg, sg, tg)
    W2f, b2f = _fold_bn(W2, b2, s2, t2)
    folded = (W1f, b1f, Wgf, bgf, W2f, b2f)

    B, C, H, W = x_nchw.shape
    N = H * W
    assert B % batch_tile == 0 and N > TOPK + 1
    x_bcn = x_nchw.reshape(B, C, N)                  # free reshape; no HBM transpose

    # Raise the scoped VMEM limit only when the (N, N) temporaries get large
    # (defaults: 16 MiB on v5e, 32 MiB on v6e/v7x). Cap below v7x's 64 MiB physical.
    n2_bytes = 6 * N * N * 4 * batch_tile
    vmem_limit = None if n2_bytes <= (12 << 20) else min(n2_bytes + (8 << 20), 60 << 20)

    def pspec(arr):
        nd = arr.ndim
        return pl.BlockSpec(arr.shape, lambda b, _nd=nd: (0,) * _nd)

    out = pl.pallas_call(
        grapher_kernel,
        out_shape=jax.ShapeDtypeStruct((B, C, N), jnp.float32),
        grid=(B // batch_tile,),
        in_specs=[pl.BlockSpec((batch_tile, C, N), lambda b: (b, 0, 0))]
                 + [pspec(p) for p in folded],
        out_specs=pl.BlockSpec((batch_tile, C, N), lambda b: (b, 0, 0)),
        compiler_params=pltpu.CompilerParams(
            dimension_semantics=("parallel",),
            vmem_limit_bytes=vmem_limit),
    )(x_bcn, *folded)
    return out.reshape(B, C, H, W)


def grapher_reference(x_nchw, params):
    # Pure-JAX mirror of the PyTorch forward (eval-mode BN), for validation.
    (W1, b1, s1, t1, Wg, bg, sg, tg, W2, b2, s2, t2) = params
    B, C, H, W = x_nchw.shape
    N = H * W
    x = x_nchw.reshape(B, C, N).transpose(0, 2, 1)                    # (B, N, C)
    y = jnp.einsum('bnc,dc->bnd', x, W1) + b1
    y = y * s1 + t1
    yn = y / jnp.maximum(jnp.sqrt(jnp.sum(y * y, -1, keepdims=True)), 1e-12)
    sim = jnp.einsum('bnc,bmc->bnm', yn, yn)
    vals, idx = jax.lax.top_k(sim, TOPK + 1)
    vals, idx = vals[:, :, 1:], idx[:, :, 1:]
    selected = jax.vmap(lambda yb, ib: yb[ib])(y, idx)                # (B, N, K, C)
    wsoft = jax.nn.softmax(vals, axis=-1)
    xg = (wsoft[..., None] * selected).reshape(B, N, TOPK * C)
    g = jnp.einsum('bnk,dk->bnd', xg, Wg) + bg
    g = g * sg + tg
    g = jax.nn.gelu(g, approximate=False)
    h = g + y
    z = jnp.einsum('bnc,dc->bnd', h, W2) + b2
    z = z * s2 + t2
    return z.transpose(0, 2, 1).reshape(B, C, H, W)


if __name__ == "__main__":
    B, C, H, W = 2, 8, 16, 16

    key = jax.random.PRNGKey(0)
    keys = iter(jax.random.split(key, 19))

    def nrm(shape, scale=1.0):
        return scale * jax.random.normal(next(keys), shape, jnp.float32)

    def conv_params(cin, cout):
        return nrm((cout, cin), 0.3), nrm((1, cout), 0.1)

    def bn_affine(c):
        gamma = 1.0 + 0.1 * nrm((1, c))
        beta = 0.1 * nrm((1, c))
        mean = 0.1 * nrm((1, c))
        var = 1.0 + 0.1 * jnp.abs(nrm((1, c)))
        scale = gamma / jnp.sqrt(var + 1e-5)
        shift = beta - mean * scale
        return scale, shift

    x = nrm((B, C, H, W))
    W1, b1 = conv_params(C, C);         s1, t1 = bn_affine(C)
    Wg, bg = conv_params(C * TOPK, C);  sg, tg = bn_affine(C)
    W2, b2 = conv_params(C, C);         s2, t2 = bn_affine(C)
    params = (W1, b1, s1, t1, Wg, bg, sg, tg, W2, b2, s2, t2)

    out = jax.block_until_ready(grapher_forward(x, params, batch_tile=1))
    ref = jax.block_until_ready(grapher_reference(x, params))

    assert out.shape == (B, C, H, W)
    if not jnp.allclose(out, ref, atol=2e-3, rtol=2e-3):
        raise AssertionError(f"mismatch, max abs diff = {jnp.max(jnp.abs(out - ref))}")
    print("KERNEL_OK")
</pallas_src>

<mosaic_0001>
module attributes {stable_mosaic.version = 11 : i64} {
  func.func @grapher_kernel(%arg0: i32, %arg1: memref<1x8x256xf32, #tpu.memory_space<vmem>>, %arg2: memref<8x8xf32, #tpu.memory_space<vmem>>, %arg3: memref<1x8xf32, #tpu.memory_space<vmem>>, %arg4: memref<8x16xf32, #tpu.memory_space<vmem>>, %arg5: memref<1x8xf32, #tpu.memory_space<vmem>>, %arg6: memref<8x8xf32, #tpu.memory_space<vmem>>, %arg7: memref<1x8xf32, #tpu.memory_space<vmem>>, %arg8: memref<1x8x256xf32, #tpu.memory_space<vmem>>) attributes {dimension_semantics = [#tpu.dimension_semantics<parallel>], iteration_bounds = array<i64: 2>, scalar_prefetch = 0 : i64, scratch_operands = 0 : i64, tpu.core_type = #tpu.core_type<tc>, window_params = [{transform_indices = @transform_0, window_bounds = array<i64: 1, 8, 256>}, {pipeline_mode = #tpu.pipeline_mode<synchronous>, transform_indices = @transform_1, window_bounds = array<i64: 8, 8>}, {pipeline_mode = #tpu.pipeline_mode<synchronous>, transform_indices = @transform_2, window_bounds = array<i64: 1, 8>}, {pipeline_mode = #tpu.pipeline_mode<synchronous>, transform_indices = @transform_3, window_bounds = array<i64: 8, 16>}, {pipeline_mode = #tpu.pipeline_mode<synchronous>, transform_indices = @transform_4, window_bounds = array<i64: 1, 8>}, {pipeline_mode = #tpu.pipeline_mode<synchronous>, transform_indices = @transform_5, window_bounds = array<i64: 8, 8>}, {pipeline_mode = #tpu.pipeline_mode<synchronous>, transform_indices = @transform_6, window_bounds = array<i64: 1, 8>}, {transform_indices = @transform_7, window_bounds = array<i64: 1, 8, 256>}]} {
    %c0 = arith.constant 0 : index
    %c0_0 = arith.constant 0 : index
    %c0_1 = arith.constant 0 : index
    %0 = vector.load %arg1[%c0, %c0_0, %c0_1] : memref<1x8x256xf32, #tpu.memory_space<vmem>>, vector<1x8x256xf32>
    %1 = vector.shape_cast %0 : vector<1x8x256xf32> to vector<8x256xf32>
    %2 = tpu.transpose %1, [1, 0] : vector<8x256xf32> -> vector<256x8xf32>
    %c0_2 = arith.constant 0 : index
    %c0_3 = arith.constant 0 : index
    %3 = vector.load %arg2[%c0_2, %c0_3] : memref<8x8xf32, #tpu.memory_space<vmem>>, vector<8x8xf32>
    %4 = tpu.transpose %3, [1, 0] : vector<8x8xf32> -> vector<8x8xf32>
    %cst = arith.constant dense<0.000000e+00> : vector<256x8xf32>
    %5 = tpu.matmul %2, %4, %cst {dimension_numbers = #tpu.dot_dimension_numbers<[1], [0], [0], [1], [0, 0, 1, 1], [], []>} : vector<256x8xf32>, vector<8x8xf32>, vector<256x8xf32> -> vector<256x8xf32>
    %c0_4 = arith.constant 0 : index
    %c0_5 = arith.constant 0 : index
    %6 = vector.load %arg3[%c0_4, %c0_5] : memref<1x8xf32, #tpu.memory_space<vmem>>, vector<1x8xf32>
    %7 = vector.broadcast %6 : vector<1x8xf32> to vector<256x8xf32>
    %8 = arith.addf %5, %7 : vector<256x8xf32>
    %9 = arith.mulf %8, %8 : vector<256x8xf32>
    %cst_6 = arith.constant dense<0.000000e+00> : vector<256xf32>
    %10 = vector.multi_reduction <add>, %9, %cst_6 [1] : vector<256x8xf32> to vector<256xf32>
    %11 = vector.shape_cast %10 : vector<256xf32> to vector<256x1xf32>
    %cst_7 = arith.constant 1.000000e-24 : f32
    %12 = vector.broadcast %cst_7 : f32 to vector<256x1xf32>
    %13 = arith.maximumf %11, %12 : vector<256x1xf32>
    %14 = math.rsqrt %13 : vector<256x1xf32>
    %15 = vector.broadcast %14 : vector<256x1xf32> to vector<256x8xf32>
    %16 = arith.mulf %8, %15 : vector<256x8xf32>
    %c0_8 = arith.constant 0 : index
    %c0_9 = arith.constant 0 : index
    %17 = vector.load %arg4[%c0_8, %c0_9] : memref<8x16xf32, #tpu.memory_space<vmem>>, vector<8x16xf32>
    %18 = tpu.transpose %17, [1, 0] : vector<8x16xf32> -> vector<16x8xf32>
    %19 = vector.extract_strided_slice %18 {offsets = [0, 0], sizes = [8, 8], strides = [1, 1]} : vector<16x8xf32> to vector<8x8xf32>
    %cst_10 = arith.constant dense<0.000000e+00> : vector<256x8xf32>
    %20 = tpu.matmul %8, %19, %cst_10 {dimension_numbers = #tpu.dot_dimension_numbers<[1], [0], [0], [1], [0, 0, 1, 1], [], []>} : vector<256x8xf32>, vector<8x8xf32>, vector<256x8xf32> -> vector<256x8xf32>
    %21 = vector.extract_strided_slice %18 {offsets = [8, 0], sizes = [8, 8], strides = [1, 1]} : vector<16x8xf32> to vector<8x8xf32>
    %cst_11 = arith.constant dense<0.000000e+00> : vector<256x8xf32>
    %22 = tpu.matmul %8, %21, %cst_11 {dimension_numbers = #tpu.dot_dimension_numbers<[1], [0], [0], [1], [0, 0, 1, 1], [], []>} : vector<256x8xf32>, vector<8x8xf32>, vector<256x8xf32> -> vector<256x8xf32>
    %23 = tpu.iota {dimensions = array<i32: 1>} : vector<256x256xi32>
    %24 = tpu.transpose %16, [1, 0] : vector<256x8xf32> -> vector<8x256xf32>
    %cst_12 = arith.constant dense<0.000000e+00> : vector<256x256xf32>
    %25 = tpu.matmul %16, %24, %cst_12 {dimension_numbers = #tpu.dot_dimension_numbers<[1], [0], [0], [1], [0, 0, 1, 1], [], []>} : vector<256x8xf32>, vector<8x256xf32>, vector<256x256xf32> -> vector<256x256xf32>
    %cst_13 = arith.constant dense<0xFF800000> : vector<256xf32>
    %26 = vector.multi_reduction <maximumf>, %25, %cst_13 [1] : vector<256x256xf32> to vector<256xf32>
    %27 = vector.shape_cast %26 : vector<256xf32> to vector<256x1xf32>
    %28 = vector.broadcast %27 : vector<256x1xf32> to vector<256x256xf32>
    %29 = arith.cmpf oeq, %25, %28 : vector<256x256xf32>
    %c256_i32 = arith.constant 256 : i32
    %30 = vector.broadcast %c256_i32 : i32 to vector<256x256xi32>
    %31 = arith.select %29, %23, %30 : vector<256x256xi1>, vector<256x256xi32>
    %cst_14 = arith.constant dense<2147483647> : vector<256xi32>
    %32 = vector.multi_reduction <minsi>, %31, %cst_14 [1] : vector<256x256xi32> to vector<256xi32>
    %33 = vector.shape_cast %32 : vector<256xi32> to vector<256x1xi32>
    %34 = vector.broadcast %33 : vector<256x1xi32> to vector<256x256xi32>
    %35 = arith.cmpi eq, %23, %34 : vector<256x256xi32>
    %cst_15 = arith.constant 0xFF800000 : f32
    %36 = vector.broadcast %cst_15 : f32 to vector<256x256xf32>
    %37 = arith.select %35, %36, %25 : vector<256x256xi1>, vector<256x256xf32>
    %cst_16 = arith.constant dense<0xFF800000> : vector<256xf32>
    %38 = vector.multi_reduction <maximumf>, %37, %cst_16 [1] : vector<256x256xf32> to vector<256xf32>
    %39 = vector.shape_cast %38 : vector<256xf32> to vector<256x1xf32>
    %40 = vector.broadcast %39 : vector<256x1xf32> to vector<256x256xf32>
    %41 = arith.cmpf oeq, %37, %40 : vector<256x256xf32>
    %c256_i32_17 = arith.constant 256 : i32
    %42 = vector.broadcast %c256_i32_17 : i32 to vector<256x256xi32>
    %43 = arith.select %41, %23, %42 : vector<256x256xi1>, vector<256x256xi32>
    %cst_18 = arith.constant dense<2147483647> : vector<256xi32>
    %44 = vector.multi_reduction <minsi>, %43, %cst_18 [1] : vector<256x256xi32> to vector<256xi32>
    %45 = vector.shape_cast %44 : vector<256xi32> to vector<256x1xi32>
    %46 = vector.broadcast %45 : vector<256x1xi32> to vector<256x256xi32>
    %47 = arith.cmpi eq, %23, %46 : vector<256x256xi32>
    %48 = arith.extui %47 : vector<256x256xi1> to vector<256x256xi32>
    %49 = arith.sitofp %48 : vector<256x256xi32> to vector<256x256xf32>
    %cst_19 = arith.constant dense<0.000000e+00> : vector<256x8xf32>
    %50 = tpu.matmul %49, %20, %cst_19 {dimension_numbers = #tpu.dot_dimension_numbers<[1], [0], [0], [1], [0, 0, 1, 1], [], []>} : vector<256x256xf32>, vector<256x8xf32>, vector<256x8xf32> -> vector<256x8xf32>
    %cst_20 = arith.constant 0xFF800000 : f32
    %51 = vector.broadcast %cst_20 : f32 to vector<256x256xf32>
    %52 = arith.select %47, %51, %37 : vector<256x256xi1>, vector<256x256xf32>
    %cst_21 = arith.constant dense<0xFF800000> : vector<256xf32>
    %53 = vector.multi_reduction <maximumf>, %52, %cst_21 [1] : vector<256x256xf32> to vector<256xf32>
    %54 = vector.shape_cast %53 : vector<256xf32> to vector<256x1xf32>
    %55 = vector.broadcast %54 : vector<256x1xf32> to vector<256x256xf32>
    %56 = arith.cmpf oeq, %52, %55 : vector<256x256xf32>
    %c256_i32_22 = arith.constant 256 : i32
    %57 = vector.broadcast %c256_i32_22 : i32 to vector<256x256xi32>
    %58 = arith.select %56, %23, %57 : vector<256x256xi1>, vector<256x256xi32>
    %cst_23 = arith.constant dense<2147483647> : vector<256xi32>
    %59 = vector.multi_reduction <minsi>, %58, %cst_23 [1] : vector<256x256xi32> to vector<256xi32>
    %60 = vector.shape_cast %59 : vector<256xi32> to vector<256x1xi32>
    %61 = vector.broadcast %60 : vector<256x1xi32> to vector<256x256xi32>
    %62 = arith.cmpi eq, %23, %61 : vector<256x256xi32>
    %63 = arith.extui %62 : vector<256x256xi1> to vector<256x256xi32>
    %64 = arith.sitofp %63 : vector<256x256xi32> to vector<256x256xf32>
    %cst_24 = arith.constant dense<0.000000e+00> : vector<256x8xf32>
    %65 = tpu.matmul %64, %22, %cst_24 {dimension_numbers = #tpu.dot_dimension_numbers<[1], [0], [0], [1], [0, 0, 1, 1], [], []>} : vector<256x256xf32>, vector<256x8xf32>, vector<256x8xf32> -> vector<256x8xf32>
    %66 = tpu.concatenate %39, %54 in 1 : vector<256x1xf32>, vector<256x1xf32> -> vector<256x2xf32>
    %cst_25 = arith.constant dense<0xFF800000> : vector<256xf32>
    %67 = vector.multi_reduction <maximumf>, %66, %cst_25 [1] : vector<256x2xf32> to vector<256xf32>
    %68 = vector.shape_cast %67 : vector<256xf32> to vector<256x1xf32>
    %69 = vector.broadcast %68 : vector<256x1xf32> to vector<256x2xf32>
    %70 = arith.subf %66, %69 : vector<256x2xf32>
    %71 = math.exp %70 : vector<256x2xf32>
    %cst_26 = arith.constant dense<0.000000e+00> : vector<256xf32>
    %72 = vector.multi_reduction <add>, %71, %cst_26 [1] : vector<256x2xf32> to vector<256xf32>
    %73 = vector.shape_cast %72 : vector<256xf32> to vector<256x1xf32>
    %74 = tpu.reciprocal %73 {approx = true} : vector<256x1xf32> -> vector<256x1xf32>
    %75 = vector.broadcast %74 : vector<256x1xf32> to vector<256x2xf32>
    %76 = arith.mulf %71, %75 : vector<256x2xf32>
    %c0_27 = arith.constant 0 : index
    %c0_28 = arith.constant 0 : index
    %77 = vector.load %arg5[%c0_27, %c0_28] : memref<1x8xf32, #tpu.memory_space<vmem>>, vector<1x8xf32>
    %78 = vector.extract_strided_slice %76 {offsets = [0, 0], sizes = [256, 1], strides = [1, 1]} : vector<256x2xf32> to vector<256x1xf32>
    %79 = vector.broadcast %78 : vector<256x1xf32> to vector<256x8xf32>
    %80 = arith.mulf %79, %50 : vector<256x8xf32>
    %cst_29 = arith.constant 0.000000e+00 : f32
    %81 = vector.broadcast %cst_29 : f32 to vector<256x8xf32>
    %82 = arith.addf %81, %80 : vector<256x8xf32>
    %83 = vector.extract_strided_slice %76 {offsets = [0, 1], sizes = [256, 1], strides = [1, 1]} : vector<256x2xf32> to vector<256x1xf32>
    %84 = vector.broadcast %83 : vector<256x1xf32> to vector<256x8xf32>
    %85 = arith.mulf %84, %65 : vector<256x8xf32>
    %86 = arith.addf %82, %85 : vector<256x8xf32>
    %87 = vector.broadcast %77 : vector<1x8xf32> to vector<256x8xf32>
    %88 = arith.addf %87, %86 : vector<256x8xf32>
    %cst_30 = arith.constant 5.000000e-01 : f32
    %89 = vector.broadcast %cst_30 : f32 to vector<256x8xf32>
    %90 = arith.mulf %89, %88 : vector<256x8xf32>
    %cst_31 = arith.constant 0.707106769 : f32
    %91 = vector.broadcast %cst_31 : f32 to vector<256x8xf32>
    %92 = arith.mulf %88, %91 : vector<256x8xf32>
    %cst_32 = arith.constant 0.000000e+00 : f32
    %93 = vector.broadcast %cst_32 : f32 to vector<256x8xf32>
    %94 = arith.cmpf oge, %92, %93 : vector<256x8xf32>
    %cst_33 = arith.constant 1.000000e+00 : f32
    %cst_34 = arith.constant -1.000000e+00 : f32
    %95 = vector.broadcast %cst_33 : f32 to vector<256x8xf32>
    %96 = vector.broadcast %cst_34 : f32 to vector<256x8xf32>
    %97 = arith.select %94, %95, %96 : vector<256x8xi1>, vector<256x8xf32>
    %98 = math.absf %92 : vector<256x8xf32>
    %cst_35 = arith.constant 0.327591091 : f32
    %99 = vector.broadcast %cst_35 : f32 to vector<256x8xf32>
    %100 = arith.mulf %99, %98 : vector<256x8xf32>
    %cst_36 = arith.constant 1.000000e+00 : f32
    %101 = vector.broadcast %cst_36 : f32 to vector<256x8xf32>
    %102 = arith.addf %101, %100 : vector<256x8xf32>
    %cst_37 = arith.constant 1.000000e+00 : f32
    %103 = vector.broadcast %cst_37 : f32 to vector<256x8xf32>
    %104 = arith.divf %103, %102 : vector<256x8xf32>
    %cst_38 = arith.constant 1.06140542 : f32
    %105 = vector.broadcast %cst_38 : f32 to vector<256x8xf32>
    %106 = arith.mulf %105, %104 : vector<256x8xf32>
    %cst_39 = arith.constant -1.45315206 : f32
    %107 = vector.broadcast %cst_39 : f32 to vector<256x8xf32>
    %108 = arith.addf %106, %107 : vector<256x8xf32>
    %109 = arith.mulf %108, %104 : vector<256x8xf32>
    %cst_40 = arith.constant 1.42141378 : f32
    %110 = vector.broadcast %cst_40 : f32 to vector<256x8xf32>
    %111 = arith.addf %109, %110 : vector<256x8xf32>
    %112 = arith.mulf %111, %104 : vector<256x8xf32>
    %cst_41 = arith.constant -0.284496725 : f32
    %113 = vector.broadcast %cst_41 : f32 to vector<256x8xf32>
    %114 = arith.addf %112, %113 : vector<256x8xf32>
    %115 = arith.mulf %114, %104 : vector<256x8xf32>
    %cst_42 = arith.constant 0.254829586 : f32
    %116 = vector.broadcast %cst_42 : f32 to vector<256x8xf32>
    %117 = arith.addf %115, %116 : vector<256x8xf32>
    %118 = arith.mulf %117, %104 : vector<256x8xf32>
    %cst_43 = arith.constant 0.000000e+00 : f32
    %119 = vector.broadcast %cst_43 : f32 to vector<256x8xf32>
    %120 = arith.subf %119, %98 : vector<256x8xf32>
    %121 = arith.mulf %120, %98 : vector<256x8xf32>
    %122 = math.exp %121 : vector<256x8xf32>
    %123 = arith.mulf %118, %122 : vector<256x8xf32>
    %cst_44 = arith.constant 1.000000e+00 : f32
    %124 = vector.broadcast %cst_44 : f32 to vector<256x8xf32>
    %125 = arith.subf %124, %123 : vector<256x8xf32>
    %126 = arith.mulf %97, %125 : vector<256x8xf32>
    %cst_45 = arith.constant 1.000000e+00 : f32
    %127 = vector.broadcast %cst_45 : f32 to vector<256x8xf32>
    %128 = arith.addf %127, %126 : vector<256x8xf32>
    %129 = arith.mulf %90, %128 : vector<256x8xf32>
    %130 = arith.addf %129, %8 : vector<256x8xf32>
    %c0_46 = arith.constant 0 : index
    %c0_47 = arith.constant 0 : index
    %131 = vector.load %arg6[%c0_46, %c0_47] : memref<8x8xf32, #tpu.memory_space<vmem>>, vector<8x8xf32>
    %132 = tpu.transpose %131, [1, 0] : vector<8x8xf32> -> vector<8x8xf32>
    %cst_48 = arith.constant dense<0.000000e+00> : vector<256x8xf32>
    %133 = tpu.matmul %130, %132, %cst_48 {dimension_numbers = #tpu.dot_dimension_numbers<[1], [0], [0], [1], [0, 0, 1, 1], [], []>} : vector<256x8xf32>, vector<8x8xf32>, vector<256x8xf32> -> vector<256x8xf32>
    %c0_49 = arith.constant 0 : index
    %c0_50 = arith.constant 0 : index
    %134 = vector.load %arg7[%c0_49, %c0_50] : memref<1x8xf32, #tpu.memory_space<vmem>>, vector<1x8xf32>
    %135 = vector.broadcast %134 : vector<1x8xf32> to vector<256x8xf32>
    %136 = arith.addf %133, %135 : vector<256x8xf32>
    %137 = tpu.transpose %136, [1, 0] : vector<256x8xf32> -> vector<8x256xf32>
    %c0_51 = arith.constant 0 : index
    %c0_52 = arith.constant 0 : index
    %c0_53 = arith.constant 0 : index
    %138 = vector.load %arg8[%c0_51, %c0_52, %c0_53] : memref<1x8x256xf32, #tpu.memory_space<vmem>>, vector<1x8x256xf32>
    %139 = vector.shape_cast %138 : vector<1x8x256xf32> to vector<8x256xf32>
    %140 = vector.shape_cast %137 : vector<8x256xf32> to vector<1x8x256xf32>
    tpu.vector_store %arg8[%c0_51, %c0_52, %c0_53], %140 {strides = array<i32>} : memref<1x8x256xf32, #tpu.memory_space<vmem>>, vector<1x8x256xf32>,
    return
  }
  func.func @transform_0(%arg0: i32) -> (i32, i32, i32) {
    %c0_i32 = arith.constant 0 : i32
    %c0_i32_0 = arith.constant 0 : i32
    %c0_i32_1 = arith.constant 0 : i32
    return %arg0, %c0_i32, %c0_i32_0 : i32, i32, i32
  }
  func.func @transform_1(%arg0: i32) -> (i32, i32) {
    %c0_i32 = arith.constant 0 : i32
    %c0_i32_0 = arith.constant 0 : i32
    %c0_i32_1 = arith.constant 0 : i32
    return %c0_i32, %c0_i32_0 : i32, i32
  }
  func.func @transform_2(%arg0: i32) -> (i32, i32) {
    %c0_i32 = arith.constant 0 : i32
    %c0_i32_0 = arith.constant 0 : i32
    %c0_i32_1 = arith.constant 0 : i32
    return %c0_i32, %c0_i32_0 : i32, i32
  }
  func.func @transform_3(%arg0: i32) -> (i32, i32) {
    %c0_i32 = arith.constant 0 : i32
    %c0_i32_0 = arith.constant 0 : i32
    %c0_i32_1 = arith.constant 0 : i32
    return %c0_i32, %c0_i32_0 : i32, i32
  }
  func.func @transform_4(%arg0: i32) -> (i32, i32) {
    %c0_i32 = arith.constant 0 : i32
    %c0_i32_0 = arith.constant 0 : i32
    %c0_i32_1 = arith.constant 0 : i32
    return %c0_i32, %c0_i32_0 : i32, i32
  }
  func.func @transform_5(%arg0: i32) -> (i32, i32) {
    %c0_i32 = arith.constant 0 : i32
    %c0_i32_0 = arith.constant 0 : i32
    %c0_i32_1 = arith.constant 0 : i32
    return %c0_i32, %c0_i32_0 : i32, i32
  }
  func.func @transform_6(%arg0: i32) -> (i32, i32) {
    %c0_i32 = arith.constant 0 : i32
    %c0_i32_0 = arith.constant 0 : i32
    %c0_i32_1 = arith.constant 0 : i32
    return %c0_i32, %c0_i32_0 : i32, i32
  }
  func.func @transform_7(%arg0: i32) -> (i32, i32, i32) {
    %c0_i32 = arith.constant 0 : i32
    %c0_i32_0 = arith.constant 0 : i32
    %c0_i32_1 = arith.constant 0 : i32
    return %arg0, %c0_i32, %c0_i32_0 : i32, i32, i32
  }
}

</mosaic_0001>

<llo_original>
// kernel: tpu_custom_call.1
$region0: #{tpu_custom_call.1}
  #allocation0 [shape = 'u32[]', space=smem, size = 0x4, offset = 0x4, fixed_abs, tag = 'smem constant byte address 0x4 - core index']
  #allocation1 [shape = 'u32[144,128]{1,0:T(1,128)}', space=vmem, size = 0x12000, scoped, tag = 'internal scratch']
  %s0 = inlined_call_operand.hbm [shape: f32[2,8,256], index: 0, kind: input, shape index: {}]
  %s1 = inlined_call_operand.hbm [shape: f32[8,8], index: 1, kind: input, shape index: {}]
  %s2 = inlined_call_operand.vmem [shape: f32[1,8], index: 2, kind: input, shape index: {}]
  %s3 = inlined_call_operand.hbm [shape: f32[8,16], index: 3, kind: input, shape index: {}]
  %s4 = inlined_call_operand.hbm [shape: f32[1,8], index: 4, kind: input, shape index: {}]
  %s5 = inlined_call_operand.vmem [shape: f32[8,8], index: 5, kind: input, shape index: {}]
  %s6 = inlined_call_operand.vmem [shape: f32[1,8], index: 6, kind: input, shape index: {}]
  %s7 = inlined_call_operand.hbm [shape: f32[2,8,256], index: 7, kind: output, shape index: {}]
  %s8 = sld [smem:[#allocation0]]
  $region77: #{tpu_custom_call.1} parent=0
    _
  %s10 = ssub.s32 1, %s8
  %s11 = scalar_select 0, %s10, %s8
  $region1: #{tpu_custom_call.1} parent=0
    #allocation2 [shape = 'u8[16384]{0}', space=vmem, size = 0x4000, scoped, tag = 'input window, operand 0']
    #allocation3 [shape = 's32[2]{0}', space=sflag, size = 0x8, scoped, tag = 'scoped memory for tpu_custom_call.1']
    #allocation4 [shape = 's32[2]{0}', space=sflag, size = 0x8, scoped, tag = 'scoped memory for tpu_custom_call.1']
    #allocation5 [shape = 'u8[4096]{0}', space=vmem, size = 0x1000, scoped, tag = 'input window, operand 1, single buffered']
    #allocation6 [shape = 's32[1]{0}', space=sflag, size = 0x4, scoped, tag = 'scoped memory for tpu_custom_call.1']
    #allocation7 [shape = 'u8[4096]{0}', space=vmem, size = 0x1000, scoped, tag = 'input window, operand 3, single buffered']
    #allocation8 [shape = 'u8[512]{0}', space=vmem, size = 0x400, scoped, tag = 'input window, operand 4, single buffered']
    #allocation9 [shape = 's32[1]{0}', space=sflag, size = 0x4, scoped, tag = 'scoped memory for tpu_custom_call.1']
    #allocation10 [shape = 'u8[16384]{0}', space=vmem, size = 0x4000, scoped, tag = 'output window, operand 0']
    %12 = vsyncpa [#allocation3], 0
    %s13 = scalar_lea.sflag [#allocation3], 1
    %14 = vsyncpa %s13, 0
    %15 = vsyncpa [#allocation6], 0
    %16 = vsyncpa [#allocation9], 0
    %17 = vsyncpa [#allocation4], 0
    %s18 = scalar_lea.sflag [#allocation4], 1
    %19 = vsyncpa %s18, 0
    loop: start=0, step=1, limit=4
    $region2: #{tpu_custom_call.1} parent=1 // loop_pre_header
      _
    $region3: #{tpu_custom_call.1} parent=1 // loop_header
      %s21 = sphi 0, %s25
      %p22 = scmp.ge.s32.totalorder %s21, 4
      %s31 = sphi 0, %s33
      %s34 = sphi 0, %s31
      %s35 = sphi 0, %s34
      %s51 = sphi 0, %s35
      %s55 = sphi 0, %s55
      %s57 = sphi 0, %s55
      %s58 = sphi 0, %s57
      %s72 = sphi 0, %s58
      %s76 = sphi 0, %s76
      %s78 = sphi 0, %s76
      %s79 = sphi 0, %s78
      %s93 = sphi 0, %s79
      %s97 = sphi 0, %s97
      %s99 = sphi 0, %s97
      %s100 = sphi 0, %s99
      %s114 = sphi 0, %s100
      %s118 = sphi 0, %s118
      %s120 = sphi 0, %s118
      %s121 = sphi 0, %s120
      %s135 = sphi 0, %s121
      %s139 = sphi 0, %s139
      %s141 = sphi 0, %s139
      %s142 = sphi 0, %s141
      %s156 = sphi 0, %s142
      %s160 = sphi 0, %s160
      %s162 = sphi 0, %s160
      %s163 = sphi 0, %s162
      %s177 = sphi 0, %s163
      %s183 = sphi 0, %s185
      %s186 = sphi 0, %s183
      %s187 = sphi 0, %s186
      %s203 = sphi 0, %s187
    $region4: #{tpu_custom_call.1} parent=1 // loop_header_branch
      %24 = sbr.rel (%p22) target = $region8
    $region5: #{tpu_custom_call.1} parent=1 // loop_body
      %s26 = ssub.s32 %s21, 1
      %s27 = ssub.s32 %s21, 2
      %s28 = sadd.s32 %s21, 1
      %s29 = ssub.s32 %s21, %s28
      %p30 = scmp.eq.s32.totalorder %s29, 0
      %s32 = sadd.s32 %s31, 1
      %s33 = scalar_select %p30, %s31, %s32
      %p36 = pneg %p30
      %p37 = scmp.eq.s32.totalorder %s21, 1
      %p38 = por %p36, %p37
      %p39 = scmp.ne.s32.totalorder %s31, %s34
      %p40 = scmp.eq.s32.totalorder %s21, 0
      %p41 = por %p39, %p40
      %p42 = scmp.ne.s32.totalorder %s31, %s34
      %p43 = scmp.eq.s32.totalorder %s26, 1
      %p44 = por %p42, %p43
      %p45 = scmp.ne.s32.totalorder %s34, %s35
      %p46 = scmp.eq.s32.totalorder %s26, 0
      %p47 = por %p45, %p46
      %p48 = scmp.ne.s32.totalorder %s34, %s35
      %p49 = scmp.eq.s32.totalorder %s27, 1
      %p50 = por %p48, %p49
      %p52 = scmp.ne.s32.totalorder %s35, %s51
      %p53 = scmp.eq.s32.totalorder %s27, 0
      %p54 = por %p52, %p53
      %s56 = sadd.s32 %s55, 1
      %p59 = scmp.eq.s32.totalorder %s21, 1
      %p60 = scmp.ne.s32.totalorder %s55, %s57
      %p61 = scmp.eq.s32.totalorder %s21, 0
      %p62 = por %p60, %p61
      %p63 = scmp.ne.s32.totalorder %s55, %s57
      %p64 = scmp.eq.s32.totalorder %s26, 1
      %p65 = por %p63, %p64
      %p66 = scmp.ne.s32.totalorder %s57, %s58
      %p67 = scmp.eq.s32.totalorder %s26, 0
      %p68 = por %p66, %p67
      %p69 = scmp.ne.s32.totalorder %s57, %s58
      %p70 = scmp.eq.s32.totalorder %s27, 1
      %p71 = por %p69, %p70
      %p73 = scmp.ne.s32.totalorder %s58, %s72
      %p74 = scmp.eq.s32.totalorder %s27, 0
      %p75 = por %p73, %p74
      %s77 = sadd.s32 %s76, 1
      %p80 = scmp.eq.s32.totalorder %s21, 1
      %p81 = scmp.ne.s32.totalorder %s76, %s78
      %p82 = scmp.eq.s32.totalorder %s21, 0
      %p83 = por %p81, %p82
      %p84 = scmp.ne.s32.totalorder %s76, %s78
      %p85 = scmp.eq.s32.totalorder %s26, 1
      %p86 = por %p84, %p85
      %p87 = scmp.ne.s32.totalorder %s78, %s79
      %p88 = scmp.eq.s32.totalorder %s26, 0
      %p89 = por %p87, %p88
      %p90 = scmp.ne.s32.totalorder %s78, %s79
      %p91 = scmp.eq.s32.totalorder %s27, 1
      %p92 = por %p90, %p91
      %p94 = scmp.ne.s32.totalorder %s79, %s93
      %p95 = scmp.eq.s32.totalorder %s27, 0
      %p96 = por %p94, %p95
      %s98 = sadd.s32 %s97, 1
      %p101 = scmp.eq.s32.totalorder %s21, 1
      %p102 = scmp.ne.s32.totalorder %s97, %s99
      %p103 = scmp.eq.s32.totalorder %s21, 0
      %p104 = por %p102, %p103
      %p105 = scmp.ne.s32.totalorder %s97, %s99
      %p106 = scmp.eq.s32.totalorder %s26, 1
      %p107 = por %p105, %p106
      %p108 = scmp.ne.s32.totalorder %s99, %s100
      %p109 = scmp.eq.s32.totalorder %s26, 0
      %p110 = por %p108, %p109
      %p111 = scmp.ne.s32.totalorder %s99, %s100
      %p112 = scmp.eq.s32.totalorder %s27, 1
      %p113 = por %p111, %p112
      %p115 = scmp.ne.s32.totalorder %s100, %s114
      %p116 = scmp.eq.s32.totalorder %s27, 0
      %p117 = por %p115, %p116
      %s119 = sadd.s32 %s118, 1
      %p122 = scmp.eq.s32.totalorder %s21, 1
      %p123 = scmp.ne.s32.totalorder %s118, %s120
      %p124 = scmp.eq.s32.totalorder %s21, 0
      %p125 = por %p123, %p124
      %p126 = scmp.ne.s32.totalorder %s118, %s120
      %p127 = scmp.eq.s32.totalorder %s26, 1
      %p128 = por %p126, %p127
      %p129 = scmp.ne.s32.totalorder %s120, %s121
      %p130 = scmp.eq.s32.totalorder %s26, 0
      %p131 = por %p129, %p130
      %p132 = scmp.ne.s32.totalorder %s120, %s121
      %p133 = scmp.eq.s32.totalorder %s27, 1
      %p134 = por %p132, %p133
      %p136 = scmp.ne.s32.totalorder %s121, %s135
      %p137 = scmp.eq.s32.totalorder %s27, 0
      %p138 = por %p136, %p137
      %s140 = sadd.s32 %s139, 1
      %p143 = scmp.eq.s32.totalorder %s21, 1
      %p144 = scmp.ne.s32.totalorder %s139, %s141
      %p145 = scmp.eq.s32.totalorder %s21, 0
      %p146 = por %p144, %p145
      %p147 = scmp.ne.s32.totalorder %s139, %s141
      %p148 = scmp.eq.s32.totalorder %s26, 1
      %p149 = por %p147, %p148
      %p150 = scmp.ne.s32.totalorder %s141, %s142
      %p151 = scmp.eq.s32.totalorder %s26, 0
      %p152 = por %p150, %p151
      %p153 = scmp.ne.s32.totalorder %s141, %s142
      %p154 = scmp.eq.s32.totalorder %s27, 1
      %p155 = por %p153, %p154
      %p157 = scmp.ne.s32.totalorder %s142, %s156
      %p158 = scmp.eq.s32.totalorder %s27, 0
      %p159 = por %p157, %p158
      %s161 = sadd.s32 %s160, 1
      %p164 = scmp.eq.s32.totalorder %s21, 1
      %p165 = scmp.ne.s32.totalorder %s160, %s162
      %p166 = scmp.eq.s32.totalorder %s21, 0
      %p167 = por %p165, %p166
      %p168 = scmp.ne.s32.totalorder %s160, %s162
      %p169 = scmp.eq.s32.totalorder %s26, 1
      %p170 = por %p168, %p169
      %p171 = scmp.ne.s32.totalorder %s162, %s163
      %p172 = scmp.eq.s32.totalorder %s26, 0
      %p173 = por %p171, %p172
      %p174 = scmp.ne.s32.totalorder %s162, %s163
      %p175 = scmp.eq.s32.totalorder %s27, 1
      %p176 = por %p174, %p175
      %p178 = scmp.ne.s32.totalorder %s163, %s177
      %p179 = scmp.eq.s32.totalorder %s27, 0
      %p180 = por %p178, %p179
      %s181 = ssub.s32 %s21, %s28
      %p182 = scmp.eq.s32.totalorder %s181, 0
      %s184 = sadd.s32 %s183, 1
      %s185 = scalar_select %p182, %s183, %s184
      %p188 = pneg %p182
      %p189 = scmp.eq.s32.totalorder %s21, 1
      %p190 = por %p188, %p189
      %p191 = scmp.ne.s32.totalorder %s183, %s186
      %p192 = scmp.eq.s32.totalorder %s21, 0
      %p193 = por %p191, %p192
      %p194 = scmp.ne.s32.totalorder %s183, %s186
      %p195 = scmp.eq.s32.totalorder %s26, 1
      %p196 = por %p194, %p195
      %p197 = scmp.ne.s32.totalorder %s186, %s187
      %p198 = scmp.eq.s32.totalorder %s26, 0
      %p199 = por %p197, %p198
      %p200 = scmp.ne.s32.totalorder %s186, %s187
      %p201 = scmp.eq.s32.totalorder %s27, 1
      %p202 = por %p200, %p201
      %p204 = scmp.ne.s32.totalorder %s187, %s203
      %p205 = scmp.eq.s32.totalorder %s27, 0
      %p206 = por %p204, %p205
      %p207 = scmp.le.s32.totalorder 1, %s21
      %p208 = scmp.lt.s32.totalorder %s21, 3
      %p209 = pnand %p207, %p208
      %p210 = pneg %p209
      // Predicated region
      $region9: #{tpu_custom_call.1} parent=5 // pred_check
        _
      $region10: #{tpu_custom_call.1} parent=5 // pred_check_branch
        %212 = sbr.rel (%p209) target = $region12
      $region11: #{tpu_custom_call.1} parent=5 // pred_region
        %s213 = ssub.s32 %s21, 1
        // Predicated region
        $region13: #{tpu_custom_call.1} parent=11 // pred_check
          %p214 = pneg %p68
        $region14: #{tpu_custom_call.1} parent=11 // pred_check_branch
          %216 = sbr.rel (%p214) target = $region16
        $region15: #{tpu_custom_call.1} parent=11 // pred_region
          %s218 = ssub.s32 128, 128
          %219 = vsyncadd [#allocation6], %s218
          %s221 = sshll.u32 [#allocation5], 4
          %s222 = int_to_ptr.vmem [resolvable:$true] %s221
          %224 = dma.hbm_to_vmem [thread:$0]  %s1, 128, %s222, [#allocation6]
        $region16: #{tpu_custom_call.1} parent=11 // pred_fallthru
          _
        // Predicated region
        $region17: #{tpu_custom_call.1} parent=11 // pred_check
          %p225 = pneg %p89
        $region18: #{tpu_custom_call.1} parent=11 // pred_check_branch
          %227 = sbr.rel (%p225) target = $region20
        $region19: #{tpu_custom_call.1} parent=11 // pred_region
          _
        $region20: #{tpu_custom_call.1} parent=11 // pred_fallthru
          _
        // Predicated region
        $region21: #{tpu_custom_call.1} parent=11 // pred_check
          %p228 = pneg %p110
        $region22: #{tpu_custom_call.1} parent=11 // pred_check_branch
          %230 = sbr.rel (%p228) target = $region24
        $region23: #{tpu_custom_call.1} parent=11 // pred_region
          %s232 = ssub.s32 128, 128
          %233 = vsyncadd [#allocation6], %s232
          %s235 = sshll.u32 [#allocation7], 4
          %s236 = int_to_ptr.vmem [resolvable:$true] %s235
          %238 = dma.hbm_to_vmem [thread:$0]  %s3, 128, %s236, [#allocation6]
        $region24: #{tpu_custom_call.1} parent=11 // pred_fallthru
          _
        // Predicated region
        $region25: #{tpu_custom_call.1} parent=11 // pred_check
          %p239 = pneg %p131
        $region26: #{tpu_custom_call.1} parent=11 // pred_check_branch
          %241 = sbr.rel (%p239) target = $region28
        $region27: #{tpu_custom_call.1} parent=11 // pred_region
          %s243 = ssub.s32 16, 16
          %244 = vsyncadd [#allocation9], %s243
          %s246 = sshll.u32 [#allocation8], 4
          %s247 = int_to_ptr.vmem [resolvable:$true] %s246
          %249 = dma.hbm_to_vmem [thread:$0]  %s4, 16, %s247, [#allocation9]
        $region28: #{tpu_custom_call.1} parent=11 // pred_fallthru
          _
        // Predicated region
        $region29: #{tpu_custom_call.1} parent=11 // pred_check
          %p250 = pneg %p152
        $region30: #{tpu_custom_call.1} parent=11 // pred_check_branch
          %252 = sbr.rel (%p250) target = $region32
        $region31: #{tpu_custom_call.1} parent=11 // pred_region
          _
        $region32: #{tpu_custom_call.1} parent=11 // pred_fallthru
          _
        // Predicated region
        $region33: #{tpu_custom_call.1} parent=11 // pred_check
          %p253 = pneg %p173
        $region34: #{tpu_custom_call.1} parent=11 // pred_check_branch
          %255 = sbr.rel (%p253) target = $region36
        $region35: #{tpu_custom_call.1} parent=11 // pred_region
          _
        $region36: #{tpu_custom_call.1} parent=11 // pred_fallthru
          _
      $region12: #{tpu_custom_call.1} parent=5 // pred_fallthru
        _
      %p256 = scmp.lt.s32.totalorder %s21, 2
      // Predicated region
      $region37: #{tpu_custom_call.1} parent=5 // pred_check
        %p257 = pneg %p256
      $region38: #{tpu_custom_call.1} parent=5 // pred_check_branch
        %259 = sbr.rel (%p257) target = $region40
      $region39: #{tpu_custom_call.1} parent=5 // pred_region
        // Predicated region
        $region41: #{tpu_custom_call.1} parent=39 // pred_check
          %p260 = pneg %p41
        $region42: #{tpu_custom_call.1} parent=39 // pred_check_branch
          %262 = sbr.rel (%p260) target = $region44
        $region43: #{tpu_custom_call.1} parent=39 // pred_region
          %s263 = sand.u32 %s31, 1
          %s264 = scalar_lea.sflag [#allocation3], %s263
          %s265 = sand.u32 %s31, 1
          %s266 = smul.addr %s265, 16
          %s267 = scalar_lea.vmem [#allocation2], %s266
          %s269 = ssub.s32 256, 256
          %270 = vsyncadd %s264, %s269
          %s271 = smul.addr %s21, 2
          %s272 = smul.addr %s271, 128
          %s273 = scalar_lea.hbm %s0, %s272
          %s275 = sshll.u32 %s267, 4
          %s276 = int_to_ptr.vmem [resolvable:$true] %s275
          %278 = dma.hbm_to_vmem [thread:$0]  %s273, 256, %s276, %s264
        $region44: #{tpu_custom_call.1} parent=39 // pred_fallthru
          _
      $region40: #{tpu_custom_call.1} parent=5 // pred_fallthru
        _
      %p279 = scmp.le.s32.totalorder 1, %s21
      %p280 = scmp.lt.s32.totalorder %s21, 3
      %p281 = pnand %p279, %p280
      %p282 = pneg %p281
      // Predicated region
      $region45: #{tpu_custom_call.1} parent=5 // pred_check
        _
      $region46: #{tpu_custom_call.1} parent=5 // pred_check_branch
        %284 = sbr.rel (%p281) target = $region48
      $region47: #{tpu_custom_call.1} parent=5 // pred_region
        %s285 = ssub.s32 %s21, 1
        %s286 = sand.u32 %s34, 1
        %s287 = scalar_lea.sflag [#allocation3], %s286
        %s288 = sand.u32 %s34, 1
        %s289 = smul.addr %s288, 16
        %s290 = scalar_lea.vmem [#allocation2], %s289
        // Predicated region
        $region49: #{tpu_custom_call.1} parent=47 // pred_check
          %p291 = pneg %p47
        $region50: #{tpu_custom_call.1} parent=47 // pred_check_branch
          %293 = sbr.rel (%p291) target = $region52
        $region51: #{tpu_custom_call.1} parent=47 // pred_region
          %294 = dma.done %s287, 256
        $region52: #{tpu_custom_call.1} parent=47 // pred_fallthru
          _
        // Predicated region
        $region53: #{tpu_custom_call.1} parent=47 // pred_check
          %p295 = pneg %p68
        $region54: #{tpu_custom_call.1} parent=47 // pred_check_branch
          %297 = sbr.rel (%p295) target = $region56
        $region55: #{tpu_custom_call.1} parent=47 // pred_region
          %298 = dma.done [#allocation6], 128
        $region56: #{tpu_custom_call.1} parent=47 // pred_fallthru
          _
        // Predicated region
        $region57: #{tpu_custom_call.1} parent=47 // pred_check
          %p299 = pneg %p110
        $region58: #{tpu_custom_call.1} parent=47 // pred_check_branch
          %301 = sbr.rel (%p299) target = $region60
        $region59: #{tpu_custom_call.1} parent=47 // pred_region
          %302 = dma.done [#allocation6], 128
        $region60: #{tpu_custom_call.1} parent=47 // pred_fallthru
          _
        // Predicated region
        $region61: #{tpu_custom_call.1} parent=47 // pred_check
          %p303 = pneg %p131
        $region62: #{tpu_custom_call.1} parent=47 // pred_check_branch
          %305 = sbr.rel (%p303) target = $region64
        $region63: #{tpu_custom_call.1} parent=47 // pred_region
          %306 = dma.done [#allocation9], 16
        $region64: #{tpu_custom_call.1} parent=47 // pred_fallthru
          _
        %s307 = sand.u32 %s34, 1
        %s308 = scalar_lea.sflag [#allocation3], %s307
        %s309 = sand.u32 %s34, 1
        %s310 = smul.addr %s309, 16
        %s311 = scalar_lea.vmem [#allocation2], %s310
        %p312 = pneg %p47
        %p313 = pneg %p44
        %p314 = pneg %p68
        %p315 = pneg %p65
        %p316 = pneg %p89
        %p317 = pneg %p86
        %p318 = pneg %p110
        %p319 = pneg %p107
        %p320 = pneg %p131
        %p321 = pneg %p128
        %p322 = pneg %p152
        %p323 = pneg %p149
        %p324 = pneg %p173
        %p325 = pneg %p170
        %p326 = pneg %p199
        %p327 = pneg %p196
        %s328 = sand.u32 %s186, 1
        %s329 = scalar_lea.sflag [#allocation4], %s328
        %s330 = sand.u32 %s186, 1
        %s331 = smul.addr %s330, 16
        %s332 = scalar_lea.vmem [#allocation10], %s331
        %v333 = vld [vmem:[%s290] sm:$0xff]
        %v334 = vld [vmem:[%s290 + $0x8] sm:$0xff]
        %335 = vxpose.xlu0.b32.start [1/16] %v333, 128
        %336 = vxpose.xlu0.b32.cont [2/16] 0.0, 128
        %337 = vxpose.xlu0.b32.cont [3/16] 0.0, 128
        %338 = vxpose.xlu0.b32.cont [4/16] 0.0, 128
        %339 = vxpose.xlu0.b32.cont [5/16] 0.0, 128
        %340 = vxpose.xlu0.b32.cont [6/16] 0.0, 128
        %341 = vxpose.xlu0.b32.cont [7/16] 0.0, 128
        %342 = vxpose.xlu0.b32.cont [8/16] 0.0, 128
        %343 = vxpose.xlu0.b32.cont [9/16] 0.0, 128
        %344 = vxpose.xlu0.b32.cont [10/16] 0.0, 128
        %345 = vxpose.xlu0.b32.cont [11/16] 0.0, 128
        %346 = vxpose.xlu0.b32.cont [12/16] 0.0, 128
        %347 = vxpose.xlu0.b32.cont [13/16] 0.0, 128
        %348 = vxpose.xlu0.b32.cont [14/16] 0.0, 128
        %349 = vxpose.xlu0.b32.cont [15/16] 0.0, 128
        %350 = vxpose.xlu0.b32.end [16/16] 0.0, 128
        %v351 = vpop.trf.xlu0
        %v352 = vpop.trf.xlu0
        %v353 = vpop.trf.xlu0
        %v354 = vpop.trf.xlu0
        %v355 = vpop.trf.xlu0
        %v356 = vpop.trf.xlu0
        %v357 = vpop.trf.xlu0
        %v358 = vpop.trf.xlu0
        %v359 = vpop.trf.xlu0
        %v360 = vpop.trf.xlu0
        %v361 = vpop.trf.xlu0
        %v362 = vpop.trf.xlu0
        %v363 = vpop.trf.xlu0
        %v364 = vpop.trf.xlu0
        %v365 = vpop.trf.xlu0
        %v366 = vpop.trf.xlu0
        %367 = vxpose.xlu0.b32.start [1/16] %v334, 128
        %368 = vxpose.xlu0.b32.cont [2/16] 0.0, 128
        %369 = vxpose.xlu0.b32.cont [3/16] 0.0, 128
        %370 = vxpose.xlu0.b32.cont [4/16] 0.0, 128
        %371 = vxpose.xlu0.b32.cont [5/16] 0.0, 128
        %372 = vxpose.xlu0.b32.cont [6/16] 0.0, 128
        %373 = vxpose.xlu0.b32.cont [7/16] 0.0, 128
        %374 = vxpose.xlu0.b32.cont [8/16] 0.0, 128
        %375 = vxpose.xlu0.b32.cont [9/16] 0.0, 128
        %376 = vxpose.xlu0.b32.cont [10/16] 0.0, 128
        %377 = vxpose.xlu0.b32.cont [11/16] 0.0, 128
        %378 = vxpose.xlu0.b32.cont [12/16] 0.0, 128
        %379 = vxpose.xlu0.b32.cont [13/16] 0.0, 128
        %380 = vxpose.xlu0.b32.cont [14/16] 0.0, 128
        %381 = vxpose.xlu0.b32.cont [15/16] 0.0, 128
        %382 = vxpose.xlu0.b32.end [16/16] 0.0, 128
        %v383 = vpop.trf.xlu0
        %v384 = vpop.trf.xlu0
        %v385 = vpop.trf.xlu0
        %v386 = vpop.trf.xlu0
        %v387 = vpop.trf.xlu0
        %v388 = vpop.trf.xlu0
        %v389 = vpop.trf.xlu0
        %v390 = vpop.trf.xlu0
        %v391 = vpop.trf.xlu0
        %v392 = vpop.trf.xlu0
        %v393 = vpop.trf.xlu0
        %v394 = vpop.trf.xlu0
        %v395 = vpop.trf.xlu0
        %v396 = vpop.trf.xlu0
        %v397 = vpop.trf.xlu0
        %v398 = vpop.trf.xlu0
        %v399 = vld [vmem:[#allocation5] sm:$0xff]
        %v400 = vld [vmem:[%s2] sm:$0x1]
        %v402 = vlaneseq
        %v403 = vshrl.u32 %v402, 7
        %v404 = vsub.s32 0, %v403
        %v405 = vrot.slane %v400, %v404
        %vm407 = vcmask 64512
        %v409 = vsel %vm407, %v351, 0
        %v412 = vsel %vm407, %v352, 0
        %v415 = vsel %vm407, %v353, 0
        %v418 = vsel %vm407, %v354, 0
        %v421 = vsel %vm407, %v355, 0
        %v424 = vsel %vm407, %v356, 0
        %v427 = vsel %vm407, %v357, 0
        %v430 = vsel %vm407, %v358, 0
        %v433 = vsel %vm407, %v359, 0
        %v436 = vsel %vm407, %v360, 0
        %v439 = vsel %vm407, %v361, 0
        %v442 = vsel %vm407, %v362, 0
        %v445 = vsel %vm407, %v363, 0
        %v448 = vsel %vm407, %v364, 0
        %v451 = vsel %vm407, %v365, 0
        %v454 = vsel %vm407, %v366, 0
        %v457 = vsel %vm407, %v383, 0
        %v460 = vsel %vm407, %v384, 0
        %v463 = vsel %vm407, %v385, 0
        %v466 = vsel %vm407, %v386, 0
        %v469 = vsel %vm407, %v387, 0
        %v472 = vsel %vm407, %v388, 0
        %v475 = vsel %vm407, %v389, 0
        %v478 = vsel %vm407, %v390, 0
        %v481 = vsel %vm407, %v391, 0
        %v484 = vsel %vm407, %v392, 0
        %v487 = vsel %vm407, %v393, 0
        %v490 = vsel %vm407, %v394, 0
        %v493 = vsel %vm407, %v395, 0
        %v496 = vsel %vm407, %v396, 0
        %v499 = vsel %vm407, %v397, 0
        %v502 = vsel %vm407, %v398, 0
        %v505 = vsel %vm407, %v399, 0
        %507 = vmatprep.subr.mxu0 0.0
        %508 = vmatpush1.xpose.msra.mxu0 0.0
        %509 = vmatprep.subr.mxu0 0.0
        %510 = vmatpush1.xpose.msra.mxu0 0.0
        %511 = vmatprep.subr.mxu0 0.0
        %512 = vmatpush1.xpose.msra.mxu0 0.0
        %513 = vmatprep.subr.mxu0 0.0
        %514 = vmatpush1.xpose.msra.mxu0 0.0
        %515 = vmatprep.subr.mxu0 0.0
        %516 = vmatpush1.xpose.msra.mxu0 0.0
        %517 = vmatprep.subr.mxu0 0.0
        %518 = vmatpush1.xpose.msra.mxu0 0.0
        %519 = vmatprep.subr.mxu0 0.0
        %520 = vmatpush1.xpose.msra.mxu0 0.0
        %521 = vmatprep.subr.mxu0 0.0
        %522 = vmatpush1.xpose.msra.mxu0 0.0
        %523 = vmatprep.subr.mxu0 0.0
        %524 = vmatpush1.xpose.msra.mxu0 0.0
        %525 = vmatprep.subr.mxu0 0.0
        %526 = vmatpush1.xpose.msra.mxu0 0.0
        %527 = vmatprep.subr.mxu0 0.0
        %528 = vmatpush1.xpose.msra.mxu0 0.0
        %529 = vmatprep.subr.mxu0 0.0
        %530 = vmatpush1.xpose.msra.mxu0 0.0
        %531 = vmatprep.subr.mxu0 0.0
        %532 = vmatpush1.xpose.msra.mxu0 0.0
        %533 = vmatprep.subr.mxu0 0.0
        %534 = vmatpush1.xpose.msra.mxu0 0.0
        %535 = vmatprep.subr.mxu0 0.0
        %536 = vmatpush1.xpose.msra.mxu0 0.0
        %537 = vmatprep.subr.mxu0 0.0
        %538 = vmatpush1.xpose.msra.mxu0 %v505
        %539 = vmatprep.subr.mxu0 0.0
        %540 = vmatpush2.xpose.msra.mxu0 0.0
        %541 = vmatprep.subr.mxu0 0.0
        %542 = vmatpush2.xpose.msra.mxu0 0.0
        %543 = vmatprep.subr.mxu0 0.0
        %544 = vmatpush2.xpose.msra.mxu0 0.0
        %545 = vmatprep.subr.mxu0 0.0
        %546 = vmatpush2.xpose.msra.mxu0 0.0
        %547 = vmatprep.subr.mxu0 0.0
        %548 = vmatpush2.xpose.msra.mxu0 0.0
        %549 = vmatprep.subr.mxu0 0.0
        %550 = vmatpush2.xpose.msra.mxu0 0.0
        %551 = vmatprep.subr.mxu0 0.0
        %552 = vmatpush2.xpose.msra.mxu0 0.0
        %553 = vmatprep.subr.mxu0 0.0
        %554 = vmatpush2.xpose.msra.mxu0 0.0
        %555 = vmatprep.subr.mxu0 0.0
        %556 = vmatpush2.xpose.msra.mxu0 0.0
        %557 = vmatprep.subr.mxu0 0.0
        %558 = vmatpush2.xpose.msra.mxu0 0.0
        %559 = vmatprep.subr.mxu0 0.0
        %560 = vmatpush2.xpose.msra.mxu0 0.0
        %561 = vmatprep.subr.mxu0 0.0
        %562 = vmatpush2.xpose.msra.mxu0 0.0
        %563 = vmatprep.subr.mxu0 0.0
        %564 = vmatpush2.xpose.msra.mxu0 0.0
        %565 = vmatprep.subr.mxu0 0.0
        %566 = vmatpush2.xpose.msra.mxu0 0.0
        %567 = vmatprep.subr.mxu0 0.0
        %568 = vmatpush2.xpose.msra.mxu0 0.0
        %569 = vmatprep.subr.mxu0 0.0
        %570 = vmatpush2.xpose.msra.mxu0 0.0
        %571 = vmatprep.mubr.f32.mxu0 0.0
        %572 = vmatmul.mubr.f32.gmra.mxu0 %v409
        %v573 = vpop.f32.mrf.mxu0
        %v574 = vadd.f32 %v405, %v573
        %v575 = vpop.f32.mrf.mxu0
        %576 = vmatprep.mubr.f32.mxu0 0.0
        %577 = vmatmul.mubr.f32.gmra.mxu0 %v412
        %v578 = vpop.f32.mrf.mxu0
        %v579 = vadd.f32 %v405, %v578
        %v580 = vpop.f32.mrf.mxu0
        %581 = vmatprep.mubr.f32.mxu0 0.0
        %582 = vmatmul.mubr.f32.gmra.mxu0 %v415
        %v583 = vpop.f32.mrf.mxu0
        %v584 = vadd.f32 %v405, %v583
        %v585 = vpop.f32.mrf.mxu0
        %586 = vmatprep.mubr.f32.mxu0 0.0
        %587 = vmatmul.mubr.f32.gmra.mxu0 %v418
        %v588 = vpop.f32.mrf.mxu0
        %v589 = vadd.f32 %v405, %v588
        %v590 = vpop.f32.mrf.mxu0
        %591 = vmatprep.mubr.f32.mxu0 0.0
        %592 = vmatmul.mubr.f32.gmra.mxu0 %v421
        %v593 = vpop.f32.mrf.mxu0
        %v594 = vadd.f32 %v405, %v593
        %v595 = vpop.f32.mrf.mxu0
        %596 = vmatprep.mubr.f32.mxu0 0.0
        %597 = vmatmul.mubr.f32.gmra.mxu0 %v424
        %v598 = vpop.f32.mrf.mxu0
        %v599 = vadd.f32 %v405, %v598
        %v600 = vpop.f32.mrf.mxu0
        %601 = vmatprep.mubr.f32.mxu0 0.0
        %602 = vmatmul.mubr.f32.gmra.mxu0 %v427
        %v603 = vpop.f32.mrf.mxu0
        %v604 = vadd.f32 %v405, %v603
        %v605 = vpop.f32.mrf.mxu0
        %606 = vmatprep.mubr.f32.mxu0 0.0
        %607 = vmatmul.mubr.f32.gmra.mxu0 %v430
        %v608 = vpop.f32.mrf.mxu0
        %v609 = vadd.f32 %v405, %v608
        %v610 = vpop.f32.mrf.mxu0
        %611 = vmatprep.mubr.f32.mxu0 0.0
        %612 = vmatmul.mubr.f32.gmra.mxu0 %v433
        %v613 = vpop.f32.mrf.mxu0
        %v614 = vadd.f32 %v405, %v613
        %v615 = vpop.f32.mrf.mxu0
        %616 = vmatprep.mubr.f32.mxu0 0.0
        %617 = vmatmul.mubr.f32.gmra.mxu0 %v436
        %v618 = vpop.f32.mrf.mxu0
        %v619 = vadd.f32 %v405, %v618
        %v620 = vpop.f32.mrf.mxu0
        %621 = vmatprep.mubr.f32.mxu0 0.0
        %622 = vmatmul.mubr.f32.gmra.mxu0 %v439
        %v623 = vpop.f32.mrf.mxu0
        %v624 = vadd.f32 %v405, %v623
        %v625 = vpop.f32.mrf.mxu0
        %626 = vmatprep.mubr.f32.mxu0 0.0
        %627 = vmatmul.mubr.f32.gmra.mxu0 %v442
        %v628 = vpop.f32.mrf.mxu0
        %v629 = vadd.f32 %v405, %v628
        %v630 = vpop.f32.mrf.mxu0
        %631 = vmatprep.mubr.f32.mxu0 0.0
        %632 = vmatmul.mubr.f32.gmra.mxu0 %v445
        %v633 = vpop.f32.mrf.mxu0
        %v634 = vadd.f32 %v405, %v633
        %v635 = vpop.f32.mrf.mxu0
        %636 = vmatprep.mubr.f32.mxu0 0.0
        %637 = vmatmul.mubr.f32.gmra.mxu0 %v448
        %v638 = vpop.f32.mrf.mxu0
        %v639 = vadd.f32 %v405, %v638
        %v640 = vpop.f32.mrf.mxu0
        %641 = vmatprep.mubr.f32.mxu0 0.0
        %642 = vmatmul.mubr.f32.gmra.mxu0 %v451
        %v643 = vpop.f32.mrf.mxu0
        %v644 = vadd.f32 %v405, %v643
        %v645 = vpop.f32.mrf.mxu0
        %646 = vmatprep.mubr.f32.mxu0 0.0
        %647 = vmatmul.mubr.f32.gmra.mxu0 %v454
        %v648 = vpop.f32.mrf.mxu0
        %v649 = vadd.f32 %v405, %v648
        %v650 = vpop.f32.mrf.mxu0
        %651 = vmatprep.mubr.f32.mxu0 0.0
        %652 = vmatmul.mubr.f32.gmra.mxu0 %v457
        %v653 = vpop.f32.mrf.mxu0
        %v654 = vadd.f32 %v405, %v653
        %v655 = vpop.f32.mrf.mxu0
        %656 = vmatprep.mubr.f32.mxu0 0.0
        %657 = vmatmul.mubr.f32.gmra.mxu0 %v460
        %v658 = vpop.f32.mrf.mxu0
        %v659 = vadd.f32 %v405, %v658
        %v660 = vpop.f32.mrf.mxu0
        %661 = vmatprep.mubr.f32.mxu0 0.0
        %662 = vmatmul.mubr.f32.gmra.mxu0 %v463
        %v663 = vpop.f32.mrf.mxu0
        %v664 = vadd.f32 %v405, %v663
        %v665 = vpop.f32.mrf.mxu0
        %666 = vmatprep.mubr.f32.mxu0 0.0
        %667 = vmatmul.mubr.f32.gmra.mxu0 %v466
        %v668 = vpop.f32.mrf.mxu0
        %v669 = vadd.f32 %v405, %v668
        %v670 = vpop.f32.mrf.mxu0
        %671 = vmatprep.mubr.f32.mxu0 0.0
        %672 = vmatmul.mubr.f32.gmra.mxu0 %v469
        %v673 = vpop.f32.mrf.mxu0
        %v674 = vadd.f32 %v405, %v673
        %v675 = vpop.f32.mrf.mxu0
        %676 = vmatprep.mubr.f32.mxu0 0.0
        %677 = vmatmul.mubr.f32.gmra.mxu0 %v472
        %v678 = vpop.f32.mrf.mxu0
        %v679 = vadd.f32 %v405, %v678
        %v680 = vpop.f32.mrf.mxu0
        %681 = vmatprep.mubr.f32.mxu0 0.0
        %682 = vmatmul.mubr.f32.gmra.mxu0 %v475
        %v683 = vpop.f32.mrf.mxu0
        %v684 = vadd.f32 %v405, %v683
        %v685 = vpop.f32.mrf.mxu0
        %686 = vmatprep.mubr.f32.mxu0 0.0
        %687 = vmatmul.mubr.f32.gmra.mxu0 %v478
        %v688 = vpop.f32.mrf.mxu0
        %v689 = vadd.f32 %v405, %v688
        %v690 = vpop.f32.mrf.mxu0
        %691 = vmatprep.mubr.f32.mxu0 0.0
        %692 = vmatmul.mubr.f32.gmra.mxu0 %v481
        %v693 = vpop.f32.mrf.mxu0
        %v694 = vadd.f32 %v405, %v693
        %v695 = vpop.f32.mrf.mxu0
        %696 = vmatprep.mubr.f32.mxu0 0.0
        %697 = vmatmul.mubr.f32.gmra.mxu0 %v484
        %v698 = vpop.f32.mrf.mxu0
        %v699 = vadd.f32 %v405, %v698
        %v700 = vpop.f32.mrf.mxu0
        %701 = vmatprep.mubr.f32.mxu0 0.0
        %702 = vmatmul.mubr.f32.gmra.mxu0 %v487
        %v703 = vpop.f32.mrf.mxu0
        %v704 = vadd.f32 %v405, %v703
        %v705 = vpop.f32.mrf.mxu0
        %706 = vmatprep.mubr.f32.mxu0 0.0
        %707 = vmatmul.mubr.f32.gmra.mxu0 %v490
        %v708 = vpop.f32.mrf.mxu0
        %v709 = vadd.f32 %v405, %v708
        %v710 = vpop.f32.mrf.mxu0
        %711 = vmatprep.mubr.f32.mxu0 0.0
        %712 = vmatmul.mubr.f32.gmra.mxu0 %v493
        %v713 = vpop.f32.mrf.mxu0
        %v714 = vadd.f32 %v405, %v713
        %v715 = vpop.f32.mrf.mxu0
        %716 = vmatprep.mubr.f32.mxu0 0.0
        %717 = vmatmul.mubr.f32.gmra.mxu0 %v496
        %v718 = vpop.f32.mrf.mxu0
        %v719 = vadd.f32 %v405, %v718
        %v720 = vpop.f32.mrf.mxu0
        %721 = vmatprep.mubr.f32.mxu0 0.0
        %722 = vmatmul.mubr.f32.gmra.mxu0 %v499
        %v723 = vpop.f32.mrf.mxu0
        %v724 = vadd.f32 %v405, %v723
        %v725 = vpop.f32.mrf.mxu0
        %726 = vmatprep.mubr.f32.mxu0 0.0
        %727 = vmatmul.mubr.f32.gmra.mxu0 %v502
        %v728 = vpop.f32.mrf.mxu0
        %v729 = vadd.f32 %v405, %v728
        %v730 = vpop.f32.mrf.mxu0
        %731 = vdwg.mxu0
        %v732 = vmul.f32 %v574, %v574
        %v733 = vmul.f32 %v579, %v579
        %v734 = vmul.f32 %v584, %v584
        %v735 = vmul.f32 %v589, %v589
        %v736 = vmul.f32 %v594, %v594
        %v737 = vmul.f32 %v599, %v599
        %v738 = vmul.f32 %v604, %v604
        %v739 = vmul.f32 %v609, %v609
        %v740 = vmul.f32 %v614, %v614
        %v741 = vmul.f32 %v619, %v619
        %v742 = vmul.f32 %v624, %v624
        %v743 = vmul.f32 %v629, %v629
        %v744 = vmul.f32 %v634, %v634
        %v745 = vmul.f32 %v639, %v639
        %v746 = vmul.f32 %v644, %v644
        %v747 = vmul.f32 %v649, %v649
        %v748 = vmul.f32 %v654, %v654
        %v749 = vmul.f32 %v659, %v659
        %v750 = vmul.f32 %v664, %v664
        %v751 = vmul.f32 %v669, %v669
        %v752 = vmul.f32 %v674, %v674
        %v753 = vmul.f32 %v679, %v679
        %v754 = vmul.f32 %v684, %v684
        %v755 = vmul.f32 %v689, %v689
        %v756 = vmul.f32 %v694, %v694
        %v757 = vmul.f32 %v699, %v699
        %v758 = vmul.f32 %v704, %v704
        %v759 = vmul.f32 %v709, %v709
        %v760 = vmul.f32 %v714, %v714
        %v761 = vmul.f32 %v719, %v719
        %v762 = vmul.f32 %v724, %v724
        %v763 = vmul.f32 %v729, %v729
        %v764 = vsel %vm407, %v732, 0.0
        %765 = vadd.xlane.f32.xlu0 %v764
        %v766 = vpop.xlane.xlu0 %765
        %v767 = vsel %vm407, %v733, 0.0
        %768 = vadd.xlane.f32.xlu0 %v767
        %v769 = vpop.xlane.xlu0 %768
        %v770 = vsel %vm407, %v734, 0.0
        %771 = vadd.xlane.f32.xlu0 %v770
        %v772 = vpop.xlane.xlu0 %771
        %v773 = vsel %vm407, %v735, 0.0
        %774 = vadd.xlane.f32.xlu0 %v773
        %v775 = vpop.xlane.xlu0 %774
        %v776 = vsel %vm407, %v736, 0.0
        %777 = vadd.xlane.f32.xlu0 %v776
        %v778 = vpop.xlane.xlu0 %777
        %v779 = vsel %vm407, %v737, 0.0
        %780 = vadd.xlane.f32.xlu0 %v779
        %v781 = vpop.xlane.xlu0 %780
        %v782 = vsel %vm407, %v738, 0.0
        %783 = vadd.xlane.f32.xlu0 %v782
        %v784 = vpop.xlane.xlu0 %783
        %v785 = vsel %vm407, %v739, 0.0
        %786 = vadd.xlane.f32.xlu0 %v785
        %v787 = vpop.xlane.xlu0 %786
        %v788 = vsel %vm407, %v740, 0.0
        %789 = vadd.xlane.f32.xlu0 %v788
        %v790 = vpop.xlane.xlu0 %789
        %v791 = vsel %vm407, %v741, 0.0
        %792 = vadd.xlane.f32.xlu0 %v791
        %v793 = vpop.xlane.xlu0 %792
        %v794 = vsel %vm407, %v742, 0.0
        %795 = vadd.xlane.f32.xlu0 %v794
        %v796 = vpop.xlane.xlu0 %795
        %v797 = vsel %vm407, %v743, 0.0
        %798 = vadd.xlane.f32.xlu0 %v797
        %v799 = vpop.xlane.xlu0 %798
        %v800 = vsel %vm407, %v744, 0.0
        %801 = vadd.xlane.f32.xlu0 %v800
        %v802 = vpop.xlane.xlu0 %801
        %v803 = vsel %vm407, %v745, 0.0
        %804 = vadd.xlane.f32.xlu0 %v803
        %v805 = vpop.xlane.xlu0 %804
        %v806 = vsel %vm407, %v746, 0.0
        %807 = vadd.xlane.f32.xlu0 %v806
        %v808 = vpop.xlane.xlu0 %807
        %v809 = vsel %vm407, %v747, 0.0
        %810 = vadd.xlane.f32.xlu0 %v809
        %v811 = vpop.xlane.xlu0 %810
        %v812 = vsel %vm407, %v748, 0.0
        %813 = vadd.xlane.f32.xlu0 %v812
        %v814 = vpop.xlane.xlu0 %813
        %v815 = vsel %vm407, %v749, 0.0
        %816 = vadd.xlane.f32.xlu0 %v815
        %v817 = vpop.xlane.xlu0 %816
        %v818 = vsel %vm407, %v750, 0.0
        %819 = vadd.xlane.f32.xlu0 %v818
        %v820 = vpop.xlane.xlu0 %819
        %v821 = vsel %vm407, %v751, 0.0
        %822 = vadd.xlane.f32.xlu0 %v821
        %v823 = vpop.xlane.xlu0 %822
        %v824 = vsel %vm407, %v752, 0.0
        %825 = vadd.xlane.f32.xlu0 %v824
        %v826 = vpop.xlane.xlu0 %825
        %v827 = vsel %vm407, %v753, 0.0
        %828 = vadd.xlane.f32.xlu0 %v827
        %v829 = vpop.xlane.xlu0 %828
        %v830 = vsel %vm407, %v754, 0.0
        %831 = vadd.xlane.f32.xlu0 %v830
        %v832 = vpop.xlane.xlu0 %831
        %v833 = vsel %vm407, %v755, 0.0
        %834 = vadd.xlane.f32.xlu0 %v833
        %v835 = vpop.xlane.xlu0 %834
        %v836 = vsel %vm407, %v756, 0.0
        %837 = vadd.xlane.f32.xlu0 %v836
        %v838 = vpop.xlane.xlu0 %837
        %v839 = vsel %vm407, %v757, 0.0
        %840 = vadd.xlane.f32.xlu0 %v839
        %v841 = vpop.xlane.xlu0 %840
        %v842 = vsel %vm407, %v758, 0.0
        %843 = vadd.xlane.f32.xlu0 %v842
        %v844 = vpop.xlane.xlu0 %843
        %v845 = vsel %vm407, %v759, 0.0
        %846 = vadd.xlane.f32.xlu0 %v845
        %v847 = vpop.xlane.xlu0 %846
        %v848 = vsel %vm407, %v760, 0.0
        %849 = vadd.xlane.f32.xlu0 %v848
        %v850 = vpop.xlane.xlu0 %849
        %v851 = vsel %vm407, %v761, 0.0
        %852 = vadd.xlane.f32.xlu0 %v851
        %v853 = vpop.xlane.xlu0 %852
        %v854 = vsel %vm407, %v762, 0.0
        %855 = vadd.xlane.f32.xlu0 %v854
        %v856 = vpop.xlane.xlu0 %855
        %v857 = vsel %vm407, %v763, 0.0
        %858 = vadd.xlane.f32.xlu0 %v857
        %v859 = vpop.xlane.xlu0 %858
        %v860 = vmax.f32 %v766, 1e-24
        %v861 = vmax.f32 %v769, 1e-24
        %v862 = vmax.f32 %v772, 1e-24
        %v863 = vmax.f32 %v775, 1e-24
        %v864 = vmax.f32 %v778, 1e-24
        %v865 = vmax.f32 %v781, 1e-24
        %v866 = vmax.f32 %v784, 1e-24
        %v867 = vmax.f32 %v787, 1e-24
        %v868 = vmax.f32 %v790, 1e-24
        %v869 = vmax.f32 %v793, 1e-24
        %v870 = vmax.f32 %v796, 1e-24
        %v871 = vmax.f32 %v799, 1e-24
        %v872 = vmax.f32 %v802, 1e-24
        %v873 = vmax.f32 %v805, 1e-24
        %v874 = vmax.f32 %v808, 1e-24
        %v875 = vmax.f32 %v811, 1e-24
        %v876 = vmax.f32 %v814, 1e-24
        %v877 = vmax.f32 %v817, 1e-24
        %v878 = vmax.f32 %v820, 1e-24
        %v879 = vmax.f32 %v823, 1e-24
        %v880 = vmax.f32 %v826, 1e-24
        %v881 = vmax.f32 %v829, 1e-24
        %v882 = vmax.f32 %v832, 1e-24
        %v883 = vmax.f32 %v835, 1e-24
        %v884 = vmax.f32 %v838, 1e-24
        %v885 = vmax.f32 %v841, 1e-24
        %v886 = vmax.f32 %v844, 1e-24
        %v887 = vmax.f32 %v847, 1e-24
        %v888 = vmax.f32 %v850, 1e-24
        %v889 = vmax.f32 %v853, 1e-24
        %v890 = vmax.f32 %v856, 1e-24
        %v891 = vmax.f32 %v859, 1e-24
        %v892 = vrsqrt.pop %v860
        %v893 = vrsqrt.pop %v861
        %v894 = vrsqrt.pop %v862
        %v895 = vrsqrt.pop %v863
        %v896 = vrsqrt.pop %v864
        %v897 = vrsqrt.pop %v865
        %v898 = vrsqrt.pop %v866
        %v899 = vrsqrt.pop %v867
        %v900 = vrsqrt.pop %v868
        %v901 = vrsqrt.pop %v869
        %v902 = vrsqrt.pop %v870
        %v903 = vrsqrt.pop %v871
        %v904 = vrsqrt.pop %v872
        %v905 = vrsqrt.pop %v873
        %v906 = vrsqrt.pop %v874
        %v907 = vrsqrt.pop %v875
        %v908 = vrsqrt.pop %v876
        %v909 = vrsqrt.pop %v877
        %v910 = vrsqrt.pop %v878
        %v911 = vrsqrt.pop %v879
        %v912 = vrsqrt.pop %v880
        %v913 = vrsqrt.pop %v881
        %v914 = vrsqrt.pop %v882
        %v915 = vrsqrt.pop %v883
        %v916 = vrsqrt.pop %v884
        %v917 = vrsqrt.pop %v885
        %v918 = vrsqrt.pop %v886
        %v919 = vrsqrt.pop %v887
        %v920 = vrsqrt.pop %v888
        %v921 = vrsqrt.pop %v889
        %v922 = vrsqrt.pop %v890
        %v923 = vrsqrt.pop %v891
        %v924 = vmul.f32 %v574, %v892
        %v925 = vmul.f32 %v579, %v893
        %v926 = vmul.f32 %v584, %v894
        %v927 = vmul.f32 %v589, %v895
        %v928 = vmul.f32 %v594, %v896
        %v929 = vmul.f32 %v599, %v897
        %v930 = vmul.f32 %v604, %v898
        %v931 = vmul.f32 %v609, %v899
        %v932 = vmul.f32 %v614, %v900
        %v933 = vmul.f32 %v619, %v901
        %v934 = vmul.f32 %v624, %v902
        %v935 = vmul.f32 %v629, %v903
        %v936 = vmul.f32 %v634, %v904
        %v937 = vmul.f32 %v639, %v905
        %v938 = vmul.f32 %v644, %v906
        %v939 = vmul.f32 %v649, %v907
        %v940 = vmul.f32 %v654, %v908
        %v941 = vmul.f32 %v659, %v909
        %v942 = vmul.f32 %v664, %v910
        %v943 = vmul.f32 %v669, %v911
        %v944 = vmul.f32 %v674, %v912
        %v945 = vmul.f32 %v679, %v913
        %v946 = vmul.f32 %v684, %v914
        %v947 = vmul.f32 %v689, %v915
        %v948 = vmul.f32 %v694, %v916
        %v949 = vmul.f32 %v699, %v917
        %v950 = vmul.f32 %v704, %v918
        %v951 = vmul.f32 %v709, %v919
        %v952 = vmul.f32 %v714, %v920
        %v953 = vmul.f32 %v719, %v921
        %v954 = vmul.f32 %v724, %v922
        %v955 = vmul.f32 %v729, %v923
        %v956 = vld [vmem:[#allocation7] sm:$0xff]
        %v958 = vsel %vm407, %v574, 0
        %v961 = vsel %vm407, %v579, 0
        %v964 = vsel %vm407, %v584, 0
        %v967 = vsel %vm407, %v589, 0
        %v970 = vsel %vm407, %v594, 0
        %v973 = vsel %vm407, %v599, 0
        %v976 = vsel %vm407, %v604, 0
        %v979 = vsel %vm407, %v609, 0
        %v982 = vsel %vm407, %v614, 0
        %v985 = vsel %vm407, %v619, 0
        %v988 = vsel %vm407, %v624, 0
        %v991 = vsel %vm407, %v629, 0
        %v994 = vsel %vm407, %v634, 0
        %v997 = vsel %vm407, %v639, 0
        %v1000 = vsel %vm407, %v644, 0
        %v1003 = vsel %vm407, %v649, 0
        %v1006 = vsel %vm407, %v654, 0
        %v1009 = vsel %vm407, %v659, 0
        %v1012 = vsel %vm407, %v664, 0
        %v1015 = vsel %vm407, %v669, 0
        %v1018 = vsel %vm407, %v674, 0
        %v1021 = vsel %vm407, %v679, 0
        %v1024 = vsel %vm407, %v684, 0
        %v1027 = vsel %vm407, %v689, 0
        %v1030 = vsel %vm407, %v694, 0
        %v1033 = vsel %vm407, %v699, 0
        %v1036 = vsel %vm407, %v704, 0
        %v1039 = vsel %vm407, %v709, 0
        %v1042 = vsel %vm407, %v714, 0
        %v1045 = vsel %vm407, %v719, 0
        %v1048 = vsel %vm407, %v724, 0
        %v1051 = vsel %vm407, %v729, 0
        %v1054 = vsel %vm407, %v956, 0
        %1056 = vmatprep.subr.mxu0 0.0
        %1057 = vmatpush1.xpose.msra.mxu0 0.0
        %1058 = vmatprep.subr.mxu0 0.0
        %1059 = vmatpush1.xpose.msra.mxu0 0.0
        %1060 = vmatprep.subr.mxu0 0.0
        %1061 = vmatpush1.xpose.msra.mxu0 0.0
        %1062 = vmatprep.subr.mxu0 0.0
        %1063 = vmatpush1.xpose.msra.mxu0 0.0
        %1064 = vmatprep.subr.mxu0 0.0
        %1065 = vmatpush1.xpose.msra.mxu0 0.0
        %1066 = vmatprep.subr.mxu0 0.0
        %1067 = vmatpush1.xpose.msra.mxu0 0.0
        %1068 = vmatprep.subr.mxu0 0.0
        %1069 = vmatpush1.xpose.msra.mxu0 0.0
        %1070 = vmatprep.subr.mxu0 0.0
        %1071 = vmatpush1.xpose.msra.mxu0 0.0
        %1072 = vmatprep.subr.mxu0 0.0
        %1073 = vmatpush1.xpose.msra.mxu0 0.0
        %1074 = vmatprep.subr.mxu0 0.0
        %1075 = vmatpush1.xpose.msra.mxu0 0.0
        %1076 = vmatprep.subr.mxu0 0.0
        %1077 = vmatpush1.xpose.msra.mxu0 0.0
        %1078 = vmatprep.subr.mxu0 0.0
        %1079 = vmatpush1.xpose.msra.mxu0 0.0
        %1080 = vmatprep.subr.mxu0 0.0
        %1081 = vmatpush1.xpose.msra.mxu0 0.0
        %1082 = vmatprep.subr.mxu0 0.0
        %1083 = vmatpush1.xpose.msra.mxu0 0.0
        %1084 = vmatprep.subr.mxu0 0.0
        %1085 = vmatpush1.xpose.msra.mxu0 0.0
        %1086 = vmatprep.subr.mxu0 0.0
        %1087 = vmatpush1.xpose.msra.mxu0 %v1054
        %1088 = vmatprep.subr.mxu0 0.0
        %1089 = vmatpush2.xpose.msra.mxu0 0.0
        %1090 = vmatprep.subr.mxu0 0.0
        %1091 = vmatpush2.xpose.msra.mxu0 0.0
        %1092 = vmatprep.subr.mxu0 0.0
        %1093 = vmatpush2.xpose.msra.mxu0 0.0
        %1094 = vmatprep.subr.mxu0 0.0
        %1095 = vmatpush2.xpose.msra.mxu0 0.0
        %1096 = vmatprep.subr.mxu0 0.0
        %1097 = vmatpush2.xpose.msra.mxu0 0.0
        %1098 = vmatprep.subr.mxu0 0.0
        %1099 = vmatpush2.xpose.msra.mxu0 0.0
        %1100 = vmatprep.subr.mxu0 0.0
        %1101 = vmatpush2.xpose.msra.mxu0 0.0
        %1102 = vmatprep.subr.mxu0 0.0
        %1103 = vmatpush2.xpose.msra.mxu0 0.0
        %1104 = vmatprep.subr.mxu0 0.0
        %1105 = vmatpush2.xpose.msra.mxu0 0.0
        %1106 = vmatprep.subr.mxu0 0.0
        %1107 = vmatpush2.xpose.msra.mxu0 0.0
        %1108 = vmatprep.subr.mxu0 0.0
        %1109 = vmatpush2.xpose.msra.mxu0 0.0
        %1110 = vmatprep.subr.mxu0 0.0
        %1111 = vmatpush2.xpose.msra.mxu0 0.0
        %1112 = vmatprep.subr.mxu0 0.0
        %1113 = vmatpush2.xpose.msra.mxu0 0.0
        %1114 = vmatprep.subr.mxu0 0.0
        %1115 = vmatpush2.xpose.msra.mxu0 0.0
        %1116 = vmatprep.subr.mxu0 0.0
        %1117 = vmatpush2.xpose.msra.mxu0 0.0
        %1118 = vmatprep.subr.mxu0 0.0
        %1119 = vmatpush2.xpose.msra.mxu0 0.0
        %1120 = vmatprep.mubr.f32.mxu0 0.0
        %1121 = vmatmul.mubr.f32.gmra.mxu0 %v958
        %v1122 = vpop.f32.mrf.mxu0
        %v1123 = vadd.f32 0.0, %v1122
        %v1124 = vpop.f32.mrf.mxu0
        %1125 = vmatprep.mubr.f32.mxu0 0.0
        %1126 = vmatmul.mubr.f32.gmra.mxu0 %v961
        %v1127 = vpop.f32.mrf.mxu0
        %v1128 = vadd.f32 0.0, %v1127
        %v1129 = vpop.f32.mrf.mxu0
        %1130 = vmatprep.mubr.f32.mxu0 0.0
        %1131 = vmatmul.mubr.f32.gmra.mxu0 %v964
        %v1132 = vpop.f32.mrf.mxu0
        %v1133 = vadd.f32 0.0, %v1132
        %v1134 = vpop.f32.mrf.mxu0
        %1135 = vmatprep.mubr.f32.mxu0 0.0
        %1136 = vmatmul.mubr.f32.gmra.mxu0 %v967
        %v1137 = vpop.f32.mrf.mxu0
        %v1138 = vadd.f32 0.0, %v1137
        %v1139 = vpop.f32.mrf.mxu0
        %1140 = vmatprep.mubr.f32.mxu0 0.0
        %1141 = vmatmul.mubr.f32.gmra.mxu0 %v970
        %v1142 = vpop.f32.mrf.mxu0
        %v1143 = vadd.f32 0.0, %v1142
        %v1144 = vpop.f32.mrf.mxu0
        %1145 = vmatprep.mubr.f32.mxu0 0.0
        %1146 = vmatmul.mubr.f32.gmra.mxu0 %v973
        %v1147 = vpop.f32.mrf.mxu0
        %v1148 = vadd.f32 0.0, %v1147
        %v1149 = vpop.f32.mrf.mxu0
        %1150 = vmatprep.mubr.f32.mxu0 0.0
        %1151 = vmatmul.mubr.f32.gmra.mxu0 %v976
        %v1152 = vpop.f32.mrf.mxu0
        %v1153 = vadd.f32 0.0, %v1152
        %v1154 = vpop.f32.mrf.mxu0
        %1155 = vmatprep.mubr.f32.mxu0 0.0
        %1156 = vmatmul.mubr.f32.gmra.mxu0 %v979
        %v1157 = vpop.f32.mrf.mxu0
        %v1158 = vadd.f32 0.0, %v1157
        %v1159 = vpop.f32.mrf.mxu0
        %1160 = vmatprep.mubr.f32.mxu0 0.0
        %1161 = vmatmul.mubr.f32.gmra.mxu0 %v982
        %v1162 = vpop.f32.mrf.mxu0
        %v1163 = vadd.f32 0.0, %v1162
        %v1164 = vpop.f32.mrf.mxu0
        %1165 = vmatprep.mubr.f32.mxu0 0.0
        %1166 = vmatmul.mubr.f32.gmra.mxu0 %v985
        %v1167 = vpop.f32.mrf.mxu0
        %v1168 = vadd.f32 0.0, %v1167
        %v1169 = vpop.f32.mrf.mxu0
        %1170 = vmatprep.mubr.f32.mxu0 0.0
        %1171 = vmatmul.mubr.f32.gmra.mxu0 %v988
        %v1172 = vpop.f32.mrf.mxu0
        %v1173 = vadd.f32 0.0, %v1172
        %v1174 = vpop.f32.mrf.mxu0
        %1175 = vmatprep.mubr.f32.mxu0 0.0
        %1176 = vmatmul.mubr.f32.gmra.mxu0 %v991
        %v1177 = vpop.f32.mrf.mxu0
        %v1178 = vadd.f32 0.0, %v1177
        %v1179 = vpop.f32.mrf.mxu0
        %1180 = vmatprep.mubr.f32.mxu0 0.0
        %1181 = vmatmul.mubr.f32.gmra.mxu0 %v994
        %v1182 = vpop.f32.mrf.mxu0
        %v1183 = vadd.f32 0.0, %v1182
        %v1184 = vpop.f32.mrf.mxu0
        %1185 = vmatprep.mubr.f32.mxu0 0.0
        %1186 = vmatmul.mubr.f32.gmra.mxu0 %v997
        %v1187 = vpop.f32.mrf.mxu0
        %v1188 = vadd.f32 0.0, %v1187
        %v1189 = vpop.f32.mrf.mxu0
        %1190 = vmatprep.mubr.f32.mxu0 0.0
        %1191 = vmatmul.mubr.f32.gmra.mxu0 %v1000
        %v1192 = vpop.f32.mrf.mxu0
        %v1193 = vadd.f32 0.0, %v1192
        %v1194 = vpop.f32.mrf.mxu0
        %1195 = vmatprep.mubr.f32.mxu0 0.0
        %1196 = vmatmul.mubr.f32.gmra.mxu0 %v1003
        %v1197 = vpop.f32.mrf.mxu0
        %v1198 = vadd.f32 0.0, %v1197
        %v1199 = vpop.f32.mrf.mxu0
        %1200 = vmatprep.mubr.f32.mxu0 0.0
        %1201 = vmatmul.mubr.f32.gmra.mxu0 %v1006
        %v1202 = vpop.f32.mrf.mxu0
        %v1203 = vadd.f32 0.0, %v1202
        %v1204 = vpop.f32.mrf.mxu0
        %1205 = vmatprep.mubr.f32.mxu0 0.0
        %1206 = vmatmul.mubr.f32.gmra.mxu0 %v1009
        %v1207 = vpop.f32.mrf.mxu0
        %v1208 = vadd.f32 0.0, %v1207
        %v1209 = vpop.f32.mrf.mxu0
        %1210 = vmatprep.mubr.f32.mxu0 0.0
        %1211 = vmatmul.mubr.f32.gmra.mxu0 %v1012
        %v1212 = vpop.f32.mrf.mxu0
        %v1213 = vadd.f32 0.0, %v1212
        %v1214 = vpop.f32.mrf.mxu0
        %1215 = vmatprep.mubr.f32.mxu0 0.0
        %1216 = vmatmul.mubr.f32.gmra.mxu0 %v1015
        %v1217 = vpop.f32.mrf.mxu0
        %v1218 = vadd.f32 0.0, %v1217
        %v1219 = vpop.f32.mrf.mxu0
        %1220 = vmatprep.mubr.f32.mxu0 0.0
        %1221 = vmatmul.mubr.f32.gmra.mxu0 %v1018
        %v1222 = vpop.f32.mrf.mxu0
        %v1223 = vadd.f32 0.0, %v1222
        %v1224 = vpop.f32.mrf.mxu0
        %1225 = vmatprep.mubr.f32.mxu0 0.0
        %1226 = vmatmul.mubr.f32.gmra.mxu0 %v1021
        %v1227 = vpop.f32.mrf.mxu0
        %v1228 = vadd.f32 0.0, %v1227
        %v1229 = vpop.f32.mrf.mxu0
        %1230 = vmatprep.mubr.f32.mxu0 0.0
        %1231 = vmatmul.mubr.f32.gmra.mxu0 %v1024
        %v1232 = vpop.f32.mrf.mxu0
        %v1233 = vadd.f32 0.0, %v1232
        %v1234 = vpop.f32.mrf.mxu0
        %1235 = vmatprep.mubr.f32.mxu0 0.0
        %1236 = vmatmul.mubr.f32.gmra.mxu0 %v1027
        %v1237 = vpop.f32.mrf.mxu0
        %v1238 = vadd.f32 0.0, %v1237
        %v1239 = vpop.f32.mrf.mxu0
        %1240 = vmatprep.mubr.f32.mxu0 0.0
        %1241 = vmatmul.mubr.f32.gmra.mxu0 %v1030
        %v1242 = vpop.f32.mrf.mxu0
        %v1243 = vadd.f32 0.0, %v1242
        %v1244 = vpop.f32.mrf.mxu0
        %1245 = vmatprep.mubr.f32.mxu0 0.0
        %1246 = vmatmul.mubr.f32.gmra.mxu0 %v1033
        %v1247 = vpop.f32.mrf.mxu0
        %v1248 = vadd.f32 0.0, %v1247
        %v1249 = vpop.f32.mrf.mxu0
        %1250 = vmatprep.mubr.f32.mxu0 0.0
        %1251 = vmatmul.mubr.f32.gmra.mxu0 %v1036
        %v1252 = vpop.f32.mrf.mxu0
        %v1253 = vadd.f32 0.0, %v1252
        %v1254 = vpop.f32.mrf.mxu0
        %1255 = vmatprep.mubr.f32.mxu0 0.0
        %1256 = vmatmul.mubr.f32.gmra.mxu0 %v1039
        %v1257 = vpop.f32.mrf.mxu0
        %v1258 = vadd.f32 0.0, %v1257
        %v1259 = vpop.f32.mrf.mxu0
        %1260 = vmatprep.mubr.f32.mxu0 0.0
        %1261 = vmatmul.mubr.f32.gmra.mxu0 %v1042
        %v1262 = vpop.f32.mrf.mxu0
        %v1263 = vadd.f32 0.0, %v1262
        %v1264 = vpop.f32.mrf.mxu0
        %1265 = vmatprep.mubr.f32.mxu0 0.0
        %1266 = vmatmul.mubr.f32.gmra.mxu0 %v1045
        %v1267 = vpop.f32.mrf.mxu0
        %v1268 = vadd.f32 0.0, %v1267
        %v1269 = vpop.f32.mrf.mxu0
        %1270 = vmatprep.mubr.f32.mxu0 0.0
        %1271 = vmatmul.mubr.f32.gmra.mxu0 %v1048
        %v1272 = vpop.f32.mrf.mxu0
        %v1273 = vadd.f32 0.0, %v1272
        %v1274 = vpop.f32.mrf.mxu0
        %1275 = vmatprep.mubr.f32.mxu0 0.0
        %1276 = vmatmul.mubr.f32.gmra.mxu0 %v1051
        %v1277 = vpop.f32.mrf.mxu0
        %v1278 = vadd.f32 0.0, %v1277
        %v1279 = vpop.f32.mrf.mxu0
        %1280 = vdwg.mxu0
        %1281 = vrot.lane.b32.xlu0 %v956, 120
        %v1282 = vpop.permute.xlu0 %1281
        %v1283 = vsel %vm407, %v1282, 0
        %1285 = vmatprep.subr.mxu0 0.0
        %1286 = vmatpush1.xpose.msra.mxu0 0.0
        %1287 = vmatprep.subr.mxu0 0.0
        %1288 = vmatpush1.xpose.msra.mxu0 0.0
        %1289 = vmatprep.subr.mxu0 0.0
        %1290 = vmatpush1.xpose.msra.mxu0 0.0
        %1291 = vmatprep.subr.mxu0 0.0
        %1292 = vmatpush1.xpose.msra.mxu0 0.0
        %1293 = vmatprep.subr.mxu0 0.0
        %1294 = vmatpush1.xpose.msra.mxu0 0.0
        %1295 = vmatprep.subr.mxu0 0.0
        %1296 = vmatpush1.xpose.msra.mxu0 0.0
        %1297 = vmatprep.subr.mxu0 0.0
        %1298 = vmatpush1.xpose.msra.mxu0 0.0
        %1299 = vmatprep.subr.mxu0 0.0
        %1300 = vmatpush1.xpose.msra.mxu0 0.0
        %1301 = vmatprep.subr.mxu0 0.0
        %1302 = vmatpush1.xpose.msra.mxu0 0.0
        %1303 = vmatprep.subr.mxu0 0.0
        %1304 = vmatpush1.xpose.msra.mxu0 0.0
        %1305 = vmatprep.subr.mxu0 0.0
        %1306 = vmatpush1.xpose.msra.mxu0 0.0
        %1307 = vmatprep.subr.mxu0 0.0
        %1308 = vmatpush1.xpose.msra.mxu0 0.0
        %1309 = vmatprep.subr.mxu0 0.0
        %1310 = vmatpush1.xpose.msra.mxu0 0.0
        %1311 = vmatprep.subr.mxu0 0.0
        %1312 = vmatpush1.xpose.msra.mxu0 0.0
        %1313 = vmatprep.subr.mxu0 0.0
        %1314 = vmatpush1.xpose.msra.mxu0 0.0
        %1315 = vmatprep.subr.mxu0 0.0
        %1316 = vmatpush1.xpose.msra.mxu0 %v1283
        %1317 = vmatprep.subr.mxu0 0.0
        %1318 = vmatpush2.xpose.msra.mxu0 0.0
        %1319 = vmatprep.subr.mxu0 0.0
        %1320 = vmatpush2.xpose.msra.mxu0 0.0
        %1321 = vmatprep.subr.mxu0 0.0
        %1322 = vmatpush2.xpose.msra.mxu0 0.0
        %1323 = vmatprep.subr.mxu0 0.0
        %1324 = vmatpush2.xpose.msra.mxu0 0.0
        %1325 = vmatprep.subr.mxu0 0.0
        %1326 = vmatpush2.xpose.msra.mxu0 0.0
        %1327 = vmatprep.subr.mxu0 0.0
        %1328 = vmatpush2.xpose.msra.mxu0 0.0
        %1329 = vmatprep.subr.mxu0 0.0
        %1330 = vmatpush2.xpose.msra.mxu0 0.0
        %1331 = vmatprep.subr.mxu0 0.0
        %1332 = vmatpush2.xpose.msra.mxu0 0.0
        %1333 = vmatprep.subr.mxu0 0.0
        %1334 = vmatpush2.xpose.msra.mxu0 0.0
        %1335 = vmatprep.subr.mxu0 0.0
        %1336 = vmatpush2.xpose.msra.mxu0 0.0
        %1337 = vmatprep.subr.mxu0 0.0
        %1338 = vmatpush2.xpose.msra.mxu0 0.0
        %1339 = vmatprep.subr.mxu0 0.0
        %1340 = vmatpush2.xpose.msra.mxu0 0.0
        %1341 = vmatprep.subr.mxu0 0.0
        %1342 = vmatpush2.xpose.msra.mxu0 0.0
        %1343 = vmatprep.subr.mxu0 0.0
        %1344 = vmatpush2.xpose.msra.mxu0 0.0
        %1345 = vmatprep.subr.mxu0 0.0
        %1346 = vmatpush2.xpose.msra.mxu0 0.0
        %1347 = vmatprep.subr.mxu0 0.0
        %1348 = vmatpush2.xpose.msra.mxu0 0.0
        %1349 = vmatprep.mubr.f32.mxu0 0.0
        %1350 = vmatmul.mubr.f32.gmra.mxu0 %v958
        %v1351 = vpop.f32.mrf.mxu0
        %v1352 = vadd.f32 0.0, %v1351
        %v1353 = vpop.f32.mrf.mxu0
        %1354 = vmatprep.mubr.f32.mxu0 0.0
        %1355 = vmatmul.mubr.f32.gmra.mxu0 %v961
        %v1356 = vpop.f32.mrf.mxu0
        %v1357 = vadd.f32 0.0, %v1356
        %v1358 = vpop.f32.mrf.mxu0
        %1359 = vmatprep.mubr.f32.mxu0 0.0
        %1360 = vmatmul.mubr.f32.gmra.mxu0 %v964
        %v1361 = vpop.f32.mrf.mxu0
        %v1362 = vadd.f32 0.0, %v1361
        %v1363 = vpop.f32.mrf.mxu0
        %1364 = vmatprep.mubr.f32.mxu0 0.0
        %1365 = vmatmul.mubr.f32.gmra.mxu0 %v967
        %v1366 = vpop.f32.mrf.mxu0
        %v1367 = vadd.f32 0.0, %v1366
        %v1368 = vpop.f32.mrf.mxu0
        %1369 = vmatprep.mubr.f32.mxu0 0.0
        %1370 = vmatmul.mubr.f32.gmra.mxu0 %v970
        %v1371 = vpop.f32.mrf.mxu0
        %v1372 = vadd.f32 0.0, %v1371
        %v1373 = vpop.f32.mrf.mxu0
        %1374 = vmatprep.mubr.f32.mxu0 0.0
        %1375 = vmatmul.mubr.f32.gmra.mxu0 %v973
        %v1376 = vpop.f32.mrf.mxu0
        %v1377 = vadd.f32 0.0, %v1376
        %v1378 = vpop.f32.mrf.mxu0
        %1379 = vmatprep.mubr.f32.mxu0 0.0
        %1380 = vmatmul.mubr.f32.gmra.mxu0 %v976
        %v1381 = vpop.f32.mrf.mxu0
        %v1382 = vadd.f32 0.0, %v1381
        %v1383 = vpop.f32.mrf.mxu0
        %1384 = vmatprep.mubr.f32.mxu0 0.0
        %1385 = vmatmul.mubr.f32.gmra.mxu0 %v979
        %v1386 = vpop.f32.mrf.mxu0
        %v1387 = vadd.f32 0.0, %v1386
        %v1388 = vpop.f32.mrf.mxu0
        %1389 = vmatprep.mubr.f32.mxu0 0.0
        %1390 = vmatmul.mubr.f32.gmra.mxu0 %v982
        %v1391 = vpop.f32.mrf.mxu0
        %v1392 = vadd.f32 0.0, %v1391
        %v1393 = vpop.f32.mrf.mxu0
        %1394 = vmatprep.mubr.f32.mxu0 0.0
        %1395 = vmatmul.mubr.f32.gmra.mxu0 %v985
        %v1396 = vpop.f32.mrf.mxu0
        %v1397 = vadd.f32 0.0, %v1396
        %v1398 = vpop.f32.mrf.mxu0
        %1399 = vmatprep.mubr.f32.mxu0 0.0
        %1400 = vmatmul.mubr.f32.gmra.mxu0 %v988
        %v1401 = vpop.f32.mrf.mxu0
        %v1402 = vadd.f32 0.0, %v1401
        %v1403 = vpop.f32.mrf.mxu0
        %1404 = vmatprep.mubr.f32.mxu0 0.0
        %1405 = vmatmul.mubr.f32.gmra.mxu0 %v991
        %v1406 = vpop.f32.mrf.mxu0
        %v1407 = vadd.f32 0.0, %v1406
        %v1408 = vpop.f32.mrf.mxu0
        %1409 = vmatprep.mubr.f32.mxu0 0.0
        %1410 = vmatmul.mubr.f32.gmra.mxu0 %v994
        %v1411 = vpop.f32.mrf.mxu0
        %v1412 = vadd.f32 0.0, %v1411
        %v1413 = vpop.f32.mrf.mxu0
        %1414 = vmatprep.mubr.f32.mxu0 0.0
        %1415 = vmatmul.mubr.f32.gmra.mxu0 %v997
        %v1416 = vpop.f32.mrf.mxu0
        %v1417 = vadd.f32 0.0, %v1416
        %v1418 = vpop.f32.mrf.mxu0
        %1419 = vmatprep.mubr.f32.mxu0 0.0
        %1420 = vmatmul.mubr.f32.gmra.mxu0 %v1000
        %v1421 = vpop.f32.mrf.mxu0
        %v1422 = vadd.f32 0.0, %v1421
        %v1423 = vpop.f32.mrf.mxu0
        %1424 = vmatprep.mubr.f32.mxu0 0.0
        %1425 = vmatmul.mubr.f32.gmra.mxu0 %v1003
        %v1426 = vpop.f32.mrf.mxu0
        %v1427 = vadd.f32 0.0, %v1426
        %v1428 = vpop.f32.mrf.mxu0
        %1429 = vmatprep.mubr.f32.mxu0 0.0
        %1430 = vmatmul.mubr.f32.gmra.mxu0 %v1006
        %v1431 = vpop.f32.mrf.mxu0
        %v1432 = vadd.f32 0.0, %v1431
        %v1433 = vpop.f32.mrf.mxu0
        %1434 = vmatprep.mubr.f32.mxu0 0.0
        %1435 = vmatmul.mubr.f32.gmra.mxu0 %v1009
        %v1436 = vpop.f32.mrf.mxu0
        %v1437 = vadd.f32 0.0, %v1436
        %v1438 = vpop.f32.mrf.mxu0
        %1439 = vmatprep.mubr.f32.mxu0 0.0
        %1440 = vmatmul.mubr.f32.gmra.mxu0 %v1012
        %v1441 = vpop.f32.mrf.mxu0
        %v1442 = vadd.f32 0.0, %v1441
        %v1443 = vpop.f32.mrf.mxu0
        %1444 = vmatprep.mubr.f32.mxu0 0.0
        %1445 = vmatmul.mubr.f32.gmra.mxu0 %v1015
        %v1446 = vpop.f32.mrf.mxu0
        %v1447 = vadd.f32 0.0, %v1446
        %v1448 = vpop.f32.mrf.mxu0
        %1449 = vmatprep.mubr.f32.mxu0 0.0
        %1450 = vmatmul.mubr.f32.gmra.mxu0 %v1018
        %v1451 = vpop.f32.mrf.mxu0
        %v1452 = vadd.f32 0.0, %v1451
        %v1453 = vpop.f32.mrf.mxu0
        %1454 = vmatprep.mubr.f32.mxu0 0.0
        %1455 = vmatmul.mubr.f32.gmra.mxu0 %v1021
        %v1456 = vpop.f32.mrf.mxu0
        %v1457 = vadd.f32 0.0, %v1456
        %v1458 = vpop.f32.mrf.mxu0
        %1459 = vmatprep.mubr.f32.mxu0 0.0
        %1460 = vmatmul.mubr.f32.gmra.mxu0 %v1024
        %v1461 = vpop.f32.mrf.mxu0
        %v1462 = vadd.f32 0.0, %v1461
        %v1463 = vpop.f32.mrf.mxu0
        %1464 = vmatprep.mubr.f32.mxu0 0.0
        %1465 = vmatmul.mubr.f32.gmra.mxu0 %v1027
        %v1466 = vpop.f32.mrf.mxu0
        %v1467 = vadd.f32 0.0, %v1466
        %v1468 = vpop.f32.mrf.mxu0
        %1469 = vmatprep.mubr.f32.mxu0 0.0
        %1470 = vmatmul.mubr.f32.gmra.mxu0 %v1030
        %v1471 = vpop.f32.mrf.mxu0
        %v1472 = vadd.f32 0.0, %v1471
        %v1473 = vpop.f32.mrf.mxu0
        %1474 = vmatprep.mubr.f32.mxu0 0.0
        %1475 = vmatmul.mubr.f32.gmra.mxu0 %v1033
        %v1476 = vpop.f32.mrf.mxu0
        %v1477 = vadd.f32 0.0, %v1476
        %v1478 = vpop.f32.mrf.mxu0
        %1479 = vmatprep.mubr.f32.mxu0 0.0
        %1480 = vmatmul.mubr.f32.gmra.mxu0 %v1036
        %v1481 = vpop.f32.mrf.mxu0
        %v1482 = vadd.f32 0.0, %v1481
        %v1483 = vpop.f32.mrf.mxu0
        %1484 = vmatprep.mubr.f32.mxu0 0.0
        %1485 = vmatmul.mubr.f32.gmra.mxu0 %v1039
        %v1486 = vpop.f32.mrf.mxu0
        %v1487 = vadd.f32 0.0, %v1486
        %v1488 = vpop.f32.mrf.mxu0
        %1489 = vmatprep.mubr.f32.mxu0 0.0
        %1490 = vmatmul.mubr.f32.gmra.mxu0 %v1042
        %v1491 = vpop.f32.mrf.mxu0
        %v1492 = vadd.f32 0.0, %v1491
        %v1493 = vpop.f32.mrf.mxu0
        %1494 = vmatprep.mubr.f32.mxu0 0.0
        %1495 = vmatmul.mubr.f32.gmra.mxu0 %v1045
        %v1496 = vpop.f32.mrf.mxu0
        %v1497 = vadd.f32 0.0, %v1496
        %v1498 = vpop.f32.mrf.mxu0
        %1499 = vmatprep.mubr.f32.mxu0 0.0
        %1500 = vmatmul.mubr.f32.gmra.mxu0 %v1048
        %v1501 = vpop.f32.mrf.mxu0
        %v1502 = vadd.f32 0.0, %v1501
        %v1503 = vpop.f32.mrf.mxu0
        %1504 = vmatprep.mubr.f32.mxu0 0.0
        %1505 = vmatmul.mubr.f32.gmra.mxu0 %v1051
        %v1506 = vpop.f32.mrf.mxu0
        %v1507 = vadd.f32 0.0, %v1506
        %v1508 = vpop.f32.mrf.mxu0
        %1509 = vdwg.mxu0
        %v1510 = vlaneseq
        %v1511 = vand.u32 %v1510, 127
        %v1512 = vadd.s32 %v1511, 128
        %v1514 = vsel %vm407, %v924, 0
        %v1517 = vsel %vm407, %v925, 0
        %v1520 = vsel %vm407, %v926, 0
        %v1523 = vsel %vm407, %v927, 0
        %v1526 = vsel %vm407, %v928, 0
        %v1529 = vsel %vm407, %v929, 0
        %v1532 = vsel %vm407, %v930, 0
        %v1535 = vsel %vm407, %v931, 0
        %v1538 = vsel %vm407, %v932, 0
        %v1541 = vsel %vm407, %v933, 0
        %v1544 = vsel %vm407, %v934, 0
        %v1547 = vsel %vm407, %v935, 0
        %v1550 = vsel %vm407, %v936, 0
        %v1553 = vsel %vm407, %v937, 0
        %v1556 = vsel %vm407, %v938, 0
        %v1559 = vsel %vm407, %v939, 0
        %v1562 = vsel %vm407, %v940, 0
        %v1565 = vsel %vm407, %v941, 0
        %v1568 = vsel %vm407, %v942, 0
        %v1571 = vsel %vm407, %v943, 0
        %v1574 = vsel %vm407, %v944, 0
        %v1577 = vsel %vm407, %v945, 0
        %v1580 = vsel %vm407, %v946, 0
        %v1583 = vsel %vm407, %v947, 0
        %v1586 = vsel %vm407, %v948, 0
        %v1589 = vsel %vm407, %v949, 0
        %v1592 = vsel %vm407, %v950, 0
        %v1595 = vsel %vm407, %v951, 0
        %v1598 = vsel %vm407, %v952, 0
        %v1601 = vsel %vm407, %v953, 0
        %v1604 = vsel %vm407, %v954, 0
        %v1607 = vsel %vm407, %v955, 0
        %1609 = vmatprep.subr.mxu0 0.0
        %1610 = vmatpush1.xpose.msra.mxu0 %v1559
        %1611 = vmatprep.subr.mxu0 0.0
        %1612 = vmatpush1.xpose.msra.mxu0 %v1556
        %1613 = vmatprep.subr.mxu0 0.0
        %1614 = vmatpush1.xpose.msra.mxu0 %v1553
        %1615 = vmatprep.subr.mxu0 0.0
        %1616 = vmatpush1.xpose.msra.mxu0 %v1550
        %1617 = vmatprep.subr.mxu0 0.0
        %1618 = vmatpush1.xpose.msra.mxu0 %v1547
        %1619 = vmatprep.subr.mxu0 0.0
        %1620 = vmatpush1.xpose.msra.mxu0 %v1544
        %1621 = vmatprep.subr.mxu0 0.0
        %1622 = vmatpush1.xpose.msra.mxu0 %v1541
        %1623 = vmatprep.subr.mxu0 0.0
        %1624 = vmatpush1.xpose.msra.mxu0 %v1538
        %1625 = vmatprep.subr.mxu0 0.0
        %1626 = vmatpush1.xpose.msra.mxu0 %v1535
        %1627 = vmatprep.subr.mxu0 0.0
        %1628 = vmatpush1.xpose.msra.mxu0 %v1532
        %1629 = vmatprep.subr.mxu0 0.0
        %1630 = vmatpush1.xpose.msra.mxu0 %v1529
        %1631 = vmatprep.subr.mxu0 0.0
        %1632 = vmatpush1.xpose.msra.mxu0 %v1526
        %1633 = vmatprep.subr.mxu0 0.0
        %1634 = vmatpush1.xpose.msra.mxu0 %v1523
        %1635 = vmatprep.subr.mxu0 0.0
        %1636 = vmatpush1.xpose.msra.mxu0 %v1520
        %1637 = vmatprep.subr.mxu0 0.0
        %1638 = vmatpush1.xpose.msra.mxu0 %v1517
        %1639 = vmatprep.subr.mxu0 0.0
        %1640 = vmatpush1.xpose.msra.mxu0 %v1514
        %1641 = vmatprep.subr.mxu0 0.0
        %1642 = vmatpush2.xpose.msra.mxu0 %v1607
        %1643 = vmatprep.subr.mxu0 0.0
        %1644 = vmatpush2.xpose.msra.mxu0 %v1604
        %1645 = vmatprep.subr.mxu0 0.0
        %1646 = vmatpush2.xpose.msra.mxu0 %v1601
        %1647 = vmatprep.subr.mxu0 0.0
        %1648 = vmatpush2.xpose.msra.mxu0 %v1598
        %1649 = vmatprep.subr.mxu0 0.0
        %1650 = vmatpush2.xpose.msra.mxu0 %v1595
        %1651 = vmatprep.subr.mxu0 0.0
        %1652 = vmatpush2.xpose.msra.mxu0 %v1592
        %1653 = vmatprep.subr.mxu0 0.0
        %1654 = vmatpush2.xpose.msra.mxu0 %v1589
        %1655 = vmatprep.subr.mxu0 0.0
        %1656 = vmatpush2.xpose.msra.mxu0 %v1586
        %1657 = vmatprep.subr.mxu0 0.0
        %1658 = vmatpush2.xpose.msra.mxu0 %v1583
        %1659 = vmatprep.subr.mxu0 0.0
        %1660 = vmatpush2.xpose.msra.mxu0 %v1580
        %1661 = vmatprep.subr.mxu0 0.0
        %1662 = vmatpush2.xpose.msra.mxu0 %v1577
        %1663 = vmatprep.subr.mxu0 0.0
        %1664 = vmatpush2.xpose.msra.mxu0 %v1574
        %1665 = vmatprep.subr.mxu0 0.0
        %1666 = vmatpush2.xpose.msra.mxu0 %v1571
        %1667 = vmatprep.subr.mxu0 0.0
        %1668 = vmatpush2.xpose.msra.mxu0 %v1568
        %1669 = vmatprep.subr.mxu0 0.0
        %1670 = vmatpush2.xpose.msra.mxu0 %v1565
        %1671 = vmatprep.subr.mxu0 0.0
        %1672 = vmatpush2.xpose.msra.mxu0 %v1562
        %1673 = vmatprep.mubr.f32.mxu0 0.0
        %1674 = vmatmul.mubr.f32.gmra.mxu0 %v1514
        %v1675 = vpop.f32.mrf.mxu0
        %v1676 = vadd.f32 0.0, %v1675
        %v1677 = vpop.f32.mrf.mxu0
        %v1678 = vadd.f32 0.0, %v1677
        %1679 = vmatprep.mubr.f32.mxu0 0.0
        %1680 = vmatmul.mubr.f32.gmra.mxu0 %v1517
        %v1681 = vpop.f32.mrf.mxu0
        %v1682 = vadd.f32 0.0, %v1681
        %v1683 = vpop.f32.mrf.mxu0
        %v1684 = vadd.f32 0.0, %v1683
        %1685 = vmatprep.mubr.f32.mxu0 0.0
        %1686 = vmatmul.mubr.f32.gmra.mxu0 %v1520
        %v1687 = vpop.f32.mrf.mxu0
        %v1688 = vadd.f32 0.0, %v1687
        %v1689 = vpop.f32.mrf.mxu0
        %v1690 = vadd.f32 0.0, %v1689
        %1691 = vmatprep.mubr.f32.mxu0 0.0
        %1692 = vmatmul.mubr.f32.gmra.mxu0 %v1523
        %v1693 = vpop.f32.mrf.mxu0
        %v1694 = vadd.f32 0.0, %v1693
        %v1695 = vpop.f32.mrf.mxu0
        %v1696 = vadd.f32 0.0, %v1695
        %1697 = vmatprep.mubr.f32.mxu0 0.0
        %1698 = vmatmul.mubr.f32.gmra.mxu0 %v1526
        %v1699 = vpop.f32.mrf.mxu0
        %v1700 = vadd.f32 0.0, %v1699
        %v1701 = vpop.f32.mrf.mxu0
        %v1702 = vadd.f32 0.0, %v1701
        %1703 = vmatprep.mubr.f32.mxu0 0.0
        %1704 = vmatmul.mubr.f32.gmra.mxu0 %v1529
        %v1705 = vpop.f32.mrf.mxu0
        %v1706 = vadd.f32 0.0, %v1705
        %v1707 = vpop.f32.mrf.mxu0
        %v1708 = vadd.f32 0.0, %v1707
        %1709 = vmatprep.mubr.f32.mxu0 0.0
        %1710 = vmatmul.mubr.f32.gmra.mxu0 %v1532
        %v1711 = vpop.f32.mrf.mxu0
        %v1712 = vadd.f32 0.0, %v1711
        %v1713 = vpop.f32.mrf.mxu0
        %v1714 = vadd.f32 0.0, %v1713
        %1715 = vmatprep.mubr.f32.mxu0 0.0
        %1716 = vmatmul.mubr.f32.gmra.mxu0 %v1535
        %v1717 = vpop.f32.mrf.mxu0
        %v1718 = vadd.f32 0.0, %v1717
        %v1719 = vpop.f32.mrf.mxu0
        %v1720 = vadd.f32 0.0, %v1719
        %1721 = vmatprep.mubr.f32.mxu0 0.0
        %1722 = vmatmul.mubr.f32.gmra.mxu0 %v1538
        %v1723 = vpop.f32.mrf.mxu0
        %v1724 = vadd.f32 0.0, %v1723
        %v1725 = vpop.f32.mrf.mxu0
        %v1726 = vadd.f32 0.0, %v1725
        %1727 = vmatprep.mubr.f32.mxu0 0.0
        %1728 = vmatmul.mubr.f32.gmra.mxu0 %v1541
        %v1729 = vpop.f32.mrf.mxu0
        %v1730 = vadd.f32 0.0, %v1729
        %v1731 = vpop.f32.mrf.mxu0
        %v1732 = vadd.f32 0.0, %v1731
        %1733 = vmatprep.mubr.f32.mxu0 0.0
        %1734 = vmatmul.mubr.f32.gmra.mxu0 %v1544
        %v1735 = vpop.f32.mrf.mxu0
        %v1736 = vadd.f32 0.0, %v1735
        %v1737 = vpop.f32.mrf.mxu0
        %v1738 = vadd.f32 0.0, %v1737
        %1739 = vmatprep.mubr.f32.mxu0 0.0
        %1740 = vmatmul.mubr.f32.gmra.mxu0 %v1547
        %v1741 = vpop.f32.mrf.mxu0
        %v1742 = vadd.f32 0.0, %v1741
        %v1743 = vpop.f32.mrf.mxu0
        %v1744 = vadd.f32 0.0, %v1743
        %1745 = vmatprep.mubr.f32.mxu0 0.0
        %1746 = vmatmul.mubr.f32.gmra.mxu0 %v1550
        %v1747 = vpop.f32.mrf.mxu0
        %v1748 = vadd.f32 0.0, %v1747
        %v1749 = vpop.f32.mrf.mxu0
        %v1750 = vadd.f32 0.0, %v1749
        %1751 = vmatprep.mubr.f32.mxu0 0.0
        %1752 = vmatmul.mubr.f32.gmra.mxu0 %v1553
        %v1753 = vpop.f32.mrf.mxu0
        %v1754 = vadd.f32 0.0, %v1753
        %v1755 = vpop.f32.mrf.mxu0
        %v1756 = vadd.f32 0.0, %v1755
        %1757 = vmatprep.mubr.f32.mxu0 0.0
        %1758 = vmatmul.mubr.f32.gmra.mxu0 %v1556
        %v1759 = vpop.f32.mrf.mxu0
        %v1760 = vadd.f32 0.0, %v1759
        %v1761 = vpop.f32.mrf.mxu0
        %v1762 = vadd.f32 0.0, %v1761
        %1763 = vmatprep.mubr.f32.mxu0 0.0
        %1764 = vmatmul.mubr.f32.gmra.mxu0 %v1559
        %v1765 = vpop.f32.mrf.mxu0
        %v1766 = vadd.f32 0.0, %v1765
        %v1767 = vpop.f32.mrf.mxu0
        %v1768 = vadd.f32 0.0, %v1767
        %1769 = vmatprep.mubr.f32.mxu0 0.0
        %1770 = vmatmul.mubr.f32.gmra.mxu0 %v1562
        %v1771 = vpop.f32.mrf.mxu0
        %v1772 = vadd.f32 0.0, %v1771
        %v1773 = vpop.f32.mrf.mxu0
        %v1774 = vadd.f32 0.0, %v1773
        %1775 = vmatprep.mubr.f32.mxu0 0.0
        %1776 = vmatmul.mubr.f32.gmra.mxu0 %v1565
        %v1777 = vpop.f32.mrf.mxu0
        %v1778 = vadd.f32 0.0, %v1777
        %v1779 = vpop.f32.mrf.mxu0
        %v1780 = vadd.f32 0.0, %v1779
        %1781 = vmatprep.mubr.f32.mxu0 0.0
        %1782 = vmatmul.mubr.f32.gmra.mxu0 %v1568
        %v1783 = vpop.f32.mrf.mxu0
        %v1784 = vadd.f32 0.0, %v1783
        %v1785 = vpop.f32.mrf.mxu0
        %v1786 = vadd.f32 0.0, %v1785
        %1787 = vmatprep.mubr.f32.mxu0 0.0
        %1788 = vmatmul.mubr.f32.gmra.mxu0 %v1571
        %v1789 = vpop.f32.mrf.mxu0
        %v1790 = vadd.f32 0.0, %v1789
        %v1791 = vpop.f32.mrf.mxu0
        %v1792 = vadd.f32 0.0, %v1791
        %1793 = vmatprep.mubr.f32.mxu0 0.0
        %1794 = vmatmul.mubr.f32.gmra.mxu0 %v1574
        %v1795 = vpop.f32.mrf.mxu0
        %v1796 = vadd.f32 0.0, %v1795
        %v1797 = vpop.f32.mrf.mxu0
        %v1798 = vadd.f32 0.0, %v1797
        %1799 = vmatprep.mubr.f32.mxu0 0.0
        %1800 = vmatmul.mubr.f32.gmra.mxu0 %v1577
        %v1801 = vpop.f32.mrf.mxu0
        %v1802 = vadd.f32 0.0, %v1801
        %v1803 = vpop.f32.mrf.mxu0
        %v1804 = vadd.f32 0.0, %v1803
        %1805 = vmatprep.mubr.f32.mxu0 0.0
        %1806 = vmatmul.mubr.f32.gmra.mxu0 %v1580
        %v1807 = vpop.f32.mrf.mxu0
        %v1808 = vadd.f32 0.0, %v1807
        %v1809 = vpop.f32.mrf.mxu0
        %v1810 = vadd.f32 0.0, %v1809
        %1811 = vmatprep.mubr.f32.mxu0 0.0
        %1812 = vmatmul.mubr.f32.gmra.mxu0 %v1583
        %v1813 = vpop.f32.mrf.mxu0
        %v1814 = vadd.f32 0.0, %v1813
        %v1815 = vpop.f32.mrf.mxu0
        %v1816 = vadd.f32 0.0, %v1815
        %1817 = vmatprep.mubr.f32.mxu0 0.0
        %1818 = vmatmul.mubr.f32.gmra.mxu0 %v1586
        %v1819 = vpop.f32.mrf.mxu0
        %v1820 = vadd.f32 0.0, %v1819
        %v1821 = vpop.f32.mrf.mxu0
        %v1822 = vadd.f32 0.0, %v1821
        %1823 = vmatprep.mubr.f32.mxu0 0.0
        %1824 = vmatmul.mubr.f32.gmra.mxu0 %v1589
        %v1825 = vpop.f32.mrf.mxu0
        %v1826 = vadd.f32 0.0, %v1825
        %v1827 = vpop.f32.mrf.mxu0
        %v1828 = vadd.f32 0.0, %v1827
        %1829 = vmatprep.mubr.f32.mxu0 0.0
        %1830 = vmatmul.mubr.f32.gmra.mxu0 %v1592
        %v1831 = vpop.f32.mrf.mxu0
        %v1832 = vadd.f32 0.0, %v1831
        %v1833 = vpop.f32.mrf.mxu0
        %v1834 = vadd.f32 0.0, %v1833
        %1835 = vmatprep.mubr.f32.mxu0 0.0
        %1836 = vmatmul.mubr.f32.gmra.mxu0 %v1595
        %v1837 = vpop.f32.mrf.mxu0
        %v1838 = vadd.f32 0.0, %v1837
        %v1839 = vpop.f32.mrf.mxu0
        %v1840 = vadd.f32 0.0, %v1839
        %1841 = vmatprep.mubr.f32.mxu0 0.0
        %1842 = vmatmul.mubr.f32.gmra.mxu0 %v1598
        %v1843 = vpop.f32.mrf.mxu0
        %v1844 = vadd.f32 0.0, %v1843
        %v1845 = vpop.f32.mrf.mxu0
        %v1846 = vadd.f32 0.0, %v1845
        %1847 = vmatprep.mubr.f32.mxu0 0.0
        %1848 = vmatmul.mubr.f32.gmra.mxu0 %v1601
        %v1849 = vpop.f32.mrf.mxu0
        %v1850 = vadd.f32 0.0, %v1849
        %v1851 = vpop.f32.mrf.mxu0
        %v1852 = vadd.f32 0.0, %v1851
        %1853 = vmatprep.mubr.f32.mxu0 0.0
        %1854 = vmatmul.mubr.f32.gmra.mxu0 %v1604
        %v1855 = vpop.f32.mrf.mxu0
        %v1856 = vadd.f32 0.0, %v1855
        %v1857 = vpop.f32.mrf.mxu0
        %v1858 = vadd.f32 0.0, %v1857
        %1859 = vmatprep.mubr.f32.mxu0 0.0
        %1860 = vmatmul.mubr.f32.gmra.mxu0 %v1607
        %v1861 = vpop.f32.mrf.mxu0
        %v1862 = vadd.f32 0.0, %v1861
        %v1863 = vpop.f32.mrf.mxu0
        %v1864 = vadd.f32 0.0, %v1863
        %1865 = vdwg.mxu0
        %v1866 = vmax.f32 %v1676, %v1678
        %1867 = vmax.xlane.f32.xlu0 %v1866
        %v1868 = vpop.xlane.xlu0 %1867
        %v1869 = vmax.f32 %v1682, %v1684
        %1870 = vmax.xlane.f32.xlu0 %v1869
        %v1871 = vpop.xlane.xlu0 %1870
        %v1872 = vmax.f32 %v1688, %v1690
        %1873 = vmax.xlane.f32.xlu0 %v1872
        %v1874 = vpop.xlane.xlu0 %1873
        %v1875 = vmax.f32 %v1694, %v1696
        %1876 = vmax.xlane.f32.xlu0 %v1875
        %v1877 = vpop.xlane.xlu0 %1876
        %v1878 = vmax.f32 %v1700, %v1702
        %1879 = vmax.xlane.f32.xlu0 %v1878
        %v1880 = vpop.xlane.xlu0 %1879
        %v1881 = vmax.f32 %v1706, %v1708
        %1882 = vmax.xlane.f32.xlu0 %v1881
        %v1883 = vpop.xlane.xlu0 %1882
        %v1884 = vmax.f32 %v1712, %v1714
        %1885 = vmax.xlane.f32.xlu0 %v1884
        %v1886 = vpop.xlane.xlu0 %1885
        %v1887 = vmax.f32 %v1718, %v1720
        %1888 = vmax.xlane.f32.xlu0 %v1887
        %v1889 = vpop.xlane.xlu0 %1888
        %v1890 = vmax.f32 %v1724, %v1726
        %1891 = vmax.xlane.f32.xlu0 %v1890
        %v1892 = vpop.xlane.xlu0 %1891
        %v1893 = vmax.f32 %v1730, %v1732
        %1894 = vmax.xlane.f32.xlu0 %v1893
        %v1895 = vpop.xlane.xlu0 %1894
        %v1896 = vmax.f32 %v1736, %v1738
        %1897 = vmax.xlane.f32.xlu0 %v1896
        %v1898 = vpop.xlane.xlu0 %1897
        %v1899 = vmax.f32 %v1742, %v1744
        %1900 = vmax.xlane.f32.xlu0 %v1899
        %v1901 = vpop.xlane.xlu0 %1900
        %v1902 = vmax.f32 %v1748, %v1750
        %1903 = vmax.xlane.f32.xlu0 %v1902
        %v1904 = vpop.xlane.xlu0 %1903
        %v1905 = vmax.f32 %v1754, %v1756
        %1906 = vmax.xlane.f32.xlu0 %v1905
        %v1907 = vpop.xlane.xlu0 %1906
        %v1908 = vmax.f32 %v1760, %v1762
        %1909 = vmax.xlane.f32.xlu0 %v1908
        %v1910 = vpop.xlane.xlu0 %1909
        %v1911 = vmax.f32 %v1766, %v1768
        %1912 = vmax.xlane.f32.xlu0 %v1911
        %v1913 = vpop.xlane.xlu0 %1912
        %v1914 = vmax.f32 %v1772, %v1774
        %1915 = vmax.xlane.f32.xlu0 %v1914
        %v1916 = vpop.xlane.xlu0 %1915
        %v1917 = vmax.f32 %v1778, %v1780
        %1918 = vmax.xlane.f32.xlu0 %v1917
        %v1919 = vpop.xlane.xlu0 %1918
        %v1920 = vmax.f32 %v1784, %v1786
        %1921 = vmax.xlane.f32.xlu0 %v1920
        %v1922 = vpop.xlane.xlu0 %1921
        %v1923 = vmax.f32 %v1790, %v1792
        %1924 = vmax.xlane.f32.xlu0 %v1923
        %v1925 = vpop.xlane.xlu0 %1924
        %v1926 = vmax.f32 %v1796, %v1798
        %1927 = vmax.xlane.f32.xlu0 %v1926
        %v1928 = vpop.xlane.xlu0 %1927
        %v1929 = vmax.f32 %v1802, %v1804
        %1930 = vmax.xlane.f32.xlu0 %v1929
        %v1931 = vpop.xlane.xlu0 %1930
        %v1932 = vmax.f32 %v1808, %v1810
        %1933 = vmax.xlane.f32.xlu0 %v1932
        %v1934 = vpop.xlane.xlu0 %1933
        %v1935 = vmax.f32 %v1814, %v1816
        %1936 = vmax.xlane.f32.xlu0 %v1935
        %v1937 = vpop.xlane.xlu0 %1936
        %v1938 = vmax.f32 %v1820, %v1822
        %1939 = vmax.xlane.f32.xlu0 %v1938
        %v1940 = vpop.xlane.xlu0 %1939
        %v1941 = vmax.f32 %v1826, %v1828
        %1942 = vmax.xlane.f32.xlu0 %v1941
        %v1943 = vpop.xlane.xlu0 %1942
        %v1944 = vmax.f32 %v1832, %v1834
        %1945 = vmax.xlane.f32.xlu0 %v1944
        %v1946 = vpop.xlane.xlu0 %1945
        %v1947 = vmax.f32 %v1838, %v1840
        %1948 = vmax.xlane.f32.xlu0 %v1947
        %v1949 = vpop.xlane.xlu0 %1948
        %v1950 = vmax.f32 %v1844, %v1846
        %1951 = vmax.xlane.f32.xlu0 %v1950
        %v1952 = vpop.xlane.xlu0 %1951
        %v1953 = vmax.f32 %v1850, %v1852
        %1954 = vmax.xlane.f32.xlu0 %v1953
        %v1955 = vpop.xlane.xlu0 %1954
        %v1956 = vmax.f32 %v1856, %v1858
        %1957 = vmax.xlane.f32.xlu0 %v1956
        %v1958 = vpop.xlane.xlu0 %1957
        %v1959 = vmax.f32 %v1862, %v1864
        %1960 = vmax.xlane.f32.xlu0 %v1959
        %v1961 = vpop.xlane.xlu0 %1960
        %vm1962 = vcmp.eq.f32.partialorder %v1676, %v1868
        %vm1963 = vcmp.eq.f32.partialorder %v1678, %v1868
        %vm1964 = vcmp.eq.f32.partialorder %v1682, %v1871
        %vm1965 = vcmp.eq.f32.partialorder %v1684, %v1871
        %vm1966 = vcmp.eq.f32.partialorder %v1688, %v1874
        %vm1967 = vcmp.eq.f32.partialorder %v1690, %v1874
        %vm1968 = vcmp.eq.f32.partialorder %v1694, %v1877
        %vm1969 = vcmp.eq.f32.partialorder %v1696, %v1877
        %vm1970 = vcmp.eq.f32.partialorder %v1700, %v1880
        %vm1971 = vcmp.eq.f32.partialorder %v1702, %v1880
        %vm1972 = vcmp.eq.f32.partialorder %v1706, %v1883
        %vm1973 = vcmp.eq.f32.partialorder %v1708, %v1883
        %vm1974 = vcmp.eq.f32.partialorder %v1712, %v1886
        %vm1975 = vcmp.eq.f32.partialorder %v1714, %v1886
        %vm1976 = vcmp.eq.f32.partialorder %v1718, %v1889
        %vm1977 = vcmp.eq.f32.partialorder %v1720, %v1889
        %vm1978 = vcmp.eq.f32.partialorder %v1724, %v1892
        %vm1979 = vcmp.eq.f32.partialorder %v1726, %v1892
        %vm1980 = vcmp.eq.f32.partialorder %v1730, %v1895
        %vm1981 = vcmp.eq.f32.partialorder %v1732, %v1895
        %vm1982 = vcmp.eq.f32.partialorder %v1736, %v1898
        %vm1983 = vcmp.eq.f32.partialorder %v1738, %v1898
        %vm1984 = vcmp.eq.f32.partialorder %v1742, %v1901
        %vm1985 = vcmp.eq.f32.partialorder %v1744, %v1901
        %vm1986 = vcmp.eq.f32.partialorder %v1748, %v1904
        %vm1987 = vcmp.eq.f32.partialorder %v1750, %v1904
        %vm1988 = vcmp.eq.f32.partialorder %v1754, %v1907
        %vm1989 = vcmp.eq.f32.partialorder %v1756, %v1907
        %vm1990 = vcmp.eq.f32.partialorder %v1760, %v1910
        %vm1991 = vcmp.eq.f32.partialorder %v1762, %v1910
        %vm1992 = vcmp.eq.f32.partialorder %v1766, %v1913
        %vm1993 = vcmp.eq.f32.partialorder %v1768, %v1913
        %vm1994 = vcmp.eq.f32.partialorder %v1772, %v1916
        %vm1995 = vcmp.eq.f32.partialorder %v1774, %v1916
        %vm1996 = vcmp.eq.f32.partialorder %v1778, %v1919
        %vm1997 = vcmp.eq.f32.partialorder %v1780, %v1919
        %vm1998 = vcmp.eq.f32.partialorder %v1784, %v1922
        %vm1999 = vcmp.eq.f32.partialorder %v1786, %v1922
        %vm2000 = vcmp.eq.f32.partialorder %v1790, %v1925
        %vm2001 = vcmp.eq.f32.partialorder %v1792, %v1925
        %vm2002 = vcmp.eq.f32.partialorder %v1796, %v1928
        %vm2003 = vcmp.eq.f32.partialorder %v1798, %v1928
        %vm2004 = vcmp.eq.f32.partialorder %v1802, %v1931
        %vm2005 = vcmp.eq.f32.partialorder %v1804, %v1931
        %vm2006 = vcmp.eq.f32.partialorder %v1808, %v1934
        %vm2007 = vcmp.eq.f32.partialorder %v1810, %v1934
        %vm2008 = vcmp.eq.f32.partialorder %v1814, %v1937
        %vm2009 = vcmp.eq.f32.partialorder %v1816, %v1937
        %vm2010 = vcmp.eq.f32.partialorder %v1820, %v1940
        %vm2011 = vcmp.eq.f32.partialorder %v1822, %v1940
        %vm2012 = vcmp.eq.f32.partialorder %v1826, %v1943
        %vm2013 = vcmp.eq.f32.partialorder %v1828, %v1943
        %vm2014 = vcmp.eq.f32.partialorder %v1832, %v1946
        %vm2015 = vcmp.eq.f32.partialorder %v1834, %v1946
        %vm2016 = vcmp.eq.f32.partialorder %v1838, %v1949
        %vm2017 = vcmp.eq.f32.partialorder %v1840, %v1949
        %vm2018 = vcmp.eq.f32.partialorder %v1844, %v1952
        %vm2019 = vcmp.eq.f32.partialorder %v1846, %v1952
        %vm2020 = vcmp.eq.f32.partialorder %v1850, %v1955
        %vm2021 = vcmp.eq.f32.partialorder %v1852, %v1955
        %vm2022 = vcmp.eq.f32.partialorder %v1856, %v1958
        %vm2023 = vcmp.eq.f32.partialorder %v1858, %v1958
        %vm2024 = vcmp.eq.f32.partialorder %v1862, %v1961
        %vm2025 = vcmp.eq.f32.partialorder %v1864, %v1961
        %v2026 = vsel %vm1962, %v1511, 256
        %v2027 = vsel %vm1963, %v1512, 256
        %v2028 = vsel %vm1964, %v1511, 256
        %v2029 = vsel %vm1965, %v1512, 256
        %v2030 = vsel %vm1966, %v1511, 256
        %v2031 = vsel %vm1967, %v1512, 256
        %v2032 = vsel %vm1968, %v1511, 256
        %v2033 = vsel %vm1969, %v1512, 256
        %v2034 = vsel %vm1970, %v1511, 256
        %v2035 = vsel %vm1971, %v1512, 256
        %v2036 = vsel %vm1972, %v1511, 256
        %v2037 = vsel %vm1973, %v1512, 256
        %v2038 = vsel %vm1974, %v1511, 256
        %v2039 = vsel %vm1975, %v1512, 256
        %v2040 = vsel %vm1976, %v1511, 256
        %v2041 = vsel %vm1977, %v1512, 256
        %v2042 = vsel %vm1978, %v1511, 256
        %v2043 = vsel %vm1979, %v1512, 256
        %v2044 = vsel %vm1980, %v1511, 256
        %v2045 = vsel %vm1981, %v1512, 256
        %v2046 = vsel %vm1982, %v1511, 256
        %v2047 = vsel %vm1983, %v1512, 256
        %v2048 = vsel %vm1984, %v1511, 256
        %v2049 = vsel %vm1985, %v1512, 256
        %v2050 = vsel %vm1986, %v1511, 256
        %v2051 = vsel %vm1987, %v1512, 256
        %v2052 = vsel %vm1988, %v1511, 256
        %v2053 = vsel %vm1989, %v1512, 256
        %v2054 = vsel %vm1990, %v1511, 256
        %v2055 = vsel %vm1991, %v1512, 256
        %v2056 = vsel %vm1992, %v1511, 256
        %v2057 = vsel %vm1993, %v1512, 256
        %v2058 = vsel %vm1994, %v1511, 256
        %v2059 = vsel %vm1995, %v1512, 256
        %v2060 = vsel %vm1996, %v1511, 256
        %v2061 = vsel %vm1997, %v1512, 256
        %v2062 = vsel %vm1998, %v1511, 256
        %v2063 = vsel %vm1999, %v1512, 256
        %v2064 = vsel %vm2000, %v1511, 256
        %v2065 = vsel %vm2001, %v1512, 256
        %v2066 = vsel %vm2002, %v1511, 256
        %v2067 = vsel %vm2003, %v1512, 256
        %v2068 = vsel %vm2004, %v1511, 256
        %v2069 = vsel %vm2005, %v1512, 256
        %v2070 = vsel %vm2006, %v1511, 256
        %v2071 = vsel %vm2007, %v1512, 256
        %v2072 = vsel %vm2008, %v1511, 256
        %v2073 = vsel %vm2009, %v1512, 256
        %v2074 = vsel %vm2010, %v1511, 256
        %v2075 = vsel %vm2011, %v1512, 256
        %v2076 = vsel %vm2012, %v1511, 256
        %v2077 = vsel %vm2013, %v1512, 256
        %v2078 = vsel %vm2014, %v1511, 256
        %v2079 = vsel %vm2015, %v1512, 256
        %v2080 = vsel %vm2016, %v1511, 256
        %v2081 = vsel %vm2017, %v1512, 256
        %v2082 = vsel %vm2018, %v1511, 256
        %v2083 = vsel %vm2019, %v1512, 256
        %v2084 = vsel %vm2020, %v1511, 256
        %v2085 = vsel %vm2021, %v1512, 256
        %v2086 = vsel %vm2022, %v1511, 256
        %v2087 = vsel %vm2023, %v1512, 256
        %v2088 = vsel %vm2024, %v1511, 256
        %v2089 = vsel %vm2025, %v1512, 256
        %vm2090 = vcmp.lt.s32.totalorder %v2026, %v2027
        %v2091 = vsel %vm2090, %v2026, %v2027
        %v2092 = vand.u32 %v2091, 65535
        %v2093 = vshra.s32 %v2091, 16
        %v2094 = vcvt.s32.f32 %v2092
        %v2095 = vcvt.s32.f32 %v2093
        %2096 = vmin.xlane.f32.xlu0 %v2095
        %v2097 = vpop.xlane.xlu0 %2096
        %vm2098 = vcmp.eq.f32.partialorder %v2095, %v2097
        %v2099 = vsel %vm2098, %v2094, inf
        %2100 = vmin.xlane.f32.xlu0 %v2099
        %v2101 = vpop.xlane.xlu0 %2100
        %v2102 = vcvt.f32.s32 %v2101
        %v2103 = vcvt.f32.s32 %v2097
        %v2104 = vshll.u32 %v2103, 16
        %v2105 = vadd.s32 %v2104, %v2102
        %vm2106 = vcmp.lt.s32.totalorder %v2028, %v2029
        %v2107 = vsel %vm2106, %v2028, %v2029
        %v2108 = vand.u32 %v2107, 65535
        %v2109 = vshra.s32 %v2107, 16
        %v2110 = vcvt.s32.f32 %v2108
        %v2111 = vcvt.s32.f32 %v2109
        %2112 = vmin.xlane.f32.xlu0 %v2111
        %v2113 = vpop.xlane.xlu0 %2112
        %vm2114 = vcmp.eq.f32.partialorder %v2111, %v2113
        %v2115 = vsel %vm2114, %v2110, inf
        %2116 = vmin.xlane.f32.xlu0 %v2115
        %v2117 = vpop.xlane.xlu0 %2116
        %v2118 = vcvt.f32.s32 %v2117
        %v2119 = vcvt.f32.s32 %v2113
        %v2120 = vshll.u32 %v2119, 16
        %v2121 = vadd.s32 %v2120, %v2118
        %vm2122 = vcmp.lt.s32.totalorder %v2030, %v2031
        %v2123 = vsel %vm2122, %v2030, %v2031
        %v2124 = vand.u32 %v2123, 65535
        %v2125 = vshra.s32 %v2123, 16
        %v2126 = vcvt.s32.f32 %v2124
        %v2127 = vcvt.s32.f32 %v2125
        %2128 = vmin.xlane.f32.xlu0 %v2127
        %v2129 = vpop.xlane.xlu0 %2128
        %vm2130 = vcmp.eq.f32.partialorder %v2127, %v2129
        %v2131 = vsel %vm2130, %v2126, inf
        %2132 = vmin.xlane.f32.xlu0 %v2131
        %v2133 = vpop.xlane.xlu0 %2132
        %v2134 = vcvt.f32.s32 %v2133
        %v2135 = vcvt.f32.s32 %v2129
        %v2136 = vshll.u32 %v2135, 16
        %v2137 = vadd.s32 %v2136, %v2134
        %vm2138 = vcmp.lt.s32.totalorder %v2032, %v2033
        %v2139 = vsel %vm2138, %v2032, %v2033
        %v2140 = vand.u32 %v2139, 65535
        %v2141 = vshra.s32 %v2139, 16
        %v2142 = vcvt.s32.f32 %v2140
        %v2143 = vcvt.s32.f32 %v2141
        %2144 = vmin.xlane.f32.xlu0 %v2143
        %v2145 = vpop.xlane.xlu0 %2144
        %vm2146 = vcmp.eq.f32.partialorder %v2143, %v2145
        %v2147 = vsel %vm2146, %v2142, inf
        %2148 = vmin.xlane.f32.xlu0 %v2147
        %v2149 = vpop.xlane.xlu0 %2148
        %v2150 = vcvt.f32.s32 %v2149
        %v2151 = vcvt.f32.s32 %v2145
        %v2152 = vshll.u32 %v2151, 16
        %v2153 = vadd.s32 %v2152, %v2150
        %vm2154 = vcmp.lt.s32.totalorder %v2034, %v2035
        %v2155 = vsel %vm2154, %v2034, %v2035
        %v2156 = vand.u32 %v2155, 65535
        %v2157 = vshra.s32 %v2155, 16
        %v2158 = vcvt.s32.f32 %v2156
        %v2159 = vcvt.s32.f32 %v2157
        %2160 = vmin.xlane.f32.xlu0 %v2159
        %v2161 = vpop.xlane.xlu0 %2160
        %vm2162 = vcmp.eq.f32.partialorder %v2159, %v2161
        %v2163 = vsel %vm2162, %v2158, inf
        %2164 = vmin.xlane.f32.xlu0 %v2163
        %v2165 = vpop.xlane.xlu0 %2164
        %v2166 = vcvt.f32.s32 %v2165
        %v2167 = vcvt.f32.s32 %v2161
        %v2168 = vshll.u32 %v2167, 16
        %v2169 = vadd.s32 %v2168, %v2166
        %vm2170 = vcmp.lt.s32.totalorder %v2036, %v2037
        %v2171 = vsel %vm2170, %v2036, %v2037
        %v2172 = vand.u32 %v2171, 65535
        %v2173 = vshra.s32 %v2171, 16
        %v2174 = vcvt.s32.f32 %v2172
        %v2175 = vcvt.s32.f32 %v2173
        %2176 = vmin.xlane.f32.xlu0 %v2175
        %v2177 = vpop.xlane.xlu0 %2176
        %vm2178 = vcmp.eq.f32.partialorder %v2175, %v2177
        %v2179 = vsel %vm2178, %v2174, inf
        %2180 = vmin.xlane.f32.xlu0 %v2179
        %v2181 = vpop.xlane.xlu0 %2180
        %v2182 = vcvt.f32.s32 %v2181
        %v2183 = vcvt.f32.s32 %v2177
        %v2184 = vshll.u32 %v2183, 16
        %v2185 = vadd.s32 %v2184, %v2182
        %vm2186 = vcmp.lt.s32.totalorder %v2038, %v2039
        %v2187 = vsel %vm2186, %v2038, %v2039
        %v2188 = vand.u32 %v2187, 65535
        %v2189 = vshra.s32 %v2187, 16
        %v2190 = vcvt.s32.f32 %v2188
        %v2191 = vcvt.s32.f32 %v2189
        %2192 = vmin.xlane.f32.xlu0 %v2191
        %v2193 = vpop.xlane.xlu0 %2192
        %vm2194 = vcmp.eq.f32.partialorder %v2191, %v2193
        %v2195 = vsel %vm2194, %v2190, inf
        %2196 = vmin.xlane.f32.xlu0 %v2195
        %v2197 = vpop.xlane.xlu0 %2196
        %v2198 = vcvt.f32.s32 %v2197
        %v2199 = vcvt.f32.s32 %v2193
        %v2200 = vshll.u32 %v2199, 16
        %v2201 = vadd.s32 %v2200, %v2198
        %vm2202 = vcmp.lt.s32.totalorder %v2040, %v2041
        %v2203 = vsel %vm2202, %v2040, %v2041
        %v2204 = vand.u32 %v2203, 65535
        %v2205 = vshra.s32 %v2203, 16
        %v2206 = vcvt.s32.f32 %v2204
        %v2207 = vcvt.s32.f32 %v2205
        %2208 = vmin.xlane.f32.xlu0 %v2207
        %v2209 = vpop.xlane.xlu0 %2208
        %vm2210 = vcmp.eq.f32.partialorder %v2207, %v2209
        %v2211 = vsel %vm2210, %v2206, inf
        %2212 = vmin.xlane.f32.xlu0 %v2211
        %v2213 = vpop.xlane.xlu0 %2212
        %v2214 = vcvt.f32.s32 %v2213
        %v2215 = vcvt.f32.s32 %v2209
        %v2216 = vshll.u32 %v2215, 16
        %v2217 = vadd.s32 %v2216, %v2214
        %vm2218 = vcmp.lt.s32.totalorder %v2042, %v2043
        %v2219 = vsel %vm2218, %v2042, %v2043
        %v2220 = vand.u32 %v2219, 65535
        %v2221 = vshra.s32 %v2219, 16
        %v2222 = vcvt.s32.f32 %v2220
        %v2223 = vcvt.s32.f32 %v2221
        %2224 = vmin.xlane.f32.xlu0 %v2223
        %v2225 = vpop.xlane.xlu0 %2224
        %vm2226 = vcmp.eq.f32.partialorder %v2223, %v2225
        %v2227 = vsel %vm2226, %v2222, inf
        %2228 = vmin.xlane.f32.xlu0 %v2227
        %v2229 = vpop.xlane.xlu0 %2228
        %v2230 = vcvt.f32.s32 %v2229
        %v2231 = vcvt.f32.s32 %v2225
        %v2232 = vshll.u32 %v2231, 16
        %v2233 = vadd.s32 %v2232, %v2230
        %vm2234 = vcmp.lt.s32.totalorder %v2044, %v2045
        %v2235 = vsel %vm2234, %v2044, %v2045
        %v2236 = vand.u32 %v2235, 65535
        %v2237 = vshra.s32 %v2235, 16
        %v2238 = vcvt.s32.f32 %v2236
        %v2239 = vcvt.s32.f32 %v2237
        %2240 = vmin.xlane.f32.xlu0 %v2239
        %v2241 = vpop.xlane.xlu0 %2240
        %vm2242 = vcmp.eq.f32.partialorder %v2239, %v2241
        %v2243 = vsel %vm2242, %v2238, inf
        %2244 = vmin.xlane.f32.xlu0 %v2243
        %v2245 = vpop.xlane.xlu0 %2244
        %v2246 = vcvt.f32.s32 %v2245
        %v2247 = vcvt.f32.s32 %v2241
        %v2248 = vshll.u32 %v2247, 16
        %v2249 = vadd.s32 %v2248, %v2246
        %vm2250 = vcmp.lt.s32.totalorder %v2046, %v2047
        %v2251 = vsel %vm2250, %v2046, %v2047
        %v2252 = vand.u32 %v2251, 65535
        %v2253 = vshra.s32 %v2251, 16
        %v2254 = vcvt.s32.f32 %v2252
        %v2255 = vcvt.s32.f32 %v2253
        %2256 = vmin.xlane.f32.xlu0 %v2255
        %v2257 = vpop.xlane.xlu0 %2256
        %vm2258 = vcmp.eq.f32.partialorder %v2255, %v2257
        %v2259 = vsel %vm2258, %v2254, inf
        %2260 = vmin.xlane.f32.xlu0 %v2259
        %v2261 = vpop.xlane.xlu0 %2260
        %v2262 = vcvt.f32.s32 %v2261
        %v2263 = vcvt.f32.s32 %v2257
        %v2264 = vshll.u32 %v2263, 16
        %v2265 = vadd.s32 %v2264, %v2262
        %vm2266 = vcmp.lt.s32.totalorder %v2048, %v2049
        %v2267 = vsel %vm2266, %v2048, %v2049
        %v2268 = vand.u32 %v2267, 65535
        %v2269 = vshra.s32 %v2267, 16
        %v2270 = vcvt.s32.f32 %v2268
        %v2271 = vcvt.s32.f32 %v2269
        %2272 = vmin.xlane.f32.xlu0 %v2271
        %v2273 = vpop.xlane.xlu0 %2272
        %vm2274 = vcmp.eq.f32.partialorder %v2271, %v2273
        %v2275 = vsel %vm2274, %v2270, inf
        %2276 = vmin.xlane.f32.xlu0 %v2275
        %v2277 = vpop.xlane.xlu0 %2276
        %v2278 = vcvt.f32.s32 %v2277
        %v2279 = vcvt.f32.s32 %v2273
        %v2280 = vshll.u32 %v2279, 16
        %v2281 = vadd.s32 %v2280, %v2278
        %vm2282 = vcmp.lt.s32.totalorder %v2050, %v2051
        %v2283 = vsel %vm2282, %v2050, %v2051
        %v2284 = vand.u32 %v2283, 65535
        %v2285 = vshra.s32 %v2283, 16
        %v2286 = vcvt.s32.f32 %v2284
        %v2287 = vcvt.s32.f32 %v2285
        %2288 = vmin.xlane.f32.xlu0 %v2287
        %v2289 = vpop.xlane.xlu0 %2288
        %vm2290 = vcmp.eq.f32.partialorder %v2287, %v2289
        %v2291 = vsel %vm2290, %v2286, inf
        %2292 = vmin.xlane.f32.xlu0 %v2291
        %v2293 = vpop.xlane.xlu0 %2292
        %v2294 = vcvt.f32.s32 %v2293
        %v2295 = vcvt.f32.s32 %v2289
        %v2296 = vshll.u32 %v2295, 16
        %v2297 = vadd.s32 %v2296, %v2294
        %vm2298 = vcmp.lt.s32.totalorder %v2052, %v2053
        %v2299 = vsel %vm2298, %v2052, %v2053
        %v2300 = vand.u32 %v2299, 65535
        %v2301 = vshra.s32 %v2299, 16
        %v2302 = vcvt.s32.f32 %v2300
        %v2303 = vcvt.s32.f32 %v2301
        %2304 = vmin.xlane.f32.xlu0 %v2303
        %v2305 = vpop.xlane.xlu0 %2304
        %vm2306 = vcmp.eq.f32.partialorder %v2303, %v2305
        %v2307 = vsel %vm2306, %v2302, inf
        %2308 = vmin.xlane.f32.xlu0 %v2307
        %v2309 = vpop.xlane.xlu0 %2308
        %v2310 = vcvt.f32.s32 %v2309
        %v2311 = vcvt.f32.s32 %v2305
        %v2312 = vshll.u32 %v2311, 16
        %v2313 = vadd.s32 %v2312, %v2310
        %vm2314 = vcmp.lt.s32.totalorder %v2054, %v2055
        %v2315 = vsel %vm2314, %v2054, %v2055
        %v2316 = vand.u32 %v2315, 65535
        %v2317 = vshra.s32 %v2315, 16
        %v2318 = vcvt.s32.f32 %v2316
        %v2319 = vcvt.s32.f32 %v2317
        %2320 = vmin.xlane.f32.xlu0 %v2319
        %v2321 = vpop.xlane.xlu0 %2320
        %vm2322 = vcmp.eq.f32.partialorder %v2319, %v2321
        %v2323 = vsel %vm2322, %v2318, inf
        %2324 = vmin.xlane.f32.xlu0 %v2323
        %v2325 = vpop.xlane.xlu0 %2324
        %v2326 = vcvt.f32.s32 %v2325
        %v2327 = vcvt.f32.s32 %v2321
        %v2328 = vshll.u32 %v2327, 16
        %v2329 = vadd.s32 %v2328, %v2326
        %vm2330 = vcmp.lt.s32.totalorder %v2056, %v2057
        %v2331 = vsel %vm2330, %v2056, %v2057
        %v2332 = vand.u32 %v2331, 65535
        %v2333 = vshra.s32 %v2331, 16
        %v2334 = vcvt.s32.f32 %v2332
        %v2335 = vcvt.s32.f32 %v2333
        %2336 = vmin.xlane.f32.xlu0 %v2335
        %v2337 = vpop.xlane.xlu0 %2336
        %vm2338 = vcmp.eq.f32.partialorder %v2335, %v2337
        %v2339 = vsel %vm2338, %v2334, inf
        %2340 = vmin.xlane.f32.xlu0 %v2339
        %v2341 = vpop.xlane.xlu0 %2340
        %v2342 = vcvt.f32.s32 %v2341
        %v2343 = vcvt.f32.s32 %v2337
        %v2344 = vshll.u32 %v2343, 16
        %v2345 = vadd.s32 %v2344, %v2342
        %vm2346 = vcmp.lt.s32.totalorder %v2058, %v2059
        %v2347 = vsel %vm2346, %v2058, %v2059
        %v2348 = vand.u32 %v2347, 65535
        %v2349 = vshra.s32 %v2347, 16
        %v2350 = vcvt.s32.f32 %v2348
        %v2351 = vcvt.s32.f32 %v2349
        %2352 = vmin.xlane.f32.xlu0 %v2351
        %v2353 = vpop.xlane.xlu0 %2352
        %vm2354 = vcmp.eq.f32.partialorder %v2351, %v2353
        %v2355 = vsel %vm2354, %v2350, inf
        %2356 = vmin.xlane.f32.xlu0 %v2355
        %v2357 = vpop.xlane.xlu0 %2356
        %v2358 = vcvt.f32.s32 %v2357
        %v2359 = vcvt.f32.s32 %v2353
        %v2360 = vshll.u32 %v2359, 16
        %v2361 = vadd.s32 %v2360, %v2358
        %vm2362 = vcmp.lt.s32.totalorder %v2060, %v2061
        %v2363 = vsel %vm2362, %v2060, %v2061
        %v2364 = vand.u32 %v2363, 65535
        %v2365 = vshra.s32 %v2363, 16
        %v2366 = vcvt.s32.f32 %v2364
        %v2367 = vcvt.s32.f32 %v2365
        %2368 = vmin.xlane.f32.xlu0 %v2367
        %v2369 = vpop.xlane.xlu0 %2368
        %vm2370 = vcmp.eq.f32.partialorder %v2367, %v2369
        %v2371 = vsel %vm2370, %v2366, inf
        %2372 = vmin.xlane.f32.xlu0 %v2371
        %v2373 = vpop.xlane.xlu0 %2372
        %v2374 = vcvt.f32.s32 %v2373
        %v2375 = vcvt.f32.s32 %v2369
        %v2376 = vshll.u32 %v2375, 16
        %v2377 = vadd.s32 %v2376, %v2374
        %vm2378 = vcmp.lt.s32.totalorder %v2062, %v2063
        %v2379 = vsel %vm2378, %v2062, %v2063
        %v2380 = vand.u32 %v2379, 65535
        %v2381 = vshra.s32 %v2379, 16
        %v2382 = vcvt.s32.f32 %v2380
        %v2383 = vcvt.s32.f32 %v2381
        %2384 = vmin.xlane.f32.xlu0 %v2383
        %v2385 = vpop.xlane.xlu0 %2384
        %vm2386 = vcmp.eq.f32.partialorder %v2383, %v2385
        %v2387 = vsel %vm2386, %v2382, inf
        %2388 = vmin.xlane.f32.xlu0 %v2387
        %v2389 = vpop.xlane.xlu0 %2388
        %v2390 = vcvt.f32.s32 %v2389
        %v2391 = vcvt.f32.s32 %v2385
        %v2392 = vshll.u32 %v2391, 16
        %v2393 = vadd.s32 %v2392, %v2390
        %vm2394 = vcmp.lt.s32.totalorder %v2064, %v2065
        %v2395 = vsel %vm2394, %v2064, %v2065
        %v2396 = vand.u32 %v2395, 65535
        %v2397 = vshra.s32 %v2395, 16
        %v2398 = vcvt.s32.f32 %v2396
        %v2399 = vcvt.s32.f32 %v2397
        %2400 = vmin.xlane.f32.xlu0 %v2399
        %v2401 = vpop.xlane.xlu0 %2400
        %vm2402 = vcmp.eq.f32.partialorder %v2399, %v2401
        %v2403 = vsel %vm2402, %v2398, inf
        %2404 = vmin.xlane.f32.xlu0 %v2403
        %v2405 = vpop.xlane.xlu0 %2404
        %v2406 = vcvt.f32.s32 %v2405
        %v2407 = vcvt.f32.s32 %v2401
        %v2408 = vshll.u32 %v2407, 16
        %v2409 = vadd.s32 %v2408, %v2406
        %vm2410 = vcmp.lt.s32.totalorder %v2066, %v2067
        %v2411 = vsel %vm2410, %v2066, %v2067
        %v2412 = vand.u32 %v2411, 65535
        %v2413 = vshra.s32 %v2411, 16
        %v2414 = vcvt.s32.f32 %v2412
        %v2415 = vcvt.s32.f32 %v2413
        %2416 = vmin.xlane.f32.xlu0 %v2415
        %v2417 = vpop.xlane.xlu0 %2416
        %vm2418 = vcmp.eq.f32.partialorder %v2415, %v2417
        %v2419 = vsel %vm2418, %v2414, inf
        %2420 = vmin.xlane.f32.xlu0 %v2419
        %v2421 = vpop.xlane.xlu0 %2420
        %v2422 = vcvt.f32.s32 %v2421
        %v2423 = vcvt.f32.s32 %v2417
        %v2424 = vshll.u32 %v2423, 16
        %v2425 = vadd.s32 %v2424, %v2422
        %vm2426 = vcmp.lt.s32.totalorder %v2068, %v2069
        %v2427 = vsel %vm2426, %v2068, %v2069
        %v2428 = vand.u32 %v2427, 65535
        %v2429 = vshra.s32 %v2427, 16
        %v2430 = vcvt.s32.f32 %v2428
        %v2431 = vcvt.s32.f32 %v2429
        %2432 = vmin.xlane.f32.xlu0 %v2431
        %v2433 = vpop.xlane.xlu0 %2432
        %vm2434 = vcmp.eq.f32.partialorder %v2431, %v2433
        %v2435 = vsel %vm2434, %v2430, inf
        %2436 = vmin.xlane.f32.xlu0 %v2435
        %v2437 = vpop.xlane.xlu0 %2436
        %v2438 = vcvt.f32.s32 %v2437
        %v2439 = vcvt.f32.s32 %v2433
        %v2440 = vshll.u32 %v2439, 16
        %v2441 = vadd.s32 %v2440, %v2438
        %vm2442 = vcmp.lt.s32.totalorder %v2070, %v2071
        %v2443 = vsel %vm2442, %v2070, %v2071
        %v2444 = vand.u32 %v2443, 65535
        %v2445 = vshra.s32 %v2443, 16
        %v2446 = vcvt.s32.f32 %v2444
        %v2447 = vcvt.s32.f32 %v2445
        %2448 = vmin.xlane.f32.xlu0 %v2447
        %v2449 = vpop.xlane.xlu0 %2448
        %vm2450 = vcmp.eq.f32.partialorder %v2447, %v2449
        %v2451 = vsel %vm2450, %v2446, inf
        %2452 = vmin.xlane.f32.xlu0 %v2451
        %v2453 = vpop.xlane.xlu0 %2452
        %v2454 = vcvt.f32.s32 %v2453
        %v2455 = vcvt.f32.s32 %v2449
        %v2456 = vshll.u32 %v2455, 16
        %v2457 = vadd.s32 %v2456, %v2454
        %vm2458 = vcmp.lt.s32.totalorder %v2072, %v2073
        %v2459 = vsel %vm2458, %v2072, %v2073
        %v2460 = vand.u32 %v2459, 65535
        %v2461 = vshra.s32 %v2459, 16
        %v2462 = vcvt.s32.f32 %v2460
        %v2463 = vcvt.s32.f32 %v2461
        %2464 = vmin.xlane.f32.xlu0 %v2463
        %v2465 = vpop.xlane.xlu0 %2464
        %vm2466 = vcmp.eq.f32.partialorder %v2463, %v2465
        %v2467 = vsel %vm2466, %v2462, inf
        %2468 = vmin.xlane.f32.xlu0 %v2467
        %v2469 = vpop.xlane.xlu0 %2468
        %v2470 = vcvt.f32.s32 %v2469
        %v2471 = vcvt.f32.s32 %v2465
        %v2472 = vshll.u32 %v2471, 16
        %v2473 = vadd.s32 %v2472, %v2470
        %vm2474 = vcmp.lt.s32.totalorder %v2074, %v2075
        %v2475 = vsel %vm2474, %v2074, %v2075
        %v2476 = vand.u32 %v2475, 65535
        %v2477 = vshra.s32 %v2475, 16
        %v2478 = vcvt.s32.f32 %v2476
        %v2479 = vcvt.s32.f32 %v2477
        %2480 = vmin.xlane.f32.xlu0 %v2479
        %v2481 = vpop.xlane.xlu0 %2480
        %vm2482 = vcmp.eq.f32.partialorder %v2479, %v2481
        %v2483 = vsel %vm2482, %v2478, inf
        %2484 = vmin.xlane.f32.xlu0 %v2483
        %v2485 = vpop.xlane.xlu0 %2484
        %v2486 = vcvt.f32.s32 %v2485
        %v2487 = vcvt.f32.s32 %v2481
        %v2488 = vshll.u32 %v2487, 16
        %v2489 = vadd.s32 %v2488, %v2486
        %vm2490 = vcmp.lt.s32.totalorder %v2076, %v2077
        %v2491 = vsel %vm2490, %v2076, %v2077
        %v2492 = vand.u32 %v2491, 65535
        %v2493 = vshra.s32 %v2491, 16
        %v2494 = vcvt.s32.f32 %v2492
        %v2495 = vcvt.s32.f32 %v2493
        %2496 = vmin.xlane.f32.xlu0 %v2495
        %v2497 = vpop.xlane.xlu0 %2496
        %vm2498 = vcmp.eq.f32.partialorder %v2495, %v2497
        %v2499 = vsel %vm2498, %v2494, inf
        %2500 = vmin.xlane.f32.xlu0 %v2499
        %v2501 = vpop.xlane.xlu0 %2500
        %v2502 = vcvt.f32.s32 %v2501
        %v2503 = vcvt.f32.s32 %v2497
        %v2504 = vshll.u32 %v2503, 16
        %v2505 = vadd.s32 %v2504, %v2502
        %vm2506 = vcmp.lt.s32.totalorder %v2078, %v2079
        %v2507 = vsel %vm2506, %v2078, %v2079
        %v2508 = vand.u32 %v2507, 65535
        %v2509 = vshra.s32 %v2507, 16
        %v2510 = vcvt.s32.f32 %v2508
        %v2511 = vcvt.s32.f32 %v2509
        %2512 = vmin.xlane.f32.xlu0 %v2511
        %v2513 = vpop.xlane.xlu0 %2512
        %vm2514 = vcmp.eq.f32.partialorder %v2511, %v2513
        %v2515 = vsel %vm2514, %v2510, inf
        %2516 = vmin.xlane.f32.xlu0 %v2515
        %v2517 = vpop.xlane.xlu0 %2516
        %v2518 = vcvt.f32.s32 %v2517
        %v2519 = vcvt.f32.s32 %v2513
        %v2520 = vshll.u32 %v2519, 16
        %v2521 = vadd.s32 %v2520, %v2518
        %vm2522 = vcmp.lt.s32.totalorder %v2080, %v2081
        %v2523 = vsel %vm2522, %v2080, %v2081
        %v2524 = vand.u32 %v2523, 65535
        %v2525 = vshra.s32 %v2523, 16
        %v2526 = vcvt.s32.f32 %v2524
        %v2527 = vcvt.s32.f32 %v2525
        %2528 = vmin.xlane.f32.xlu0 %v2527
        %v2529 = vpop.xlane.xlu0 %2528
        %vm2530 = vcmp.eq.f32.partialorder %v2527, %v2529
        %v2531 = vsel %vm2530, %v2526, inf
        %2532 = vmin.xlane.f32.xlu0 %v2531
        %v2533 = vpop.xlane.xlu0 %2532
        %v2534 = vcvt.f32.s32 %v2533
        %v2535 = vcvt.f32.s32 %v2529
        %v2536 = vshll.u32 %v2535, 16
        %v2537 = vadd.s32 %v2536, %v2534
        %vm2538 = vcmp.lt.s32.totalorder %v2082, %v2083
        %v2539 = vsel %vm2538, %v2082, %v2083
        %v2540 = vand.u32 %v2539, 65535
        %v2541 = vshra.s32 %v2539, 16
        %v2542 = vcvt.s32.f32 %v2540
        %v2543 = vcvt.s32.f32 %v2541
        %2544 = vmin.xlane.f32.xlu0 %v2543
        %v2545 = vpop.xlane.xlu0 %2544
        %vm2546 = vcmp.eq.f32.partialorder %v2543, %v2545
        %v2547 = vsel %vm2546, %v2542, inf
        %2548 = vmin.xlane.f32.xlu0 %v2547
        %v2549 = vpop.xlane.xlu0 %2548
        %v2550 = vcvt.f32.s32 %v2549
        %v2551 = vcvt.f32.s32 %v2545
        %v2552 = vshll.u32 %v2551, 16
        %v2553 = vadd.s32 %v2552, %v2550
        %vm2554 = vcmp.lt.s32.totalorder %v2084, %v2085
        %v2555 = vsel %vm2554, %v2084, %v2085
        %v2556 = vand.u32 %v2555, 65535
        %v2557 = vshra.s32 %v2555, 16
        %v2558 = vcvt.s32.f32 %v2556
        %v2559 = vcvt.s32.f32 %v2557
        %2560 = vmin.xlane.f32.xlu0 %v2559
        %v2561 = vpop.xlane.xlu0 %2560
        %vm2562 = vcmp.eq.f32.partialorder %v2559, %v2561
        %v2563 = vsel %vm2562, %v2558, inf
        %2564 = vmin.xlane.f32.xlu0 %v2563
        %v2565 = vpop.xlane.xlu0 %2564
        %v2566 = vcvt.f32.s32 %v2565
        %v2567 = vcvt.f32.s32 %v2561
        %v2568 = vshll.u32 %v2567, 16
        %v2569 = vadd.s32 %v2568, %v2566
        %vm2570 = vcmp.lt.s32.totalorder %v2086, %v2087
        %v2571 = vsel %vm2570, %v2086, %v2087
        %v2572 = vand.u32 %v2571, 65535
        %v2573 = vshra.s32 %v2571, 16
        %v2574 = vcvt.s32.f32 %v2572
        %v2575 = vcvt.s32.f32 %v2573
        %2576 = vmin.xlane.f32.xlu0 %v2575
        %v2577 = vpop.xlane.xlu0 %2576
        %vm2578 = vcmp.eq.f32.partialorder %v2575, %v2577
        %v2579 = vsel %vm2578, %v2574, inf
        %2580 = vmin.xlane.f32.xlu0 %v2579
        %v2581 = vpop.xlane.xlu0 %2580
        %v2582 = vcvt.f32.s32 %v2581
        %v2583 = vcvt.f32.s32 %v2577
        %v2584 = vshll.u32 %v2583, 16
        %v2585 = vadd.s32 %v2584, %v2582
        %vm2586 = vcmp.lt.s32.totalorder %v2088, %v2089
        %v2587 = vsel %vm2586, %v2088, %v2089
        %v2588 = vand.u32 %v2587, 65535
        %v2589 = vshra.s32 %v2587, 16
        %v2590 = vcvt.s32.f32 %v2588
        %v2591 = vcvt.s32.f32 %v2589
        %2592 = vmin.xlane.f32.xlu0 %v2591
        %v2593 = vpop.xlane.xlu0 %2592
        %vm2594 = vcmp.eq.f32.partialorder %v2591, %v2593
        %v2595 = vsel %vm2594, %v2590, inf
        %2596 = vmin.xlane.f32.xlu0 %v2595
        %v2597 = vpop.xlane.xlu0 %2596
        %v2598 = vcvt.f32.s32 %v2597
        %v2599 = vcvt.f32.s32 %v2593
        %v2600 = vshll.u32 %v2599, 16
        %v2601 = vadd.s32 %v2600, %v2598
        %vm2602 = vcmp.eq.s32.totalorder %v1511, %v2105
        %vm2603 = vcmp.eq.s32.totalorder %v1512, %v2105
        %vm2604 = vcmp.eq.s32.totalorder %v1511, %v2121
        %vm2605 = vcmp.eq.s32.totalorder %v1512, %v2121
        %vm2606 = vcmp.eq.s32.totalorder %v1511, %v2137
        %vm2607 = vcmp.eq.s32.totalorder %v1512, %v2137
        %vm2608 = vcmp.eq.s32.totalorder %v1511, %v2153
        %vm2609 = vcmp.eq.s32.totalorder %v1512, %v2153
        %vm2610 = vcmp.eq.s32.totalorder %v1511, %v2169
        %vm2611 = vcmp.eq.s32.totalorder %v1512, %v2169
        %vm2612 = vcmp.eq.s32.totalorder %v1511, %v2185
        %vm2613 = vcmp.eq.s32.totalorder %v1512, %v2185
        %vm2614 = vcmp.eq.s32.totalorder %v1511, %v2201
        %vm2615 = vcmp.eq.s32.totalorder %v1512, %v2201
        %vm2616 = vcmp.eq.s32.totalorder %v1511, %v2217
        %vm2617 = vcmp.eq.s32.totalorder %v1512, %v2217
        %vm2618 = vcmp.eq.s32.totalorder %v1511, %v2233
        %vm2619 = vcmp.eq.s32.totalorder %v1512, %v2233
        %vm2620 = vcmp.eq.s32.totalorder %v1511, %v2249
        %vm2621 = vcmp.eq.s32.totalorder %v1512, %v2249
        %vm2622 = vcmp.eq.s32.totalorder %v1511, %v2265
        %vm2623 = vcmp.eq.s32.totalorder %v1512, %v2265
        %vm2624 = vcmp.eq.s32.totalorder %v1511, %v2281
        %vm2625 = vcmp.eq.s32.totalorder %v1512, %v2281
        %vm2626 = vcmp.eq.s32.totalorder %v1511, %v2297
        %vm2627 = vcmp.eq.s32.totalorder %v1512, %v2297
        %vm2628 = vcmp.eq.s32.totalorder %v1511, %v2313
        %vm2629 = vcmp.eq.s32.totalorder %v1512, %v2313
        %vm2630 = vcmp.eq.s32.totalorder %v1511, %v2329
        %vm2631 = vcmp.eq.s32.totalorder %v1512, %v2329
        %vm2632 = vcmp.eq.s32.totalorder %v1511, %v2345
        %vm2633 = vcmp.eq.s32.totalorder %v1512, %v2345
        %vm2634 = vcmp.eq.s32.totalorder %v1511, %v2361
        %vm2635 = vcmp.eq.s32.totalorder %v1512, %v2361
        %vm2636 = vcmp.eq.s32.totalorder %v1511, %v2377
        %vm2637 = vcmp.eq.s32.totalorder %v1512, %v2377
        %vm2638 = vcmp.eq.s32.totalorder %v1511, %v2393
        %vm2639 = vcmp.eq.s32.totalorder %v1512, %v2393
        %vm2640 = vcmp.eq.s32.totalorder %v1511, %v2409
        %vm2641 = vcmp.eq.s32.totalorder %v1512, %v2409
        %vm2642 = vcmp.eq.s32.totalorder %v1511, %v2425
        %vm2643 = vcmp.eq.s32.totalorder %v1512, %v2425
        %vm2644 = vcmp.eq.s32.totalorder %v1511, %v2441
        %vm2645 = vcmp.eq.s32.totalorder %v1512, %v2441
        %vm2646 = vcmp.eq.s32.totalorder %v1511, %v2457
        %vm2647 = vcmp.eq.s32.totalorder %v1512, %v2457
        %vm2648 = vcmp.eq.s32.totalorder %v1511, %v2473
        %vm2649 = vcmp.eq.s32.totalorder %v1512, %v2473
        %vm2650 = vcmp.eq.s32.totalorder %v1511, %v2489
        %vm2651 = vcmp.eq.s32.totalorder %v1512, %v2489
        %vm2652 = vcmp.eq.s32.totalorder %v1511, %v2505
        %vm2653 = vcmp.eq.s32.totalorder %v1512, %v2505
        %vm2654 = vcmp.eq.s32.totalorder %v1511, %v2521
        %vm2655 = vcmp.eq.s32.totalorder %v1512, %v2521
        %vm2656 = vcmp.eq.s32.totalorder %v1511, %v2537
        %vm2657 = vcmp.eq.s32.totalorder %v1512, %v2537
        %vm2658 = vcmp.eq.s32.totalorder %v1511, %v2553
        %vm2659 = vcmp.eq.s32.totalorder %v1512, %v2553
        %vm2660 = vcmp.eq.s32.totalorder %v1511, %v2569
        %vm2661 = vcmp.eq.s32.totalorder %v1512, %v2569
        %vm2662 = vcmp.eq.s32.totalorder %v1511, %v2585
        %vm2663 = vcmp.eq.s32.totalorder %v1512, %v2585
        %vm2664 = vcmp.eq.s32.totalorder %v1511, %v2601
        %vm2665 = vcmp.eq.s32.totalorder %v1512, %v2601
        %v2666 = vsel %vm2602, -inf, %v1676
        %v2667 = vsel %vm2603, -inf, %v1678
        %v2668 = vsel %vm2604, -inf, %v1682
        %v2669 = vsel %vm2605, -inf, %v1684
        %v2670 = vsel %vm2606, -inf, %v1688
        %v2671 = vsel %vm2607, -inf, %v1690
        %v2672 = vsel %vm2608, -inf, %v1694
        %v2673 = vsel %vm2609, -inf, %v1696
        %v2674 = vsel %vm2610, -inf, %v1700
        %v2675 = vsel %vm2611, -inf, %v1702
        %v2676 = vsel %vm2612, -inf, %v1706
        %v2677 = vsel %vm2613, -inf, %v1708
        %v2678 = vsel %vm2614, -inf, %v1712
        %v2679 = vsel %vm2615, -inf, %v1714
        %v2680 = vsel %vm2616, -inf, %v1718
        %v2681 = vsel %vm2617, -inf, %v1720
        %v2682 = vsel %vm2618, -inf, %v1724
        %v2683 = vsel %vm2619, -inf, %v1726
        %v2684 = vsel %vm2620, -inf, %v1730
        %v2685 = vsel %vm2621, -inf, %v1732
        %v2686 = vsel %vm2622, -inf, %v1736
        %v2687 = vsel %vm2623, -inf, %v1738
        %v2688 = vsel %vm2624, -inf, %v1742
        %v2689 = vsel %vm2625, -inf, %v1744
        %v2690 = vsel %vm2626, -inf, %v1748
        %v2691 = vsel %vm2627, -inf, %v1750
        %v2692 = vsel %vm2628, -inf, %v1754
        %v2693 = vsel %vm2629, -inf, %v1756
        %v2694 = vsel %vm2630, -inf, %v1760
        %v2695 = vsel %vm2631, -inf, %v1762
        %v2696 = vsel %vm2632, -inf, %v1766
        %v2697 = vsel %vm2633, -inf, %v1768
        %v2698 = vsel %vm2634, -inf, %v1772
        %v2699 = vsel %vm2635, -inf, %v1774
        %v2700 = vsel %vm2636, -inf, %v1778
        %v2701 = vsel %vm2637, -inf, %v1780
        %v2702 = vsel %vm2638, -inf, %v1784
        %v2703 = vsel %vm2639, -inf, %v1786
        %v2704 = vsel %vm2640, -inf, %v1790
        %v2705 = vsel %vm2641, -inf, %v1792
        %v2706 = vsel %vm2642, -inf, %v1796
        %v2707 = vsel %vm2643, -inf, %v1798
        %v2708 = vsel %vm2644, -inf, %v1802
        %v2709 = vsel %vm2645, -inf, %v1804
        %v2710 = vsel %vm2646, -inf, %v1808
        %v2711 = vsel %vm2647, -inf, %v1810
        %v2712 = vsel %vm2648, -inf, %v1814
        %v2713 = vsel %vm2649, -inf, %v1816
        %v2714 = vsel %vm2650, -inf, %v1820
        %v2715 = vsel %vm2651, -inf, %v1822
        %v2716 = vsel %vm2652, -inf, %v1826
        %v2717 = vsel %vm2653, -inf, %v1828
        %v2718 = vsel %vm2654, -inf, %v1832
        %v2719 = vsel %vm2655, -inf, %v1834
        %v2720 = vsel %vm2656, -inf, %v1838
        %v2721 = vsel %vm2657, -inf, %v1840
        %v2722 = vsel %vm2658, -inf, %v1844
        %v2723 = vsel %vm2659, -inf, %v1846
        %v2724 = vsel %vm2660, -inf, %v1850
        %v2725 = vsel %vm2661, -inf, %v1852
        %v2726 = vsel %vm2662, -inf, %v1856
        %v2727 = vsel %vm2663, -inf, %v1858
        %v2728 = vsel %vm2664, -inf, %v1862
        %v2729 = vsel %vm2665, -inf, %v1864
        %v2730 = vmax.f32 %v2666, %v2667
        %2731 = vmax.xlane.f32.xlu0 %v2730
        %v2732 = vpop.xlane.xlu0 %2731
        %v2733 = vmax.f32 %v2668, %v2669
        %2734 = vmax.xlane.f32.xlu0 %v2733
        %v2735 = vpop.xlane.xlu0 %2734
        %v2736 = vmax.f32 %v2670, %v2671
        %2737 = vmax.xlane.f32.xlu0 %v2736
        %v2738 = vpop.xlane.xlu0 %2737
        %v2739 = vmax.f32 %v2672, %v2673
        %2740 = vmax.xlane.f32.xlu0 %v2739
        %v2741 = vpop.xlane.xlu0 %2740
        %v2742 = vmax.f32 %v2674, %v2675
        %2743 = vmax.xlane.f32.xlu0 %v2742
        %v2744 = vpop.xlane.xlu0 %2743
        %v2745 = vmax.f32 %v2676, %v2677
        %2746 = vmax.xlane.f32.xlu0 %v2745
        %v2747 = vpop.xlane.xlu0 %2746
        %v2748 = vmax.f32 %v2678, %v2679
        %2749 = vmax.xlane.f32.xlu0 %v2748
        %v2750 = vpop.xlane.xlu0 %2749
        %v2751 = vmax.f32 %v2680, %v2681
        %2752 = vmax.xlane.f32.xlu0 %v2751
        %v2753 = vpop.xlane.xlu0 %2752
        %v2754 = vmax.f32 %v2682, %v2683
        %2755 = vmax.xlane.f32.xlu0 %v2754
        %v2756 = vpop.xlane.xlu0 %2755
        %v2757 = vmax.f32 %v2684, %v2685
        %2758 = vmax.xlane.f32.xlu0 %v2757
        %v2759 = vpop.xlane.xlu0 %2758
        %v2760 = vmax.f32 %v2686, %v2687
        %2761 = vmax.xlane.f32.xlu0 %v2760
        %v2762 = vpop.xlane.xlu0 %2761
        %v2763 = vmax.f32 %v2688, %v2689
        %2764 = vmax.xlane.f32.xlu0 %v2763
        %v2765 = vpop.xlane.xlu0 %2764
        %v2766 = vmax.f32 %v2690, %v2691
        %2767 = vmax.xlane.f32.xlu0 %v2766
        %v2768 = vpop.xlane.xlu0 %2767
        %v2769 = vmax.f32 %v2692, %v2693
        %2770 = vmax.xlane.f32.xlu0 %v2769
        %v2771 = vpop.xlane.xlu0 %2770
        %v2772 = vmax.f32 %v2694, %v2695
        %2773 = vmax.xlane.f32.xlu0 %v2772
        %v2774 = vpop.xlane.xlu0 %2773
        %v2775 = vmax.f32 %v2696, %v2697
        %2776 = vmax.xlane.f32.xlu0 %v2775
        %v2777 = vpop.xlane.xlu0 %2776
        %v2778 = vmax.f32 %v2698, %v2699
        %2779 = vmax.xlane.f32.xlu0 %v2778
        %v2780 = vpop.xlane.xlu0 %2779
        %v2781 = vmax.f32 %v2700, %v2701
        %2782 = vmax.xlane.f32.xlu0 %v2781
        %v2783 = vpop.xlane.xlu0 %2782
        %v2784 = vmax.f32 %v2702, %v2703
        %2785 = vmax.xlane.f32.xlu0 %v2784
        %v2786 = vpop.xlane.xlu0 %2785
        %v2787 = vmax.f32 %v2704, %v2705
        %2788 = vmax.xlane.f32.xlu0 %v2787
        %v2789 = vpop.xlane.xlu0 %2788
        %v2790 = vmax.f32 %v2706, %v2707
        %2791 = vmax.xlane.f32.xlu0 %v2790
        %v2792 = vpop.xlane.xlu0 %2791
        %v2793 = vmax.f32 %v2708, %v2709
        %2794 = vmax.xlane.f32.xlu0 %v2793
        %v2795 = vpop.xlane.xlu0 %2794
        %v2796 = vmax.f32 %v2710, %v2711
        %2797 = vmax.xlane.f32.xlu0 %v2796
        %v2798 = vpop.xlane.xlu0 %2797
        %v2799 = vmax.f32 %v2712, %v2713
        %2800 = vmax.xlane.f32.xlu0 %v2799
        %v2801 = vpop.xlane.xlu0 %2800
        %v2802 = vmax.f32 %v2714, %v2715
        %2803 = vmax.xlane.f32.xlu0 %v2802
        %v2804 = vpop.xlane.xlu0 %2803
        %v2805 = vmax.f32 %v2716, %v2717
        %2806 = vmax.xlane.f32.xlu0 %v2805
        %v2807 = vpop.xlane.xlu0 %2806
        %v2808 = vmax.f32 %v2718, %v2719
        %2809 = vmax.xlane.f32.xlu0 %v2808
        %v2810 = vpop.xlane.xlu0 %2809
        %v2811 = vmax.f32 %v2720, %v2721
        %2812 = vmax.xlane.f32.xlu0 %v2811
        %v2813 = vpop.xlane.xlu0 %2812
        %v2814 = vmax.f32 %v2722, %v2723
        %2815 = vmax.xlane.f32.xlu0 %v2814
        %v2816 = vpop.xlane.xlu0 %2815
        %v2817 = vmax.f32 %v2724, %v2725
        %2818 = vmax.xlane.f32.xlu0 %v2817
        %v2819 = vpop.xlane.xlu0 %2818
        %v2820 = vmax.f32 %v2726, %v2727
        %2821 = vmax.xlane.f32.xlu0 %v2820
        %v2822 = vpop.xlane.xlu0 %2821
        %v2823 = vmax.f32 %v2728, %v2729
        %2824 = vmax.xlane.f32.xlu0 %v2823
        %v2825 = vpop.xlane.xlu0 %2824
        %vm2826 = vcmp.eq.f32.partialorder %v2666, %v2732
        %vm2827 = vcmp.eq.f32.partialorder %v2667, %v2732
        %vm2828 = vcmp.eq.f32.partialorder %v2668, %v2735
        %vm2829 = vcmp.eq.f32.partialorder %v2669, %v2735
        %vm2830 = vcmp.eq.f32.partialorder %v2670, %v2738
        %vm2831 = vcmp.eq.f32.partialorder %v2671, %v2738
        %vm2832 = vcmp.eq.f32.partialorder %v2672, %v2741
        %vm2833 = vcmp.eq.f32.partialorder %v2673, %v2741
        %vm2834 = vcmp.eq.f32.partialorder %v2674, %v2744
        %vm2835 = vcmp.eq.f32.partialorder %v2675, %v2744
        %vm2836 = vcmp.eq.f32.partialorder %v2676, %v2747
        %vm2837 = vcmp.eq.f32.partialorder %v2677, %v2747
        %vm2838 = vcmp.eq.f32.partialorder %v2678, %v2750
        %vm2839 = vcmp.eq.f32.partialorder %v2679, %v2750
        %vm2840 = vcmp.eq.f32.partialorder %v2680, %v2753
        %vm2841 = vcmp.eq.f32.partialorder %v2681, %v2753
        %vm2842 = vcmp.eq.f32.partialorder %v2682, %v2756
        %vm2843 = vcmp.eq.f32.partialorder %v2683, %v2756
        %vm2844 = vcmp.eq.f32.partialorder %v2684, %v2759
        %vm2845 = vcmp.eq.f32.partialorder %v2685, %v2759
        %vm2846 = vcmp.eq.f32.partialorder %v2686, %v2762
        %vm2847 = vcmp.eq.f32.partialorder %v2687, %v2762
        %vm2848 = vcmp.eq.f32.partialorder %v2688, %v2765
        %vm2849 = vcmp.eq.f32.partialorder %v2689, %v2765
        %vm2850 = vcmp.eq.f32.partialorder %v2690, %v2768
        %vm2851 = vcmp.eq.f32.partialorder %v2691, %v2768
        %vm2852 = vcmp.eq.f32.partialorder %v2692, %v2771
        %vm2853 = vcmp.eq.f32.partialorder %v2693, %v2771
        %vm2854 = vcmp.eq.f32.partialorder %v2694, %v2774
        %vm2855 = vcmp.eq.f32.partialorder %v2695, %v2774
        %vm2856 = vcmp.eq.f32.partialorder %v2696, %v2777
        %vm2857 = vcmp.eq.f32.partialorder %v2697, %v2777
        %vm2858 = vcmp.eq.f32.partialorder %v2698, %v2780
        %vm2859 = vcmp.eq.f32.partialorder %v2699, %v2780
        %vm2860 = vcmp.eq.f32.partialorder %v2700, %v2783
        %vm2861 = vcmp.eq.f32.partialorder %v2701, %v2783
        %vm2862 = vcmp.eq.f32.partialorder %v2702, %v2786
        %vm2863 = vcmp.eq.f32.partialorder %v2703, %v2786
        %vm2864 = vcmp.eq.f32.partialorder %v2704, %v2789
        %vm2865 = vcmp.eq.f32.partialorder %v2705, %v2789
        %vm2866 = vcmp.eq.f32.partialorder %v2706, %v2792
        %vm2867 = vcmp.eq.f32.partialorder %v2707, %v2792
        %vm2868 = vcmp.eq.f32.partialorder %v2708, %v2795
        %vm2869 = vcmp.eq.f32.partialorder %v2709, %v2795
        %vm2870 = vcmp.eq.f32.partialorder %v2710, %v2798
        %vm2871 = vcmp.eq.f32.partialorder %v2711, %v2798
        %vm2872 = vcmp.eq.f32.partialorder %v2712, %v2801
        %vm2873 = vcmp.eq.f32.partialorder %v2713, %v2801
        %vm2874 = vcmp.eq.f32.partialorder %v2714, %v2804
        %vm2875 = vcmp.eq.f32.partialorder %v2715, %v2804
        %vm2876 = vcmp.eq.f32.partialorder %v2716, %v2807
        %vm2877 = vcmp.eq.f32.partialorder %v2717, %v2807
        %vm2878 = vcmp.eq.f32.partialorder %v2718, %v2810
        %vm2879 = vcmp.eq.f32.partialorder %v2719, %v2810
        %vm2880 = vcmp.eq.f32.partialorder %v2720, %v2813
        %vm2881 = vcmp.eq.f32.partialorder %v2721, %v2813
        %vm2882 = vcmp.eq.f32.partialorder %v2722, %v2816
        %vm2883 = vcmp.eq.f32.partialorder %v2723, %v2816
        %vm2884 = vcmp.eq.f32.partialorder %v2724, %v2819
        %vm2885 = vcmp.eq.f32.partialorder %v2725, %v2819
        %vm2886 = vcmp.eq.f32.partialorder %v2726, %v2822
        %vm2887 = vcmp.eq.f32.partialorder %v2727, %v2822
        %vm2888 = vcmp.eq.f32.partialorder %v2728, %v2825
        %vm2889 = vcmp.eq.f32.partialorder %v2729, %v2825
        %v2890 = vsel %vm2826, %v1511, 256
        %v2891 = vsel %vm2827, %v1512, 256
        %v2892 = vsel %vm2828, %v1511, 256
        %v2893 = vsel %vm2829, %v1512, 256
        %v2894 = vsel %vm2830, %v1511, 256
        %v2895 = vsel %vm2831, %v1512, 256
        %v2896 = vsel %vm2832, %v1511, 256
        %v2897 = vsel %vm2833, %v1512, 256
        %v2898 = vsel %vm2834, %v1511, 256
        %v2899 = vsel %vm2835, %v1512, 256
        %v2900 = vsel %vm2836, %v1511, 256
        %v2901 = vsel %vm2837, %v1512, 256
        %v2902 = vsel %vm2838, %v1511, 256
        %v2903 = vsel %vm2839, %v1512, 256
        %v2904 = vsel %vm2840, %v1511, 256
        %v2905 = vsel %vm2841, %v1512, 256
        %v2906 = vsel %vm2842, %v1511, 256
        %v2907 = vsel %vm2843, %v1512, 256
        %v2908 = vsel %vm2844, %v1511, 256
        %v2909 = vsel %vm2845, %v1512, 256
        %v2910 = vsel %vm2846, %v1511, 256
        %v2911 = vsel %vm2847, %v1512, 256
        %v2912 = vsel %vm2848, %v1511, 256
        %v2913 = vsel %vm2849, %v1512, 256
        %v2914 = vsel %vm2850, %v1511, 256
        %v2915 = vsel %vm2851, %v1512, 256
        %v2916 = vsel %vm2852, %v1511, 256
        %v2917 = vsel %vm2853, %v1512, 256
        %v2918 = vsel %vm2854, %v1511, 256
        %v2919 = vsel %vm2855, %v1512, 256
        %v2920 = vsel %vm2856, %v1511, 256
        %v2921 = vsel %vm2857, %v1512, 256
        %v2922 = vsel %vm2858, %v1511, 256
        %v2923 = vsel %vm2859, %v1512, 256
        %v2924 = vsel %vm2860, %v1511, 256
        %v2925 = vsel %vm2861, %v1512, 256
        %v2926 = vsel %vm2862, %v1511, 256
        %v2927 = vsel %vm2863, %v1512, 256
        %v2928 = vsel %vm2864, %v1511, 256
        %v2929 = vsel %vm2865, %v1512, 256
        %v2930 = vsel %vm2866, %v1511, 256
        %v2931 = vsel %vm2867, %v1512, 256
        %v2932 = vsel %vm2868, %v1511, 256
        %v2933 = vsel %vm2869, %v1512, 256
        %v2934 = vsel %vm2870, %v1511, 256
        %v2935 = vsel %vm2871, %v1512, 256
        %v2936 = vsel %vm2872, %v1511, 256
        %v2937 = vsel %vm2873, %v1512, 256
        %v2938 = vsel %vm2874, %v1511, 256
        %v2939 = vsel %vm2875, %v1512, 256
        %v2940 = vsel %vm2876, %v1511, 256
        %v2941 = vsel %vm2877, %v1512, 256
        %v2942 = vsel %vm2878, %v1511, 256
        %v2943 = vsel %vm2879, %v1512, 256
        %v2944 = vsel %vm2880, %v1511, 256
        %v2945 = vsel %vm2881, %v1512, 256
        %v2946 = vsel %vm2882, %v1511, 256
        %v2947 = vsel %vm2883, %v1512, 256
        %v2948 = vsel %vm2884, %v1511, 256
        %v2949 = vsel %vm2885, %v1512, 256
        %v2950 = vsel %vm2886, %v1511, 256
        %v2951 = vsel %vm2887, %v1512, 256
        %v2952 = vsel %vm2888, %v1511, 256
        %v2953 = vsel %vm2889, %v1512, 256
        %vm2954 = vcmp.lt.s32.totalorder %v2890, %v2891
        %v2955 = vsel %vm2954, %v2890, %v2891
        %v2956 = vand.u32 %v2955, 65535
        %v2957 = vshra.s32 %v2955, 16
        %v2958 = vcvt.s32.f32 %v2956
        %v2959 = vcvt.s32.f32 %v2957
        %2960 = vmin.xlane.f32.xlu0 %v2959
        %v2961 = vpop.xlane.xlu0 %2960
        %vm2962 = vcmp.eq.f32.partialorder %v2959, %v2961
        %v2963 = vsel %vm2962, %v2958, inf
        %2964 = vmin.xlane.f32.xlu0 %v2963
        %v2965 = vpop.xlane.xlu0 %2964
        %v2966 = vcvt.f32.s32 %v2965
        %v2967 = vcvt.f32.s32 %v2961
        %v2968 = vshll.u32 %v2967, 16
        %v2969 = vadd.s32 %v2968, %v2966
        %vm2970 = vcmp.lt.s32.totalorder %v2892, %v2893
        %v2971 = vsel %vm2970, %v2892, %v2893
        %v2972 = vand.u32 %v2971, 65535
        %v2973 = vshra.s32 %v2971, 16
        %v2974 = vcvt.s32.f32 %v2972
        %v2975 = vcvt.s32.f32 %v2973
        %2976 = vmin.xlane.f32.xlu0 %v2975
        %v2977 = vpop.xlane.xlu0 %2976
        %vm2978 = vcmp.eq.f32.partialorder %v2975, %v2977
        %v2979 = vsel %vm2978, %v2974, inf
        %2980 = vmin.xlane.f32.xlu0 %v2979
        %v2981 = vpop.xlane.xlu0 %2980
        %v2982 = vcvt.f32.s32 %v2981
        %v2983 = vcvt.f32.s32 %v2977
        %v2984 = vshll.u32 %v2983, 16
        %v2985 = vadd.s32 %v2984, %v2982
        %vm2986 = vcmp.lt.s32.totalorder %v2894, %v2895
        %v2987 = vsel %vm2986, %v2894, %v2895
        %v2988 = vand.u32 %v2987, 65535
        %v2989 = vshra.s32 %v2987, 16
        %v2990 = vcvt.s32.f32 %v2988
        %v2991 = vcvt.s32.f32 %v2989
        %2992 = vmin.xlane.f32.xlu0 %v2991
        %v2993 = vpop.xlane.xlu0 %2992
        %vm2994 = vcmp.eq.f32.partialorder %v2991, %v2993
        %v2995 = vsel %vm2994, %v2990, inf
        %2996 = vmin.xlane.f32.xlu0 %v2995
        %v2997 = vpop.xlane.xlu0 %2996
        %v2998 = vcvt.f32.s32 %v2997
        %v2999 = vcvt.f32.s32 %v2993
        %v3000 = vshll.u32 %v2999, 16
        %v3001 = vadd.s32 %v3000, %v2998
        %vm3002 = vcmp.lt.s32.totalorder %v2896, %v2897
        %v3003 = vsel %vm3002, %v2896, %v2897
        %v3004 = vand.u32 %v3003, 65535
        %v3005 = vshra.s32 %v3003, 16
        %v3006 = vcvt.s32.f32 %v3004
        %v3007 = vcvt.s32.f32 %v3005
        %3008 = vmin.xlane.f32.xlu0 %v3007
        %v3009 = vpop.xlane.xlu0 %3008
        %vm3010 = vcmp.eq.f32.partialorder %v3007, %v3009
        %v3011 = vsel %vm3010, %v3006, inf
        %3012 = vmin.xlane.f32.xlu0 %v3011
        %v3013 = vpop.xlane.xlu0 %3012
        %v3014 = vcvt.f32.s32 %v3013
        %v3015 = vcvt.f32.s32 %v3009
        %v3016 = vshll.u32 %v3015, 16
        %v3017 = vadd.s32 %v3016, %v3014
        %vm3018 = vcmp.lt.s32.totalorder %v2898, %v2899
        %v3019 = vsel %vm3018, %v2898, %v2899
        %v3020 = vand.u32 %v3019, 65535
        %v3021 = vshra.s32 %v3019, 16
        %v3022 = vcvt.s32.f32 %v3020
        %v3023 = vcvt.s32.f32 %v3021
        %3024 = vmin.xlane.f32.xlu0 %v3023
        %v3025 = vpop.xlane.xlu0 %3024
        %vm3026 = vcmp.eq.f32.partialorder %v3023, %v3025
        %v3027 = vsel %vm3026, %v3022, inf
        %3028 = vmin.xlane.f32.xlu0 %v3027
        %v3029 = vpop.xlane.xlu0 %3028
        %v3030 = vcvt.f32.s32 %v3029
        %v3031 = vcvt.f32.s32 %v3025
        %v3032 = vshll.u32 %v3031, 16
        %v3033 = vadd.s32 %v3032, %v3030
        %vm3034 = vcmp.lt.s32.totalorder %v2900, %v2901
        %v3035 = vsel %vm3034, %v2900, %v2901
        %v3036 = vand.u32 %v3035, 65535
        %v3037 = vshra.s32 %v3035, 16
        %v3038 = vcvt.s32.f32 %v3036
        %v3039 = vcvt.s32.f32 %v3037
        %3040 = vmin.xlane.f32.xlu0 %v3039
        %v3041 = vpop.xlane.xlu0 %3040
        %vm3042 = vcmp.eq.f32.partialorder %v3039, %v3041
        %v3043 = vsel %vm3042, %v3038, inf
        %3044 = vmin.xlane.f32.xlu0 %v3043
        %v3045 = vpop.xlane.xlu0 %3044
        %v3046 = vcvt.f32.s32 %v3045
        %v3047 = vcvt.f32.s32 %v3041
        %v3048 = vshll.u32 %v3047, 16
        %v3049 = vadd.s32 %v3048, %v3046
        %vm3050 = vcmp.lt.s32.totalorder %v2902, %v2903
        %v3051 = vsel %vm3050, %v2902, %v2903
        %v3052 = vand.u32 %v3051, 65535
        %v3053 = vshra.s32 %v3051, 16
        %v3054 = vcvt.s32.f32 %v3052
        %v3055 = vcvt.s32.f32 %v3053
        %3056 = vmin.xlane.f32.xlu0 %v3055
        %v3057 = vpop.xlane.xlu0 %3056
        %vm3058 = vcmp.eq.f32.partialorder %v3055, %v3057
        %v3059 = vsel %vm3058, %v3054, inf
        %3060 = vmin.xlane.f32.xlu0 %v3059
        %v3061 = vpop.xlane.xlu0 %3060
        %v3062 = vcvt.f32.s32 %v3061
        %v3063 = vcvt.f32.s32 %v3057
        %v3064 = vshll.u32 %v3063, 16
        %v3065 = vadd.s32 %v3064, %v3062
        %vm3066 = vcmp.lt.s32.totalorder %v2904, %v2905
        %v3067 = vsel %vm3066, %v2904, %v2905
        %v3068 = vand.u32 %v3067, 65535
        %v3069 = vshra.s32 %v3067, 16
        %v3070 = vcvt.s32.f32 %v3068
        %v3071 = vcvt.s32.f32 %v3069
        %3072 = vmin.xlane.f32.xlu0 %v3071
        %v3073 = vpop.xlane.xlu0 %3072
        %vm3074 = vcmp.eq.f32.partialorder %v3071, %v3073
        %v3075 = vsel %vm3074, %v3070, inf
        %3076 = vmin.xlane.f32.xlu0 %v3075
        %v3077 = vpop.xlane.xlu0 %3076
        %v3078 = vcvt.f32.s32 %v3077
        %v3079 = vcvt.f32.s32 %v3073
        %v3080 = vshll.u32 %v3079, 16
        %v3081 = vadd.s32 %v3080, %v3078
        %vm3082 = vcmp.lt.s32.totalorder %v2906, %v2907
        %v3083 = vsel %vm3082, %v2906, %v2907
        %v3084 = vand.u32 %v3083, 65535
        %v3085 = vshra.s32 %v3083, 16
        %v3086 = vcvt.s32.f32 %v3084
        %v3087 = vcvt.s32.f32 %v3085
        %3088 = vmin.xlane.f32.xlu0 %v3087
        %v3089 = vpop.xlane.xlu0 %3088
        %vm3090 = vcmp.eq.f32.partialorder %v3087, %v3089
        %v3091 = vsel %vm3090, %v3086, inf
        %3092 = vmin.xlane.f32.xlu0 %v3091
        %v3093 = vpop.xlane.xlu0 %3092
        %v3094 = vcvt.f32.s32 %v3093
        %v3095 = vcvt.f32.s32 %v3089
        %v3096 = vshll.u32 %v3095, 16
        %v3097 = vadd.s32 %v3096, %v3094
        %vm3098 = vcmp.lt.s32.totalorder %v2908, %v2909
        %v3099 = vsel %vm3098, %v2908, %v2909
        %v3100 = vand.u32 %v3099, 65535
        %v3101 = vshra.s32 %v3099, 16
        %v3102 = vcvt.s32.f32 %v3100
        %v3103 = vcvt.s32.f32 %v3101
        %3104 = vmin.xlane.f32.xlu0 %v3103
        %v3105 = vpop.xlane.xlu0 %3104
        %vm3106 = vcmp.eq.f32.partialorder %v3103, %v3105
        %v3107 = vsel %vm3106, %v3102, inf
        %3108 = vmin.xlane.f32.xlu0 %v3107
        %v3109 = vpop.xlane.xlu0 %3108
        %v3110 = vcvt.f32.s32 %v3109
        %v3111 = vcvt.f32.s32 %v3105
        %v3112 = vshll.u32 %v3111, 16
        %v3113 = vadd.s32 %v3112, %v3110
        %vm3114 = vcmp.lt.s32.totalorder %v2910, %v2911
        %v3115 = vsel %vm3114, %v2910, %v2911
        %v3116 = vand.u32 %v3115, 65535
        %v3117 = vshra.s32 %v3115, 16
        %v3118 = vcvt.s32.f32 %v3116
        %v3119 = vcvt.s32.f32 %v3117
        %3120 = vmin.xlane.f32.xlu0 %v3119
        %v3121 = vpop.xlane.xlu0 %3120
        %vm3122 = vcmp.eq.f32.partialorder %v3119, %v3121
        %v3123 = vsel %vm3122, %v3118, inf
        %3124 = vmin.xlane.f32.xlu0 %v3123
        %v3125 = vpop.xlane.xlu0 %3124
        %v3126 = vcvt.f32.s32 %v3125
        %v3127 = vcvt.f32.s32 %v3121
        %v3128 = vshll.u32 %v3127, 16
        %v3129 = vadd.s32 %v3128, %v3126
        %vm3130 = vcmp.lt.s32.totalorder %v2912, %v2913
        %v3131 = vsel %vm3130, %v2912, %v2913
        %v3132 = vand.u32 %v3131, 65535
        %v3133 = vshra.s32 %v3131, 16
        %v3134 = vcvt.s32.f32 %v3132
        %v3135 = vcvt.s32.f32 %v3133
        %3136 = vmin.xlane.f32.xlu0 %v3135
        %v3137 = vpop.xlane.xlu0 %3136
        %vm3138 = vcmp.eq.f32.partialorder %v3135, %v3137
        %v3139 = vsel %vm3138, %v3134, inf
        %3140 = vmin.xlane.f32.xlu0 %v3139
        %v3141 = vpop.xlane.xlu0 %3140
        %v3142 = vcvt.f32.s32 %v3141
        %v3143 = vcvt.f32.s32 %v3137
        %v3144 = vshll.u32 %v3143, 16
        %v3145 = vadd.s32 %v3144, %v3142
        %vm3146 = vcmp.lt.s32.totalorder %v2914, %v2915
        %v3147 = vsel %vm3146, %v2914, %v2915
        %v3148 = vand.u32 %v3147, 65535
        %v3149 = vshra.s32 %v3147, 16
        %v3150 = vcvt.s32.f32 %v3148
        %v3151 = vcvt.s32.f32 %v3149
        %3152 = vmin.xlane.f32.xlu0 %v3151
        %v3153 = vpop.xlane.xlu0 %3152
        %vm3154 = vcmp.eq.f32.partialorder %v3151, %v3153
        %v3155 = vsel %vm3154, %v3150, inf
        %3156 = vmin.xlane.f32.xlu0 %v3155
        %v3157 = vpop.xlane.xlu0 %3156
        %v3158 = vcvt.f32.s32 %v3157
        %v3159 = vcvt.f32.s32 %v3153
        %v3160 = vshll.u32 %v3159, 16
        %v3161 = vadd.s32 %v3160, %v3158
        %vm3162 = vcmp.lt.s32.totalorder %v2916, %v2917
        %v3163 = vsel %vm3162, %v2916, %v2917
        %v3164 = vand.u32 %v3163, 65535
        %v3165 = vshra.s32 %v3163, 16
        %v3166 = vcvt.s32.f32 %v3164
        %v3167 = vcvt.s32.f32 %v3165
        %3168 = vmin.xlane.f32.xlu0 %v3167
        %v3169 = vpop.xlane.xlu0 %3168
        %vm3170 = vcmp.eq.f32.partialorder %v3167, %v3169
        %v3171 = vsel %vm3170, %v3166, inf
        %3172 = vmin.xlane.f32.xlu0 %v3171
        %v3173 = vpop.xlane.xlu0 %3172
        %v3174 = vcvt.f32.s32 %v3173
        %v3175 = vcvt.f32.s32 %v3169
        %v3176 = vshll.u32 %v3175, 16
        %v3177 = vadd.s32 %v3176, %v3174
        %vm3178 = vcmp.lt.s32.totalorder %v2918, %v2919
        %v3179 = vsel %vm3178, %v2918, %v2919
        %v3180 = vand.u32 %v3179, 65535
        %v3181 = vshra.s32 %v3179, 16
        %v3182 = vcvt.s32.f32 %v3180
        %v3183 = vcvt.s32.f32 %v3181
        %3184 = vmin.xlane.f32.xlu0 %v3183
        %v3185 = vpop.xlane.xlu0 %3184
        %vm3186 = vcmp.eq.f32.partialorder %v3183, %v3185
        %v3187 = vsel %vm3186, %v3182, inf
        %3188 = vmin.xlane.f32.xlu0 %v3187
        %v3189 = vpop.xlane.xlu0 %3188
        %v3190 = vcvt.f32.s32 %v3189
        %v3191 = vcvt.f32.s32 %v3185
        %v3192 = vshll.u32 %v3191, 16
        %v3193 = vadd.s32 %v3192, %v3190
        %vm3194 = vcmp.lt.s32.totalorder %v2920, %v2921
        %v3195 = vsel %vm3194, %v2920, %v2921
        %v3196 = vand.u32 %v3195, 65535
        %v3197 = vshra.s32 %v3195, 16
        %v3198 = vcvt.s32.f32 %v3196
        %v3199 = vcvt.s32.f32 %v3197
        %3200 = vmin.xlane.f32.xlu0 %v3199
        %v3201 = vpop.xlane.xlu0 %3200
        %vm3202 = vcmp.eq.f32.partialorder %v3199, %v3201
        %v3203 = vsel %vm3202, %v3198, inf
        %3204 = vmin.xlane.f32.xlu0 %v3203
        %v3205 = vpop.xlane.xlu0 %3204
        %v3206 = vcvt.f32.s32 %v3205
        %v3207 = vcvt.f32.s32 %v3201
        %v3208 = vshll.u32 %v3207, 16
        %v3209 = vadd.s32 %v3208, %v3206
        %vm3210 = vcmp.lt.s32.totalorder %v2922, %v2923
        %v3211 = vsel %vm3210, %v2922, %v2923
        %v3212 = vand.u32 %v3211, 65535
        %v3213 = vshra.s32 %v3211, 16
        %v3214 = vcvt.s32.f32 %v3212
        %v3215 = vcvt.s32.f32 %v3213
        %3216 = vmin.xlane.f32.xlu0 %v3215
        %v3217 = vpop.xlane.xlu0 %3216
        %vm3218 = vcmp.eq.f32.partialorder %v3215, %v3217
        %v3219 = vsel %vm3218, %v3214, inf
        %3220 = vmin.xlane.f32.xlu0 %v3219
        %v3221 = vpop.xlane.xlu0 %3220
        %v3222 = vcvt.f32.s32 %v3221
        %v3223 = vcvt.f32.s32 %v3217
        %v3224 = vshll.u32 %v3223, 16
        %v3225 = vadd.s32 %v3224, %v3222
        %vm3226 = vcmp.lt.s32.totalorder %v2924, %v2925
        %v3227 = vsel %vm3226, %v2924, %v2925
        %v3228 = vand.u32 %v3227, 65535
        %v3229 = vshra.s32 %v3227, 16
        %v3230 = vcvt.s32.f32 %v3228
        %v3231 = vcvt.s32.f32 %v3229
        %3232 = vmin.xlane.f32.xlu0 %v3231
        %v3233 = vpop.xlane.xlu0 %3232
        %vm3234 = vcmp.eq.f32.partialorder %v3231, %v3233
        %v3235 = vsel %vm3234, %v3230, inf
        %3236 = vmin.xlane.f32.xlu0 %v3235
        %v3237 = vpop.xlane.xlu0 %3236
        %v3238 = vcvt.f32.s32 %v3237
        %v3239 = vcvt.f32.s32 %v3233
        %v3240 = vshll.u32 %v3239, 16
        %v3241 = vadd.s32 %v3240, %v3238
        %vm3242 = vcmp.lt.s32.totalorder %v2926, %v2927
        %v3243 = vsel %vm3242, %v2926, %v2927
        %v3244 = vand.u32 %v3243, 65535
        %v3245 = vshra.s32 %v3243, 16
        %v3246 = vcvt.s32.f32 %v3244
        %v3247 = vcvt.s32.f32 %v3245
        %3248 = vmin.xlane.f32.xlu0 %v3247
        %v3249 = vpop.xlane.xlu0 %3248
        %vm3250 = vcmp.eq.f32.partialorder %v3247, %v3249
        %v3251 = vsel %vm3250, %v3246, inf
        %3252 = vmin.xlane.f32.xlu0 %v3251
        %v3253 = vpop.xlane.xlu0 %3252
        %v3254 = vcvt.f32.s32 %v3253
        %v3255 = vcvt.f32.s32 %v3249
        %v3256 = vshll.u32 %v3255, 16
        %v3257 = vadd.s32 %v3256, %v3254
        %vm3258 = vcmp.lt.s32.totalorder %v2928, %v2929
        %v3259 = vsel %vm3258, %v2928, %v2929
        %v3260 = vand.u32 %v3259, 65535
        %v3261 = vshra.s32 %v3259, 16
        %v3262 = vcvt.s32.f32 %v3260
        %v3263 = vcvt.s32.f32 %v3261
        %3264 = vmin.xlane.f32.xlu0 %v3263
        %v3265 = vpop.xlane.xlu0 %3264
        %vm3266 = vcmp.eq.f32.partialorder %v3263, %v3265
        %v3267 = vsel %vm3266, %v3262, inf
        %3268 = vmin.xlane.f32.xlu0 %v3267
        %v3269 = vpop.xlane.xlu0 %3268
        %v3270 = vcvt.f32.s32 %v3269
        %v3271 = vcvt.f32.s32 %v3265
        %v3272 = vshll.u32 %v3271, 16
        %v3273 = vadd.s32 %v3272, %v3270
        %vm3274 = vcmp.lt.s32.totalorder %v2930, %v2931
        %v3275 = vsel %vm3274, %v2930, %v2931
        %v3276 = vand.u32 %v3275, 65535
        %v3277 = vshra.s32 %v3275, 16
        %v3278 = vcvt.s32.f32 %v3276
        %v3279 = vcvt.s32.f32 %v3277
        %3280 = vmin.xlane.f32.xlu0 %v3279
        %v3281 = vpop.xlane.xlu0 %3280
        %vm3282 = vcmp.eq.f32.partialorder %v3279, %v3281
        %v3283 = vsel %vm3282, %v3278, inf
        %3284 = vmin.xlane.f32.xlu0 %v3283
        %v3285 = vpop.xlane.xlu0 %3284
        %v3286 = vcvt.f32.s32 %v3285
        %v3287 = vcvt.f32.s32 %v3281
        %v3288 = vshll.u32 %v3287, 16
        %v3289 = vadd.s32 %v3288, %v3286
        %vm3290 = vcmp.lt.s32.totalorder %v2932, %v2933
        %v3291 = vsel %vm3290, %v2932, %v2933
        %v3292 = vand.u32 %v3291, 65535
        %v3293 = vshra.s32 %v3291, 16
        %v3294 = vcvt.s32.f32 %v3292
        %v3295 = vcvt.s32.f32 %v3293
        %3296 = vmin.xlane.f32.xlu0 %v3295
        %v3297 = vpop.xlane.xlu0 %3296
        %vm3298 = vcmp.eq.f32.partialorder %v3295, %v3297
        %v3299 = vsel %vm3298, %v3294, inf
        %3300 = vmin.xlane.f32.xlu0 %v3299
        %v3301 = vpop.xlane.xlu0 %3300
        %v3302 = vcvt.f32.s32 %v3301
        %v3303 = vcvt.f32.s32 %v3297
        %v3304 = vshll.u32 %v3303, 16
        %v3305 = vadd.s32 %v3304, %v3302
        %vm3306 = vcmp.lt.s32.totalorder %v2934, %v2935
        %v3307 = vsel %vm3306, %v2934, %v2935
        %v3308 = vand.u32 %v3307, 65535
        %v3309 = vshra.s32 %v3307, 16
        %v3310 = vcvt.s32.f32 %v3308
        %v3311 = vcvt.s32.f32 %v3309
        %3312 = vmin.xlane.f32.xlu0 %v3311
        %v3313 = vpop.xlane.xlu0 %3312
        %vm3314 = vcmp.eq.f32.partialorder %v3311, %v3313
        %v3315 = vsel %vm3314, %v3310, inf
        %3316 = vmin.xlane.f32.xlu0 %v3315
        %v3317 = vpop.xlane.xlu0 %3316
        %v3318 = vcvt.f32.s32 %v3317
        %v3319 = vcvt.f32.s32 %v3313
        %v3320 = vshll.u32 %v3319, 16
        %v3321 = vadd.s32 %v3320, %v3318
        %vm3322 = vcmp.lt.s32.totalorder %v2936, %v2937
        %v3323 = vsel %vm3322, %v2936, %v2937
        %v3324 = vand.u32 %v3323, 65535
        %v3325 = vshra.s32 %v3323, 16
        %v3326 = vcvt.s32.f32 %v3324
        %v3327 = vcvt.s32.f32 %v3325
        %3328 = vmin.xlane.f32.xlu0 %v3327
        %v3329 = vpop.xlane.xlu0 %3328
        %vm3330 = vcmp.eq.f32.partialorder %v3327, %v3329
        %v3331 = vsel %vm3330, %v3326, inf
        %3332 = vmin.xlane.f32.xlu0 %v3331
        %v3333 = vpop.xlane.xlu0 %3332
        %v3334 = vcvt.f32.s32 %v3333
        %v3335 = vcvt.f32.s32 %v3329
        %v3336 = vshll.u32 %v3335, 16
        %v3337 = vadd.s32 %v3336, %v3334
        %vm3338 = vcmp.lt.s32.totalorder %v2938, %v2939
        %v3339 = vsel %vm3338, %v2938, %v2939
        %v3340 = vand.u32 %v3339, 65535
        %v3341 = vshra.s32 %v3339, 16
        %v3342 = vcvt.s32.f32 %v3340
        %v3343 = vcvt.s32.f32 %v3341
        %3344 = vmin.xlane.f32.xlu0 %v3343
        %v3345 = vpop.xlane.xlu0 %3344
        %vm3346 = vcmp.eq.f32.partialorder %v3343, %v3345
        %v3347 = vsel %vm3346, %v3342, inf
        %3348 = vmin.xlane.f32.xlu0 %v3347
        %v3349 = vpop.xlane.xlu0 %3348
        %v3350 = vcvt.f32.s32 %v3349
        %v3351 = vcvt.f32.s32 %v3345
        %v3352 = vshll.u32 %v3351, 16
        %v3353 = vadd.s32 %v3352, %v3350
        %vm3354 = vcmp.lt.s32.totalorder %v2940, %v2941
        %v3355 = vsel %vm3354, %v2940, %v2941
        %v3356 = vand.u32 %v3355, 65535
        %v3357 = vshra.s32 %v3355, 16
        %v3358 = vcvt.s32.f32 %v3356
        %v3359 = vcvt.s32.f32 %v3357
        %3360 = vmin.xlane.f32.xlu0 %v3359
        %v3361 = vpop.xlane.xlu0 %3360
        %vm3362 = vcmp.eq.f32.partialorder %v3359, %v3361
        %v3363 = vsel %vm3362, %v3358, inf
        %3364 = vmin.xlane.f32.xlu0 %v3363
        %v3365 = vpop.xlane.xlu0 %3364
        %v3366 = vcvt.f32.s32 %v3365
        %v3367 = vcvt.f32.s32 %v3361
        %v3368 = vshll.u32 %v3367, 16
        %v3369 = vadd.s32 %v3368, %v3366
        %vm3370 = vcmp.lt.s32.totalorder %v2942, %v2943
        %v3371 = vsel %vm3370, %v2942, %v2943
        %v3372 = vand.u32 %v3371, 65535
        %v3373 = vshra.s32 %v3371, 16
        %v3374 = vcvt.s32.f32 %v3372
        %v3375 = vcvt.s32.f32 %v3373
        %3376 = vmin.xlane.f32.xlu0 %v3375
        %v3377 = vpop.xlane.xlu0 %3376
        %vm3378 = vcmp.eq.f32.partialorder %v3375, %v3377
        %v3379 = vsel %vm3378, %v3374, inf
        %3380 = vmin.xlane.f32.xlu0 %v3379
        %v3381 = vpop.xlane.xlu0 %3380
        %v3382 = vcvt.f32.s32 %v3381
        %v3383 = vcvt.f32.s32 %v3377
        %v3384 = vshll.u32 %v3383, 16
        %v3385 = vadd.s32 %v3384, %v3382
        %vm3386 = vcmp.lt.s32.totalorder %v2944, %v2945
        %v3387 = vsel %vm3386, %v2944, %v2945
        %v3388 = vand.u32 %v3387, 65535
        %v3389 = vshra.s32 %v3387, 16
        %v3390 = vcvt.s32.f32 %v3388
        %v3391 = vcvt.s32.f32 %v3389
        %3392 = vmin.xlane.f32.xlu0 %v3391
        %v3393 = vpop.xlane.xlu0 %3392
        %vm3394 = vcmp.eq.f32.partialorder %v3391, %v3393
        %v3395 = vsel %vm3394, %v3390, inf
        %3396 = vmin.xlane.f32.xlu0 %v3395
        %v3397 = vpop.xlane.xlu0 %3396
        %v3398 = vcvt.f32.s32 %v3397
        %v3399 = vcvt.f32.s32 %v3393
        %v3400 = vshll.u32 %v3399, 16
        %v3401 = vadd.s32 %v3400, %v3398
        %vm3402 = vcmp.lt.s32.totalorder %v2946, %v2947
        %v3403 = vsel %vm3402, %v2946, %v2947
        %v3404 = vand.u32 %v3403, 65535
        %v3405 = vshra.s32 %v3403, 16
        %v3406 = vcvt.s32.f32 %v3404
        %v3407 = vcvt.s32.f32 %v3405
        %3408 = vmin.xlane.f32.xlu0 %v3407
        %v3409 = vpop.xlane.xlu0 %3408
        %vm3410 = vcmp.eq.f32.partialorder %v3407, %v3409
        %v3411 = vsel %vm3410, %v3406, inf
        %3412 = vmin.xlane.f32.xlu0 %v3411
        %v3413 = vpop.xlane.xlu0 %3412
        %v3414 = vcvt.f32.s32 %v3413
        %v3415 = vcvt.f32.s32 %v3409
        %v3416 = vshll.u32 %v3415, 16
        %v3417 = vadd.s32 %v3416, %v3414
        %vm3418 = vcmp.lt.s32.totalorder %v2948, %v2949
        %v3419 = vsel %vm3418, %v2948, %v2949
        %v3420 = vand.u32 %v3419, 65535
        %v3421 = vshra.s32 %v3419, 16
        %v3422 = vcvt.s32.f32 %v3420
        %v3423 = vcvt.s32.f32 %v3421
        %3424 = vmin.xlane.f32.xlu0 %v3423
        %v3425 = vpop.xlane.xlu0 %3424
        %vm3426 = vcmp.eq.f32.partialorder %v3423, %v3425
        %v3427 = vsel %vm3426, %v3422, inf
        %3428 = vmin.xlane.f32.xlu0 %v3427
        %v3429 = vpop.xlane.xlu0 %3428
        %v3430 = vcvt.f32.s32 %v3429
        %v3431 = vcvt.f32.s32 %v3425
        %v3432 = vshll.u32 %v3431, 16
        %v3433 = vadd.s32 %v3432, %v3430
        %vm3434 = vcmp.lt.s32.totalorder %v2950, %v2951
        %v3435 = vsel %vm3434, %v2950, %v2951
        %v3436 = vand.u32 %v3435, 65535
        %v3437 = vshra.s32 %v3435, 16
        %v3438 = vcvt.s32.f32 %v3436
        %v3439 = vcvt.s32.f32 %v3437
        %3440 = vmin.xlane.f32.xlu0 %v3439
        %v3441 = vpop.xlane.xlu0 %3440
        %vm3442 = vcmp.eq.f32.partialorder %v3439, %v3441
        %v3443 = vsel %vm3442, %v3438, inf
        %3444 = vmin.xlane.f32.xlu0 %v3443
        %v3445 = vpop.xlane.xlu0 %3444
        %v3446 = vcvt.f32.s32 %v3445
        %v3447 = vcvt.f32.s32 %v3441
        %v3448 = vshll.u32 %v3447, 16
        %v3449 = vadd.s32 %v3448, %v3446
        %vm3450 = vcmp.lt.s32.totalorder %v2952, %v2953
        %v3451 = vsel %vm3450, %v2952, %v2953
        %v3452 = vand.u32 %v3451, 65535
        %v3453 = vshra.s32 %v3451, 16
        %v3454 = vcvt.s32.f32 %v3452
        %v3455 = vcvt.s32.f32 %v3453
        %3456 = vmin.xlane.f32.xlu0 %v3455
        %v3457 = vpop.xlane.xlu0 %3456
        %vm3458 = vcmp.eq.f32.partialorder %v3455, %v3457
        %v3459 = vsel %vm3458, %v3454, inf
        %3460 = vmin.xlane.f32.xlu0 %v3459
        %v3461 = vpop.xlane.xlu0 %3460
        %v3462 = vcvt.f32.s32 %v3461
        %v3463 = vcvt.f32.s32 %v3457
        %v3464 = vshll.u32 %v3463, 16
        %v3465 = vadd.s32 %v3464, %v3462
        %vm3466 = vcmp.eq.s32.totalorder %v1511, %v2969
        %vm3467 = vcmp.eq.s32.totalorder %v1512, %v2969
        %vm3468 = vcmp.eq.s32.totalorder %v1511, %v2985
        %vm3469 = vcmp.eq.s32.totalorder %v1512, %v2985
        %vm3470 = vcmp.eq.s32.totalorder %v1511, %v3001
        %vm3471 = vcmp.eq.s32.totalorder %v1512, %v3001
        %vm3472 = vcmp.eq.s32.totalorder %v1511, %v3017
        %vm3473 = vcmp.eq.s32.totalorder %v1512, %v3017
        %vm3474 = vcmp.eq.s32.totalorder %v1511, %v3033
        %vm3475 = vcmp.eq.s32.totalorder %v1512, %v3033
        %vm3476 = vcmp.eq.s32.totalorder %v1511, %v3049
        %vm3477 = vcmp.eq.s32.totalorder %v1512, %v3049
        %vm3478 = vcmp.eq.s32.totalorder %v1511, %v3065
        %vm3479 = vcmp.eq.s32.totalorder %v1512, %v3065
        %vm3480 = vcmp.eq.s32.totalorder %v1511, %v3081
        %vm3481 = vcmp.eq.s32.totalorder %v1512, %v3081
        %vm3482 = vcmp.eq.s32.totalorder %v1511, %v3097
        %vm3483 = vcmp.eq.s32.totalorder %v1512, %v3097
        %vm3484 = vcmp.eq.s32.totalorder %v1511, %v3113
        %vm3485 = vcmp.eq.s32.totalorder %v1512, %v3113
        %vm3486 = vcmp.eq.s32.totalorder %v1511, %v3129
        %vm3487 = vcmp.eq.s32.totalorder %v1512, %v3129
        %vm3488 = vcmp.eq.s32.totalorder %v1511, %v3145
        %vm3489 = vcmp.eq.s32.totalorder %v1512, %v3145
        %vm3490 = vcmp.eq.s32.totalorder %v1511, %v3161
        %vm3491 = vcmp.eq.s32.totalorder %v1512, %v3161
        %vm3492 = vcmp.eq.s32.totalorder %v1511, %v3177
        %vm3493 = vcmp.eq.s32.totalorder %v1512, %v3177
        %vm3494 = vcmp.eq.s32.totalorder %v1511, %v3193
        %vm3495 = vcmp.eq.s32.totalorder %v1512, %v3193
        %vm3496 = vcmp.eq.s32.totalorder %v1511, %v3209
        %vm3497 = vcmp.eq.s32.totalorder %v1512, %v3209
        %vm3498 = vcmp.eq.s32.totalorder %v1511, %v3225
        %vm3499 = vcmp.eq.s32.totalorder %v1512, %v3225
        %vm3500 = vcmp.eq.s32.totalorder %v1511, %v3241
        %vm3501 = vcmp.eq.s32.totalorder %v1512, %v3241
        %vm3502 = vcmp.eq.s32.totalorder %v1511, %v3257
        %vm3503 = vcmp.eq.s32.totalorder %v1512, %v3257
        %vm3504 = vcmp.eq.s32.totalorder %v1511, %v3273
        %vm3505 = vcmp.eq.s32.totalorder %v1512, %v3273
        %vm3506 = vcmp.eq.s32.totalorder %v1511, %v3289
        %vm3507 = vcmp.eq.s32.totalorder %v1512, %v3289
        %vm3508 = vcmp.eq.s32.totalorder %v1511, %v3305
        %vm3509 = vcmp.eq.s32.totalorder %v1512, %v3305
        %vm3510 = vcmp.eq.s32.totalorder %v1511, %v3321
        %vm3511 = vcmp.eq.s32.totalorder %v1512, %v3321
        %vm3512 = vcmp.eq.s32.totalorder %v1511, %v3337
        %vm3513 = vcmp.eq.s32.totalorder %v1512, %v3337
        %vm3514 = vcmp.eq.s32.totalorder %v1511, %v3353
        %vm3515 = vcmp.eq.s32.totalorder %v1512, %v3353
        %vm3516 = vcmp.eq.s32.totalorder %v1511, %v3369
        %vm3517 = vcmp.eq.s32.totalorder %v1512, %v3369
        %vm3518 = vcmp.eq.s32.totalorder %v1511, %v3385
        %vm3519 = vcmp.eq.s32.totalorder %v1512, %v3385
        %vm3520 = vcmp.eq.s32.totalorder %v1511, %v3401
        %vm3521 = vcmp.eq.s32.totalorder %v1512, %v3401
        %vm3522 = vcmp.eq.s32.totalorder %v1511, %v3417
        %vm3523 = vcmp.eq.s32.totalorder %v1512, %v3417
        %vm3524 = vcmp.eq.s32.totalorder %v1511, %v3433
        %vm3525 = vcmp.eq.s32.totalorder %v1512, %v3433
        %vm3526 = vcmp.eq.s32.totalorder %v1511, %v3449
        %vm3527 = vcmp.eq.s32.totalorder %v1512, %v3449
        %vm3528 = vcmp.eq.s32.totalorder %v1511, %v3465
        %vm3529 = vcmp.eq.s32.totalorder %v1512, %v3465
        %v3530 = vsel %vm3466, 1, 0
        %v3531 = vsel %vm3467, 1, 0
        %v3532 = vsel %vm3468, 1, 0
        %v3533 = vsel %vm3469, 1, 0
        %v3534 = vsel %vm3470, 1, 0
        %v3535 = vsel %vm3471, 1, 0
        %v3536 = vsel %vm3472, 1, 0
        %v3537 = vsel %vm3473, 1, 0
        %v3538 = vsel %vm3474, 1, 0
        %v3539 = vsel %vm3475, 1, 0
        %v3540 = vsel %vm3476, 1, 0
        %v3541 = vsel %vm3477, 1, 0
        %v3542 = vsel %vm3478, 1, 0
        %v3543 = vsel %vm3479, 1, 0
        %v3544 = vsel %vm3480, 1, 0
        %v3545 = vsel %vm3481, 1, 0
        %v3546 = vsel %vm3482, 1, 0
        %v3547 = vsel %vm3483, 1, 0
        %v3548 = vsel %vm3484, 1, 0
        %v3549 = vsel %vm3485, 1, 0
        %v3550 = vsel %vm3486, 1, 0
        %v3551 = vsel %vm3487, 1, 0
        %v3552 = vsel %vm3488, 1, 0
        %v3553 = vsel %vm3489, 1, 0
        %v3554 = vsel %vm3490, 1, 0
        %v3555 = vsel %vm3491, 1, 0
        %v3556 = vsel %vm3492, 1, 0
        %v3557 = vsel %vm3493, 1, 0
        %v3558 = vsel %vm3494, 1, 0
        %v3559 = vsel %vm3495, 1, 0
        %v3560 = vsel %vm3496, 1, 0
        %v3561 = vsel %vm3497, 1, 0
        %v3562 = vsel %vm3498, 1, 0
        %v3563 = vsel %vm3499, 1, 0
        %v3564 = vsel %vm3500, 1, 0
        %v3565 = vsel %vm3501, 1, 0
        %v3566 = vsel %vm3502, 1, 0
        %v3567 = vsel %vm3503, 1, 0
        %v3568 = vsel %vm3504, 1, 0
        %v3569 = vsel %vm3505, 1, 0
        %v3570 = vsel %vm3506, 1, 0
        %v3571 = vsel %vm3507, 1, 0
        %v3572 = vsel %vm3508, 1, 0
        %v3573 = vsel %vm3509, 1, 0
        %v3574 = vsel %vm3510, 1, 0
        %v3575 = vsel %vm3511, 1, 0
        %v3576 = vsel %vm3512, 1, 0
        %v3577 = vsel %vm3513, 1, 0
        %v3578 = vsel %vm3514, 1, 0
        %v3579 = vsel %vm3515, 1, 0
        %v3580 = vsel %vm3516, 1, 0
        %v3581 = vsel %vm3517, 1, 0
        %v3582 = vsel %vm3518, 1, 0
        %v3583 = vsel %vm3519, 1, 0
        %v3584 = vsel %vm3520, 1, 0
        %v3585 = vsel %vm3521, 1, 0
        %v3586 = vsel %vm3522, 1, 0
        %v3587 = vsel %vm3523, 1, 0
        %v3588 = vsel %vm3524, 1, 0
        %v3589 = vsel %vm3525, 1, 0
        %v3590 = vsel %vm3526, 1, 0
        %v3591 = vsel %vm3527, 1, 0
        %v3592 = vsel %vm3528, 1, 0
        %v3593 = vsel %vm3529, 1, 0
        %v3594 = vcvt.s32.f32 %v3530
        %v3595 = vcvt.s32.f32 %v3531
        %v3596 = vcvt.s32.f32 %v3532
        %v3597 = vcvt.s32.f32 %v3533
        %v3598 = vcvt.s32.f32 %v3534
        %v3599 = vcvt.s32.f32 %v3535
        %v3600 = vcvt.s32.f32 %v3536
        %v3601 = vcvt.s32.f32 %v3537
        %v3602 = vcvt.s32.f32 %v3538
        %v3603 = vcvt.s32.f32 %v3539
        %v3604 = vcvt.s32.f32 %v3540
        %v3605 = vcvt.s32.f32 %v3541
        %v3606 = vcvt.s32.f32 %v3542
        %v3607 = vcvt.s32.f32 %v3543
        %v3608 = vcvt.s32.f32 %v3544
        %v3609 = vcvt.s32.f32 %v3545
        %v3610 = vcvt.s32.f32 %v3546
        %v3611 = vcvt.s32.f32 %v3547
        %v3612 = vcvt.s32.f32 %v3548
        %v3613 = vcvt.s32.f32 %v3549
        %v3614 = vcvt.s32.f32 %v3550
        %v3615 = vcvt.s32.f32 %v3551
        %v3616 = vcvt.s32.f32 %v3552
        %v3617 = vcvt.s32.f32 %v3553
        %v3618 = vcvt.s32.f32 %v3554
        %v3619 = vcvt.s32.f32 %v3555
        %v3620 = vcvt.s32.f32 %v3556
        %v3621 = vcvt.s32.f32 %v3557
        %v3622 = vcvt.s32.f32 %v3558
        %v3623 = vcvt.s32.f32 %v3559
        %v3624 = vcvt.s32.f32 %v3560
        %v3625 = vcvt.s32.f32 %v3561
        %v3626 = vcvt.s32.f32 %v3562
        %v3627 = vcvt.s32.f32 %v3563
        %v3628 = vcvt.s32.f32 %v3564
        %v3629 = vcvt.s32.f32 %v3565
        %v3630 = vcvt.s32.f32 %v3566
        %v3631 = vcvt.s32.f32 %v3567
        %v3632 = vcvt.s32.f32 %v3568
        %v3633 = vcvt.s32.f32 %v3569
        %v3634 = vcvt.s32.f32 %v3570
        %v3635 = vcvt.s32.f32 %v3571
        %v3636 = vcvt.s32.f32 %v3572
        %v3637 = vcvt.s32.f32 %v3573
        %v3638 = vcvt.s32.f32 %v3574
        %v3639 = vcvt.s32.f32 %v3575
        %v3640 = vcvt.s32.f32 %v3576
        %v3641 = vcvt.s32.f32 %v3577
        %v3642 = vcvt.s32.f32 %v3578
        %v3643 = vcvt.s32.f32 %v3579
        %v3644 = vcvt.s32.f32 %v3580
        %v3645 = vcvt.s32.f32 %v3581
        %v3646 = vcvt.s32.f32 %v3582
        %v3647 = vcvt.s32.f32 %v3583
        %v3648 = vcvt.s32.f32 %v3584
        %v3649 = vcvt.s32.f32 %v3585
        %v3650 = vcvt.s32.f32 %v3586
        %v3651 = vcvt.s32.f32 %v3587
        %v3652 = vcvt.s32.f32 %v3588
        %v3653 = vcvt.s32.f32 %v3589
        %v3654 = vcvt.s32.f32 %v3590
        %v3655 = vcvt.s32.f32 %v3591
        %v3656 = vcvt.s32.f32 %v3592
        %v3657 = vcvt.s32.f32 %v3593
        %3658 = vmatprep.subr.mxu0 0.0
        %3659 = vmatpush1.msra.mxu0 %v1198
        %3660 = vmatprep.subr.mxu0 0.0
        %3661 = vmatpush1.msra.mxu0 %v1193
        %3662 = vmatprep.subr.mxu0 0.0
        %3663 = vmatpush1.msra.mxu0 %v1188
        %3664 = vmatprep.subr.mxu0 0.0
        %3665 = vmatpush1.msra.mxu0 %v1183
        %3666 = vmatprep.subr.mxu0 0.0
        %3667 = vmatpush1.msra.mxu0 %v1178
        %3668 = vmatprep.subr.mxu0 0.0
        %3669 = vmatpush1.msra.mxu0 %v1173
        %3670 = vmatprep.subr.mxu0 0.0
        %3671 = vmatpush1.msra.mxu0 %v1168
        %3672 = vmatprep.subr.mxu0 0.0
        %3673 = vmatpush1.msra.mxu0 %v1163
        %3674 = vmatprep.subr.mxu0 0.0
        %3675 = vmatpush1.msra.mxu0 %v1158
        %3676 = vmatprep.subr.mxu0 0.0
        %3677 = vmatpush1.msra.mxu0 %v1153
        %3678 = vmatprep.subr.mxu0 0.0
        %3679 = vmatpush1.msra.mxu0 %v1148
        %3680 = vmatprep.subr.mxu0 0.0
        %3681 = vmatpush1.msra.mxu0 %v1143
        %3682 = vmatprep.subr.mxu0 0.0
        %3683 = vmatpush1.msra.mxu0 %v1138
        %3684 = vmatprep.subr.mxu0 0.0
        %3685 = vmatpush1.msra.mxu0 %v1133
        %3686 = vmatprep.subr.mxu0 0.0
        %3687 = vmatpush1.msra.mxu0 %v1128
        %3688 = vmatprep.subr.mxu0 0.0
        %3689 = vmatpush1.msra.mxu0 %v1123
        %3690 = vmatprep.subr.mxu0 0.0
        %3691 = vmatpush2.msra.mxu0 %v1278
        %3692 = vmatprep.subr.mxu0 0.0
        %3693 = vmatpush2.msra.mxu0 %v1273
        %3694 = vmatprep.subr.mxu0 0.0
        %3695 = vmatpush2.msra.mxu0 %v1268
        %3696 = vmatprep.subr.mxu0 0.0
        %3697 = vmatpush2.msra.mxu0 %v1263
        %3698 = vmatprep.subr.mxu0 0.0
        %3699 = vmatpush2.msra.mxu0 %v1258
        %3700 = vmatprep.subr.mxu0 0.0
        %3701 = vmatpush2.msra.mxu0 %v1253
        %3702 = vmatprep.subr.mxu0 0.0
        %3703 = vmatpush2.msra.mxu0 %v1248
        %3704 = vmatprep.subr.mxu0 0.0
        %3705 = vmatpush2.msra.mxu0 %v1243
        %3706 = vmatprep.subr.mxu0 0.0
        %3707 = vmatpush2.msra.mxu0 %v1238
        %3708 = vmatprep.subr.mxu0 0.0
        %3709 = vmatpush2.msra.mxu0 %v1233
        %3710 = vmatprep.subr.mxu0 0.0
        %3711 = vmatpush2.msra.mxu0 %v1228
        %3712 = vmatprep.subr.mxu0 0.0
        %3713 = vmatpush2.msra.mxu0 %v1223
        %3714 = vmatprep.subr.mxu0 0.0
        %3715 = vmatpush2.msra.mxu0 %v1218
        %3716 = vmatprep.subr.mxu0 0.0
        %3717 = vmatpush2.msra.mxu0 %v1213
        %3718 = vmatprep.subr.mxu0 0.0
        %3719 = vmatpush2.msra.mxu0 %v1208
        %3720 = vmatprep.subr.mxu0 0.0
        %3721 = vmatpush2.msra.mxu0 %v1203
        %3722 = vmatprep.mubr.f32.mxu0 %v3595
        %3723 = vmatmul.mubr.f32.gmra.mxu0 %v3594
        %v3724 = vpop.f32.mrf.mxu0
        %v3725 = vadd.f32 0.0, %v3724
        %v3726 = vpop.f32.mrf.mxu0
        %3727 = vmatprep.mubr.f32.mxu0 %v3597
        %3728 = vmatmul.mubr.f32.gmra.mxu0 %v3596
        %v3729 = vpop.f32.mrf.mxu0
        %v3730 = vadd.f32 0.0, %v3729
        %v3731 = vpop.f32.mrf.mxu0
        %3732 = vmatprep.mubr.f32.mxu0 %v3599
        %3733 = vmatmul.mubr.f32.gmra.mxu0 %v3598
        %v3734 = vpop.f32.mrf.mxu0
        %v3735 = vadd.f32 0.0, %v3734
        %v3736 = vpop.f32.mrf.mxu0
        %3737 = vmatprep.mubr.f32.mxu0 %v3601
        %3738 = vmatmul.mubr.f32.gmra.mxu0 %v3600
        %v3739 = vpop.f32.mrf.mxu0
        %v3740 = vadd.f32 0.0, %v3739
        %v3741 = vpop.f32.mrf.mxu0
        %3742 = vmatprep.mubr.f32.mxu0 %v3603
        %3743 = vmatmul.mubr.f32.gmra.mxu0 %v3602
        %v3744 = vpop.f32.mrf.mxu0
        %v3745 = vadd.f32 0.0, %v3744
        %v3746 = vpop.f32.mrf.mxu0
        %3747 = vmatprep.mubr.f32.mxu0 %v3605
        %3748 = vmatmul.mubr.f32.gmra.mxu0 %v3604
        %v3749 = vpop.f32.mrf.mxu0
        %v3750 = vadd.f32 0.0, %v3749
        %v3751 = vpop.f32.mrf.mxu0
        %3752 = vmatprep.mubr.f32.mxu0 %v3607
        %3753 = vmatmul.mubr.f32.gmra.mxu0 %v3606
        %v3754 = vpop.f32.mrf.mxu0
        %v3755 = vadd.f32 0.0, %v3754
        %v3756 = vpop.f32.mrf.mxu0
        %3757 = vmatprep.mubr.f32.mxu0 %v3609
        %3758 = vmatmul.mubr.f32.gmra.mxu0 %v3608
        %v3759 = vpop.f32.mrf.mxu0
        %v3760 = vadd.f32 0.0, %v3759
        %v3761 = vpop.f32.mrf.mxu0
        %3762 = vmatprep.mubr.f32.mxu0 %v3611
        %3763 = vmatmul.mubr.f32.gmra.mxu0 %v3610
        %v3764 = vpop.f32.mrf.mxu0
        %v3765 = vadd.f32 0.0, %v3764
        %v3766 = vpop.f32.mrf.mxu0
        %3767 = vmatprep.mubr.f32.mxu0 %v3613
        %3768 = vmatmul.mubr.f32.gmra.mxu0 %v3612
        %v3769 = vpop.f32.mrf.mxu0
        %v3770 = vadd.f32 0.0, %v3769
        %v3771 = vpop.f32.mrf.mxu0
        %3772 = vmatprep.mubr.f32.mxu0 %v3615
        %3773 = vmatmul.mubr.f32.gmra.mxu0 %v3614
        %v3774 = vpop.f32.mrf.mxu0
        %v3775 = vadd.f32 0.0, %v3774
        %v3776 = vpop.f32.mrf.mxu0
        %3777 = vmatprep.mubr.f32.mxu0 %v3617
        %3778 = vmatmul.mubr.f32.gmra.mxu0 %v3616
        %v3779 = vpop.f32.mrf.mxu0
        %v3780 = vadd.f32 0.0, %v3779
        %v3781 = vpop.f32.mrf.mxu0
        %3782 = vmatprep.mubr.f32.mxu0 %v3619
        %3783 = vmatmul.mubr.f32.gmra.mxu0 %v3618
        %v3784 = vpop.f32.mrf.mxu0
        %v3785 = vadd.f32 0.0, %v3784
        %v3786 = vpop.f32.mrf.mxu0
        %3787 = vmatprep.mubr.f32.mxu0 %v3621
        %3788 = vmatmul.mubr.f32.gmra.mxu0 %v3620
        %v3789 = vpop.f32.mrf.mxu0
        %v3790 = vadd.f32 0.0, %v3789
        %v3791 = vpop.f32.mrf.mxu0
        %3792 = vmatprep.mubr.f32.mxu0 %v3623
        %3793 = vmatmul.mubr.f32.gmra.mxu0 %v3622
        %v3794 = vpop.f32.mrf.mxu0
        %v3795 = vadd.f32 0.0, %v3794
        %v3796 = vpop.f32.mrf.mxu0
        %3797 = vmatprep.mubr.f32.mxu0 %v3625
        %3798 = vmatmul.mubr.f32.gmra.mxu0 %v3624
        %v3799 = vpop.f32.mrf.mxu0
        %v3800 = vadd.f32 0.0, %v3799
        %v3801 = vpop.f32.mrf.mxu0
        %3802 = vmatprep.mubr.f32.mxu0 %v3627
        %3803 = vmatmul.mubr.f32.gmra.mxu0 %v3626
        %v3804 = vpop.f32.mrf.mxu0
        %v3805 = vadd.f32 0.0, %v3804
        %v3806 = vpop.f32.mrf.mxu0
        %3807 = vmatprep.mubr.f32.mxu0 %v3629
        %3808 = vmatmul.mubr.f32.gmra.mxu0 %v3628
        %v3809 = vpop.f32.mrf.mxu0
        %v3810 = vadd.f32 0.0, %v3809
        %v3811 = vpop.f32.mrf.mxu0
        %3812 = vmatprep.mubr.f32.mxu0 %v3631
        %3813 = vmatmul.mubr.f32.gmra.mxu0 %v3630
        %v3814 = vpop.f32.mrf.mxu0
        %v3815 = vadd.f32 0.0, %v3814
        %v3816 = vpop.f32.mrf.mxu0
        %3817 = vmatprep.mubr.f32.mxu0 %v3633
        %3818 = vmatmul.mubr.f32.gmra.mxu0 %v3632
        %v3819 = vpop.f32.mrf.mxu0
        %v3820 = vadd.f32 0.0, %v3819
        %v3821 = vpop.f32.mrf.mxu0
        %3822 = vmatprep.mubr.f32.mxu0 %v3635
        %3823 = vmatmul.mubr.f32.gmra.mxu0 %v3634
        %v3824 = vpop.f32.mrf.mxu0
        %v3825 = vadd.f32 0.0, %v3824
        %v3826 = vpop.f32.mrf.mxu0
        %3827 = vmatprep.mubr.f32.mxu0 %v3637
        %3828 = vmatmul.mubr.f32.gmra.mxu0 %v3636
        %v3829 = vpop.f32.mrf.mxu0
        %v3830 = vadd.f32 0.0, %v3829
        %v3831 = vpop.f32.mrf.mxu0
        %3832 = vmatprep.mubr.f32.mxu0 %v3639
        %3833 = vmatmul.mubr.f32.gmra.mxu0 %v3638
        %v3834 = vpop.f32.mrf.mxu0
        %v3835 = vadd.f32 0.0, %v3834
        %v3836 = vpop.f32.mrf.mxu0
        %3837 = vmatprep.mubr.f32.mxu0 %v3641
        %3838 = vmatmul.mubr.f32.gmra.mxu0 %v3640
        %v3839 = vpop.f32.mrf.mxu0
        %v3840 = vadd.f32 0.0, %v3839
        %v3841 = vpop.f32.mrf.mxu0
        %3842 = vmatprep.mubr.f32.mxu0 %v3643
        %3843 = vmatmul.mubr.f32.gmra.mxu0 %v3642
        %v3844 = vpop.f32.mrf.mxu0
        %v3845 = vadd.f32 0.0, %v3844
        %v3846 = vpop.f32.mrf.mxu0
        %3847 = vmatprep.mubr.f32.mxu0 %v3645
        %3848 = vmatmul.mubr.f32.gmra.mxu0 %v3644
        %v3849 = vpop.f32.mrf.mxu0
        %v3850 = vadd.f32 0.0, %v3849
        %v3851 = vpop.f32.mrf.mxu0
        %3852 = vmatprep.mubr.f32.mxu0 %v3647
        %3853 = vmatmul.mubr.f32.gmra.mxu0 %v3646
        %v3854 = vpop.f32.mrf.mxu0
        %v3855 = vadd.f32 0.0, %v3854
        %v3856 = vpop.f32.mrf.mxu0
        %3857 = vmatprep.mubr.f32.mxu0 %v3649
        %3858 = vmatmul.mubr.f32.gmra.mxu0 %v3648
        %v3859 = vpop.f32.mrf.mxu0
        %v3860 = vadd.f32 0.0, %v3859
        %v3861 = vpop.f32.mrf.mxu0
        %3862 = vmatprep.mubr.f32.mxu0 %v3651
        %3863 = vmatmul.mubr.f32.gmra.mxu0 %v3650
        %v3864 = vpop.f32.mrf.mxu0
        %v3865 = vadd.f32 0.0, %v3864
        %v3866 = vpop.f32.mrf.mxu0
        %3867 = vmatprep.mubr.f32.mxu0 %v3653
        %3868 = vmatmul.mubr.f32.gmra.mxu0 %v3652
        %v3869 = vpop.f32.mrf.mxu0
        %v3870 = vadd.f32 0.0, %v3869
        %v3871 = vpop.f32.mrf.mxu0
        %3872 = vmatprep.mubr.f32.mxu0 %v3655
        %3873 = vmatmul.mubr.f32.gmra.mxu0 %v3654
        %v3874 = vpop.f32.mrf.mxu0
        %v3875 = vadd.f32 0.0, %v3874
        %v3876 = vpop.f32.mrf.mxu0
        %3877 = vmatprep.mubr.f32.mxu0 %v3657
        %3878 = vmatmul.mubr.f32.gmra.mxu0 %v3656
        %v3879 = vpop.f32.mrf.mxu0
        %v3880 = vadd.f32 0.0, %v3879
        %v3881 = vpop.f32.mrf.mxu0
        %3882 = vdwg.mxu0
        %v3883 = vsel %vm3466, -inf, %v2666
        %v3884 = vsel %vm3467, -inf, %v2667
        %v3885 = vsel %vm3468, -inf, %v2668
        %v3886 = vsel %vm3469, -inf, %v2669
        %v3887 = vsel %vm3470, -inf, %v2670
        %v3888 = vsel %vm3471, -inf, %v2671
        %v3889 = vsel %vm3472, -inf, %v2672
        %v3890 = vsel %vm3473, -inf, %v2673
        %v3891 = vsel %vm3474, -inf, %v2674
        %v3892 = vsel %vm3475, -inf, %v2675
        %v3893 = vsel %vm3476, -inf, %v2676
        %v3894 = vsel %vm3477, -inf, %v2677
        %v3895 = vsel %vm3478, -inf, %v2678
        %v3896 = vsel %vm3479, -inf, %v2679
        %v3897 = vsel %vm3480, -inf, %v2680
        %v3898 = vsel %vm3481, -inf, %v2681
        %v3899 = vsel %vm3482, -inf, %v2682
        %v3900 = vsel %vm3483, -inf, %v2683
        %v3901 = vsel %vm3484, -inf, %v2684
        %v3902 = vsel %vm3485, -inf, %v2685
        %v3903 = vsel %vm3486, -inf, %v2686
        %v3904 = vsel %vm3487, -inf, %v2687
        %v3905 = vsel %vm3488, -inf, %v2688
        %v3906 = vsel %vm3489, -inf, %v2689
        %v3907 = vsel %vm3490, -inf, %v2690
        %v3908 = vsel %vm3491, -inf, %v2691
        %v3909 = vsel %vm3492, -inf, %v2692
        %v3910 = vsel %vm3493, -inf, %v2693
        %v3911 = vsel %vm3494, -inf, %v2694
        %v3912 = vsel %vm3495, -inf, %v2695
        %v3913 = vsel %vm3496, -inf, %v2696
        %v3914 = vsel %vm3497, -inf, %v2697
        %v3915 = vsel %vm3498, -inf, %v2698
        %v3916 = vsel %vm3499, -inf, %v2699
        %v3917 = vsel %vm3500, -inf, %v2700
        %v3918 = vsel %vm3501, -inf, %v2701
        %v3919 = vsel %vm3502, -inf, %v2702
        %v3920 = vsel %vm3503, -inf, %v2703
        %v3921 = vsel %vm3504, -inf, %v2704
        %v3922 = vsel %vm3505, -inf, %v2705
        %v3923 = vsel %vm3506, -inf, %v2706
        %v3924 = vsel %vm3507, -inf, %v2707
        %v3925 = vsel %vm3508, -inf, %v2708
        %v3926 = vsel %vm3509, -inf, %v2709
        %v3927 = vsel %vm3510, -inf, %v2710
        %v3928 = vsel %vm3511, -inf, %v2711
        %v3929 = vsel %vm3512, -inf, %v2712
        %v3930 = vsel %vm3513, -inf, %v2713
        %v3931 = vsel %vm3514, -inf, %v2714
        %v3932 = vsel %vm3515, -inf, %v2715
        %v3933 = vsel %vm3516, -inf, %v2716
        %v3934 = vsel %vm3517, -inf, %v2717
        %v3935 = vsel %vm3518, -inf, %v2718
        %v3936 = vsel %vm3519, -inf, %v2719
        %v3937 = vsel %vm3520, -inf, %v2720
        %v3938 = vsel %vm3521, -inf, %v2721
        %v3939 = vsel %vm3522, -inf, %v2722
        %v3940 = vsel %vm3523, -inf, %v2723
        %v3941 = vsel %vm3524, -inf, %v2724
        %v3942 = vsel %vm3525, -inf, %v2725
        %v3943 = vsel %vm3526, -inf, %v2726
        %v3944 = vsel %vm3527, -inf, %v2727
        %v3945 = vsel %vm3528, -inf, %v2728
        %v3946 = vsel %vm3529, -inf, %v2729
        %v3947 = vmax.f32 %v3883, %v3884
        %3948 = vmax.xlane.f32.xlu0 %v3947
        %v3949 = vpop.xlane.xlu0 %3948
        %v3950 = vmax.f32 %v3885, %v3886
        %3951 = vmax.xlane.f32.xlu0 %v3950
        %v3952 = vpop.xlane.xlu0 %3951
        %v3953 = vmax.f32 %v3887, %v3888
        %3954 = vmax.xlane.f32.xlu0 %v3953
        %v3955 = vpop.xlane.xlu0 %3954
        %v3956 = vmax.f32 %v3889, %v3890
        %3957 = vmax.xlane.f32.xlu0 %v3956
        %v3958 = vpop.xlane.xlu0 %3957
        %v3959 = vmax.f32 %v3891, %v3892
        %3960 = vmax.xlane.f32.xlu0 %v3959
        %v3961 = vpop.xlane.xlu0 %3960
        %v3962 = vmax.f32 %v3893, %v3894
        %3963 = vmax.xlane.f32.xlu0 %v3962
        %v3964 = vpop.xlane.xlu0 %3963
        %v3965 = vmax.f32 %v3895, %v3896
        %3966 = vmax.xlane.f32.xlu0 %v3965
        %v3967 = vpop.xlane.xlu0 %3966
        %v3968 = vmax.f32 %v3897, %v3898
        %3969 = vmax.xlane.f32.xlu0 %v3968
        %v3970 = vpop.xlane.xlu0 %3969
        %v3971 = vmax.f32 %v3899, %v3900
        %3972 = vmax.xlane.f32.xlu0 %v3971
        %v3973 = vpop.xlane.xlu0 %3972
        %v3974 = vmax.f32 %v3901, %v3902
        %3975 = vmax.xlane.f32.xlu0 %v3974
        %v3976 = vpop.xlane.xlu0 %3975
        %v3977 = vmax.f32 %v3903, %v3904
        %3978 = vmax.xlane.f32.xlu0 %v3977
        %v3979 = vpop.xlane.xlu0 %3978
        %v3980 = vmax.f32 %v3905, %v3906
        %3981 = vmax.xlane.f32.xlu0 %v3980
        %v3982 = vpop.xlane.xlu0 %3981
        %v3983 = vmax.f32 %v3907, %v3908
        %3984 = vmax.xlane.f32.xlu0 %v3983
        %v3985 = vpop.xlane.xlu0 %3984
        %v3986 = vmax.f32 %v3909, %v3910
        %3987 = vmax.xlane.f32.xlu0 %v3986
        %v3988 = vpop.xlane.xlu0 %3987
        %v3989 = vmax.f32 %v3911, %v3912
        %3990 = vmax.xlane.f32.xlu0 %v3989
        %v3991 = vpop.xlane.xlu0 %3990
        %v3992 = vmax.f32 %v3913, %v3914
        %3993 = vmax.xlane.f32.xlu0 %v3992
        %v3994 = vpop.xlane.xlu0 %3993
        %v3995 = vmax.f32 %v3915, %v3916
        %3996 = vmax.xlane.f32.xlu0 %v3995
        %v3997 = vpop.xlane.xlu0 %3996
        %v3998 = vmax.f32 %v3917, %v3918
        %3999 = vmax.xlane.f32.xlu0 %v3998
        %v4000 = vpop.xlane.xlu0 %3999
        %v4001 = vmax.f32 %v3919, %v3920
        %4002 = vmax.xlane.f32.xlu0 %v4001
        %v4003 = vpop.xlane.xlu0 %4002
        %v4004 = vmax.f32 %v3921, %v3922
        %4005 = vmax.xlane.f32.xlu0 %v4004
        %v4006 = vpop.xlane.xlu0 %4005
        %v4007 = vmax.f32 %v3923, %v3924
        %4008 = vmax.xlane.f32.xlu0 %v4007
        %v4009 = vpop.xlane.xlu0 %4008
        %v4010 = vmax.f32 %v3925, %v3926
        %4011 = vmax.xlane.f32.xlu0 %v4010
        %v4012 = vpop.xlane.xlu0 %4011
        %v4013 = vmax.f32 %v3927, %v3928
        %4014 = vmax.xlane.f32.xlu0 %v4013
        %v4015 = vpop.xlane.xlu0 %4014
        %v4016 = vmax.f32 %v3929, %v3930
        %4017 = vmax.xlane.f32.xlu0 %v4016
        %v4018 = vpop.xlane.xlu0 %4017
        %v4019 = vmax.f32 %v3931, %v3932
        %4020 = vmax.xlane.f32.xlu0 %v4019
        %v4021 = vpop.xlane.xlu0 %4020
        %v4022 = vmax.f32 %v3933, %v3934
        %4023 = vmax.xlane.f32.xlu0 %v4022
        %v4024 = vpop.xlane.xlu0 %4023
        %v4025 = vmax.f32 %v3935, %v3936
        %4026 = vmax.xlane.f32.xlu0 %v4025
        %v4027 = vpop.xlane.xlu0 %4026
        %v4028 = vmax.f32 %v3937, %v3938
        %4029 = vmax.xlane.f32.xlu0 %v4028
        %v4030 = vpop.xlane.xlu0 %4029
        %v4031 = vmax.f32 %v3939, %v3940
        %4032 = vmax.xlane.f32.xlu0 %v4031
        %v4033 = vpop.xlane.xlu0 %4032
        %v4034 = vmax.f32 %v3941, %v3942
        %4035 = vmax.xlane.f32.xlu0 %v4034
        %v4036 = vpop.xlane.xlu0 %4035
        %v4037 = vmax.f32 %v3943, %v3944
        %4038 = vmax.xlane.f32.xlu0 %v4037
        %v4039 = vpop.xlane.xlu0 %4038
        %v4040 = vmax.f32 %v3945, %v3946
        %4041 = vmax.xlane.f32.xlu0 %v4040
        %v4042 = vpop.xlane.xlu0 %4041
        %vm4043 = vcmp.eq.f32.partialorder %v3883, %v3949
        %vm4044 = vcmp.eq.f32.partialorder %v3884, %v3949
        %vm4045 = vcmp.eq.f32.partialorder %v3885, %v3952
        %vm4046 = vcmp.eq.f32.partialorder %v3886, %v3952
        %vm4047 = vcmp.eq.f32.partialorder %v3887, %v3955
        %vm4048 = vcmp.eq.f32.partialorder %v3888, %v3955
        %vm4049 = vcmp.eq.f32.partialorder %v3889, %v3958
        %vm4050 = vcmp.eq.f32.partialorder %v3890, %v3958
        %vm4051 = vcmp.eq.f32.partialorder %v3891, %v3961
        %vm4052 = vcmp.eq.f32.partialorder %v3892, %v3961
        %vm4053 = vcmp.eq.f32.partialorder %v3893, %v3964
        %vm4054 = vcmp.eq.f32.partialorder %v3894, %v3964
        %vm4055 = vcmp.eq.f32.partialorder %v3895, %v3967
        %vm4056 = vcmp.eq.f32.partialorder %v3896, %v3967
        %vm4057 = vcmp.eq.f32.partialorder %v3897, %v3970
        %vm4058 = vcmp.eq.f32.partialorder %v3898, %v3970
        %vm4059 = vcmp.eq.f32.partialorder %v3899, %v3973
        %vm4060 = vcmp.eq.f32.partialorder %v3900, %v3973
        %vm4061 = vcmp.eq.f32.partialorder %v3901, %v3976
        %vm4062 = vcmp.eq.f32.partialorder %v3902, %v3976
        %vm4063 = vcmp.eq.f32.partialorder %v3903, %v3979
        %vm4064 = vcmp.eq.f32.partialorder %v3904, %v3979
        %vm4065 = vcmp.eq.f32.partialorder %v3905, %v3982
        %vm4066 = vcmp.eq.f32.partialorder %v3906, %v3982
        %vm4067 = vcmp.eq.f32.partialorder %v3907, %v3985
        %vm4068 = vcmp.eq.f32.partialorder %v3908, %v3985
        %vm4069 = vcmp.eq.f32.partialorder %v3909, %v3988
        %vm4070 = vcmp.eq.f32.partialorder %v3910, %v3988
        %vm4071 = vcmp.eq.f32.partialorder %v3911, %v3991
        %vm4072 = vcmp.eq.f32.partialorder %v3912, %v3991
        %vm4073 = vcmp.eq.f32.partialorder %v3913, %v3994
        %vm4074 = vcmp.eq.f32.partialorder %v3914, %v3994
        %vm4075 = vcmp.eq.f32.partialorder %v3915, %v3997
        %vm4076 = vcmp.eq.f32.partialorder %v3916, %v3997
        %vm4077 = vcmp.eq.f32.partialorder %v3917, %v4000
        %vm4078 = vcmp.eq.f32.partialorder %v3918, %v4000
        %vm4079 = vcmp.eq.f32.partialorder %v3919, %v4003
        %vm4080 = vcmp.eq.f32.partialorder %v3920, %v4003
        %vm4081 = vcmp.eq.f32.partialorder %v3921, %v4006
        %vm4082 = vcmp.eq.f32.partialorder %v3922, %v4006
        %vm4083 = vcmp.eq.f32.partialorder %v3923, %v4009
        %vm4084 = vcmp.eq.f32.partialorder %v3924, %v4009
        %vm4085 = vcmp.eq.f32.partialorder %v3925, %v4012
        %vm4086 = vcmp.eq.f32.partialorder %v3926, %v4012
        %vm4087 = vcmp.eq.f32.partialorder %v3927, %v4015
        %vm4088 = vcmp.eq.f32.partialorder %v3928, %v4015
        %vm4089 = vcmp.eq.f32.partialorder %v3929, %v4018
        %vm4090 = vcmp.eq.f32.partialorder %v3930, %v4018
        %vm4091 = vcmp.eq.f32.partialorder %v3931, %v4021
        %vm4092 = vcmp.eq.f32.partialorder %v3932, %v4021
        %vm4093 = vcmp.eq.f32.partialorder %v3933, %v4024
        %vm4094 = vcmp.eq.f32.partialorder %v3934, %v4024
        %vm4095 = vcmp.eq.f32.partialorder %v3935, %v4027
        %vm4096 = vcmp.eq.f32.partialorder %v3936, %v4027
        %vm4097 = vcmp.eq.f32.partialorder %v3937, %v4030
        %vm4098 = vcmp.eq.f32.partialorder %v3938, %v4030
        %vm4099 = vcmp.eq.f32.partialorder %v3939, %v4033
        %vm4100 = vcmp.eq.f32.partialorder %v3940, %v4033
        %vm4101 = vcmp.eq.f32.partialorder %v3941, %v4036
        %vm4102 = vcmp.eq.f32.partialorder %v3942, %v4036
        %vm4103 = vcmp.eq.f32.partialorder %v3943, %v4039
        %vm4104 = vcmp.eq.f32.partialorder %v3944, %v4039
        %vm4105 = vcmp.eq.f32.partialorder %v3945, %v4042
        %vm4106 = vcmp.eq.f32.partialorder %v3946, %v4042
        %v4107 = vsel %vm4043, %v1511, 256
        %v4108 = vsel %vm4044, %v1512, 256
        %v4109 = vsel %vm4045, %v1511, 256
        %v4110 = vsel %vm4046, %v1512, 256
        %v4111 = vsel %vm4047, %v1511, 256
        %v4112 = vsel %vm4048, %v1512, 256
        %v4113 = vsel %vm4049, %v1511, 256
        %v4114 = vsel %vm4050, %v1512, 256
        %v4115 = vsel %vm4051, %v1511, 256
        %v4116 = vsel %vm4052, %v1512, 256
        %v4117 = vsel %vm4053, %v1511, 256
        %v4118 = vsel %vm4054, %v1512, 256
        %v4119 = vsel %vm4055, %v1511, 256
        %v4120 = vsel %vm4056, %v1512, 256
        %v4121 = vsel %vm4057, %v1511, 256
        %v4122 = vsel %vm4058, %v1512, 256
        %v4123 = vsel %vm4059, %v1511, 256
        %v4124 = vsel %vm4060, %v1512, 256
        %v4125 = vsel %vm4061, %v1511, 256
        %v4126 = vsel %vm4062, %v1512, 256
        %v4127 = vsel %vm4063, %v1511, 256
        %v4128 = vsel %vm4064, %v1512, 256
        %v4129 = vsel %vm4065, %v1511, 256
        %v4130 = vsel %vm4066, %v1512, 256
        %v4131 = vsel %vm4067, %v1511, 256
        %v4132 = vsel %vm4068, %v1512, 256
        %v4133 = vsel %vm4069, %v1511, 256
        %v4134 = vsel %vm4070, %v1512, 256
        %v4135 = vsel %vm4071, %v1511, 256
        %v4136 = vsel %vm4072, %v1512, 256
        %v4137 = vsel %vm4073, %v1511, 256
        %v4138 = vsel %vm4074, %v1512, 256
        %v4139 = vsel %vm4075, %v1511, 256
        %v4140 = vsel %vm4076, %v1512, 256
        %v4141 = vsel %vm4077, %v1511, 256
        %v4142 = vsel %vm4078, %v1512, 256
        %v4143 = vsel %vm4079, %v1511, 256
        %v4144 = vsel %vm4080, %v1512, 256
        %v4145 = vsel %vm4081, %v1511, 256
        %v4146 = vsel %vm4082, %v1512, 256
        %v4147 = vsel %vm4083, %v1511, 256
        %v4148 = vsel %vm4084, %v1512, 256
        %v4149 = vsel %vm4085, %v1511, 256
        %v4150 = vsel %vm4086, %v1512, 256
        %v4151 = vsel %vm4087, %v1511, 256
        %v4152 = vsel %vm4088, %v1512, 256
        %v4153 = vsel %vm4089, %v1511, 256
        %v4154 = vsel %vm4090, %v1512, 256
        %v4155 = vsel %vm4091, %v1511, 256
        %v4156 = vsel %vm4092, %v1512, 256
        %v4157 = vsel %vm4093, %v1511, 256
        %v4158 = vsel %vm4094, %v1512, 256
        %v4159 = vsel %vm4095, %v1511, 256
        %v4160 = vsel %vm4096, %v1512, 256
        %v4161 = vsel %vm4097, %v1511, 256
        %v4162 = vsel %vm4098, %v1512, 256
        %v4163 = vsel %vm4099, %v1511, 256
        %v4164 = vsel %vm4100, %v1512, 256
        %v4165 = vsel %vm4101, %v1511, 256
        %v4166 = vsel %vm4102, %v1512, 256
        %v4167 = vsel %vm4103, %v1511, 256
        %v4168 = vsel %vm4104, %v1512, 256
        %v4169 = vsel %vm4105, %v1511, 256
        %v4170 = vsel %vm4106, %v1512, 256
        %vm4171 = vcmp.lt.s32.totalorder %v4107, %v4108
        %v4172 = vsel %vm4171, %v4107, %v4108
        %v4173 = vand.u32 %v4172, 65535
        %v4174 = vshra.s32 %v4172, 16
        %v4175 = vcvt.s32.f32 %v4173
        %v4176 = vcvt.s32.f32 %v4174
        %4177 = vmin.xlane.f32.xlu0 %v4176
        %v4178 = vpop.xlane.xlu0 %4177
        %vm4179 = vcmp.eq.f32.partialorder %v4176, %v4178
        %v4180 = vsel %vm4179, %v4175, inf
        %4181 = vmin.xlane.f32.xlu0 %v4180
        %v4182 = vpop.xlane.xlu0 %4181
        %v4183 = vcvt.f32.s32 %v4182
        %v4184 = vcvt.f32.s32 %v4178
        %v4185 = vshll.u32 %v4184, 16
        %v4186 = vadd.s32 %v4185, %v4183
        %vm4187 = vcmp.lt.s32.totalorder %v4109, %v4110
        %v4188 = vsel %vm4187, %v4109, %v4110
        %v4189 = vand.u32 %v4188, 65535
        %v4190 = vshra.s32 %v4188, 16
        %v4191 = vcvt.s32.f32 %v4189
        %v4192 = vcvt.s32.f32 %v4190
        %4193 = vmin.xlane.f32.xlu0 %v4192
        %v4194 = vpop.xlane.xlu0 %4193
        %vm4195 = vcmp.eq.f32.partialorder %v4192, %v4194
        %v4196 = vsel %vm4195, %v4191, inf
        %4197 = vmin.xlane.f32.xlu0 %v4196
        %v4198 = vpop.xlane.xlu0 %4197
        %v4199 = vcvt.f32.s32 %v4198
        %v4200 = vcvt.f32.s32 %v4194
        %v4201 = vshll.u32 %v4200, 16
        %v4202 = vadd.s32 %v4201, %v4199
        %vm4203 = vcmp.lt.s32.totalorder %v4111, %v4112
        %v4204 = vsel %vm4203, %v4111, %v4112
        %v4205 = vand.u32 %v4204, 65535
        %v4206 = vshra.s32 %v4204, 16
        %v4207 = vcvt.s32.f32 %v4205
        %v4208 = vcvt.s32.f32 %v4206
        %4209 = vmin.xlane.f32.xlu0 %v4208
        %v4210 = vpop.xlane.xlu0 %4209
        %vm4211 = vcmp.eq.f32.partialorder %v4208, %v4210
        %v4212 = vsel %vm4211, %v4207, inf
        %4213 = vmin.xlane.f32.xlu0 %v4212
        %v4214 = vpop.xlane.xlu0 %4213
        %v4215 = vcvt.f32.s32 %v4214
        %v4216 = vcvt.f32.s32 %v4210
        %v4217 = vshll.u32 %v4216, 16
        %v4218 = vadd.s32 %v4217, %v4215
        %vm4219 = vcmp.lt.s32.totalorder %v4113, %v4114
        %v4220 = vsel %vm4219, %v4113, %v4114
        %v4221 = vand.u32 %v4220, 65535
        %v4222 = vshra.s32 %v4220, 16
        %v4223 = vcvt.s32.f32 %v4221
        %v4224 = vcvt.s32.f32 %v4222
        %4225 = vmin.xlane.f32.xlu0 %v4224
        %v4226 = vpop.xlane.xlu0 %4225
        %vm4227 = vcmp.eq.f32.partialorder %v4224, %v4226
        %v4228 = vsel %vm4227, %v4223, inf
        %4229 = vmin.xlane.f32.xlu0 %v4228
        %v4230 = vpop.xlane.xlu0 %4229
        %v4231 = vcvt.f32.s32 %v4230
        %v4232 = vcvt.f32.s32 %v4226
        %v4233 = vshll.u32 %v4232, 16
        %v4234 = vadd.s32 %v4233, %v4231
        %vm4235 = vcmp.lt.s32.totalorder %v4115, %v4116
        %v4236 = vsel %vm4235, %v4115, %v4116
        %v4237 = vand.u32 %v4236, 65535
        %v4238 = vshra.s32 %v4236, 16
        %v4239 = vcvt.s32.f32 %v4237
        %v4240 = vcvt.s32.f32 %v4238
        %4241 = vmin.xlane.f32.xlu0 %v4240
        %v4242 = vpop.xlane.xlu0 %4241
        %vm4243 = vcmp.eq.f32.partialorder %v4240, %v4242
        %v4244 = vsel %vm4243, %v4239, inf
        %4245 = vmin.xlane.f32.xlu0 %v4244
        %v4246 = vpop.xlane.xlu0 %4245
        %v4247 = vcvt.f32.s32 %v4246
        %v4248 = vcvt.f32.s32 %v4242
        %v4249 = vshll.u32 %v4248, 16
        %v4250 = vadd.s32 %v4249, %v4247
        %vm4251 = vcmp.lt.s32.totalorder %v4117, %v4118
        %v4252 = vsel %vm4251, %v4117, %v4118
        %v4253 = vand.u32 %v4252, 65535
        %v4254 = vshra.s32 %v4252, 16
        %v4255 = vcvt.s32.f32 %v4253
        %v4256 = vcvt.s32.f32 %v4254
        %4257 = vmin.xlane.f32.xlu0 %v4256
        %v4258 = vpop.xlane.xlu0 %4257
        %vm4259 = vcmp.eq.f32.partialorder %v4256, %v4258
        %v4260 = vsel %vm4259, %v4255, inf
        %4261 = vmin.xlane.f32.xlu0 %v4260
        %v4262 = vpop.xlane.xlu0 %4261
        %v4263 = vcvt.f32.s32 %v4262
        %v4264 = vcvt.f32.s32 %v4258
        %v4265 = vshll.u32 %v4264, 16
        %v4266 = vadd.s32 %v4265, %v4263
        %vm4267 = vcmp.lt.s32.totalorder %v4119, %v4120
        %v4268 = vsel %vm4267, %v4119, %v4120
        %v4269 = vand.u32 %v4268, 65535
        %v4270 = vshra.s32 %v4268, 16
        %v4271 = vcvt.s32.f32 %v4269
        %v4272 = vcvt.s32.f32 %v4270
        %4273 = vmin.xlane.f32.xlu0 %v4272
        %v4274 = vpop.xlane.xlu0 %4273
        %vm4275 = vcmp.eq.f32.partialorder %v4272, %v4274
        %v4276 = vsel %vm4275, %v4271, inf
        %4277 = vmin.xlane.f32.xlu0 %v4276
        %v4278 = vpop.xlane.xlu0 %4277
        %v4279 = vcvt.f32.s32 %v4278
        %v4280 = vcvt.f32.s32 %v4274
        %v4281 = vshll.u32 %v4280, 16
        %v4282 = vadd.s32 %v4281, %v4279
        %vm4283 = vcmp.lt.s32.totalorder %v4121, %v4122
        %v4284 = vsel %vm4283, %v4121, %v4122
        %v4285 = vand.u32 %v4284, 65535
        %v4286 = vshra.s32 %v4284, 16
        %v4287 = vcvt.s32.f32 %v4285
        %v4288 = vcvt.s32.f32 %v4286
        %4289 = vmin.xlane.f32.xlu0 %v4288
        %v4290 = vpop.xlane.xlu0 %4289
        %vm4291 = vcmp.eq.f32.partialorder %v4288, %v4290
        %v4292 = vsel %vm4291, %v4287, inf
        %4293 = vmin.xlane.f32.xlu0 %v4292
        %v4294 = vpop.xlane.xlu0 %4293
        %v4295 = vcvt.f32.s32 %v4294
        %v4296 = vcvt.f32.s32 %v4290
        %v4297 = vshll.u32 %v4296, 16
        %v4298 = vadd.s32 %v4297, %v4295
        %vm4299 = vcmp.lt.s32.totalorder %v4123, %v4124
        %v4300 = vsel %vm4299, %v4123, %v4124
        %v4301 = vand.u32 %v4300, 65535
        %v4302 = vshra.s32 %v4300, 16
        %v4303 = vcvt.s32.f32 %v4301
        %v4304 = vcvt.s32.f32 %v4302
        %4305 = vmin.xlane.f32.xlu0 %v4304
        %v4306 = vpop.xlane.xlu0 %4305
        %vm4307 = vcmp.eq.f32.partialorder %v4304, %v4306
        %v4308 = vsel %vm4307, %v4303, inf
        %4309 = vmin.xlane.f32.xlu0 %v4308
        %v4310 = vpop.xlane.xlu0 %4309
        %v4311 = vcvt.f32.s32 %v4310
        %v4312 = vcvt.f32.s32 %v4306
        %v4313 = vshll.u32 %v4312, 16
        %v4314 = vadd.s32 %v4313, %v4311
        %vm4315 = vcmp.lt.s32.totalorder %v4125, %v4126
        %v4316 = vsel %vm4315, %v4125, %v4126
        %v4317 = vand.u32 %v4316, 65535
        %v4318 = vshra.s32 %v4316, 16
        %v4319 = vcvt.s32.f32 %v4317
        %v4320 = vcvt.s32.f32 %v4318
        %4321 = vmin.xlane.f32.xlu0 %v4320
        %v4322 = vpop.xlane.xlu0 %4321
        %vm4323 = vcmp.eq.f32.partialorder %v4320, %v4322
        %v4324 = vsel %vm4323, %v4319, inf
        %4325 = vmin.xlane.f32.xlu0 %v4324
        %v4326 = vpop.xlane.xlu0 %4325
        %v4327 = vcvt.f32.s32 %v4326
        %v4328 = vcvt.f32.s32 %v4322
        %v4329 = vshll.u32 %v4328, 16
        %v4330 = vadd.s32 %v4329, %v4327
        %vm4331 = vcmp.lt.s32.totalorder %v4127, %v4128
        %v4332 = vsel %vm4331, %v4127, %v4128
        %v4333 = vand.u32 %v4332, 65535
        %v4334 = vshra.s32 %v4332, 16
        %v4335 = vcvt.s32.f32 %v4333
        %v4336 = vcvt.s32.f32 %v4334
        %4337 = vmin.xlane.f32.xlu0 %v4336
        %v4338 = vpop.xlane.xlu0 %4337
        %vm4339 = vcmp.eq.f32.partialorder %v4336, %v4338
        %v4340 = vsel %vm4339, %v4335, inf
        %4341 = vmin.xlane.f32.xlu0 %v4340
        %v4342 = vpop.xlane.xlu0 %4341
        %v4343 = vcvt.f32.s32 %v4342
        %v4344 = vcvt.f32.s32 %v4338
        %v4345 = vshll.u32 %v4344, 16
        %v4346 = vadd.s32 %v4345, %v4343
        %vm4347 = vcmp.lt.s32.totalorder %v4129, %v4130
        %v4348 = vsel %vm4347, %v4129, %v4130
        %v4349 = vand.u32 %v4348, 65535
        %v4350 = vshra.s32 %v4348, 16
        %v4351 = vcvt.s32.f32 %v4349
        %v4352 = vcvt.s32.f32 %v4350
        %4353 = vmin.xlane.f32.xlu0 %v4352
        %v4354 = vpop.xlane.xlu0 %4353
        %vm4355 = vcmp.eq.f32.partialorder %v4352, %v4354
        %v4356 = vsel %vm4355, %v4351, inf
        %4357 = vmin.xlane.f32.xlu0 %v4356
        %v4358 = vpop.xlane.xlu0 %4357
        %v4359 = vcvt.f32.s32 %v4358
        %v4360 = vcvt.f32.s32 %v4354
        %v4361 = vshll.u32 %v4360, 16
        %v4362 = vadd.s32 %v4361, %v4359
        %vm4363 = vcmp.lt.s32.totalorder %v4131, %v4132
        %v4364 = vsel %vm4363, %v4131, %v4132
        %v4365 = vand.u32 %v4364, 65535
        %v4366 = vshra.s32 %v4364, 16
        %v4367 = vcvt.s32.f32 %v4365
        %v4368 = vcvt.s32.f32 %v4366
        %4369 = vmin.xlane.f32.xlu0 %v4368
        %v4370 = vpop.xlane.xlu0 %4369
        %vm4371 = vcmp.eq.f32.partialorder %v4368, %v4370
        %v4372 = vsel %vm4371, %v4367, inf
        %4373 = vmin.xlane.f32.xlu0 %v4372
        %v4374 = vpop.xlane.xlu0 %4373
        %v4375 = vcvt.f32.s32 %v4374
        %v4376 = vcvt.f32.s32 %v4370
        %v4377 = vshll.u32 %v4376, 16
        %v4378 = vadd.s32 %v4377, %v4375
        %vm4379 = vcmp.lt.s32.totalorder %v4133, %v4134
        %v4380 = vsel %vm4379, %v4133, %v4134
        %v4381 = vand.u32 %v4380, 65535
        %v4382 = vshra.s32 %v4380, 16
        %v4383 = vcvt.s32.f32 %v4381
        %v4384 = vcvt.s32.f32 %v4382
        %4385 = vmin.xlane.f32.xlu0 %v4384
        %v4386 = vpop.xlane.xlu0 %4385
        %vm4387 = vcmp.eq.f32.partialorder %v4384, %v4386
        %v4388 = vsel %vm4387, %v4383, inf
        %4389 = vmin.xlane.f32.xlu0 %v4388
        %v4390 = vpop.xlane.xlu0 %4389
        %v4391 = vcvt.f32.s32 %v4390
        %v4392 = vcvt.f32.s32 %v4386
        %v4393 = vshll.u32 %v4392, 16
        %v4394 = vadd.s32 %v4393, %v4391
        %vm4395 = vcmp.lt.s32.totalorder %v4135, %v4136
        %v4396 = vsel %vm4395, %v4135, %v4136
        %v4397 = vand.u32 %v4396, 65535
        %v4398 = vshra.s32 %v4396, 16
        %v4399 = vcvt.s32.f32 %v4397
        %v4400 = vcvt.s32.f32 %v4398
        %4401 = vmin.xlane.f32.xlu0 %v4400
        %v4402 = vpop.xlane.xlu0 %4401
        %vm4403 = vcmp.eq.f32.partialorder %v4400, %v4402
        %v4404 = vsel %vm4403, %v4399, inf
        %4405 = vmin.xlane.f32.xlu0 %v4404
        %v4406 = vpop.xlane.xlu0 %4405
        %v4407 = vcvt.f32.s32 %v4406
        %v4408 = vcvt.f32.s32 %v4402
        %v4409 = vshll.u32 %v4408, 16
        %v4410 = vadd.s32 %v4409, %v4407
        %vm4411 = vcmp.lt.s32.totalorder %v4137, %v4138
        %v4412 = vsel %vm4411, %v4137, %v4138
        %v4413 = vand.u32 %v4412, 65535
        %v4414 = vshra.s32 %v4412, 16
        %v4415 = vcvt.s32.f32 %v4413
        %v4416 = vcvt.s32.f32 %v4414
        %4417 = vmin.xlane.f32.xlu0 %v4416
        %v4418 = vpop.xlane.xlu0 %4417
        %vm4419 = vcmp.eq.f32.partialorder %v4416, %v4418
        %v4420 = vsel %vm4419, %v4415, inf
        %4421 = vmin.xlane.f32.xlu0 %v4420
        %v4422 = vpop.xlane.xlu0 %4421
        %v4423 = vcvt.f32.s32 %v4422
        %v4424 = vcvt.f32.s32 %v4418
        %v4425 = vshll.u32 %v4424, 16
        %v4426 = vadd.s32 %v4425, %v4423
        %vm4427 = vcmp.lt.s32.totalorder %v4139, %v4140
        %v4428 = vsel %vm4427, %v4139, %v4140
        %v4429 = vand.u32 %v4428, 65535
        %v4430 = vshra.s32 %v4428, 16
        %v4431 = vcvt.s32.f32 %v4429
        %v4432 = vcvt.s32.f32 %v4430
        %4433 = vmin.xlane.f32.xlu0 %v4432
        %v4434 = vpop.xlane.xlu0 %4433
        %vm4435 = vcmp.eq.f32.partialorder %v4432, %v4434
        %v4436 = vsel %vm4435, %v4431, inf
        %4437 = vmin.xlane.f32.xlu0 %v4436
        %v4438 = vpop.xlane.xlu0 %4437
        %v4439 = vcvt.f32.s32 %v4438
        %v4440 = vcvt.f32.s32 %v4434
        %v4441 = vshll.u32 %v4440, 16
        %v4442 = vadd.s32 %v4441, %v4439
        %vm4443 = vcmp.lt.s32.totalorder %v4141, %v4142
        %v4444 = vsel %vm4443, %v4141, %v4142
        %v4445 = vand.u32 %v4444, 65535
        %v4446 = vshra.s32 %v4444, 16
        %v4447 = vcvt.s32.f32 %v4445
        %v4448 = vcvt.s32.f32 %v4446
        %4449 = vmin.xlane.f32.xlu0 %v4448
        %v4450 = vpop.xlane.xlu0 %4449
        %vm4451 = vcmp.eq.f32.partialorder %v4448, %v4450
        %v4452 = vsel %vm4451, %v4447, inf
        %4453 = vmin.xlane.f32.xlu0 %v4452
        %v4454 = vpop.xlane.xlu0 %4453
        %v4455 = vcvt.f32.s32 %v4454
        %v4456 = vcvt.f32.s32 %v4450
        %v4457 = vshll.u32 %v4456, 16
        %v4458 = vadd.s32 %v4457, %v4455
        %vm4459 = vcmp.lt.s32.totalorder %v4143, %v4144
        %v4460 = vsel %vm4459, %v4143, %v4144
        %v4461 = vand.u32 %v4460, 65535
        %v4462 = vshra.s32 %v4460, 16
        %v4463 = vcvt.s32.f32 %v4461
        %v4464 = vcvt.s32.f32 %v4462
        %4465 = vmin.xlane.f32.xlu0 %v4464
        %v4466 = vpop.xlane.xlu0 %4465
        %vm4467 = vcmp.eq.f32.partialorder %v4464, %v4466
        %v4468 = vsel %vm4467, %v4463, inf
        %4469 = vmin.xlane.f32.xlu0 %v4468
        %v4470 = vpop.xlane.xlu0 %4469
        %v4471 = vcvt.f32.s32 %v4470
        %v4472 = vcvt.f32.s32 %v4466
        %v4473 = vshll.u32 %v4472, 16
        %v4474 = vadd.s32 %v4473, %v4471
        %vm4475 = vcmp.lt.s32.totalorder %v4145, %v4146
        %v4476 = vsel %vm4475, %v4145, %v4146
        %v4477 = vand.u32 %v4476, 65535
        %v4478 = vshra.s32 %v4476, 16
        %v4479 = vcvt.s32.f32 %v4477
        %v4480 = vcvt.s32.f32 %v4478
        %4481 = vmin.xlane.f32.xlu0 %v4480
        %v4482 = vpop.xlane.xlu0 %4481
        %vm4483 = vcmp.eq.f32.partialorder %v4480, %v4482
        %v4484 = vsel %vm4483, %v4479, inf
        %4485 = vmin.xlane.f32.xlu0 %v4484
        %v4486 = vpop.xlane.xlu0 %4485
        %v4487 = vcvt.f32.s32 %v4486
        %v4488 = vcvt.f32.s32 %v4482
        %v4489 = vshll.u32 %v4488, 16
        %v4490 = vadd.s32 %v4489, %v4487
        %vm4491 = vcmp.lt.s32.totalorder %v4147, %v4148
        %v4492 = vsel %vm4491, %v4147, %v4148
        %v4493 = vand.u32 %v4492, 65535
        %v4494 = vshra.s32 %v4492, 16
        %v4495 = vcvt.s32.f32 %v4493
        %v4496 = vcvt.s32.f32 %v4494
        %4497 = vmin.xlane.f32.xlu0 %v4496
        %v4498 = vpop.xlane.xlu0 %4497
        %vm4499 = vcmp.eq.f32.partialorder %v4496, %v4498
        %v4500 = vsel %vm4499, %v4495, inf
        %4501 = vmin.xlane.f32.xlu0 %v4500
        %v4502 = vpop.xlane.xlu0 %4501
        %v4503 = vcvt.f32.s32 %v4502
        %v4504 = vcvt.f32.s32 %v4498
        %v4505 = vshll.u32 %v4504, 16
        %v4506 = vadd.s32 %v4505, %v4503
        %vm4507 = vcmp.lt.s32.totalorder %v4149, %v4150
        %v4508 = vsel %vm4507, %v4149, %v4150
        %v4509 = vand.u32 %v4508, 65535
        %v4510 = vshra.s32 %v4508, 16
        %v4511 = vcvt.s32.f32 %v4509
        %v4512 = vcvt.s32.f32 %v4510
        %4513 = vmin.xlane.f32.xlu0 %v4512
        %v4514 = vpop.xlane.xlu0 %4513
        %vm4515 = vcmp.eq.f32.partialorder %v4512, %v4514
        %v4516 = vsel %vm4515, %v4511, inf
        %4517 = vmin.xlane.f32.xlu0 %v4516
        %v4518 = vpop.xlane.xlu0 %4517
        %v4519 = vcvt.f32.s32 %v4518
        %v4520 = vcvt.f32.s32 %v4514
        %v4521 = vshll.u32 %v4520, 16
        %v4522 = vadd.s32 %v4521, %v4519
        %vm4523 = vcmp.lt.s32.totalorder %v4151, %v4152
        %v4524 = vsel %vm4523, %v4151, %v4152
        %v4525 = vand.u32 %v4524, 65535
        %v4526 = vshra.s32 %v4524, 16
        %v4527 = vcvt.s32.f32 %v4525
        %v4528 = vcvt.s32.f32 %v4526
        %4529 = vmin.xlane.f32.xlu0 %v4528
        %v4530 = vpop.xlane.xlu0 %4529
        %vm4531 = vcmp.eq.f32.partialorder %v4528, %v4530
        %v4532 = vsel %vm4531, %v4527, inf
        %4533 = vmin.xlane.f32.xlu0 %v4532
        %v4534 = vpop.xlane.xlu0 %4533
        %v4535 = vcvt.f32.s32 %v4534
        %v4536 = vcvt.f32.s32 %v4530
        %v4537 = vshll.u32 %v4536, 16
        %v4538 = vadd.s32 %v4537, %v4535
        %vm4539 = vcmp.lt.s32.totalorder %v4153, %v4154
        %v4540 = vsel %vm4539, %v4153, %v4154
        %v4541 = vand.u32 %v4540, 65535
        %v4542 = vshra.s32 %v4540, 16
        %v4543 = vcvt.s32.f32 %v4541
        %v4544 = vcvt.s32.f32 %v4542
        %4545 = vmin.xlane.f32.xlu0 %v4544
        %v4546 = vpop.xlane.xlu0 %4545
        %vm4547 = vcmp.eq.f32.partialorder %v4544, %v4546
        %v4548 = vsel %vm4547, %v4543, inf
        %4549 = vmin.xlane.f32.xlu0 %v4548
        %v4550 = vpop.xlane.xlu0 %4549
        %v4551 = vcvt.f32.s32 %v4550
        %v4552 = vcvt.f32.s32 %v4546
        %v4553 = vshll.u32 %v4552, 16
        %v4554 = vadd.s32 %v4553, %v4551
        %vm4555 = vcmp.lt.s32.totalorder %v4155, %v4156
        %v4556 = vsel %vm4555, %v4155, %v4156
        %v4557 = vand.u32 %v4556, 65535
        %v4558 = vshra.s32 %v4556, 16
        %v4559 = vcvt.s32.f32 %v4557
        %v4560 = vcvt.s32.f32 %v4558
        %4561 = vmin.xlane.f32.xlu0 %v4560
        %v4562 = vpop.xlane.xlu0 %4561
        %vm4563 = vcmp.eq.f32.partialorder %v4560, %v4562
        %v4564 = vsel %vm4563, %v4559, inf
        %4565 = vmin.xlane.f32.xlu0 %v4564
        %v4566 = vpop.xlane.xlu0 %4565
        %v4567 = vcvt.f32.s32 %v4566
        %v4568 = vcvt.f32.s32 %v4562
        %v4569 = vshll.u32 %v4568, 16
        %v4570 = vadd.s32 %v4569, %v4567
        %vm4571 = vcmp.lt.s32.totalorder %v4157, %v4158
        %v4572 = vsel %vm4571, %v4157, %v4158
        %v4573 = vand.u32 %v4572, 65535
        %v4574 = vshra.s32 %v4572, 16
        %v4575 = vcvt.s32.f32 %v4573
        %v4576 = vcvt.s32.f32 %v4574
        %4577 = vmin.xlane.f32.xlu0 %v4576
        %v4578 = vpop.xlane.xlu0 %4577
        %vm4579 = vcmp.eq.f32.partialorder %v4576, %v4578
        %v4580 = vsel %vm4579, %v4575, inf
        %4581 = vmin.xlane.f32.xlu0 %v4580
        %v4582 = vpop.xlane.xlu0 %4581
        %v4583 = vcvt.f32.s32 %v4582
        %v4584 = vcvt.f32.s32 %v4578
        %v4585 = vshll.u32 %v4584, 16
        %v4586 = vadd.s32 %v4585, %v4583
        %vm4587 = vcmp.lt.s32.totalorder %v4159, %v4160
        %v4588 = vsel %vm4587, %v4159, %v4160
        %v4589 = vand.u32 %v4588, 65535
        %v4590 = vshra.s32 %v4588, 16
        %v4591 = vcvt.s32.f32 %v4589
        %v4592 = vcvt.s32.f32 %v4590
        %4593 = vmin.xlane.f32.xlu0 %v4592
        %v4594 = vpop.xlane.xlu0 %4593
        %vm4595 = vcmp.eq.f32.partialorder %v4592, %v4594
        %v4596 = vsel %vm4595, %v4591, inf
        %4597 = vmin.xlane.f32.xlu0 %v4596
        %v4598 = vpop.xlane.xlu0 %4597
        %v4599 = vcvt.f32.s32 %v4598
        %v4600 = vcvt.f32.s32 %v4594
        %v4601 = vshll.u32 %v4600, 16
        %v4602 = vadd.s32 %v4601, %v4599
        %vm4603 = vcmp.lt.s32.totalorder %v4161, %v4162
        %v4604 = vsel %vm4603, %v4161, %v4162
        %v4605 = vand.u32 %v4604, 65535
        %v4606 = vshra.s32 %v4604, 16
        %v4607 = vcvt.s32.f32 %v4605
        %v4608 = vcvt.s32.f32 %v4606
        %4609 = vmin.xlane.f32.xlu0 %v4608
        %v4610 = vpop.xlane.xlu0 %4609
        %vm4611 = vcmp.eq.f32.partialorder %v4608, %v4610
        %v4612 = vsel %vm4611, %v4607, inf
        %4613 = vmin.xlane.f32.xlu0 %v4612
        %v4614 = vpop.xlane.xlu0 %4613
        %v4615 = vcvt.f32.s32 %v4614
        %v4616 = vcvt.f32.s32 %v4610
        %v4617 = vshll.u32 %v4616, 16
        %v4618 = vadd.s32 %v4617, %v4615
        %vm4619 = vcmp.lt.s32.totalorder %v4163, %v4164
        %v4620 = vsel %vm4619, %v4163, %v4164
        %v4621 = vand.u32 %v4620, 65535
        %v4622 = vshra.s32 %v4620, 16
        %v4623 = vcvt.s32.f32 %v4621
        %v4624 = vcvt.s32.f32 %v4622
        %4625 = vmin.xlane.f32.xlu0 %v4624
        %v4626 = vpop.xlane.xlu0 %4625
        %vm4627 = vcmp.eq.f32.partialorder %v4624, %v4626
        %v4628 = vsel %vm4627, %v4623, inf
        %4629 = vmin.xlane.f32.xlu0 %v4628
        %v4630 = vpop.xlane.xlu0 %4629
        %v4631 = vcvt.f32.s32 %v4630
        %v4632 = vcvt.f32.s32 %v4626
        %v4633 = vshll.u32 %v4632, 16
        %v4634 = vadd.s32 %v4633, %v4631
        %vm4635 = vcmp.lt.s32.totalorder %v4165, %v4166
        %v4636 = vsel %vm4635, %v4165, %v4166
        %v4637 = vand.u32 %v4636, 65535
        %v4638 = vshra.s32 %v4636, 16
        %v4639 = vcvt.s32.f32 %v4637
        %v4640 = vcvt.s32.f32 %v4638
        %4641 = vmin.xlane.f32.xlu0 %v4640
        %v4642 = vpop.xlane.xlu0 %4641
        %vm4643 = vcmp.eq.f32.partialorder %v4640, %v4642
        %v4644 = vsel %vm4643, %v4639, inf
        %4645 = vmin.xlane.f32.xlu0 %v4644
        %v4646 = vpop.xlane.xlu0 %4645
        %v4647 = vcvt.f32.s32 %v4646
        %v4648 = vcvt.f32.s32 %v4642
        %v4649 = vshll.u32 %v4648, 16
        %v4650 = vadd.s32 %v4649, %v4647
        %vm4651 = vcmp.lt.s32.totalorder %v4167, %v4168
        %v4652 = vsel %vm4651, %v4167, %v4168
        %v4653 = vand.u32 %v4652, 65535
        %v4654 = vshra.s32 %v4652, 16
        %v4655 = vcvt.s32.f32 %v4653
        %v4656 = vcvt.s32.f32 %v4654
        %4657 = vmin.xlane.f32.xlu0 %v4656
        %v4658 = vpop.xlane.xlu0 %4657
        %vm4659 = vcmp.eq.f32.partialorder %v4656, %v4658
        %v4660 = vsel %vm4659, %v4655, inf
        %4661 = vmin.xlane.f32.xlu0 %v4660
        %v4662 = vpop.xlane.xlu0 %4661
        %v4663 = vcvt.f32.s32 %v4662
        %v4664 = vcvt.f32.s32 %v4658
        %v4665 = vshll.u32 %v4664, 16
        %v4666 = vadd.s32 %v4665, %v4663
        %vm4667 = vcmp.lt.s32.totalorder %v4169, %v4170
        %v4668 = vsel %vm4667, %v4169, %v4170
        %v4669 = vand.u32 %v4668, 65535
        %v4670 = vshra.s32 %v4668, 16
        %v4671 = vcvt.s32.f32 %v4669
        %v4672 = vcvt.s32.f32 %v4670
        %4673 = vmin.xlane.f32.xlu0 %v4672
        %v4674 = vpop.xlane.xlu0 %4673
        %vm4675 = vcmp.eq.f32.partialorder %v4672, %v4674
        %v4676 = vsel %vm4675, %v4671, inf
        %4677 = vmin.xlane.f32.xlu0 %v4676
        %v4678 = vpop.xlane.xlu0 %4677
        %v4679 = vcvt.f32.s32 %v4678
        %v4680 = vcvt.f32.s32 %v4674
        %v4681 = vshll.u32 %v4680, 16
        %v4682 = vadd.s32 %v4681, %v4679
        %vm4683 = vcmp.eq.s32.totalorder %v1511, %v4186
        %vm4684 = vcmp.eq.s32.totalorder %v1512, %v4186
        %vm4685 = vcmp.eq.s32.totalorder %v1511, %v4202
        %vm4686 = vcmp.eq.s32.totalorder %v1512, %v4202
        %vm4687 = vcmp.eq.s32.totalorder %v1511, %v4218
        %vm4688 = vcmp.eq.s32.totalorder %v1512, %v4218
        %vm4689 = vcmp.eq.s32.totalorder %v1511, %v4234
        %vm4690 = vcmp.eq.s32.totalorder %v1512, %v4234
        %vm4691 = vcmp.eq.s32.totalorder %v1511, %v4250
        %vm4692 = vcmp.eq.s32.totalorder %v1512, %v4250
        %vm4693 = vcmp.eq.s32.totalorder %v1511, %v4266
        %vm4694 = vcmp.eq.s32.totalorder %v1512, %v4266
        %vm4695 = vcmp.eq.s32.totalorder %v1511, %v4282
        %vm4696 = vcmp.eq.s32.totalorder %v1512, %v4282
        %vm4697 = vcmp.eq.s32.totalorder %v1511, %v4298
        %vm4698 = vcmp.eq.s32.totalorder %v1512, %v4298
        %vm4699 = vcmp.eq.s32.totalorder %v1511, %v4314
        %vm4700 = vcmp.eq.s32.totalorder %v1512, %v4314
        %vm4701 = vcmp.eq.s32.totalorder %v1511, %v4330
        %vm4702 = vcmp.eq.s32.totalorder %v1512, %v4330
        %vm4703 = vcmp.eq.s32.totalorder %v1511, %v4346
        %vm4704 = vcmp.eq.s32.totalorder %v1512, %v4346
        %vm4705 = vcmp.eq.s32.totalorder %v1511, %v4362
        %vm4706 = vcmp.eq.s32.totalorder %v1512, %v4362
        %vm4707 = vcmp.eq.s32.totalorder %v1511, %v4378
        %vm4708 = vcmp.eq.s32.totalorder %v1512, %v4378
        %vm4709 = vcmp.eq.s32.totalorder %v1511, %v4394
        %vm4710 = vcmp.eq.s32.totalorder %v1512, %v4394
        %vm4711 = vcmp.eq.s32.totalorder %v1511, %v4410
        %vm4712 = vcmp.eq.s32.totalorder %v1512, %v4410
        %vm4713 = vcmp.eq.s32.totalorder %v1511, %v4426
        %vm4714 = vcmp.eq.s32.totalorder %v1512, %v4426
        %vm4715 = vcmp.eq.s32.totalorder %v1511, %v4442
        %vm4716 = vcmp.eq.s32.totalorder %v1512, %v4442
        %vm4717 = vcmp.eq.s32.totalorder %v1511, %v4458
        %vm4718 = vcmp.eq.s32.totalorder %v1512, %v4458
        %vm4719 = vcmp.eq.s32.totalorder %v1511, %v4474
        %vm4720 = vcmp.eq.s32.totalorder %v1512, %v4474
        %vm4721 = vcmp.eq.s32.totalorder %v1511, %v4490
        %vm4722 = vcmp.eq.s32.totalorder %v1512, %v4490
        %vm4723 = vcmp.eq.s32.totalorder %v1511, %v4506
        %vm4724 = vcmp.eq.s32.totalorder %v1512, %v4506
        %vm4725 = vcmp.eq.s32.totalorder %v1511, %v4522
        %vm4726 = vcmp.eq.s32.totalorder %v1512, %v4522
        %vm4727 = vcmp.eq.s32.totalorder %v1511, %v4538
        %vm4728 = vcmp.eq.s32.totalorder %v1512, %v4538
        %vm4729 = vcmp.eq.s32.totalorder %v1511, %v4554
        %vm4730 = vcmp.eq.s32.totalorder %v1512, %v4554
        %vm4731 = vcmp.eq.s32.totalorder %v1511, %v4570
        %vm4732 = vcmp.eq.s32.totalorder %v1512, %v4570
        %vm4733 = vcmp.eq.s32.totalorder %v1511, %v4586
        %vm4734 = vcmp.eq.s32.totalorder %v1512, %v4586
        %vm4735 = vcmp.eq.s32.totalorder %v1511, %v4602
        %vm4736 = vcmp.eq.s32.totalorder %v1512, %v4602
        %vm4737 = vcmp.eq.s32.totalorder %v1511, %v4618
        %vm4738 = vcmp.eq.s32.totalorder %v1512, %v4618
        %vm4739 = vcmp.eq.s32.totalorder %v1511, %v4634
        %vm4740 = vcmp.eq.s32.totalorder %v1512, %v4634
        %vm4741 = vcmp.eq.s32.totalorder %v1511, %v4650
        %vm4742 = vcmp.eq.s32.totalorder %v1512, %v4650
        %vm4743 = vcmp.eq.s32.totalorder %v1511, %v4666
        %vm4744 = vcmp.eq.s32.totalorder %v1512, %v4666
        %vm4745 = vcmp.eq.s32.totalorder %v1511, %v4682
        %vm4746 = vcmp.eq.s32.totalorder %v1512, %v4682
        %v4747 = vsel %vm4683, 1, 0
        %v4748 = vsel %vm4684, 1, 0
        %v4749 = vsel %vm4685, 1, 0
        %v4750 = vsel %vm4686, 1, 0
        %v4751 = vsel %vm4687, 1, 0
        %v4752 = vsel %vm4688, 1, 0
        %v4753 = vsel %vm4689, 1, 0
        %v4754 = vsel %vm4690, 1, 0
        %v4755 = vsel %vm4691, 1, 0
        %v4756 = vsel %vm4692, 1, 0
        %v4757 = vsel %vm4693, 1, 0
        %v4758 = vsel %vm4694, 1, 0
        %v4759 = vsel %vm4695, 1, 0
        %v4760 = vsel %vm4696, 1, 0
        %v4761 = vsel %vm4697, 1, 0
        %v4762 = vsel %vm4698, 1, 0
        %v4763 = vsel %vm4699, 1, 0
        %v4764 = vsel %vm4700, 1, 0
        %v4765 = vsel %vm4701, 1, 0
        %v4766 = vsel %vm4702, 1, 0
        %v4767 = vsel %vm4703, 1, 0
        %v4768 = vsel %vm4704, 1, 0
        %v4769 = vsel %vm4705, 1, 0
        %v4770 = vsel %vm4706, 1, 0
        %v4771 = vsel %vm4707, 1, 0
        %v4772 = vsel %vm4708, 1, 0
        %v4773 = vsel %vm4709, 1, 0
        %v4774 = vsel %vm4710, 1, 0
        %v4775 = vsel %vm4711, 1, 0
        %v4776 = vsel %vm4712, 1, 0
        %v4777 = vsel %vm4713, 1, 0
        %v4778 = vsel %vm4714, 1, 0
        %v4779 = vsel %vm4715, 1, 0
        %v4780 = vsel %vm4716, 1, 0
        %v4781 = vsel %vm4717, 1, 0
        %v4782 = vsel %vm4718, 1, 0
        %v4783 = vsel %vm4719, 1, 0
        %v4784 = vsel %vm4720, 1, 0
        %v4785 = vsel %vm4721, 1, 0
        %v4786 = vsel %vm4722, 1, 0
        %v4787 = vsel %vm4723, 1, 0
        %v4788 = vsel %vm4724, 1, 0
        %v4789 = vsel %vm4725, 1, 0
        %v4790 = vsel %vm4726, 1, 0
        %v4791 = vsel %vm4727, 1, 0
        %v4792 = vsel %vm4728, 1, 0
        %v4793 = vsel %vm4729, 1, 0
        %v4794 = vsel %vm4730, 1, 0
        %v4795 = vsel %vm4731, 1, 0
        %v4796 = vsel %vm4732, 1, 0
        %v4797 = vsel %vm4733, 1, 0
        %v4798 = vsel %vm4734, 1, 0
        %v4799 = vsel %vm4735, 1, 0
        %v4800 = vsel %vm4736, 1, 0
        %v4801 = vsel %vm4737, 1, 0
        %v4802 = vsel %vm4738, 1, 0
        %v4803 = vsel %vm4739, 1, 0
        %v4804 = vsel %vm4740, 1, 0
        %v4805 = vsel %vm4741, 1, 0
        %v4806 = vsel %vm4742, 1, 0
        %v4807 = vsel %vm4743, 1, 0
        %v4808 = vsel %vm4744, 1, 0
        %v4809 = vsel %vm4745, 1, 0
        %v4810 = vsel %vm4746, 1, 0
        %v4811 = vcvt.s32.f32 %v4747
        %v4812 = vcvt.s32.f32 %v4748
        %v4813 = vcvt.s32.f32 %v4749
        %v4814 = vcvt.s32.f32 %v4750
        %v4815 = vcvt.s32.f32 %v4751
        %v4816 = vcvt.s32.f32 %v4752
        %v4817 = vcvt.s32.f32 %v4753
        %v4818 = vcvt.s32.f32 %v4754
        %v4819 = vcvt.s32.f32 %v4755
        %v4820 = vcvt.s32.f32 %v4756
        %v4821 = vcvt.s32.f32 %v4757
        %v4822 = vcvt.s32.f32 %v4758
        %v4823 = vcvt.s32.f32 %v4759
        %v4824 = vcvt.s32.f32 %v4760
        %v4825 = vcvt.s32.f32 %v4761
        %v4826 = vcvt.s32.f32 %v4762
        %v4827 = vcvt.s32.f32 %v4763
        %v4828 = vcvt.s32.f32 %v4764
        %v4829 = vcvt.s32.f32 %v4765
        %v4830 = vcvt.s32.f32 %v4766
        %v4831 = vcvt.s32.f32 %v4767
        %v4832 = vcvt.s32.f32 %v4768
        %v4833 = vcvt.s32.f32 %v4769
        %v4834 = vcvt.s32.f32 %v4770
        %v4835 = vcvt.s32.f32 %v4771
        %v4836 = vcvt.s32.f32 %v4772
        %v4837 = vcvt.s32.f32 %v4773
        %v4838 = vcvt.s32.f32 %v4774
        %v4839 = vcvt.s32.f32 %v4775
        %v4840 = vcvt.s32.f32 %v4776
        %v4841 = vcvt.s32.f32 %v4777
        %v4842 = vcvt.s32.f32 %v4778
        %v4843 = vcvt.s32.f32 %v4779
        %v4844 = vcvt.s32.f32 %v4780
        %v4845 = vcvt.s32.f32 %v4781
        %v4846 = vcvt.s32.f32 %v4782
        %v4847 = vcvt.s32.f32 %v4783
        %v4848 = vcvt.s32.f32 %v4784
        %v4849 = vcvt.s32.f32 %v4785
        %v4850 = vcvt.s32.f32 %v4786
        %v4851 = vcvt.s32.f32 %v4787
        %v4852 = vcvt.s32.f32 %v4788
        %v4853 = vcvt.s32.f32 %v4789
        %v4854 = vcvt.s32.f32 %v4790
        %v4855 = vcvt.s32.f32 %v4791
        %v4856 = vcvt.s32.f32 %v4792
        %v4857 = vcvt.s32.f32 %v4793
        %v4858 = vcvt.s32.f32 %v4794
        %v4859 = vcvt.s32.f32 %v4795
        %v4860 = vcvt.s32.f32 %v4796
        %v4861 = vcvt.s32.f32 %v4797
        %v4862 = vcvt.s32.f32 %v4798
        %v4863 = vcvt.s32.f32 %v4799
        %v4864 = vcvt.s32.f32 %v4800
        %v4865 = vcvt.s32.f32 %v4801
        %v4866 = vcvt.s32.f32 %v4802
        %v4867 = vcvt.s32.f32 %v4803
        %v4868 = vcvt.s32.f32 %v4804
        %v4869 = vcvt.s32.f32 %v4805
        %v4870 = vcvt.s32.f32 %v4806
        %v4871 = vcvt.s32.f32 %v4807
        %v4872 = vcvt.s32.f32 %v4808
        %v4873 = vcvt.s32.f32 %v4809
        %v4874 = vcvt.s32.f32 %v4810
        %4875 = vmatprep.subr.mxu0 0.0
        %4876 = vmatpush1.msra.mxu0 %v1427
        %4877 = vmatprep.subr.mxu0 0.0
        %4878 = vmatpush1.msra.mxu0 %v1422
        %4879 = vmatprep.subr.mxu0 0.0
        %4880 = vmatpush1.msra.mxu0 %v1417
        %4881 = vmatprep.subr.mxu0 0.0
        %4882 = vmatpush1.msra.mxu0 %v1412
        %4883 = vmatprep.subr.mxu0 0.0
        %4884 = vmatpush1.msra.mxu0 %v1407
        %4885 = vmatprep.subr.mxu0 0.0
        %4886 = vmatpush1.msra.mxu0 %v1402
        %4887 = vmatprep.subr.mxu0 0.0
        %4888 = vmatpush1.msra.mxu0 %v1397
        %4889 = vmatprep.subr.mxu0 0.0
        %4890 = vmatpush1.msra.mxu0 %v1392
        %4891 = vmatprep.subr.mxu0 0.0
        %4892 = vmatpush1.msra.mxu0 %v1387
        %4893 = vmatprep.subr.mxu0 0.0
        %4894 = vmatpush1.msra.mxu0 %v1382
        %4895 = vmatprep.subr.mxu0 0.0
        %4896 = vmatpush1.msra.mxu0 %v1377
        %4897 = vmatprep.subr.mxu0 0.0
        %4898 = vmatpush1.msra.mxu0 %v1372
        %4899 = vmatprep.subr.mxu0 0.0
        %4900 = vmatpush1.msra.mxu0 %v1367
        %4901 = vmatprep.subr.mxu0 0.0
        %4902 = vmatpush1.msra.mxu0 %v1362
        %4903 = vmatprep.subr.mxu0 0.0
        %4904 = vmatpush1.msra.mxu0 %v1357
        %4905 = vmatprep.subr.mxu0 0.0
        %4906 = vmatpush1.msra.mxu0 %v1352
        %4907 = vmatprep.subr.mxu0 0.0
        %4908 = vmatpush2.msra.mxu0 %v1507
        %4909 = vmatprep.subr.mxu0 0.0
        %4910 = vmatpush2.msra.mxu0 %v1502
        %4911 = vmatprep.subr.mxu0 0.0
        %4912 = vmatpush2.msra.mxu0 %v1497
        %4913 = vmatprep.subr.mxu0 0.0
        %4914 = vmatpush2.msra.mxu0 %v1492
        %4915 = vmatprep.subr.mxu0 0.0
        %4916 = vmatpush2.msra.mxu0 %v1487
        %4917 = vmatprep.subr.mxu0 0.0
        %4918 = vmatpush2.msra.mxu0 %v1482
        %4919 = vmatprep.subr.mxu0 0.0
        %4920 = vmatpush2.msra.mxu0 %v1477
        %4921 = vmatprep.subr.mxu0 0.0
        %4922 = vmatpush2.msra.mxu0 %v1472
        %4923 = vmatprep.subr.mxu0 0.0
        %4924 = vmatpush2.msra.mxu0 %v1467
        %4925 = vmatprep.subr.mxu0 0.0
        %4926 = vmatpush2.msra.mxu0 %v1462
        %4927 = vmatprep.subr.mxu0 0.0
        %4928 = vmatpush2.msra.mxu0 %v1457
        %4929 = vmatprep.subr.mxu0 0.0
        %4930 = vmatpush2.msra.mxu0 %v1452
        %4931 = vmatprep.subr.mxu0 0.0
        %4932 = vmatpush2.msra.mxu0 %v1447
        %4933 = vmatprep.subr.mxu0 0.0
        %4934 = vmatpush2.msra.mxu0 %v1442
        %4935 = vmatprep.subr.mxu0 0.0
        %4936 = vmatpush2.msra.mxu0 %v1437
        %4937 = vmatprep.subr.mxu0 0.0
        %4938 = vmatpush2.msra.mxu0 %v1432
        %4939 = vmatprep.mubr.f32.mxu0 %v4812
        %4940 = vmatmul.mubr.f32.gmra.mxu0 %v4811
        %v4941 = vpop.f32.mrf.mxu0
        %v4942 = vadd.f32 0.0, %v4941
        %v4943 = vpop.f32.mrf.mxu0
        %4944 = vmatprep.mubr.f32.mxu0 %v4814
        %4945 = vmatmul.mubr.f32.gmra.mxu0 %v4813
        %v4946 = vpop.f32.mrf.mxu0
        %v4947 = vadd.f32 0.0, %v4946
        %v4948 = vpop.f32.mrf.mxu0
        %4949 = vmatprep.mubr.f32.mxu0 %v4816
        %4950 = vmatmul.mubr.f32.gmra.mxu0 %v4815
        %v4951 = vpop.f32.mrf.mxu0
        %v4952 = vadd.f32 0.0, %v4951
        %v4953 = vpop.f32.mrf.mxu0
        %4954 = vmatprep.mubr.f32.mxu0 %v4818
        %4955 = vmatmul.mubr.f32.gmra.mxu0 %v4817
        %v4956 = vpop.f32.mrf.mxu0
        %v4957 = vadd.f32 0.0, %v4956
        %v4958 = vpop.f32.mrf.mxu0
        %4959 = vmatprep.mubr.f32.mxu0 %v4820
        %4960 = vmatmul.mubr.f32.gmra.mxu0 %v4819
        %v4961 = vpop.f32.mrf.mxu0
        %v4962 = vadd.f32 0.0, %v4961
        %v4963 = vpop.f32.mrf.mxu0
        %4964 = vmatprep.mubr.f32.mxu0 %v4822
        %4965 = vmatmul.mubr.f32.gmra.mxu0 %v4821
        %v4966 = vpop.f32.mrf.mxu0
        %v4967 = vadd.f32 0.0, %v4966
        %v4968 = vpop.f32.mrf.mxu0
        %4969 = vmatprep.mubr.f32.mxu0 %v4824
        %4970 = vmatmul.mubr.f32.gmra.mxu0 %v4823
        %v4971 = vpop.f32.mrf.mxu0
        %v4972 = vadd.f32 0.0, %v4971
        %v4973 = vpop.f32.mrf.mxu0
        %4974 = vmatprep.mubr.f32.mxu0 %v4826
        %4975 = vmatmul.mubr.f32.gmra.mxu0 %v4825
        %v4976 = vpop.f32.mrf.mxu0
        %v4977 = vadd.f32 0.0, %v4976
        %v4978 = vpop.f32.mrf.mxu0
        %4979 = vmatprep.mubr.f32.mxu0 %v4828
        %4980 = vmatmul.mubr.f32.gmra.mxu0 %v4827
        %v4981 = vpop.f32.mrf.mxu0
        %v4982 = vadd.f32 0.0, %v4981
        %v4983 = vpop.f32.mrf.mxu0
        %4984 = vmatprep.mubr.f32.mxu0 %v4830
        %4985 = vmatmul.mubr.f32.gmra.mxu0 %v4829
        %v4986 = vpop.f32.mrf.mxu0
        %v4987 = vadd.f32 0.0, %v4986
        %v4988 = vpop.f32.mrf.mxu0
        %4989 = vmatprep.mubr.f32.mxu0 %v4832
        %4990 = vmatmul.mubr.f32.gmra.mxu0 %v4831
        %v4991 = vpop.f32.mrf.mxu0
        %v4992 = vadd.f32 0.0, %v4991
        %v4993 = vpop.f32.mrf.mxu0
        %4994 = vmatprep.mubr.f32.mxu0 %v4834
        %4995 = vmatmul.mubr.f32.gmra.mxu0 %v4833
        %v4996 = vpop.f32.mrf.mxu0
        %v4997 = vadd.f32 0.0, %v4996
        %v4998 = vpop.f32.mrf.mxu0
        %4999 = vmatprep.mubr.f32.mxu0 %v4836
        %5000 = vmatmul.mubr.f32.gmra.mxu0 %v4835
        %v5001 = vpop.f32.mrf.mxu0
        %v5002 = vadd.f32 0.0, %v5001
        %v5003 = vpop.f32.mrf.mxu0
        %5004 = vmatprep.mubr.f32.mxu0 %v4838
        %5005 = vmatmul.mubr.f32.gmra.mxu0 %v4837
        %v5006 = vpop.f32.mrf.mxu0
        %v5007 = vadd.f32 0.0, %v5006
        %v5008 = vpop.f32.mrf.mxu0
        %5009 = vmatprep.mubr.f32.mxu0 %v4840
        %5010 = vmatmul.mubr.f32.gmra.mxu0 %v4839
        %v5011 = vpop.f32.mrf.mxu0
        %v5012 = vadd.f32 0.0, %v5011
        %v5013 = vpop.f32.mrf.mxu0
        %5014 = vmatprep.mubr.f32.mxu0 %v4842
        %5015 = vmatmul.mubr.f32.gmra.mxu0 %v4841
        %v5016 = vpop.f32.mrf.mxu0
        %v5017 = vadd.f32 0.0, %v5016
        %v5018 = vpop.f32.mrf.mxu0
        %5019 = vmatprep.mubr.f32.mxu0 %v4844
        %5020 = vmatmul.mubr.f32.gmra.mxu0 %v4843
        %v5021 = vpop.f32.mrf.mxu0
        %v5022 = vadd.f32 0.0, %v5021
        %v5023 = vpop.f32.mrf.mxu0
        %5024 = vmatprep.mubr.f32.mxu0 %v4846
        %5025 = vmatmul.mubr.f32.gmra.mxu0 %v4845
        %v5026 = vpop.f32.mrf.mxu0
        %v5027 = vadd.f32 0.0, %v5026
        %v5028 = vpop.f32.mrf.mxu0
        %5029 = vmatprep.mubr.f32.mxu0 %v4848
        %5030 = vmatmul.mubr.f32.gmra.mxu0 %v4847
        %v5031 = vpop.f32.mrf.mxu0
        %v5032 = vadd.f32 0.0, %v5031
        %v5033 = vpop.f32.mrf.mxu0
        %5034 = vmatprep.mubr.f32.mxu0 %v4850
        %5035 = vmatmul.mubr.f32.gmra.mxu0 %v4849
        %v5036 = vpop.f32.mrf.mxu0
        %v5037 = vadd.f32 0.0, %v5036
        %v5038 = vpop.f32.mrf.mxu0
        %5039 = vmatprep.mubr.f32.mxu0 %v4852
        %5040 = vmatmul.mubr.f32.gmra.mxu0 %v4851
        %v5041 = vpop.f32.mrf.mxu0
        %v5042 = vadd.f32 0.0, %v5041
        %v5043 = vpop.f32.mrf.mxu0
        %5044 = vmatprep.mubr.f32.mxu0 %v4854
        %5045 = vmatmul.mubr.f32.gmra.mxu0 %v4853
        %v5046 = vpop.f32.mrf.mxu0
        %v5047 = vadd.f32 0.0, %v5046
        %v5048 = vpop.f32.mrf.mxu0
        %5049 = vmatprep.mubr.f32.mxu0 %v4856
        %5050 = vmatmul.mubr.f32.gmra.mxu0 %v4855
        %v5051 = vpop.f32.mrf.mxu0
        %v5052 = vadd.f32 0.0, %v5051
        %v5053 = vpop.f32.mrf.mxu0
        %5054 = vmatprep.mubr.f32.mxu0 %v4858
        %5055 = vmatmul.mubr.f32.gmra.mxu0 %v4857
        %v5056 = vpop.f32.mrf.mxu0
        %v5057 = vadd.f32 0.0, %v5056
        %v5058 = vpop.f32.mrf.mxu0
        %5059 = vmatprep.mubr.f32.mxu0 %v4860
        %5060 = vmatmul.mubr.f32.gmra.mxu0 %v4859
        %v5061 = vpop.f32.mrf.mxu0
        %v5062 = vadd.f32 0.0, %v5061
        %v5063 = vpop.f32.mrf.mxu0
        %5064 = vmatprep.mubr.f32.mxu0 %v4862
        %5065 = vmatmul.mubr.f32.gmra.mxu0 %v4861
        %v5066 = vpop.f32.mrf.mxu0
        %v5067 = vadd.f32 0.0, %v5066
        %v5068 = vpop.f32.mrf.mxu0
        %5069 = vmatprep.mubr.f32.mxu0 %v4864
        %5070 = vmatmul.mubr.f32.gmra.mxu0 %v4863
        %v5071 = vpop.f32.mrf.mxu0
        %v5072 = vadd.f32 0.0, %v5071
        %v5073 = vpop.f32.mrf.mxu0
        %5074 = vmatprep.mubr.f32.mxu0 %v4866
        %5075 = vmatmul.mubr.f32.gmra.mxu0 %v4865
        %v5076 = vpop.f32.mrf.mxu0
        %v5077 = vadd.f32 0.0, %v5076
        %v5078 = vpop.f32.mrf.mxu0
        %5079 = vmatprep.mubr.f32.mxu0 %v4868
        %5080 = vmatmul.mubr.f32.gmra.mxu0 %v4867
        %v5081 = vpop.f32.mrf.mxu0
        %v5082 = vadd.f32 0.0, %v5081
        %v5083 = vpop.f32.mrf.mxu0
        %5084 = vmatprep.mubr.f32.mxu0 %v4870
        %5085 = vmatmul.mubr.f32.gmra.mxu0 %v4869
        %v5086 = vpop.f32.mrf.mxu0
        %v5087 = vadd.f32 0.0, %v5086
        %v5088 = vpop.f32.mrf.mxu0
        %5089 = vmatprep.mubr.f32.mxu0 %v4872
        %5090 = vmatmul.mubr.f32.gmra.mxu0 %v4871
        %v5091 = vpop.f32.mrf.mxu0
        %v5092 = vadd.f32 0.0, %v5091
        %v5093 = vpop.f32.mrf.mxu0
        %5094 = vmatprep.mubr.f32.mxu0 %v4874
        %5095 = vmatmul.mubr.f32.gmra.mxu0 %v4873
        %v5096 = vpop.f32.mrf.mxu0
        %v5097 = vadd.f32 0.0, %v5096
        %v5098 = vpop.f32.mrf.mxu0
        %5099 = vdwg.mxu0
        %vm5100 = vcmask 7168
        %v5101 = vsel %vm5100, %v2732, %v3949
        %v5102 = vsel %vm5100, %v2735, %v3952
        %v5103 = vsel %vm5100, %v2738, %v3955
        %v5104 = vsel %vm5100, %v2741, %v3958
        %v5105 = vsel %vm5100, %v2744, %v3961
        %v5106 = vsel %vm5100, %v2747, %v3964
        %v5107 = vsel %vm5100, %v2750, %v3967
        %v5108 = vsel %vm5100, %v2753, %v3970
        %v5109 = vsel %vm5100, %v2756, %v3973
        %v5110 = vsel %vm5100, %v2759, %v3976
        %v5111 = vsel %vm5100, %v2762, %v3979
        %v5112 = vsel %vm5100, %v2765, %v3982
        %v5113 = vsel %vm5100, %v2768, %v3985
        %v5114 = vsel %vm5100, %v2771, %v3988
        %v5115 = vsel %vm5100, %v2774, %v3991
        %v5116 = vsel %vm5100, %v2777, %v3994
        %v5117 = vsel %vm5100, %v2780, %v3997
        %v5118 = vsel %vm5100, %v2783, %v4000
        %v5119 = vsel %vm5100, %v2786, %v4003
        %v5120 = vsel %vm5100, %v2789, %v4006
        %v5121 = vsel %vm5100, %v2792, %v4009
        %v5122 = vsel %vm5100, %v2795, %v4012
        %v5123 = vsel %vm5100, %v2798, %v4015
        %v5124 = vsel %vm5100, %v2801, %v4018
        %v5125 = vsel %vm5100, %v2804, %v4021
        %v5126 = vsel %vm5100, %v2807, %v4024
        %v5127 = vsel %vm5100, %v2810, %v4027
        %v5128 = vsel %vm5100, %v2813, %v4030
        %v5129 = vsel %vm5100, %v2816, %v4033
        %v5130 = vsel %vm5100, %v2819, %v4036
        %v5131 = vsel %vm5100, %v2822, %v4039
        %v5132 = vsel %vm5100, %v2825, %v4042
        %vm5133 = vcmask 15360
        %v5134 = vsel %vm5133, %v5101, -inf
        %5135 = vmax.xlane.f32.xlu0 %v5134
        %v5136 = vpop.xlane.xlu0 %5135
        %v5137 = vsel %vm5133, %v5102, -inf
        %5138 = vmax.xlane.f32.xlu0 %v5137
        %v5139 = vpop.xlane.xlu0 %5138
        %v5140 = vsel %vm5133, %v5103, -inf
        %5141 = vmax.xlane.f32.xlu0 %v5140
        %v5142 = vpop.xlane.xlu0 %5141
        %v5143 = vsel %vm5133, %v5104, -inf
        %5144 = vmax.xlane.f32.xlu0 %v5143
        %v5145 = vpop.xlane.xlu0 %5144
        %v5146 = vsel %vm5133, %v5105, -inf
        %5147 = vmax.xlane.f32.xlu0 %v5146
        %v5148 = vpop.xlane.xlu0 %5147
        %v5149 = vsel %vm5133, %v5106, -inf
        %5150 = vmax.xlane.f32.xlu0 %v5149
        %v5151 = vpop.xlane.xlu0 %5150
        %v5152 = vsel %vm5133, %v5107, -inf
        %5153 = vmax.xlane.f32.xlu0 %v5152
        %v5154 = vpop.xlane.xlu0 %5153
        %v5155 = vsel %vm5133, %v5108, -inf
        %5156 = vmax.xlane.f32.xlu0 %v5155
        %v5157 = vpop.xlane.xlu0 %5156
        %v5158 = vsel %vm5133, %v5109, -inf
        %5159 = vmax.xlane.f32.xlu0 %v5158
        %v5160 = vpop.xlane.xlu0 %5159
        %v5161 = vsel %vm5133, %v5110, -inf
        %5162 = vmax.xlane.f32.xlu0 %v5161
        %v5163 = vpop.xlane.xlu0 %5162
        %v5164 = vsel %vm5133, %v5111, -inf
        %5165 = vmax.xlane.f32.xlu0 %v5164
        %v5166 = vpop.xlane.xlu0 %5165
        %v5167 = vsel %vm5133, %v5112, -inf
        %5168 = vmax.xlane.f32.xlu0 %v5167
        %v5169 = vpop.xlane.xlu0 %5168
        %v5170 = vsel %vm5133, %v5113, -inf
        %5171 = vmax.xlane.f32.xlu0 %v5170
        %v5172 = vpop.xlane.xlu0 %5171
        %v5173 = vsel %vm5133, %v5114, -inf
        %5174 = vmax.xlane.f32.xlu0 %v5173
        %v5175 = vpop.xlane.xlu0 %5174
        %v5176 = vsel %vm5133, %v5115, -inf
        %5177 = vmax.xlane.f32.xlu0 %v5176
        %v5178 = vpop.xlane.xlu0 %5177
        %v5179 = vsel %vm5133, %v5116, -inf
        %5180 = vmax.xlane.f32.xlu0 %v5179
        %v5181 = vpop.xlane.xlu0 %5180
        %v5182 = vsel %vm5133, %v5117, -inf
        %5183 = vmax.xlane.f32.xlu0 %v5182
        %v5184 = vpop.xlane.xlu0 %5183
        %v5185 = vsel %vm5133, %v5118, -inf
        %5186 = vmax.xlane.f32.xlu0 %v5185
        %v5187 = vpop.xlane.xlu0 %5186
        %v5188 = vsel %vm5133, %v5119, -inf
        %5189 = vmax.xlane.f32.xlu0 %v5188
        %v5190 = vpop.xlane.xlu0 %5189
        %v5191 = vsel %vm5133, %v5120, -inf
        %5192 = vmax.xlane.f32.xlu0 %v5191
        %v5193 = vpop.xlane.xlu0 %5192
        %v5194 = vsel %vm5133, %v5121, -inf
        %5195 = vmax.xlane.f32.xlu0 %v5194
        %v5196 = vpop.xlane.xlu0 %5195
        %v5197 = vsel %vm5133, %v5122, -inf
        %5198 = vmax.xlane.f32.xlu0 %v5197
        %v5199 = vpop.xlane.xlu0 %5198
        %v5200 = vsel %vm5133, %v5123, -inf
        %5201 = vmax.xlane.f32.xlu0 %v5200
        %v5202 = vpop.xlane.xlu0 %5201
        %v5203 = vsel %vm5133, %v5124, -inf
        %5204 = vmax.xlane.f32.xlu0 %v5203
        %v5205 = vpop.xlane.xlu0 %5204
        %v5206 = vsel %vm5133, %v5125, -inf
        %5207 = vmax.xlane.f32.xlu0 %v5206
        %v5208 = vpop.xlane.xlu0 %5207
        %v5209 = vsel %vm5133, %v5126, -inf
        %5210 = vmax.xlane.f32.xlu0 %v5209
        %v5211 = vpop.xlane.xlu0 %5210
        %v5212 = vsel %vm5133, %v5127, -inf
        %5213 = vmax.xlane.f32.xlu0 %v5212
        %v5214 = vpop.xlane.xlu0 %5213
        %v5215 = vsel %vm5133, %v5128, -inf
        %5216 = vmax.xlane.f32.xlu0 %v5215
        %v5217 = vpop.xlane.xlu0 %5216
        %v5218 = vsel %vm5133, %v5129, -inf
        %5219 = vmax.xlane.f32.xlu0 %v5218
        %v5220 = vpop.xlane.xlu0 %5219
        %v5221 = vsel %vm5133, %v5130, -inf
        %5222 = vmax.xlane.f32.xlu0 %v5221
        %v5223 = vpop.xlane.xlu0 %5222
        %v5224 = vsel %vm5133, %v5131, -inf
        %5225 = vmax.xlane.f32.xlu0 %v5224
        %v5226 = vpop.xlane.xlu0 %5225
        %v5227 = vsel %vm5133, %v5132, -inf
        %5228 = vmax.xlane.f32.xlu0 %v5227
        %v5229 = vpop.xlane.xlu0 %5228
        %v5230 = vsub.f32 %v5101, %v5136
        %v5231 = vsub.f32 %v5102, %v5139
        %v5232 = vsub.f32 %v5103, %v5142
        %v5233 = vsub.f32 %v5104, %v5145
        %v5234 = vsub.f32 %v5105, %v5148
        %v5235 = vsub.f32 %v5106, %v5151
        %v5236 = vsub.f32 %v5107, %v5154
        %v5237 = vsub.f32 %v5108, %v5157
        %v5238 = vsub.f32 %v5109, %v5160
        %v5239 = vsub.f32 %v5110, %v5163
        %v5240 = vsub.f32 %v5111, %v5166
        %v5241 = vsub.f32 %v5112, %v5169
        %v5242 = vsub.f32 %v5113, %v5172
        %v5243 = vsub.f32 %v5114, %v5175
        %v5244 = vsub.f32 %v5115, %v5178
        %v5245 = vsub.f32 %v5116, %v5181
        %v5246 = vsub.f32 %v5117, %v5184
        %v5247 = vsub.f32 %v5118, %v5187
        %v5248 = vsub.f32 %v5119, %v5190
        %v5249 = vsub.f32 %v5120, %v5193
        %v5250 = vsub.f32 %v5121, %v5196
        %v5251 = vsub.f32 %v5122, %v5199
        %v5252 = vsub.f32 %v5123, %v5202
        %v5253 = vsub.f32 %v5124, %v5205
        %v5254 = vsub.f32 %v5125, %v5208
        %v5255 = vsub.f32 %v5126, %v5211
        %v5256 = vsub.f32 %v5127, %v5214
        %v5257 = vsub.f32 %v5128, %v5217
        %v5258 = vsub.f32 %v5129, %v5220
        %v5259 = vsub.f32 %v5130, %v5223
        %v5260 = vsub.f32 %v5131, %v5226
        %v5261 = vsub.f32 %v5132, %v5229
        %v5262 = vmul.f32 %v5230, 1.442695
        %v5263 = vpow.pop %v5262
        %v5264 = vmul.f32 %v5231, 1.442695
        %v5265 = vpow.pop %v5264
        %v5266 = vmul.f32 %v5232, 1.442695
        %v5267 = vpow.pop %v5266
        %v5268 = vmul.f32 %v5233, 1.442695
        %v5269 = vpow.pop %v5268
        %v5270 = vmul.f32 %v5234, 1.442695
        %v5271 = vpow.pop %v5270
        %v5272 = vmul.f32 %v5235, 1.442695
        %v5273 = vpow.pop %v5272
        %v5274 = vmul.f32 %v5236, 1.442695
        %v5275 = vpow.pop %v5274
        %v5276 = vmul.f32 %v5237, 1.442695
        %v5277 = vpow.pop %v5276
        %v5278 = vmul.f32 %v5238, 1.442695
        %v5279 = vpow.pop %v5278
        %v5280 = vmul.f32 %v5239, 1.442695
        %v5281 = vpow.pop %v5280
        %v5282 = vmul.f32 %v5240, 1.442695
        %v5283 = vpow.pop %v5282
        %v5284 = vmul.f32 %v5241, 1.442695
        %v5285 = vpow.pop %v5284
        %v5286 = vmul.f32 %v5242, 1.442695
        %v5287 = vpow.pop %v5286
        %v5288 = vmul.f32 %v5243, 1.442695
        %v5289 = vpow.pop %v5288
        %v5290 = vmul.f32 %v5244, 1.442695
        %v5291 = vpow.pop %v5290
        %v5292 = vmul.f32 %v5245, 1.442695
        %v5293 = vpow.pop %v5292
        %v5294 = vmul.f32 %v5246, 1.442695
        %v5295 = vpow.pop %v5294
        %v5296 = vmul.f32 %v5247, 1.442695
        %v5297 = vpow.pop %v5296
        %v5298 = vmul.f32 %v5248, 1.442695
        %v5299 = vpow.pop %v5298
        %v5300 = vmul.f32 %v5249, 1.442695
        %v5301 = vpow.pop %v5300
        %v5302 = vmul.f32 %v5250, 1.442695
        %v5303 = vpow.pop %v5302
        %v5304 = vmul.f32 %v5251, 1.442695
        %v5305 = vpow.pop %v5304
        %v5306 = vmul.f32 %v5252, 1.442695
        %v5307 = vpow.pop %v5306
        %v5308 = vmul.f32 %v5253, 1.442695
        %v5309 = vpow.pop %v5308
        %v5310 = vmul.f32 %v5254, 1.442695
        %v5311 = vpow.pop %v5310
        %v5312 = vmul.f32 %v5255, 1.442695
        %v5313 = vpow.pop %v5312
        %v5314 = vmul.f32 %v5256, 1.442695
        %v5315 = vpow.pop %v5314
        %v5316 = vmul.f32 %v5257, 1.442695
        %v5317 = vpow.pop %v5316
        %v5318 = vmul.f32 %v5258, 1.442695
        %v5319 = vpow.pop %v5318
        %v5320 = vmul.f32 %v5259, 1.442695
        %v5321 = vpow.pop %v5320
        %v5322 = vmul.f32 %v5260, 1.442695
        %v5323 = vpow.pop %v5322
        %v5324 = vmul.f32 %v5261, 1.442695
        %v5325 = vpow.pop %v5324
        %v5326 = vsel %vm5133, %v5263, 0.0
        %5327 = vadd.xlane.f32.xlu0 %v5326
        %v5328 = vpop.xlane.xlu0 %5327
        %v5329 = vsel %vm5133, %v5265, 0.0
        %5330 = vadd.xlane.f32.xlu0 %v5329
        %v5331 = vpop.xlane.xlu0 %5330
        %v5332 = vsel %vm5133, %v5267, 0.0
        %5333 = vadd.xlane.f32.xlu0 %v5332
        %v5334 = vpop.xlane.xlu0 %5333
        %v5335 = vsel %vm5133, %v5269, 0.0
        %5336 = vadd.xlane.f32.xlu0 %v5335
        %v5337 = vpop.xlane.xlu0 %5336
        %v5338 = vsel %vm5133, %v5271, 0.0
        %5339 = vadd.xlane.f32.xlu0 %v5338
        %v5340 = vpop.xlane.xlu0 %5339
        %v5341 = vsel %vm5133, %v5273, 0.0
        %5342 = vadd.xlane.f32.xlu0 %v5341
        %v5343 = vpop.xlane.xlu0 %5342
        %v5344 = vsel %vm5133, %v5275, 0.0
        %5345 = vadd.xlane.f32.xlu0 %v5344
        %v5346 = vpop.xlane.xlu0 %5345
        %v5347 = vsel %vm5133, %v5277, 0.0
        %5348 = vadd.xlane.f32.xlu0 %v5347
        %v5349 = vpop.xlane.xlu0 %5348
        %v5350 = vsel %vm5133, %v5279, 0.0
        %5351 = vadd.xlane.f32.xlu0 %v5350
        %v5352 = vpop.xlane.xlu0 %5351
        %v5353 = vsel %vm5133, %v5281, 0.0
        %5354 = vadd.xlane.f32.xlu0 %v5353
        %v5355 = vpop.xlane.xlu0 %5354
        %v5356 = vsel %vm5133, %v5283, 0.0
        %5357 = vadd.xlane.f32.xlu0 %v5356
        %v5358 = vpop.xlane.xlu0 %5357
        %v5359 = vsel %vm5133, %v5285, 0.0
        %5360 = vadd.xlane.f32.xlu0 %v5359
        %v5361 = vpop.xlane.xlu0 %5360
        %v5362 = vsel %vm5133, %v5287, 0.0
        %5363 = vadd.xlane.f32.xlu0 %v5362
        %v5364 = vpop.xlane.xlu0 %5363
        %v5365 = vsel %vm5133, %v5289, 0.0
        %5366 = vadd.xlane.f32.xlu0 %v5365
        %v5367 = vpop.xlane.xlu0 %5366
        %v5368 = vsel %vm5133, %v5291, 0.0
        %5369 = vadd.xlane.f32.xlu0 %v5368
        %v5370 = vpop.xlane.xlu0 %5369
        %v5371 = vsel %vm5133, %v5293, 0.0
        %5372 = vadd.xlane.f32.xlu0 %v5371
        %v5373 = vpop.xlane.xlu0 %5372
        %v5374 = vsel %vm5133, %v5295, 0.0
        %5375 = vadd.xlane.f32.xlu0 %v5374
        %v5376 = vpop.xlane.xlu0 %5375
        %v5377 = vsel %vm5133, %v5297, 0.0
        %5378 = vadd.xlane.f32.xlu0 %v5377
        %v5379 = vpop.xlane.xlu0 %5378
        %v5380 = vsel %vm5133, %v5299, 0.0
        %5381 = vadd.xlane.f32.xlu0 %v5380
        %v5382 = vpop.xlane.xlu0 %5381
        %v5383 = vsel %vm5133, %v5301, 0.0
        %5384 = vadd.xlane.f32.xlu0 %v5383
        %v5385 = vpop.xlane.xlu0 %5384
        %v5386 = vsel %vm5133, %v5303, 0.0
        %5387 = vadd.xlane.f32.xlu0 %v5386
        %v5388 = vpop.xlane.xlu0 %5387
        %v5389 = vsel %vm5133, %v5305, 0.0
        %5390 = vadd.xlane.f32.xlu0 %v5389
        %v5391 = vpop.xlane.xlu0 %5390
        %v5392 = vsel %vm5133, %v5307, 0.0
        %5393 = vadd.xlane.f32.xlu0 %v5392
        %v5394 = vpop.xlane.xlu0 %5393
        %v5395 = vsel %vm5133, %v5309, 0.0
        %5396 = vadd.xlane.f32.xlu0 %v5395
        %v5397 = vpop.xlane.xlu0 %5396
        %v5398 = vsel %vm5133, %v5311, 0.0
        %5399 = vadd.xlane.f32.xlu0 %v5398
        %v5400 = vpop.xlane.xlu0 %5399
        %v5401 = vsel %vm5133, %v5313, 0.0
        %5402 = vadd.xlane.f32.xlu0 %v5401
        %v5403 = vpop.xlane.xlu0 %5402
        %v5404 = vsel %vm5133, %v5315, 0.0
        %5405 = vadd.xlane.f32.xlu0 %v5404
        %v5406 = vpop.xlane.xlu0 %5405
        %v5407 = vsel %vm5133, %v5317, 0.0
        %5408 = vadd.xlane.f32.xlu0 %v5407
        %v5409 = vpop.xlane.xlu0 %5408
        %v5410 = vsel %vm5133, %v5319, 0.0
        %5411 = vadd.xlane.f32.xlu0 %v5410
        %v5412 = vpop.xlane.xlu0 %5411
        %v5413 = vsel %vm5133, %v5321, 0.0
        %5414 = vadd.xlane.f32.xlu0 %v5413
        %v5415 = vpop.xlane.xlu0 %5414
        %v5416 = vsel %vm5133, %v5323, 0.0
        %5417 = vadd.xlane.f32.xlu0 %v5416
        %v5418 = vpop.xlane.xlu0 %5417
        %v5419 = vsel %vm5133, %v5325, 0.0
        %5420 = vadd.xlane.f32.xlu0 %v5419
        %v5421 = vpop.xlane.xlu0 %5420
        %v5422 = vrcp.pop %v5328
        %v5423 = vrcp.pop %v5331
        %v5424 = vrcp.pop %v5334
        %v5425 = vrcp.pop %v5337
        %v5426 = vrcp.pop %v5340
        %v5427 = vrcp.pop %v5343
        %v5428 = vrcp.pop %v5346
        %v5429 = vrcp.pop %v5349
        %v5430 = vrcp.pop %v5352
        %v5431 = vrcp.pop %v5355
        %v5432 = vrcp.pop %v5358
        %v5433 = vrcp.pop %v5361
        %v5434 = vrcp.pop %v5364
        %v5435 = vrcp.pop %v5367
        %v5436 = vrcp.pop %v5370
        %v5437 = vrcp.pop %v5373
        %v5438 = vrcp.pop %v5376
        %v5439 = vrcp.pop %v5379
        %v5440 = vrcp.pop %v5382
        %v5441 = vrcp.pop %v5385
        %v5442 = vrcp.pop %v5388
        %v5443 = vrcp.pop %v5391
        %v5444 = vrcp.pop %v5394
        %v5445 = vrcp.pop %v5397
        %v5446 = vrcp.pop %v5400
        %v5447 = vrcp.pop %v5403
        %v5448 = vrcp.pop %v5406
        %v5449 = vrcp.pop %v5409
        %v5450 = vrcp.pop %v5412
        %v5451 = vrcp.pop %v5415
        %v5452 = vrcp.pop %v5418
        %v5453 = vrcp.pop %v5421
        %v5454 = vmul.f32 %v5263, %v5422
        %v5455 = vmul.f32 %v5265, %v5423
        %v5456 = vmul.f32 %v5267, %v5424
        %v5457 = vmul.f32 %v5269, %v5425
        %v5458 = vmul.f32 %v5271, %v5426
        %v5459 = vmul.f32 %v5273, %v5427
        %v5460 = vmul.f32 %v5275, %v5428
        %v5461 = vmul.f32 %v5277, %v5429
        %v5462 = vmul.f32 %v5279, %v5430
        %v5463 = vmul.f32 %v5281, %v5431
        %v5464 = vmul.f32 %v5283, %v5432
        %v5465 = vmul.f32 %v5285, %v5433
        %v5466 = vmul.f32 %v5287, %v5434
        %v5467 = vmul.f32 %v5289, %v5435
        %v5468 = vmul.f32 %v5291, %v5436
        %v5469 = vmul.f32 %v5293, %v5437
        %v5470 = vmul.f32 %v5295, %v5438
        %v5471 = vmul.f32 %v5297, %v5439
        %v5472 = vmul.f32 %v5299, %v5440
        %v5473 = vmul.f32 %v5301, %v5441
        %v5474 = vmul.f32 %v5303, %v5442
        %v5475 = vmul.f32 %v5305, %v5443
        %v5476 = vmul.f32 %v5307, %v5444
        %v5477 = vmul.f32 %v5309, %v5445
        %v5478 = vmul.f32 %v5311, %v5446
        %v5479 = vmul.f32 %v5313, %v5447
        %v5480 = vmul.f32 %v5315, %v5448
        %v5481 = vmul.f32 %v5317, %v5449
        %v5482 = vmul.f32 %v5319, %v5450
        %v5483 = vmul.f32 %v5321, %v5451
        %v5484 = vmul.f32 %v5323, %v5452
        %v5485 = vmul.f32 %v5325, %v5453
        %v5486 = vld [vmem:[#allocation8] sm:$0x1]
        %5488 = vset.pattern.permute.xlu0 0
        %5489 = vperm.xlu0 %5488, %v5454
        %v5490 = vpop.permute.xlu0 %5489
        %5493 = vset.pattern.permute.xlu0 0
        %5494 = vperm.xlu0 %5493, %v5455
        %v5495 = vpop.permute.xlu0 %5494
        %5498 = vset.pattern.permute.xlu0 0
        %5499 = vperm.xlu0 %5498, %v5456
        %v5500 = vpop.permute.xlu0 %5499
        %5503 = vset.pattern.permute.xlu0 0
        %5504 = vperm.xlu0 %5503, %v5457
        %v5505 = vpop.permute.xlu0 %5504
        %5508 = vset.pattern.permute.xlu0 0
        %5509 = vperm.xlu0 %5508, %v5458
        %v5510 = vpop.permute.xlu0 %5509
        %5513 = vset.pattern.permute.xlu0 0
        %5514 = vperm.xlu0 %5513, %v5459
        %v5515 = vpop.permute.xlu0 %5514
        %5518 = vset.pattern.permute.xlu0 0
        %5519 = vperm.xlu0 %5518, %v5460
        %v5520 = vpop.permute.xlu0 %5519
        %5523 = vset.pattern.permute.xlu0 0
        %5524 = vperm.xlu0 %5523, %v5461
        %v5525 = vpop.permute.xlu0 %5524
        %5528 = vset.pattern.permute.xlu0 0
        %5529 = vperm.xlu0 %5528, %v5462
        %v5530 = vpop.permute.xlu0 %5529
        %5533 = vset.pattern.permute.xlu0 0
        %5534 = vperm.xlu0 %5533, %v5463
        %v5535 = vpop.permute.xlu0 %5534
        %5538 = vset.pattern.permute.xlu0 0
        %5539 = vperm.xlu0 %5538, %v5464
        %v5540 = vpop.permute.xlu0 %5539
        %5543 = vset.pattern.permute.xlu0 0
        %5544 = vperm.xlu0 %5543, %v5465
        %v5545 = vpop.permute.xlu0 %5544
        %5548 = vset.pattern.permute.xlu0 0
        %5549 = vperm.xlu0 %5548, %v5466
        %v5550 = vpop.permute.xlu0 %5549
        %5553 = vset.pattern.permute.xlu0 0
        %5554 = vperm.xlu0 %5553, %v5467
        %v5555 = vpop.permute.xlu0 %5554
        %5558 = vset.pattern.permute.xlu0 0
        %5559 = vperm.xlu0 %5558, %v5468
        %v5560 = vpop.permute.xlu0 %5559
        %5563 = vset.pattern.permute.xlu0 0
        %5564 = vperm.xlu0 %5563, %v5469
        %v5565 = vpop.permute.xlu0 %5564
        %5568 = vset.pattern.permute.xlu0 0
        %5569 = vperm.xlu0 %5568, %v5470
        %v5570 = vpop.permute.xlu0 %5569
        %5573 = vset.pattern.permute.xlu0 0
        %5574 = vperm.xlu0 %5573, %v5471
        %v5575 = vpop.permute.xlu0 %5574
        %5578 = vset.pattern.permute.xlu0 0
        %5579 = vperm.xlu0 %5578, %v5472
        %v5580 = vpop.permute.xlu0 %5579
        %5583 = vset.pattern.permute.xlu0 0
        %5584 = vperm.xlu0 %5583, %v5473
        %v5585 = vpop.permute.xlu0 %5584
        %5588 = vset.pattern.permute.xlu0 0
        %5589 = vperm.xlu0 %5588, %v5474
        %v5590 = vpop.permute.xlu0 %5589
        %5593 = vset.pattern.permute.xlu0 0
        %5594 = vperm.xlu0 %5593, %v5475
        %v5595 = vpop.permute.xlu0 %5594
        %5598 = vset.pattern.permute.xlu0 0
        %5599 = vperm.xlu0 %5598, %v5476
        %v5600 = vpop.permute.xlu0 %5599
        %5603 = vset.pattern.permute.xlu0 0
        %5604 = vperm.xlu0 %5603, %v5477
        %v5605 = vpop.permute.xlu0 %5604
        %5608 = vset.pattern.permute.xlu0 0
        %5609 = vperm.xlu0 %5608, %v5478
        %v5610 = vpop.permute.xlu0 %5609
        %5613 = vset.pattern.permute.xlu0 0
        %5614 = vperm.xlu0 %5613, %v5479
        %v5615 = vpop.permute.xlu0 %5614
        %5618 = vset.pattern.permute.xlu0 0
        %5619 = vperm.xlu0 %5618, %v5480
        %v5620 = vpop.permute.xlu0 %5619
        %5623 = vset.pattern.permute.xlu0 0
        %5624 = vperm.xlu0 %5623, %v5481
        %v5625 = vpop.permute.xlu0 %5624
        %5628 = vset.pattern.permute.xlu0 0
        %5629 = vperm.xlu0 %5628, %v5482
        %v5630 = vpop.permute.xlu0 %5629
        %5633 = vset.pattern.permute.xlu0 0
        %5634 = vperm.xlu0 %5633, %v5483
        %v5635 = vpop.permute.xlu0 %5634
        %5638 = vset.pattern.permute.xlu0 0
        %5639 = vperm.xlu0 %5638, %v5484
        %v5640 = vpop.permute.xlu0 %5639
        %5643 = vset.pattern.permute.xlu0 0
        %5644 = vperm.xlu0 %5643, %v5485
        %v5645 = vpop.permute.xlu0 %5644
        %v5647 = vmul.f32 %v5490, %v3725
        %v5648 = vmul.f32 %v5495, %v3730
        %v5649 = vmul.f32 %v5500, %v3735
        %v5650 = vmul.f32 %v5505, %v3740
        %v5651 = vmul.f32 %v5510, %v3745
        %v5652 = vmul.f32 %v5515, %v3750
        %v5653 = vmul.f32 %v5520, %v3755
        %v5654 = vmul.f32 %v5525, %v3760
        %v5655 = vmul.f32 %v5530, %v3765
        %v5656 = vmul.f32 %v5535, %v3770
        %v5657 = vmul.f32 %v5540, %v3775
        %v5658 = vmul.f32 %v5545, %v3780
        %v5659 = vmul.f32 %v5550, %v3785
        %v5660 = vmul.f32 %v5555, %v3790
        %v5661 = vmul.f32 %v5560, %v3795
        %v5662 = vmul.f32 %v5565, %v3800
        %v5663 = vmul.f32 %v5570, %v3805
        %v5664 = vmul.f32 %v5575, %v3810
        %v5665 = vmul.f32 %v5580, %v3815
        %v5666 = vmul.f32 %v5585, %v3820
        %v5667 = vmul.f32 %v5590, %v3825
        %v5668 = vmul.f32 %v5595, %v3830
        %v5669 = vmul.f32 %v5600, %v3835
        %v5670 = vmul.f32 %v5605, %v3840
        %v5671 = vmul.f32 %v5610, %v3845
        %v5672 = vmul.f32 %v5615, %v3850
        %v5673 = vmul.f32 %v5620, %v3855
        %v5674 = vmul.f32 %v5625, %v3860
        %v5675 = vmul.f32 %v5630, %v3865
        %v5676 = vmul.f32 %v5635, %v3870
        %v5677 = vmul.f32 %v5640, %v3875
        %v5678 = vmul.f32 %v5645, %v3880
        %v5679 = vadd.f32 %v5647, 0.0
        %v5680 = vadd.f32 %v5648, 0.0
        %v5681 = vadd.f32 %v5649, 0.0
        %v5682 = vadd.f32 %v5650, 0.0
        %v5683 = vadd.f32 %v5651, 0.0
        %v5684 = vadd.f32 %v5652, 0.0
        %v5685 = vadd.f32 %v5653, 0.0
        %v5686 = vadd.f32 %v5654, 0.0
        %v5687 = vadd.f32 %v5655, 0.0
        %v5688 = vadd.f32 %v5656, 0.0
        %v5689 = vadd.f32 %v5657, 0.0
        %v5690 = vadd.f32 %v5658, 0.0
        %v5691 = vadd.f32 %v5659, 0.0
        %v5692 = vadd.f32 %v5660, 0.0
        %v5693 = vadd.f32 %v5661, 0.0
        %v5694 = vadd.f32 %v5662, 0.0
        %v5695 = vadd.f32 %v5663, 0.0
        %v5696 = vadd.f32 %v5664, 0.0
        %v5697 = vadd.f32 %v5665, 0.0
        %v5698 = vadd.f32 %v5666, 0.0
        %v5699 = vadd.f32 %v5667, 0.0
        %v5700 = vadd.f32 %v5668, 0.0
        %v5701 = vadd.f32 %v5669, 0.0
        %v5702 = vadd.f32 %v5670, 0.0
        %v5703 = vadd.f32 %v5671, 0.0
        %v5704 = vadd.f32 %v5672, 0.0
        %v5705 = vadd.f32 %v5673, 0.0
        %v5706 = vadd.f32 %v5674, 0.0
        %v5707 = vadd.f32 %v5675, 0.0
        %v5708 = vadd.f32 %v5676, 0.0
        %v5709 = vadd.f32 %v5677, 0.0
        %v5710 = vadd.f32 %v5678, 0.0
        %5711 = vset.pattern.permute.xlu0 1
        %5712 = vperm.xlu0 %5711, %v5454
        %v5713 = vpop.permute.xlu0 %5712
        %5715 = vset.pattern.permute.xlu0 1
        %5716 = vperm.xlu0 %5715, %v5455
        %v5717 = vpop.permute.xlu0 %5716
        %5719 = vset.pattern.permute.xlu0 1
        %5720 = vperm.xlu0 %5719, %v5456
        %v5721 = vpop.permute.xlu0 %5720
        %5723 = vset.pattern.permute.xlu0 1
        %5724 = vperm.xlu0 %5723, %v5457
        %v5725 = vpop.permute.xlu0 %5724
        %5727 = vset.pattern.permute.xlu0 1
        %5728 = vperm.xlu0 %5727, %v5458
        %v5729 = vpop.permute.xlu0 %5728
        %5731 = vset.pattern.permute.xlu0 1
        %5732 = vperm.xlu0 %5731, %v5459
        %v5733 = vpop.permute.xlu0 %5732
        %5735 = vset.pattern.permute.xlu0 1
        %5736 = vperm.xlu0 %5735, %v5460
        %v5737 = vpop.permute.xlu0 %5736
        %5739 = vset.pattern.permute.xlu0 1
        %5740 = vperm.xlu0 %5739, %v5461
        %v5741 = vpop.permute.xlu0 %5740
        %5743 = vset.pattern.permute.xlu0 1
        %5744 = vperm.xlu0 %5743, %v5462
        %v5745 = vpop.permute.xlu0 %5744
        %5747 = vset.pattern.permute.xlu0 1
        %5748 = vperm.xlu0 %5747, %v5463
        %v5749 = vpop.permute.xlu0 %5748
        %5751 = vset.pattern.permute.xlu0 1
        %5752 = vperm.xlu0 %5751, %v5464
        %v5753 = vpop.permute.xlu0 %5752
        %5755 = vset.pattern.permute.xlu0 1
        %5756 = vperm.xlu0 %5755, %v5465
        %v5757 = vpop.permute.xlu0 %5756
        %5759 = vset.pattern.permute.xlu0 1
        %5760 = vperm.xlu0 %5759, %v5466
        %v5761 = vpop.permute.xlu0 %5760
        %5763 = vset.pattern.permute.xlu0 1
        %5764 = vperm.xlu0 %5763, %v5467
        %v5765 = vpop.permute.xlu0 %5764
        %5767 = vset.pattern.permute.xlu0 1
        %5768 = vperm.xlu0 %5767, %v5468
        %v5769 = vpop.permute.xlu0 %5768
        %5771 = vset.pattern.permute.xlu0 1
        %5772 = vperm.xlu0 %5771, %v5469
        %v5773 = vpop.permute.xlu0 %5772
        %5775 = vset.pattern.permute.xlu0 1
        %5776 = vperm.xlu0 %5775, %v5470
        %v5777 = vpop.permute.xlu0 %5776
        %5779 = vset.pattern.permute.xlu0 1
        %5780 = vperm.xlu0 %5779, %v5471
        %v5781 = vpop.permute.xlu0 %5780
        %5783 = vset.pattern.permute.xlu0 1
        %5784 = vperm.xlu0 %5783, %v5472
        %v5785 = vpop.permute.xlu0 %5784
        %5787 = vset.pattern.permute.xlu0 1
        %5788 = vperm.xlu0 %5787, %v5473
        %v5789 = vpop.permute.xlu0 %5788
        %5791 = vset.pattern.permute.xlu0 1
        %5792 = vperm.xlu0 %5791, %v5474
        %v5793 = vpop.permute.xlu0 %5792
        %5795 = vset.pattern.permute.xlu0 1
        %5796 = vperm.xlu0 %5795, %v5475
        %v5797 = vpop.permute.xlu0 %5796
        %5799 = vset.pattern.permute.xlu0 1
        %5800 = vperm.xlu0 %5799, %v5476
        %v5801 = vpop.permute.xlu0 %5800
        %5803 = vset.pattern.permute.xlu0 1
        %5804 = vperm.xlu0 %5803, %v5477
        %v5805 = vpop.permute.xlu0 %5804
        %5807 = vset.pattern.permute.xlu0 1
        %5808 = vperm.xlu0 %5807, %v5478
        %v5809 = vpop.permute.xlu0 %5808
        %5811 = vset.pattern.permute.xlu0 1
        %5812 = vperm.xlu0 %5811, %v5479
        %v5813 = vpop.permute.xlu0 %5812
        %5815 = vset.pattern.permute.xlu0 1
        %5816 = vperm.xlu0 %5815, %v5480
        %v5817 = vpop.permute.xlu0 %5816
        %5819 = vset.pattern.permute.xlu0 1
        %5820 = vperm.xlu0 %5819, %v5481
        %v5821 = vpop.permute.xlu0 %5820
        %5823 = vset.pattern.permute.xlu0 1
        %5824 = vperm.xlu0 %5823, %v5482
        %v5825 = vpop.permute.xlu0 %5824
        %5827 = vset.pattern.permute.xlu0 1
        %5828 = vperm.xlu0 %5827, %v5483
        %v5829 = vpop.permute.xlu0 %5828
        %5831 = vset.pattern.permute.xlu0 1
        %5832 = vperm.xlu0 %5831, %v5484
        %v5833 = vpop.permute.xlu0 %5832
        %5835 = vset.pattern.permute.xlu0 1
        %5836 = vperm.xlu0 %5835, %v5485
        %v5837 = vpop.permute.xlu0 %5836
        %v5839 = vmul.f32 %v5713, %v4942
        %v5840 = vmul.f32 %v5717, %v4947
        %v5841 = vmul.f32 %v5721, %v4952
        %v5842 = vmul.f32 %v5725, %v4957
        %v5843 = vmul.f32 %v5729, %v4962
        %v5844 = vmul.f32 %v5733, %v4967
        %v5845 = vmul.f32 %v5737, %v4972
        %v5846 = vmul.f32 %v5741, %v4977
        %v5847 = vmul.f32 %v5745, %v4982
        %v5848 = vmul.f32 %v5749, %v4987
        %v5849 = vmul.f32 %v5753, %v4992
        %v5850 = vmul.f32 %v5757, %v4997
        %v5851 = vmul.f32 %v5761, %v5002
        %v5852 = vmul.f32 %v5765, %v5007
        %v5853 = vmul.f32 %v5769, %v5012
        %v5854 = vmul.f32 %v5773, %v5017
        %v5855 = vmul.f32 %v5777, %v5022
        %v5856 = vmul.f32 %v5781, %v5027
        %v5857 = vmul.f32 %v5785, %v5032
        %v5858 = vmul.f32 %v5789, %v5037
        %v5859 = vmul.f32 %v5793, %v5042
        %v5860 = vmul.f32 %v5797, %v5047
        %v5861 = vmul.f32 %v5801, %v5052
        %v5862 = vmul.f32 %v5805, %v5057
        %v5863 = vmul.f32 %v5809, %v5062
        %v5864 = vmul.f32 %v5813, %v5067
        %v5865 = vmul.f32 %v5817, %v5072
        %v5866 = vmul.f32 %v5821, %v5077
        %v5867 = vmul.f32 %v5825, %v5082
        %v5868 = vmul.f32 %v5829, %v5087
        %v5869 = vmul.f32 %v5833, %v5092
        %v5870 = vmul.f32 %v5837, %v5097
        %v5871 = vadd.f32 %v5679, %v5839
        %v5872 = vadd.f32 %v5680, %v5840
        %v5873 = vadd.f32 %v5681, %v5841
        %v5874 = vadd.f32 %v5682, %v5842
        %v5875 = vadd.f32 %v5683, %v5843
        %v5876 = vadd.f32 %v5684, %v5844
        %v5877 = vadd.f32 %v5685, %v5845
        %v5878 = vadd.f32 %v5686, %v5846
        %v5879 = vadd.f32 %v5687, %v5847
        %v5880 = vadd.f32 %v5688, %v5848
        %v5881 = vadd.f32 %v5689, %v5849
        %v5882 = vadd.f32 %v5690, %v5850
        %v5883 = vadd.f32 %v5691, %v5851
        %v5884 = vadd.f32 %v5692, %v5852
        %v5885 = vadd.f32 %v5693, %v5853
        %v5886 = vadd.f32 %v5694, %v5854
        %v5887 = vadd.f32 %v5695, %v5855
        %v5888 = vadd.f32 %v5696, %v5856
        %v5889 = vadd.f32 %v5697, %v5857
        %v5890 = vadd.f32 %v5698, %v5858
        %v5891 = vadd.f32 %v5699, %v5859
        %v5892 = vadd.f32 %v5700, %v5860
        %v5893 = vadd.f32 %v5701, %v5861
        %v5894 = vadd.f32 %v5702, %v5862
        %v5895 = vadd.f32 %v5703, %v5863
        %v5896 = vadd.f32 %v5704, %v5864
        %v5897 = vadd.f32 %v5705, %v5865
        %v5898 = vadd.f32 %v5706, %v5866
        %v5899 = vadd.f32 %v5707, %v5867
        %v5900 = vadd.f32 %v5708, %v5868
        %v5901 = vadd.f32 %v5709, %v5869
        %v5902 = vadd.f32 %v5710, %v5870
        %v5904 = vlaneseq
        %v5905 = vshrl.u32 %v5904, 7
        %v5906 = vsub.s32 0, %v5905
        %v5907 = vrot.slane %v5486, %v5906
        %v5909 = vadd.f32 %v5907, %v5871
        %v5910 = vadd.f32 %v5907, %v5872
        %v5911 = vadd.f32 %v5907, %v5873
        %v5912 = vadd.f32 %v5907, %v5874
        %v5913 = vadd.f32 %v5907, %v5875
        %v5914 = vadd.f32 %v5907, %v5876
        %v5915 = vadd.f32 %v5907, %v5877
        %v5916 = vadd.f32 %v5907, %v5878
        %v5917 = vadd.f32 %v5907, %v5879
        %v5918 = vadd.f32 %v5907, %v5880
        %v5919 = vadd.f32 %v5907, %v5881
        %v5920 = vadd.f32 %v5907, %v5882
        %v5921 = vadd.f32 %v5907, %v5883
        %v5922 = vadd.f32 %v5907, %v5884
        %v5923 = vadd.f32 %v5907, %v5885
        %v5924 = vadd.f32 %v5907, %v5886
        %v5925 = vadd.f32 %v5907, %v5887
        %v5926 = vadd.f32 %v5907, %v5888
        %v5927 = vadd.f32 %v5907, %v5889
        %v5928 = vadd.f32 %v5907, %v5890
        %v5929 = vadd.f32 %v5907, %v5891
        %v5930 = vadd.f32 %v5907, %v5892
        %v5931 = vadd.f32 %v5907, %v5893
        %v5932 = vadd.f32 %v5907, %v5894
        %v5933 = vadd.f32 %v5907, %v5895
        %v5934 = vadd.f32 %v5907, %v5896
        %v5935 = vadd.f32 %v5907, %v5897
        %v5936 = vadd.f32 %v5907, %v5898
        %v5937 = vadd.f32 %v5907, %v5899
        %v5938 = vadd.f32 %v5907, %v5900
        %v5939 = vadd.f32 %v5907, %v5901
        %v5940 = vadd.f32 %v5907, %v5902
        %v5941 = vmul.f32 %v5909, 0.5
        %v5942 = vmul.f32 %v5910, 0.5
        %v5943 = vmul.f32 %v5911, 0.5
        %v5944 = vmul.f32 %v5912, 0.5
        %v5945 = vmul.f32 %v5913, 0.5
        %v5946 = vmul.f32 %v5914, 0.5
        %v5947 = vmul.f32 %v5915, 0.5
        %v5948 = vmul.f32 %v5916, 0.5
        %v5949 = vmul.f32 %v5917, 0.5
        %v5950 = vmul.f32 %v5918, 0.5
        %v5951 = vmul.f32 %v5919, 0.5
        %v5952 = vmul.f32 %v5920, 0.5
        %v5953 = vmul.f32 %v5921, 0.5
        %v5954 = vmul.f32 %v5922, 0.5
        %v5955 = vmul.f32 %v5923, 0.5
        %v5956 = vmul.f32 %v5924, 0.5
        %v5957 = vmul.f32 %v5925, 0.5
        %v5958 = vmul.f32 %v5926, 0.5
        %v5959 = vmul.f32 %v5927, 0.5
        %v5960 = vmul.f32 %v5928, 0.5
        %v5961 = vmul.f32 %v5929, 0.5
        %v5962 = vmul.f32 %v5930, 0.5
        %v5963 = vmul.f32 %v5931, 0.5
        %v5964 = vmul.f32 %v5932, 0.5
        %v5965 = vmul.f32 %v5933, 0.5
        %v5966 = vmul.f32 %v5934, 0.5
        %v5967 = vmul.f32 %v5935, 0.5
        %v5968 = vmul.f32 %v5936, 0.5
        %v5969 = vmul.f32 %v5937, 0.5
        %v5970 = vmul.f32 %v5938, 0.5
        %v5971 = vmul.f32 %v5939, 0.5
        %v5972 = vmul.f32 %v5940, 0.5
        %v5973 = vmul.f32 %v5909, 0.70710677
        %v5974 = vmul.f32 %v5910, 0.70710677
        %v5975 = vmul.f32 %v5911, 0.70710677
        %v5976 = vmul.f32 %v5912, 0.70710677
        %v5977 = vmul.f32 %v5913, 0.70710677
        %v5978 = vmul.f32 %v5914, 0.70710677
        %v5979 = vmul.f32 %v5915, 0.70710677
        %v5980 = vmul.f32 %v5916, 0.70710677
        %v5981 = vmul.f32 %v5917, 0.70710677
        %v5982 = vmul.f32 %v5918, 0.70710677
        %v5983 = vmul.f32 %v5919, 0.70710677
        %v5984 = vmul.f32 %v5920, 0.70710677
        %v5985 = vmul.f32 %v5921, 0.70710677
        %v5986 = vmul.f32 %v5922, 0.70710677
        %v5987 = vmul.f32 %v5923, 0.70710677
        %v5988 = vmul.f32 %v5924, 0.70710677
        %v5989 = vmul.f32 %v5925, 0.70710677
        %v5990 = vmul.f32 %v5926, 0.70710677
        %v5991 = vmul.f32 %v5927, 0.70710677
        %v5992 = vmul.f32 %v5928, 0.70710677
        %v5993 = vmul.f32 %v5929, 0.70710677
        %v5994 = vmul.f32 %v5930, 0.70710677
        %v5995 = vmul.f32 %v5931, 0.70710677
        %v5996 = vmul.f32 %v5932, 0.70710677
        %v5997 = vmul.f32 %v5933, 0.70710677
        %v5998 = vmul.f32 %v5934, 0.70710677
        %v5999 = vmul.f32 %v5935, 0.70710677
        %v6000 = vmul.f32 %v5936, 0.70710677
        %v6001 = vmul.f32 %v5937, 0.70710677
        %v6002 = vmul.f32 %v5938, 0.70710677
        %v6003 = vmul.f32 %v5939, 0.70710677
        %v6004 = vmul.f32 %v5940, 0.70710677
        %vm6005 = vcmp.ge.f32.partialorder %v5973, 0.0
        %vm6006 = vcmp.ge.f32.partialorder %v5974, 0.0
        %vm6007 = vcmp.ge.f32.partialorder %v5975, 0.0
        %vm6008 = vcmp.ge.f32.partialorder %v5976, 0.0
        %vm6009 = vcmp.ge.f32.partialorder %v5977, 0.0
        %vm6010 = vcmp.ge.f32.partialorder %v5978, 0.0
        %vm6011 = vcmp.ge.f32.partialorder %v5979, 0.0
        %vm6012 = vcmp.ge.f32.partialorder %v5980, 0.0
        %vm6013 = vcmp.ge.f32.partialorder %v5981, 0.0
        %vm6014 = vcmp.ge.f32.partialorder %v5982, 0.0
        %vm6015 = vcmp.ge.f32.partialorder %v5983, 0.0
        %vm6016 = vcmp.ge.f32.partialorder %v5984, 0.0
        %vm6017 = vcmp.ge.f32.partialorder %v5985, 0.0
        %vm6018 = vcmp.ge.f32.partialorder %v5986, 0.0
        %vm6019 = vcmp.ge.f32.partialorder %v5987, 0.0
        %vm6020 = vcmp.ge.f32.partialorder %v5988, 0.0
        %vm6021 = vcmp.ge.f32.partialorder %v5989, 0.0
        %vm6022 = vcmp.ge.f32.partialorder %v5990, 0.0
        %vm6023 = vcmp.ge.f32.partialorder %v5991, 0.0
        %vm6024 = vcmp.ge.f32.partialorder %v5992, 0.0
        %vm6025 = vcmp.ge.f32.partialorder %v5993, 0.0
        %vm6026 = vcmp.ge.f32.partialorder %v5994, 0.0
        %vm6027 = vcmp.ge.f32.partialorder %v5995, 0.0
        %vm6028 = vcmp.ge.f32.partialorder %v5996, 0.0
        %vm6029 = vcmp.ge.f32.partialorder %v5997, 0.0
        %vm6030 = vcmp.ge.f32.partialorder %v5998, 0.0
        %vm6031 = vcmp.ge.f32.partialorder %v5999, 0.0
        %vm6032 = vcmp.ge.f32.partialorder %v6000, 0.0
        %vm6033 = vcmp.ge.f32.partialorder %v6001, 0.0
        %vm6034 = vcmp.ge.f32.partialorder %v6002, 0.0
        %vm6035 = vcmp.ge.f32.partialorder %v6003, 0.0
        %vm6036 = vcmp.ge.f32.partialorder %v6004, 0.0
        %v6037 = vsel %vm6005, 1.0, -1.0
        %v6038 = vsel %vm6006, 1.0, -1.0
        %v6039 = vsel %vm6007, 1.0, -1.0
        %v6040 = vsel %vm6008, 1.0, -1.0
        %v6041 = vsel %vm6009, 1.0, -1.0
        %v6042 = vsel %vm6010, 1.0, -1.0
        %v6043 = vsel %vm6011, 1.0, -1.0
        %v6044 = vsel %vm6012, 1.0, -1.0
        %v6045 = vsel %vm6013, 1.0, -1.0
        %v6046 = vsel %vm6014, 1.0, -1.0
        %v6047 = vsel %vm6015, 1.0, -1.0
        %v6048 = vsel %vm6016, 1.0, -1.0
        %v6049 = vsel %vm6017, 1.0, -1.0
        %v6050 = vsel %vm6018, 1.0, -1.0
        %v6051 = vsel %vm6019, 1.0, -1.0
        %v6052 = vsel %vm6020, 1.0, -1.0
        %v6053 = vsel %vm6021, 1.0, -1.0
        %v6054 = vsel %vm6022, 1.0, -1.0
        %v6055 = vsel %vm6023, 1.0, -1.0
        %v6056 = vsel %vm6024, 1.0, -1.0
        %v6057 = vsel %vm6025, 1.0, -1.0
        %v6058 = vsel %vm6026, 1.0, -1.0
        %v6059 = vsel %vm6027, 1.0, -1.0
        %v6060 = vsel %vm6028, 1.0, -1.0
        %v6061 = vsel %vm6029, 1.0, -1.0
        %v6062 = vsel %vm6030, 1.0, -1.0
        %v6063 = vsel %vm6031, 1.0, -1.0
        %v6064 = vsel %vm6032, 1.0, -1.0
        %v6065 = vsel %vm6033, 1.0, -1.0
        %v6066 = vsel %vm6034, 1.0, -1.0
        %v6067 = vsel %vm6035, 1.0, -1.0
        %v6068 = vsel %vm6036, 1.0, -1.0
        %v6069 = vand.u32 2147483647, %v5973
        %v6070 = vand.u32 2147483647, %v5974
        %v6071 = vand.u32 2147483647, %v5975
        %v6072 = vand.u32 2147483647, %v5976
        %v6073 = vand.u32 2147483647, %v5977
        %v6074 = vand.u32 2147483647, %v5978
        %v6075 = vand.u32 2147483647, %v5979
        %v6076 = vand.u32 2147483647, %v5980
        %v6077 = vand.u32 2147483647, %v5981
        %v6078 = vand.u32 2147483647, %v5982
        %v6079 = vand.u32 2147483647, %v5983
        %v6080 = vand.u32 2147483647, %v5984
        %v6081 = vand.u32 2147483647, %v5985
        %v6082 = vand.u32 2147483647, %v5986
        %v6083 = vand.u32 2147483647, %v5987
        %v6084 = vand.u32 2147483647, %v5988
        %v6085 = vand.u32 2147483647, %v5989
        %v6086 = vand.u32 2147483647, %v5990
        %v6087 = vand.u32 2147483647, %v5991
        %v6088 = vand.u32 2147483647, %v5992
        %v6089 = vand.u32 2147483647, %v5993
        %v6090 = vand.u32 2147483647, %v5994
        %v6091 = vand.u32 2147483647, %v5995
        %v6092 = vand.u32 2147483647, %v5996
        %v6093 = vand.u32 2147483647, %v5997
        %v6094 = vand.u32 2147483647, %v5998
        %v6095 = vand.u32 2147483647, %v5999
        %v6096 = vand.u32 2147483647, %v6000
        %v6097 = vand.u32 2147483647, %v6001
        %v6098 = vand.u32 2147483647, %v6002
        %v6099 = vand.u32 2147483647, %v6003
        %v6100 = vand.u32 2147483647, %v6004
        %v6101 = vmul.f32 %v6069, 0.3275911
        %v6102 = vmul.f32 %v6070, 0.3275911
        %v6103 = vmul.f32 %v6071, 0.3275911
        %v6104 = vmul.f32 %v6072, 0.3275911
        %v6105 = vmul.f32 %v6073, 0.3275911
        %v6106 = vmul.f32 %v6074, 0.3275911
        %v6107 = vmul.f32 %v6075, 0.3275911
        %v6108 = vmul.f32 %v6076, 0.3275911
        %v6109 = vmul.f32 %v6077, 0.3275911
        %v6110 = vmul.f32 %v6078, 0.3275911
        %v6111 = vmul.f32 %v6079, 0.3275911
        %v6112 = vmul.f32 %v6080, 0.3275911
        %v6113 = vmul.f32 %v6081, 0.3275911
        %v6114 = vmul.f32 %v6082, 0.3275911
        %v6115 = vmul.f32 %v6083, 0.3275911
        %v6116 = vmul.f32 %v6084, 0.3275911
        %v6117 = vmul.f32 %v6085, 0.3275911
        %v6118 = vmul.f32 %v6086, 0.3275911
        %v6119 = vmul.f32 %v6087, 0.3275911
        %v6120 = vmul.f32 %v6088, 0.3275911
        %v6121 = vmul.f32 %v6089, 0.3275911
        %v6122 = vmul.f32 %v6090, 0.3275911
        %v6123 = vmul.f32 %v6091, 0.3275911
        %v6124 = vmul.f32 %v6092, 0.3275911
        %v6125 = vmul.f32 %v6093, 0.3275911
        %v6126 = vmul.f32 %v6094, 0.3275911
        %v6127 = vmul.f32 %v6095, 0.3275911
        %v6128 = vmul.f32 %v6096, 0.3275911
        %v6129 = vmul.f32 %v6097, 0.3275911
        %v6130 = vmul.f32 %v6098, 0.3275911
        %v6131 = vmul.f32 %v6099, 0.3275911
        %v6132 = vmul.f32 %v6100, 0.3275911
        %v6133 = vadd.f32 %v6101, 1.0
        %v6134 = vadd.f32 %v6102, 1.0
        %v6135 = vadd.f32 %v6103, 1.0
        %v6136 = vadd.f32 %v6104, 1.0
        %v6137 = vadd.f32 %v6105, 1.0
        %v6138 = vadd.f32 %v6106, 1.0
        %v6139 = vadd.f32 %v6107, 1.0
        %v6140 = vadd.f32 %v6108, 1.0
        %v6141 = vadd.f32 %v6109, 1.0
        %v6142 = vadd.f32 %v6110, 1.0
        %v6143 = vadd.f32 %v6111, 1.0
        %v6144 = vadd.f32 %v6112, 1.0
        %v6145 = vadd.f32 %v6113, 1.0
        %v6146 = vadd.f32 %v6114, 1.0
        %v6147 = vadd.f32 %v6115, 1.0
        %v6148 = vadd.f32 %v6116, 1.0
        %v6149 = vadd.f32 %v6117, 1.0
        %v6150 = vadd.f32 %v6118, 1.0
        %v6151 = vadd.f32 %v6119, 1.0
        %v6152 = vadd.f32 %v6120, 1.0
        %v6153 = vadd.f32 %v6121, 1.0
        %v6154 = vadd.f32 %v6122, 1.0
        %v6155 = vadd.f32 %v6123, 1.0
        %v6156 = vadd.f32 %v6124, 1.0
        %v6157 = vadd.f32 %v6125, 1.0
        %v6158 = vadd.f32 %v6126, 1.0
        %v6159 = vadd.f32 %v6127, 1.0
        %v6160 = vadd.f32 %v6128, 1.0
        %v6161 = vadd.f32 %v6129, 1.0
        %v6162 = vadd.f32 %v6130, 1.0
        %v6163 = vadd.f32 %v6131, 1.0
        %v6164 = vadd.f32 %v6132, 1.0
        %v6165 = vrcp.pop %v6133
        %v6166 = vmul.f32 1.0, %v6165
        %v6167 = vrcp.pop %v6134
        %v6168 = vmul.f32 1.0, %v6167
        %v6169 = vrcp.pop %v6135
        %v6170 = vmul.f32 1.0, %v6169
        %v6171 = vrcp.pop %v6136
        %v6172 = vmul.f32 1.0, %v6171
        %v6173 = vrcp.pop %v6137
        %v6174 = vmul.f32 1.0, %v6173
        %v6175 = vrcp.pop %v6138
        %v6176 = vmul.f32 1.0, %v6175
        %v6177 = vrcp.pop %v6139
        %v6178 = vmul.f32 1.0, %v6177
        %v6179 = vrcp.pop %v6140
        %v6180 = vmul.f32 1.0, %v6179
        %v6181 = vrcp.pop %v6141
        %v6182 = vmul.f32 1.0, %v6181
        %v6183 = vrcp.pop %v6142
        %v6184 = vmul.f32 1.0, %v6183
        %v6185 = vrcp.pop %v6143
        %v6186 = vmul.f32 1.0, %v6185
        %v6187 = vrcp.pop %v6144
        %v6188 = vmul.f32 1.0, %v6187
        %v6189 = vrcp.pop %v6145
        %v6190 = vmul.f32 1.0, %v6189
        %v6191 = vrcp.pop %v6146
        %v6192 = vmul.f32 1.0, %v6191
        %v6193 = vrcp.pop %v6147
        %v6194 = vmul.f32 1.0, %v6193
        %v6195 = vrcp.pop %v6148
        %v6196 = vmul.f32 1.0, %v6195
        %v6197 = vrcp.pop %v6149
        %v6198 = vmul.f32 1.0, %v6197
        %v6199 = vrcp.pop %v6150
        %v6200 = vmul.f32 1.0, %v6199
        %v6201 = vrcp.pop %v6151
        %v6202 = vmul.f32 1.0, %v6201
        %v6203 = vrcp.pop %v6152
        %v6204 = vmul.f32 1.0, %v6203
        %v6205 = vrcp.pop %v6153
        %v6206 = vmul.f32 1.0, %v6205
        %v6207 = vrcp.pop %v6154
        %v6208 = vmul.f32 1.0, %v6207
        %v6209 = vrcp.pop %v6155
        %v6210 = vmul.f32 1.0, %v6209
        %v6211 = vrcp.pop %v6156
        %v6212 = vmul.f32 1.0, %v6211
        %v6213 = vrcp.pop %v6157
        %v6214 = vmul.f32 1.0, %v6213
        %v6215 = vrcp.pop %v6158
        %v6216 = vmul.f32 1.0, %v6215
        %v6217 = vrcp.pop %v6159
        %v6218 = vmul.f32 1.0, %v6217
        %v6219 = vrcp.pop %v6160
        %v6220 = vmul.f32 1.0, %v6219
        %v6221 = vrcp.pop %v6161
        %v6222 = vmul.f32 1.0, %v6221
        %v6223 = vrcp.pop %v6162
        %v6224 = vmul.f32 1.0, %v6223
        %v6225 = vrcp.pop %v6163
        %v6226 = vmul.f32 1.0, %v6225
        %v6227 = vrcp.pop %v6164
        %v6228 = vmul.f32 1.0, %v6227
        %v6229 = vmul.f32 %v6166, 1.0614054
        %v6230 = vmul.f32 %v6168, 1.0614054
        %v6231 = vmul.f32 %v6170, 1.0614054
        %v6232 = vmul.f32 %v6172, 1.0614054
        %v6233 = vmul.f32 %v6174, 1.0614054
        %v6234 = vmul.f32 %v6176, 1.0614054
        %v6235 = vmul.f32 %v6178, 1.0614054
        %v6236 = vmul.f32 %v6180, 1.0614054
        %v6237 = vmul.f32 %v6182, 1.0614054
        %v6238 = vmul.f32 %v6184, 1.0614054
        %v6239 = vmul.f32 %v6186, 1.0614054
        %v6240 = vmul.f32 %v6188, 1.0614054
        %v6241 = vmul.f32 %v6190, 1.0614054
        %v6242 = vmul.f32 %v6192, 1.0614054
        %v6243 = vmul.f32 %v6194, 1.0614054
        %v6244 = vmul.f32 %v6196, 1.0614054
        %v6245 = vmul.f32 %v6198, 1.0614054
        %v6246 = vmul.f32 %v6200, 1.0614054
        %v6247 = vmul.f32 %v6202, 1.0614054
        %v6248 = vmul.f32 %v6204, 1.0614054
        %v6249 = vmul.f32 %v6206, 1.0614054
        %v6250 = vmul.f32 %v6208, 1.0614054
        %v6251 = vmul.f32 %v6210, 1.0614054
        %v6252 = vmul.f32 %v6212, 1.0614054
        %v6253 = vmul.f32 %v6214, 1.0614054
        %v6254 = vmul.f32 %v6216, 1.0614054
        %v6255 = vmul.f32 %v6218, 1.0614054
        %v6256 = vmul.f32 %v6220, 1.0614054
        %v6257 = vmul.f32 %v6222, 1.0614054
        %v6258 = vmul.f32 %v6224, 1.0614054
        %v6259 = vmul.f32 %v6226, 1.0614054
        %v6260 = vmul.f32 %v6228, 1.0614054
        %v6261 = vadd.f32 %v6229, -1.4531521
        %v6262 = vadd.f32 %v6230, -1.4531521
        %v6263 = vadd.f32 %v6231, -1.4531521
        %v6264 = vadd.f32 %v6232, -1.4531521
        %v6265 = vadd.f32 %v6233, -1.4531521
        %v6266 = vadd.f32 %v6234, -1.4531521
        %v6267 = vadd.f32 %v6235, -1.4531521
        %v6268 = vadd.f32 %v6236, -1.4531521
        %v6269 = vadd.f32 %v6237, -1.4531521
        %v6270 = vadd.f32 %v6238, -1.4531521
        %v6271 = vadd.f32 %v6239, -1.4531521
        %v6272 = vadd.f32 %v6240, -1.4531521
        %v6273 = vadd.f32 %v6241, -1.4531521
        %v6274 = vadd.f32 %v6242, -1.4531521
        %v6275 = vadd.f32 %v6243, -1.4531521
        %v6276 = vadd.f32 %v6244, -1.4531521
        %v6277 = vadd.f32 %v6245, -1.4531521
        %v6278 = vadd.f32 %v6246, -1.4531521
        %v6279 = vadd.f32 %v6247, -1.4531521
        %v6280 = vadd.f32 %v6248, -1.4531521
        %v6281 = vadd.f32 %v6249, -1.4531521
        %v6282 = vadd.f32 %v6250, -1.4531521
        %v6283 = vadd.f32 %v6251, -1.4531521
        %v6284 = vadd.f32 %v6252, -1.4531521
        %v6285 = vadd.f32 %v6253, -1.4531521
        %v6286 = vadd.f32 %v6254, -1.4531521
        %v6287 = vadd.f32 %v6255, -1.4531521
        %v6288 = vadd.f32 %v6256, -1.4531521
        %v6289 = vadd.f32 %v6257, -1.4531521
        %v6290 = vadd.f32 %v6258, -1.4531521
        %v6291 = vadd.f32 %v6259, -1.4531521
        %v6292 = vadd.f32 %v6260, -1.4531521
        %v6293 = vmul.f32 %v6261, %v6166
        %v6294 = vmul.f32 %v6262, %v6168
        %v6295 = vmul.f32 %v6263, %v6170
        %v6296 = vmul.f32 %v6264, %v6172
        %v6297 = vmul.f32 %v6265, %v6174
        %v6298 = vmul.f32 %v6266, %v6176
        %v6299 = vmul.f32 %v6267, %v6178
        %v6300 = vmul.f32 %v6268, %v6180
        %v6301 = vmul.f32 %v6269, %v6182
        %v6302 = vmul.f32 %v6270, %v6184
        %v6303 = vmul.f32 %v6271, %v6186
        %v6304 = vmul.f32 %v6272, %v6188
        %v6305 = vmul.f32 %v6273, %v6190
        %v6306 = vmul.f32 %v6274, %v6192
        %v6307 = vmul.f32 %v6275, %v6194
        %v6308 = vmul.f32 %v6276, %v6196
        %v6309 = vmul.f32 %v6277, %v6198
        %v6310 = vmul.f32 %v6278, %v6200
        %v6311 = vmul.f32 %v6279, %v6202
        %v6312 = vmul.f32 %v6280, %v6204
        %v6313 = vmul.f32 %v6281, %v6206
        %v6314 = vmul.f32 %v6282, %v6208
        %v6315 = vmul.f32 %v6283, %v6210
        %v6316 = vmul.f32 %v6284, %v6212
        %v6317 = vmul.f32 %v6285, %v6214
        %v6318 = vmul.f32 %v6286, %v6216
        %v6319 = vmul.f32 %v6287, %v6218
        %v6320 = vmul.f32 %v6288, %v6220
        %v6321 = vmul.f32 %v6289, %v6222
        %v6322 = vmul.f32 %v6290, %v6224
        %v6323 = vmul.f32 %v6291, %v6226
        %v6324 = vmul.f32 %v6292, %v6228
        %v6325 = vadd.f32 %v6293, 1.4214138
        %v6326 = vadd.f32 %v6294, 1.4214138
        %v6327 = vadd.f32 %v6295, 1.4214138
        %v6328 = vadd.f32 %v6296, 1.4214138
        %v6329 = vadd.f32 %v6297, 1.4214138
        %v6330 = vadd.f32 %v6298, 1.4214138
        %v6331 = vadd.f32 %v6299, 1.4214138
        %v6332 = vadd.f32 %v6300, 1.4214138
        %v6333 = vadd.f32 %v6301, 1.4214138
        %v6334 = vadd.f32 %v6302, 1.4214138
        %v6335 = vadd.f32 %v6303, 1.4214138
        %v6336 = vadd.f32 %v6304, 1.4214138
        %v6337 = vadd.f32 %v6305, 1.4214138
        %v6338 = vadd.f32 %v6306, 1.4214138
        %v6339 = vadd.f32 %v6307, 1.4214138
        %v6340 = vadd.f32 %v6308, 1.4214138
        %v6341 = vadd.f32 %v6309, 1.4214138
        %v6342 = vadd.f32 %v6310, 1.4214138
        %v6343 = vadd.f32 %v6311, 1.4214138
        %v6344 = vadd.f32 %v6312, 1.4214138
        %v6345 = vadd.f32 %v6313, 1.4214138
        %v6346 = vadd.f32 %v6314, 1.4214138
        %v6347 = vadd.f32 %v6315, 1.4214138
        %v6348 = vadd.f32 %v6316, 1.4214138
        %v6349 = vadd.f32 %v6317, 1.4214138
        %v6350 = vadd.f32 %v6318, 1.4214138
        %v6351 = vadd.f32 %v6319, 1.4214138
        %v6352 = vadd.f32 %v6320, 1.4214138
        %v6353 = vadd.f32 %v6321, 1.4214138
        %v6354 = vadd.f32 %v6322, 1.4214138
        %v6355 = vadd.f32 %v6323, 1.4214138
        %v6356 = vadd.f32 %v6324, 1.4214138
        %v6357 = vmul.f32 %v6325, %v6166
        %v6358 = vmul.f32 %v6326, %v6168
        %v6359 = vmul.f32 %v6327, %v6170
        %v6360 = vmul.f32 %v6328, %v6172
        %v6361 = vmul.f32 %v6329, %v6174
        %v6362 = vmul.f32 %v6330, %v6176
        %v6363 = vmul.f32 %v6331, %v6178
        %v6364 = vmul.f32 %v6332, %v6180
        %v6365 = vmul.f32 %v6333, %v6182
        %v6366 = vmul.f32 %v6334, %v6184
        %v6367 = vmul.f32 %v6335, %v6186
        %v6368 = vmul.f32 %v6336, %v6188
        %v6369 = vmul.f32 %v6337, %v6190
        %v6370 = vmul.f32 %v6338, %v6192
        %v6371 = vmul.f32 %v6339, %v6194
        %v6372 = vmul.f32 %v6340, %v6196
        %v6373 = vmul.f32 %v6341, %v6198
        %v6374 = vmul.f32 %v6342, %v6200
        %v6375 = vmul.f32 %v6343, %v6202
        %v6376 = vmul.f32 %v6344, %v6204
        %v6377 = vmul.f32 %v6345, %v6206
        %v6378 = vmul.f32 %v6346, %v6208
        %v6379 = vmul.f32 %v6347, %v6210
        %v6380 = vmul.f32 %v6348, %v6212
        %v6381 = vmul.f32 %v6349, %v6214
        %v6382 = vmul.f32 %v6350, %v6216
        %v6383 = vmul.f32 %v6351, %v6218
        %v6384 = vmul.f32 %v6352, %v6220
        %v6385 = vmul.f32 %v6353, %v6222
        %v6386 = vmul.f32 %v6354, %v6224
        %v6387 = vmul.f32 %v6355, %v6226
        %v6388 = vmul.f32 %v6356, %v6228
        %v6389 = vadd.f32 %v6357, -0.28449672
        %v6390 = vadd.f32 %v6358, -0.28449672
        %v6391 = vadd.f32 %v6359, -0.28449672
        %v6392 = vadd.f32 %v6360, -0.28449672
        %v6393 = vadd.f32 %v6361, -0.28449672
        %v6394 = vadd.f32 %v6362, -0.28449672
        %v6395 = vadd.f32 %v6363, -0.28449672
        %v6396 = vadd.f32 %v6364, -0.28449672
        %v6397 = vadd.f32 %v6365, -0.28449672
        %v6398 = vadd.f32 %v6366, -0.28449672
        %v6399 = vadd.f32 %v6367, -0.28449672
        %v6400 = vadd.f32 %v6368, -0.28449672
        %v6401 = vadd.f32 %v6369, -0.28449672
        %v6402 = vadd.f32 %v6370, -0.28449672
        %v6403 = vadd.f32 %v6371, -0.28449672
        %v6404 = vadd.f32 %v6372, -0.28449672
        %v6405 = vadd.f32 %v6373, -0.28449672
        %v6406 = vadd.f32 %v6374, -0.28449672
        %v6407 = vadd.f32 %v6375, -0.28449672
        %v6408 = vadd.f32 %v6376, -0.28449672
        %v6409 = vadd.f32 %v6377, -0.28449672
        %v6410 = vadd.f32 %v6378, -0.28449672
        %v6411 = vadd.f32 %v6379, -0.28449672
        %v6412 = vadd.f32 %v6380, -0.28449672
        %v6413 = vadd.f32 %v6381, -0.28449672
        %v6414 = vadd.f32 %v6382, -0.28449672
        %v6415 = vadd.f32 %v6383, -0.28449672
        %v6416 = vadd.f32 %v6384, -0.28449672
        %v6417 = vadd.f32 %v6385, -0.28449672
        %v6418 = vadd.f32 %v6386, -0.28449672
        %v6419 = vadd.f32 %v6387, -0.28449672
        %v6420 = vadd.f32 %v6388, -0.28449672
        %v6421 = vmul.f32 %v6389, %v6166
        %v6422 = vmul.f32 %v6390, %v6168
        %v6423 = vmul.f32 %v6391, %v6170
        %v6424 = vmul.f32 %v6392, %v6172
        %v6425 = vmul.f32 %v6393, %v6174
        %v6426 = vmul.f32 %v6394, %v6176
        %v6427 = vmul.f32 %v6395, %v6178
        %v6428 = vmul.f32 %v6396, %v6180
        %v6429 = vmul.f32 %v6397, %v6182
        %v6430 = vmul.f32 %v6398, %v6184
        %v6431 = vmul.f32 %v6399, %v6186
        %v6432 = vmul.f32 %v6400, %v6188
        %v6433 = vmul.f32 %v6401, %v6190
        %v6434 = vmul.f32 %v6402, %v6192
        %v6435 = vmul.f32 %v6403, %v6194
        %v6436 = vmul.f32 %v6404, %v6196
        %v6437 = vmul.f32 %v6405, %v6198
        %v6438 = vmul.f32 %v6406, %v6200
        %v6439 = vmul.f32 %v6407, %v6202
        %v6440 = vmul.f32 %v6408, %v6204
        %v6441 = vmul.f32 %v6409, %v6206
        %v6442 = vmul.f32 %v6410, %v6208
        %v6443 = vmul.f32 %v6411, %v6210
        %v6444 = vmul.f32 %v6412, %v6212
        %v6445 = vmul.f32 %v6413, %v6214
        %v6446 = vmul.f32 %v6414, %v6216
        %v6447 = vmul.f32 %v6415, %v6218
        %v6448 = vmul.f32 %v6416, %v6220
        %v6449 = vmul.f32 %v6417, %v6222
        %v6450 = vmul.f32 %v6418, %v6224
        %v6451 = vmul.f32 %v6419, %v6226
        %v6452 = vmul.f32 %v6420, %v6228
        %v6453 = vadd.f32 %v6421, 0.2548296
        %v6454 = vadd.f32 %v6422, 0.2548296
        %v6455 = vadd.f32 %v6423, 0.2548296
        %v6456 = vadd.f32 %v6424, 0.2548296
        %v6457 = vadd.f32 %v6425, 0.2548296
        %v6458 = vadd.f32 %v6426, 0.2548296
        %v6459 = vadd.f32 %v6427, 0.2548296
        %v6460 = vadd.f32 %v6428, 0.2548296
        %v6461 = vadd.f32 %v6429, 0.2548296
        %v6462 = vadd.f32 %v6430, 0.2548296
        %v6463 = vadd.f32 %v6431, 0.2548296
        %v6464 = vadd.f32 %v6432, 0.2548296
        %v6465 = vadd.f32 %v6433, 0.2548296
        %v6466 = vadd.f32 %v6434, 0.2548296
        %v6467 = vadd.f32 %v6435, 0.2548296
        %v6468 = vadd.f32 %v6436, 0.2548296
        %v6469 = vadd.f32 %v6437, 0.2548296
        %v6470 = vadd.f32 %v6438, 0.2548296
        %v6471 = vadd.f32 %v6439, 0.2548296
        %v6472 = vadd.f32 %v6440, 0.2548296
        %v6473 = vadd.f32 %v6441, 0.2548296
        %v6474 = vadd.f32 %v6442, 0.2548296
        %v6475 = vadd.f32 %v6443, 0.2548296
        %v6476 = vadd.f32 %v6444, 0.2548296
        %v6477 = vadd.f32 %v6445, 0.2548296
        %v6478 = vadd.f32 %v6446, 0.2548296
        %v6479 = vadd.f32 %v6447, 0.2548296
        %v6480 = vadd.f32 %v6448, 0.2548296
        %v6481 = vadd.f32 %v6449, 0.2548296
        %v6482 = vadd.f32 %v6450, 0.2548296
        %v6483 = vadd.f32 %v6451, 0.2548296
        %v6484 = vadd.f32 %v6452, 0.2548296
        %v6485 = vmul.f32 %v6453, %v6166
        %v6486 = vmul.f32 %v6454, %v6168
        %v6487 = vmul.f32 %v6455, %v6170
        %v6488 = vmul.f32 %v6456, %v6172
        %v6489 = vmul.f32 %v6457, %v6174
        %v6490 = vmul.f32 %v6458, %v6176
        %v6491 = vmul.f32 %v6459, %v6178
        %v6492 = vmul.f32 %v6460, %v6180
        %v6493 = vmul.f32 %v6461, %v6182
        %v6494 = vmul.f32 %v6462, %v6184
        %v6495 = vmul.f32 %v6463, %v6186
        %v6496 = vmul.f32 %v6464, %v6188
        %v6497 = vmul.f32 %v6465, %v6190
        %v6498 = vmul.f32 %v6466, %v6192
        %v6499 = vmul.f32 %v6467, %v6194
        %v6500 = vmul.f32 %v6468, %v6196
        %v6501 = vmul.f32 %v6469, %v6198
        %v6502 = vmul.f32 %v6470, %v6200
        %v6503 = vmul.f32 %v6471, %v6202
        %v6504 = vmul.f32 %v6472, %v6204
        %v6505 = vmul.f32 %v6473, %v6206
        %v6506 = vmul.f32 %v6474, %v6208
        %v6507 = vmul.f32 %v6475, %v6210
        %v6508 = vmul.f32 %v6476, %v6212
        %v6509 = vmul.f32 %v6477, %v6214
        %v6510 = vmul.f32 %v6478, %v6216
        %v6511 = vmul.f32 %v6479, %v6218
        %v6512 = vmul.f32 %v6480, %v6220
        %v6513 = vmul.f32 %v6481, %v6222
        %v6514 = vmul.f32 %v6482, %v6224
        %v6515 = vmul.f32 %v6483, %v6226
        %v6516 = vmul.f32 %v6484, %v6228
        %v6517 = vsub.f32 0.0, %v6069
        %v6518 = vsub.f32 0.0, %v6070
        %v6519 = vsub.f32 0.0, %v6071
        %v6520 = vsub.f32 0.0, %v6072
        %v6521 = vsub.f32 0.0, %v6073
        %v6522 = vsub.f32 0.0, %v6074
        %v6523 = vsub.f32 0.0, %v6075
        %v6524 = vsub.f32 0.0, %v6076
        %v6525 = vsub.f32 0.0, %v6077
        %v6526 = vsub.f32 0.0, %v6078
        %v6527 = vsub.f32 0.0, %v6079
        %v6528 = vsub.f32 0.0, %v6080
        %v6529 = vsub.f32 0.0, %v6081
        %v6530 = vsub.f32 0.0, %v6082
        %v6531 = vsub.f32 0.0, %v6083
        %v6532 = vsub.f32 0.0, %v6084
        %v6533 = vsub.f32 0.0, %v6085
        %v6534 = vsub.f32 0.0, %v6086
        %v6535 = vsub.f32 0.0, %v6087
        %v6536 = vsub.f32 0.0, %v6088
        %v6537 = vsub.f32 0.0, %v6089
        %v6538 = vsub.f32 0.0, %v6090
        %v6539 = vsub.f32 0.0, %v6091
        %v6540 = vsub.f32 0.0, %v6092
        %v6541 = vsub.f32 0.0, %v6093
        %v6542 = vsub.f32 0.0, %v6094
        %v6543 = vsub.f32 0.0, %v6095
        %v6544 = vsub.f32 0.0, %v6096
        %v6545 = vsub.f32 0.0, %v6097
        %v6546 = vsub.f32 0.0, %v6098
        %v6547 = vsub.f32 0.0, %v6099
        %v6548 = vsub.f32 0.0, %v6100
        %v6549 = vmul.f32 %v6517, %v6069
        %v6550 = vmul.f32 %v6518, %v6070
        %v6551 = vmul.f32 %v6519, %v6071
        %v6552 = vmul.f32 %v6520, %v6072
        %v6553 = vmul.f32 %v6521, %v6073
        %v6554 = vmul.f32 %v6522, %v6074
        %v6555 = vmul.f32 %v6523, %v6075
        %v6556 = vmul.f32 %v6524, %v6076
        %v6557 = vmul.f32 %v6525, %v6077
        %v6558 = vmul.f32 %v6526, %v6078
        %v6559 = vmul.f32 %v6527, %v6079
        %v6560 = vmul.f32 %v6528, %v6080
        %v6561 = vmul.f32 %v6529, %v6081
        %v6562 = vmul.f32 %v6530, %v6082
        %v6563 = vmul.f32 %v6531, %v6083
        %v6564 = vmul.f32 %v6532, %v6084
        %v6565 = vmul.f32 %v6533, %v6085
        %v6566 = vmul.f32 %v6534, %v6086
        %v6567 = vmul.f32 %v6535, %v6087
        %v6568 = vmul.f32 %v6536, %v6088
        %v6569 = vmul.f32 %v6537, %v6089
        %v6570 = vmul.f32 %v6538, %v6090
        %v6571 = vmul.f32 %v6539, %v6091
        %v6572 = vmul.f32 %v6540, %v6092
        %v6573 = vmul.f32 %v6541, %v6093
        %v6574 = vmul.f32 %v6542, %v6094
        %v6575 = vmul.f32 %v6543, %v6095
        %v6576 = vmul.f32 %v6544, %v6096
        %v6577 = vmul.f32 %v6545, %v6097
        %v6578 = vmul.f32 %v6546, %v6098
        %v6579 = vmul.f32 %v6547, %v6099
        %v6580 = vmul.f32 %v6548, %v6100
        %v6581 = vmul.f32 %v6549, 1.442695
        %v6582 = vpow.pop %v6581
        %v6583 = vmul.f32 %v6550, 1.442695
        %v6584 = vpow.pop %v6583
        %v6585 = vmul.f32 %v6551, 1.442695
        %v6586 = vpow.pop %v6585
        %v6587 = vmul.f32 %v6552, 1.442695
        %v6588 = vpow.pop %v6587
        %v6589 = vmul.f32 %v6553, 1.442695
        %v6590 = vpow.pop %v6589
        %v6591 = vmul.f32 %v6554, 1.442695
        %v6592 = vpow.pop %v6591
        %v6593 = vmul.f32 %v6555, 1.442695
        %v6594 = vpow.pop %v6593
        %v6595 = vmul.f32 %v6556, 1.442695
        %v6596 = vpow.pop %v6595
        %v6597 = vmul.f32 %v6557, 1.442695
        %v6598 = vpow.pop %v6597
        %v6599 = vmul.f32 %v6558, 1.442695
        %v6600 = vpow.pop %v6599
        %v6601 = vmul.f32 %v6559, 1.442695
        %v6602 = vpow.pop %v6601
        %v6603 = vmul.f32 %v6560, 1.442695
        %v6604 = vpow.pop %v6603
        %v6605 = vmul.f32 %v6561, 1.442695
        %v6606 = vpow.pop %v6605
        %v6607 = vmul.f32 %v6562, 1.442695
        %v6608 = vpow.pop %v6607
        %v6609 = vmul.f32 %v6563, 1.442695
        %v6610 = vpow.pop %v6609
        %v6611 = vmul.f32 %v6564, 1.442695
        %v6612 = vpow.pop %v6611
        %v6613 = vmul.f32 %v6565, 1.442695
        %v6614 = vpow.pop %v6613
        %v6615 = vmul.f32 %v6566, 1.442695
        %v6616 = vpow.pop %v6615
        %v6617 = vmul.f32 %v6567, 1.442695
        %v6618 = vpow.pop %v6617
        %v6619 = vmul.f32 %v6568, 1.442695
        %v6620 = vpow.pop %v6619
        %v6621 = vmul.f32 %v6569, 1.442695
        %v6622 = vpow.pop %v6621
        %v6623 = vmul.f32 %v6570, 1.442695
        %v6624 = vpow.pop %v6623
        %v6625 = vmul.f32 %v6571, 1.442695
        %v6626 = vpow.pop %v6625
        %v6627 = vmul.f32 %v6572, 1.442695
        %v6628 = vpow.pop %v6627
        %v6629 = vmul.f32 %v6573, 1.442695
        %v6630 = vpow.pop %v6629
        %v6631 = vmul.f32 %v6574, 1.442695
        %v6632 = vpow.pop %v6631
        %v6633 = vmul.f32 %v6575, 1.442695
        %v6634 = vpow.pop %v6633
        %v6635 = vmul.f32 %v6576, 1.442695
        %v6636 = vpow.pop %v6635
        %v6637 = vmul.f32 %v6577, 1.442695
        %v6638 = vpow.pop %v6637
        %v6639 = vmul.f32 %v6578, 1.442695
        %v6640 = vpow.pop %v6639
        %v6641 = vmul.f32 %v6579, 1.442695
        %v6642 = vpow.pop %v6641
        %v6643 = vmul.f32 %v6580, 1.442695
        %v6644 = vpow.pop %v6643
        %v6645 = vmul.f32 %v6485, %v6582
        %v6646 = vmul.f32 %v6486, %v6584
        %v6647 = vmul.f32 %v6487, %v6586
        %v6648 = vmul.f32 %v6488, %v6588
        %v6649 = vmul.f32 %v6489, %v6590
        %v6650 = vmul.f32 %v6490, %v6592
        %v6651 = vmul.f32 %v6491, %v6594
        %v6652 = vmul.f32 %v6492, %v6596
        %v6653 = vmul.f32 %v6493, %v6598
        %v6654 = vmul.f32 %v6494, %v6600
        %v6655 = vmul.f32 %v6495, %v6602
        %v6656 = vmul.f32 %v6496, %v6604
        %v6657 = vmul.f32 %v6497, %v6606
        %v6658 = vmul.f32 %v6498, %v6608
        %v6659 = vmul.f32 %v6499, %v6610
        %v6660 = vmul.f32 %v6500, %v6612
        %v6661 = vmul.f32 %v6501, %v6614
        %v6662 = vmul.f32 %v6502, %v6616
        %v6663 = vmul.f32 %v6503, %v6618
        %v6664 = vmul.f32 %v6504, %v6620
        %v6665 = vmul.f32 %v6505, %v6622
        %v6666 = vmul.f32 %v6506, %v6624
        %v6667 = vmul.f32 %v6507, %v6626
        %v6668 = vmul.f32 %v6508, %v6628
        %v6669 = vmul.f32 %v6509, %v6630
        %v6670 = vmul.f32 %v6510, %v6632
        %v6671 = vmul.f32 %v6511, %v6634
        %v6672 = vmul.f32 %v6512, %v6636
        %v6673 = vmul.f32 %v6513, %v6638
        %v6674 = vmul.f32 %v6514, %v6640
        %v6675 = vmul.f32 %v6515, %v6642
        %v6676 = vmul.f32 %v6516, %v6644
        %v6677 = vsub.f32 1.0, %v6645
        %v6678 = vsub.f32 1.0, %v6646
        %v6679 = vsub.f32 1.0, %v6647
        %v6680 = vsub.f32 1.0, %v6648
        %v6681 = vsub.f32 1.0, %v6649
        %v6682 = vsub.f32 1.0, %v6650
        %v6683 = vsub.f32 1.0, %v6651
        %v6684 = vsub.f32 1.0, %v6652
        %v6685 = vsub.f32 1.0, %v6653
        %v6686 = vsub.f32 1.0, %v6654
        %v6687 = vsub.f32 1.0, %v6655
        %v6688 = vsub.f32 1.0, %v6656
        %v6689 = vsub.f32 1.0, %v6657
        %v6690 = vsub.f32 1.0, %v6658
        %v6691 = vsub.f32 1.0, %v6659
        %v6692 = vsub.f32 1.0, %v6660
        %v6693 = vsub.f32 1.0, %v6661
        %v6694 = vsub.f32 1.0, %v6662
        %v6695 = vsub.f32 1.0, %v6663
        %v6696 = vsub.f32 1.0, %v6664
        %v6697 = vsub.f32 1.0, %v6665
        %v6698 = vsub.f32 1.0, %v6666
        %v6699 = vsub.f32 1.0, %v6667
        %v6700 = vsub.f32 1.0, %v6668
        %v6701 = vsub.f32 1.0, %v6669
        %v6702 = vsub.f32 1.0, %v6670
        %v6703 = vsub.f32 1.0, %v6671
        %v6704 = vsub.f32 1.0, %v6672
        %v6705 = vsub.f32 1.0, %v6673
        %v6706 = vsub.f32 1.0, %v6674
        %v6707 = vsub.f32 1.0, %v6675
        %v6708 = vsub.f32 1.0, %v6676
        %v6709 = vmul.f32 %v6037, %v6677
        %v6710 = vmul.f32 %v6038, %v6678
        %v6711 = vmul.f32 %v6039, %v6679
        %v6712 = vmul.f32 %v6040, %v6680
        %v6713 = vmul.f32 %v6041, %v6681
        %v6714 = vmul.f32 %v6042, %v6682
        %v6715 = vmul.f32 %v6043, %v6683
        %v6716 = vmul.f32 %v6044, %v6684
        %v6717 = vmul.f32 %v6045, %v6685
        %v6718 = vmul.f32 %v6046, %v6686
        %v6719 = vmul.f32 %v6047, %v6687
        %v6720 = vmul.f32 %v6048, %v6688
        %v6721 = vmul.f32 %v6049, %v6689
        %v6722 = vmul.f32 %v6050, %v6690
        %v6723 = vmul.f32 %v6051, %v6691
        %v6724 = vmul.f32 %v6052, %v6692
        %v6725 = vmul.f32 %v6053, %v6693
        %v6726 = vmul.f32 %v6054, %v6694
        %v6727 = vmul.f32 %v6055, %v6695
        %v6728 = vmul.f32 %v6056, %v6696
        %v6729 = vmul.f32 %v6057, %v6697
        %v6730 = vmul.f32 %v6058, %v6698
        %v6731 = vmul.f32 %v6059, %v6699
        %v6732 = vmul.f32 %v6060, %v6700
        %v6733 = vmul.f32 %v6061, %v6701
        %v6734 = vmul.f32 %v6062, %v6702
        %v6735 = vmul.f32 %v6063, %v6703
        %v6736 = vmul.f32 %v6064, %v6704
        %v6737 = vmul.f32 %v6065, %v6705
        %v6738 = vmul.f32 %v6066, %v6706
        %v6739 = vmul.f32 %v6067, %v6707
        %v6740 = vmul.f32 %v6068, %v6708
        %v6741 = vadd.f32 %v6709, 1.0
        %v6742 = vadd.f32 %v6710, 1.0
        %v6743 = vadd.f32 %v6711, 1.0
        %v6744 = vadd.f32 %v6712, 1.0
        %v6745 = vadd.f32 %v6713, 1.0
        %v6746 = vadd.f32 %v6714, 1.0
        %v6747 = vadd.f32 %v6715, 1.0
        %v6748 = vadd.f32 %v6716, 1.0
        %v6749 = vadd.f32 %v6717, 1.0
        %v6750 = vadd.f32 %v6718, 1.0
        %v6751 = vadd.f32 %v6719, 1.0
        %v6752 = vadd.f32 %v6720, 1.0
        %v6753 = vadd.f32 %v6721, 1.0
        %v6754 = vadd.f32 %v6722, 1.0
        %v6755 = vadd.f32 %v6723, 1.0
        %v6756 = vadd.f32 %v6724, 1.0
        %v6757 = vadd.f32 %v6725, 1.0
        %v6758 = vadd.f32 %v6726, 1.0
        %v6759 = vadd.f32 %v6727, 1.0
        %v6760 = vadd.f32 %v6728, 1.0
        %v6761 = vadd.f32 %v6729, 1.0
        %v6762 = vadd.f32 %v6730, 1.0
        %v6763 = vadd.f32 %v6731, 1.0
        %v6764 = vadd.f32 %v6732, 1.0
        %v6765 = vadd.f32 %v6733, 1.0
        %v6766 = vadd.f32 %v6734, 1.0
        %v6767 = vadd.f32 %v6735, 1.0
        %v6768 = vadd.f32 %v6736, 1.0
        %v6769 = vadd.f32 %v6737, 1.0
        %v6770 = vadd.f32 %v6738, 1.0
        %v6771 = vadd.f32 %v6739, 1.0
        %v6772 = vadd.f32 %v6740, 1.0
        %v6773 = vmul.f32 %v5941, %v6741
        %v6774 = vmul.f32 %v5942, %v6742
        %v6775 = vmul.f32 %v5943, %v6743
        %v6776 = vmul.f32 %v5944, %v6744
        %v6777 = vmul.f32 %v5945, %v6745
        %v6778 = vmul.f32 %v5946, %v6746
        %v6779 = vmul.f32 %v5947, %v6747
        %v6780 = vmul.f32 %v5948, %v6748
        %v6781 = vmul.f32 %v5949, %v6749
        %v6782 = vmul.f32 %v5950, %v6750
        %v6783 = vmul.f32 %v5951, %v6751
        %v6784 = vmul.f32 %v5952, %v6752
        %v6785 = vmul.f32 %v5953, %v6753
        %v6786 = vmul.f32 %v5954, %v6754
        %v6787 = vmul.f32 %v5955, %v6755
        %v6788 = vmul.f32 %v5956, %v6756
        %v6789 = vmul.f32 %v5957, %v6757
        %v6790 = vmul.f32 %v5958, %v6758
        %v6791 = vmul.f32 %v5959, %v6759
        %v6792 = vmul.f32 %v5960, %v6760
        %v6793 = vmul.f32 %v5961, %v6761
        %v6794 = vmul.f32 %v5962, %v6762
        %v6795 = vmul.f32 %v5963, %v6763
        %v6796 = vmul.f32 %v5964, %v6764
        %v6797 = vmul.f32 %v5965, %v6765
        %v6798 = vmul.f32 %v5966, %v6766
        %v6799 = vmul.f32 %v5967, %v6767
        %v6800 = vmul.f32 %v5968, %v6768
        %v6801 = vmul.f32 %v5969, %v6769
        %v6802 = vmul.f32 %v5970, %v6770
        %v6803 = vmul.f32 %v5971, %v6771
        %v6804 = vmul.f32 %v5972, %v6772
        %v6805 = vadd.f32 %v6773, %v574
        %v6806 = vadd.f32 %v6774, %v579
        %v6807 = vadd.f32 %v6775, %v584
        %v6808 = vadd.f32 %v6776, %v589
        %v6809 = vadd.f32 %v6777, %v594
        %v6810 = vadd.f32 %v6778, %v599
        %v6811 = vadd.f32 %v6779, %v604
        %v6812 = vadd.f32 %v6780, %v609
        %v6813 = vadd.f32 %v6781, %v614
        %v6814 = vadd.f32 %v6782, %v619
        %v6815 = vadd.f32 %v6783, %v624
        %v6816 = vadd.f32 %v6784, %v629
        %v6817 = vadd.f32 %v6785, %v634
        %v6818 = vadd.f32 %v6786, %v639
        %v6819 = vadd.f32 %v6787, %v644
        %v6820 = vadd.f32 %v6788, %v649
        %v6821 = vadd.f32 %v6789, %v654
        %v6822 = vadd.f32 %v6790, %v659
        %v6823 = vadd.f32 %v6791, %v664
        %v6824 = vadd.f32 %v6792, %v669
        %v6825 = vadd.f32 %v6793, %v674
        %v6826 = vadd.f32 %v6794, %v679
        %v6827 = vadd.f32 %v6795, %v684
        %v6828 = vadd.f32 %v6796, %v689
        %v6829 = vadd.f32 %v6797, %v694
        %v6830 = vadd.f32 %v6798, %v699
        %v6831 = vadd.f32 %v6799, %v704
        %v6832 = vadd.f32 %v6800, %v709
        %v6833 = vadd.f32 %v6801, %v714
        %v6834 = vadd.f32 %v6802, %v719
        %v6835 = vadd.f32 %v6803, %v724
        %v6836 = vadd.f32 %v6804, %v729
        %v6837 = vld [vmem:[%s5] sm:$0xff]
        %v6838 = vld [vmem:[%s6] sm:$0x1]
        %v6840 = vlaneseq
        %v6841 = vshrl.u32 %v6840, 7
        %v6842 = vsub.s32 0, %v6841
        %v6843 = vrot.slane %v6838, %v6842
        %v6846 = vsel %vm407, %v6805, 0
        %v6849 = vsel %vm407, %v6806, 0
        %v6852 = vsel %vm407, %v6807, 0
        %v6855 = vsel %vm407, %v6808, 0
        %v6858 = vsel %vm407, %v6809, 0
        %v6861 = vsel %vm407, %v6810, 0
        %v6864 = vsel %vm407, %v6811, 0
        %v6867 = vsel %vm407, %v6812, 0
        %v6870 = vsel %vm407, %v6813, 0
        %v6873 = vsel %vm407, %v6814, 0
        %v6876 = vsel %vm407, %v6815, 0
        %v6879 = vsel %vm407, %v6816, 0
        %v6882 = vsel %vm407, %v6817, 0
        %v6885 = vsel %vm407, %v6818, 0
        %v6888 = vsel %vm407, %v6819, 0
        %v6891 = vsel %vm407, %v6820, 0
        %v6894 = vsel %vm407, %v6821, 0
        %v6897 = vsel %vm407, %v6822, 0
        %v6900 = vsel %vm407, %v6823, 0
        %v6903 = vsel %vm407, %v6824, 0
        %v6906 = vsel %vm407, %v6825, 0
        %v6909 = vsel %vm407, %v6826, 0
        %v6912 = vsel %vm407, %v6827, 0
        %v6915 = vsel %vm407, %v6828, 0
        %v6918 = vsel %vm407, %v6829, 0
        %v6921 = vsel %vm407, %v6830, 0
        %v6924 = vsel %vm407, %v6831, 0
        %v6927 = vsel %vm407, %v6832, 0
        %v6930 = vsel %vm407, %v6833, 0
        %v6933 = vsel %vm407, %v6834, 0
        %v6936 = vsel %vm407, %v6835, 0
        %v6939 = vsel %vm407, %v6836, 0
        %v6942 = vsel %vm407, %v6837, 0
        %6944 = vmatprep.subr.mxu0 0.0
        %6945 = vmatpush1.xpose.msra.mxu0 0.0
        %6946 = vmatprep.subr.mxu0 0.0
        %6947 = vmatpush1.xpose.msra.mxu0 0.0
        %6948 = vmatprep.subr.mxu0 0.0
        %6949 = vmatpush1.xpose.msra.mxu0 0.0
        %6950 = vmatprep.subr.mxu0 0.0
        %6951 = vmatpush1.xpose.msra.mxu0 0.0
        %6952 = vmatprep.subr.mxu0 0.0
        %6953 = vmatpush1.xpose.msra.mxu0 0.0
        %6954 = vmatprep.subr.mxu0 0.0
        %6955 = vmatpush1.xpose.msra.mxu0 0.0
        %6956 = vmatprep.subr.mxu0 0.0
        %6957 = vmatpush1.xpose.msra.mxu0 0.0
        %6958 = vmatprep.subr.mxu0 0.0
        %6959 = vmatpush1.xpose.msra.mxu0 0.0
        %6960 = vmatprep.subr.mxu0 0.0
        %6961 = vmatpush1.xpose.msra.mxu0 0.0
        %6962 = vmatprep.subr.mxu0 0.0
        %6963 = vmatpush1.xpose.msra.mxu0 0.0
        %6964 = vmatprep.subr.mxu0 0.0
        %6965 = vmatpush1.xpose.msra.mxu0 0.0
        %6966 = vmatprep.subr.mxu0 0.0
        %6967 = vmatpush1.xpose.msra.mxu0 0.0
        %6968 = vmatprep.subr.mxu0 0.0
        %6969 = vmatpush1.xpose.msra.mxu0 0.0
        %6970 = vmatprep.subr.mxu0 0.0
        %6971 = vmatpush1.xpose.msra.mxu0 0.0
        %6972 = vmatprep.subr.mxu0 0.0
        %6973 = vmatpush1.xpose.msra.mxu0 0.0
        %6974 = vmatprep.subr.mxu0 0.0
        %6975 = vmatpush1.xpose.msra.mxu0 %v6942
        %6976 = vmatprep.subr.mxu0 0.0
        %6977 = vmatpush2.xpose.msra.mxu0 0.0
        %6978 = vmatprep.subr.mxu0 0.0
        %6979 = vmatpush2.xpose.msra.mxu0 0.0
        %6980 = vmatprep.subr.mxu0 0.0
        %6981 = vmatpush2.xpose.msra.mxu0 0.0
        %6982 = vmatprep.subr.mxu0 0.0
        %6983 = vmatpush2.xpose.msra.mxu0 0.0
        %6984 = vmatprep.subr.mxu0 0.0
        %6985 = vmatpush2.xpose.msra.mxu0 0.0
        %6986 = vmatprep.subr.mxu0 0.0
        %6987 = vmatpush2.xpose.msra.mxu0 0.0
        %6988 = vmatprep.subr.mxu0 0.0
        %6989 = vmatpush2.xpose.msra.mxu0 0.0
        %6990 = vmatprep.subr.mxu0 0.0
        %6991 = vmatpush2.xpose.msra.mxu0 0.0
        %6992 = vmatprep.subr.mxu0 0.0
        %6993 = vmatpush2.xpose.msra.mxu0 0.0
        %6994 = vmatprep.subr.mxu0 0.0
        %6995 = vmatpush2.xpose.msra.mxu0 0.0
        %6996 = vmatprep.subr.mxu0 0.0
        %6997 = vmatpush2.xpose.msra.mxu0 0.0
        %6998 = vmatprep.subr.mxu0 0.0
        %6999 = vmatpush2.xpose.msra.mxu0 0.0
        %7000 = vmatprep.subr.mxu0 0.0
        %7001 = vmatpush2.xpose.msra.mxu0 0.0
        %7002 = vmatprep.subr.mxu0 0.0
        %7003 = vmatpush2.xpose.msra.mxu0 0.0
        %7004 = vmatprep.subr.mxu0 0.0
        %7005 = vmatpush2.xpose.msra.mxu0 0.0
        %7006 = vmatprep.subr.mxu0 0.0
        %7007 = vmatpush2.xpose.msra.mxu0 0.0
        %7008 = vmatprep.mubr.f32.mxu0 0.0
        %7009 = vmatmul.mubr.f32.gmra.mxu0 %v6846
        %v7010 = vpop.f32.mrf.mxu0
        %v7011 = vadd.f32 %v6843, %v7010
        %v7012 = vpop.f32.mrf.mxu0
        %7013 = vmatprep.mubr.f32.mxu0 0.0
        %7014 = vmatmul.mubr.f32.gmra.mxu0 %v6849
        %v7015 = vpop.f32.mrf.mxu0
        %v7016 = vadd.f32 %v6843, %v7015
        %v7017 = vpop.f32.mrf.mxu0
        %7018 = vmatprep.mubr.f32.mxu0 0.0
        %7019 = vmatmul.mubr.f32.gmra.mxu0 %v6852
        %v7020 = vpop.f32.mrf.mxu0
        %v7021 = vadd.f32 %v6843, %v7020
        %v7022 = vpop.f32.mrf.mxu0
        %7023 = vmatprep.mubr.f32.mxu0 0.0
        %7024 = vmatmul.mubr.f32.gmra.mxu0 %v6855
        %v7025 = vpop.f32.mrf.mxu0
        %v7026 = vadd.f32 %v6843, %v7025
        %v7027 = vpop.f32.mrf.mxu0
        %7028 = vmatprep.mubr.f32.mxu0 0.0
        %7029 = vmatmul.mubr.f32.gmra.mxu0 %v6858
        %v7030 = vpop.f32.mrf.mxu0
        %v7031 = vadd.f32 %v6843, %v7030
        %v7032 = vpop.f32.mrf.mxu0
        %7033 = vmatprep.mubr.f32.mxu0 0.0
        %7034 = vmatmul.mubr.f32.gmra.mxu0 %v6861
        %v7035 = vpop.f32.mrf.mxu0
        %v7036 = vadd.f32 %v6843, %v7035
        %v7037 = vpop.f32.mrf.mxu0
        %7038 = vmatprep.mubr.f32.mxu0 0.0
        %7039 = vmatmul.mubr.f32.gmra.mxu0 %v6864
        %v7040 = vpop.f32.mrf.mxu0
        %v7041 = vadd.f32 %v6843, %v7040
        %v7042 = vpop.f32.mrf.mxu0
        %7043 = vmatprep.mubr.f32.mxu0 0.0
        %7044 = vmatmul.mubr.f32.gmra.mxu0 %v6867
        %v7045 = vpop.f32.mrf.mxu0
        %v7046 = vadd.f32 %v6843, %v7045
        %v7047 = vpop.f32.mrf.mxu0
        %7048 = vmatprep.mubr.f32.mxu0 0.0
        %7049 = vmatmul.mubr.f32.gmra.mxu0 %v6870
        %v7050 = vpop.f32.mrf.mxu0
        %v7051 = vadd.f32 %v6843, %v7050
        %v7052 = vpop.f32.mrf.mxu0
        %7053 = vmatprep.mubr.f32.mxu0 0.0
        %7054 = vmatmul.mubr.f32.gmra.mxu0 %v6873
        %v7055 = vpop.f32.mrf.mxu0
        %v7056 = vadd.f32 %v6843, %v7055
        %v7057 = vpop.f32.mrf.mxu0
        %7058 = vmatprep.mubr.f32.mxu0 0.0
        %7059 = vmatmul.mubr.f32.gmra.mxu0 %v6876
        %v7060 = vpop.f32.mrf.mxu0
        %v7061 = vadd.f32 %v6843, %v7060
        %v7062 = vpop.f32.mrf.mxu0
        %7063 = vmatprep.mubr.f32.mxu0 0.0
        %7064 = vmatmul.mubr.f32.gmra.mxu0 %v6879
        %v7065 = vpop.f32.mrf.mxu0
        %v7066 = vadd.f32 %v6843, %v7065
        %v7067 = vpop.f32.mrf.mxu0
        %7068 = vmatprep.mubr.f32.mxu0 0.0
        %7069 = vmatmul.mubr.f32.gmra.mxu0 %v6882
        %v7070 = vpop.f32.mrf.mxu0
        %v7071 = vadd.f32 %v6843, %v7070
        %v7072 = vpop.f32.mrf.mxu0
        %7073 = vmatprep.mubr.f32.mxu0 0.0
        %7074 = vmatmul.mubr.f32.gmra.mxu0 %v6885
        %v7075 = vpop.f32.mrf.mxu0
        %v7076 = vadd.f32 %v6843, %v7075
        %v7077 = vpop.f32.mrf.mxu0
        %7078 = vmatprep.mubr.f32.mxu0 0.0
        %7079 = vmatmul.mubr.f32.gmra.mxu0 %v6888
        %v7080 = vpop.f32.mrf.mxu0
        %v7081 = vadd.f32 %v6843, %v7080
        %v7082 = vpop.f32.mrf.mxu0
        %7083 = vmatprep.mubr.f32.mxu0 0.0
        %7084 = vmatmul.mubr.f32.gmra.mxu0 %v6891
        %v7085 = vpop.f32.mrf.mxu0
        %v7086 = vadd.f32 %v6843, %v7085
        %v7087 = vpop.f32.mrf.mxu0
        %7088 = vmatprep.mubr.f32.mxu0 0.0
        %7089 = vmatmul.mubr.f32.gmra.mxu0 %v6894
        %v7090 = vpop.f32.mrf.mxu0
        %v7091 = vadd.f32 %v6843, %v7090
        %v7092 = vpop.f32.mrf.mxu0
        %7093 = vmatprep.mubr.f32.mxu0 0.0
        %7094 = vmatmul.mubr.f32.gmra.mxu0 %v6897
        %v7095 = vpop.f32.mrf.mxu0
        %v7096 = vadd.f32 %v6843, %v7095
        %v7097 = vpop.f32.mrf.mxu0
        %7098 = vmatprep.mubr.f32.mxu0 0.0
        %7099 = vmatmul.mubr.f32.gmra.mxu0 %v6900
        %v7100 = vpop.f32.mrf.mxu0
        %v7101 = vadd.f32 %v6843, %v7100
        %v7102 = vpop.f32.mrf.mxu0
        %7103 = vmatprep.mubr.f32.mxu0 0.0
        %7104 = vmatmul.mubr.f32.gmra.mxu0 %v6903
        %v7105 = vpop.f32.mrf.mxu0
        %v7106 = vadd.f32 %v6843, %v7105
        %v7107 = vpop.f32.mrf.mxu0
        %7108 = vmatprep.mubr.f32.mxu0 0.0
        %7109 = vmatmul.mubr.f32.gmra.mxu0 %v6906
        %v7110 = vpop.f32.mrf.mxu0
        %v7111 = vadd.f32 %v6843, %v7110
        %v7112 = vpop.f32.mrf.mxu0
        %7113 = vmatprep.mubr.f32.mxu0 0.0
        %7114 = vmatmul.mubr.f32.gmra.mxu0 %v6909
        %v7115 = vpop.f32.mrf.mxu0
        %v7116 = vadd.f32 %v6843, %v7115
        %v7117 = vpop.f32.mrf.mxu0
        %7118 = vmatprep.mubr.f32.mxu0 0.0
        %7119 = vmatmul.mubr.f32.gmra.mxu0 %v6912
        %v7120 = vpop.f32.mrf.mxu0
        %v7121 = vadd.f32 %v6843, %v7120
        %v7122 = vpop.f32.mrf.mxu0
        %7123 = vmatprep.mubr.f32.mxu0 0.0
        %7124 = vmatmul.mubr.f32.gmra.mxu0 %v6915
        %v7125 = vpop.f32.mrf.mxu0
        %v7126 = vadd.f32 %v6843, %v7125
        %v7127 = vpop.f32.mrf.mxu0
        %7128 = vmatprep.mubr.f32.mxu0 0.0
        %7129 = vmatmul.mubr.f32.gmra.mxu0 %v6918
        %v7130 = vpop.f32.mrf.mxu0
        %v7131 = vadd.f32 %v6843, %v7130
        %v7132 = vpop.f32.mrf.mxu0
        %7133 = vmatprep.mubr.f32.mxu0 0.0
        %7134 = vmatmul.mubr.f32.gmra.mxu0 %v6921
        %v7135 = vpop.f32.mrf.mxu0
        %v7136 = vadd.f32 %v6843, %v7135
        %v7137 = vpop.f32.mrf.mxu0
        %7138 = vmatprep.mubr.f32.mxu0 0.0
        %7139 = vmatmul.mubr.f32.gmra.mxu0 %v6924
        %v7140 = vpop.f32.mrf.mxu0
        %v7141 = vadd.f32 %v6843, %v7140
        %v7142 = vpop.f32.mrf.mxu0
        %7143 = vmatprep.mubr.f32.mxu0 0.0
        %7144 = vmatmul.mubr.f32.gmra.mxu0 %v6927
        %v7145 = vpop.f32.mrf.mxu0
        %v7146 = vadd.f32 %v6843, %v7145
        %v7147 = vpop.f32.mrf.mxu0
        %7148 = vmatprep.mubr.f32.mxu0 0.0
        %7149 = vmatmul.mubr.f32.gmra.mxu0 %v6930
        %v7150 = vpop.f32.mrf.mxu0
        %v7151 = vadd.f32 %v6843, %v7150
        %v7152 = vpop.f32.mrf.mxu0
        %7153 = vmatprep.mubr.f32.mxu0 0.0
        %7154 = vmatmul.mubr.f32.gmra.mxu0 %v6933
        %v7155 = vpop.f32.mrf.mxu0
        %v7156 = vadd.f32 %v6843, %v7155
        %v7157 = vpop.f32.mrf.mxu0
        %7158 = vmatprep.mubr.f32.mxu0 0.0
        %7159 = vmatmul.mubr.f32.gmra.mxu0 %v6936
        %v7160 = vpop.f32.mrf.mxu0
        %v7161 = vadd.f32 %v6843, %v7160
        %v7162 = vpop.f32.mrf.mxu0
        %7163 = vmatprep.mubr.f32.mxu0 0.0
        %7164 = vmatmul.mubr.f32.gmra.mxu0 %v6939
        %v7165 = vpop.f32.mrf.mxu0
        %v7166 = vadd.f32 %v6843, %v7165
        %v7167 = vpop.f32.mrf.mxu0
        %7168 = vdwg.mxu0
        %7169 = vxpose.xlu0.b32.start [1/16] %v7011, 128
        %7170 = vxpose.xlu0.b32.cont [2/16] %v7016, 128
        %7171 = vxpose.xlu0.b32.cont [3/16] %v7021, 128
        %7172 = vxpose.xlu0.b32.cont [4/16] %v7026, 128
        %7173 = vxpose.xlu0.b32.cont [5/16] %v7031, 128
        %7174 = vxpose.xlu0.b32.cont [6/16] %v7036, 128
        %7175 = vxpose.xlu0.b32.cont [7/16] %v7041, 128
        %7176 = vxpose.xlu0.b32.cont [8/16] %v7046, 128
        %7177 = vxpose.xlu0.b32.cont [9/16] %v7051, 128
        %7178 = vxpose.xlu0.b32.cont [10/16] %v7056, 128
        %7179 = vxpose.xlu0.b32.cont [11/16] %v7061, 128
        %7180 = vxpose.xlu0.b32.cont [12/16] %v7066, 128
        %7181 = vxpose.xlu0.b32.cont [13/16] %v7071, 128
        %7182 = vxpose.xlu0.b32.cont [14/16] %v7076, 128
        %7183 = vxpose.xlu0.b32.cont [15/16] %v7081, 128
        %7184 = vxpose.xlu0.b32.end [16/16] %v7086, 128
        %v7185 = vpop.trf.xlu0
        %v7186 = vpop.trf.xlu0
        %v7187 = vpop.trf.xlu0
        %v7188 = vpop.trf.xlu0
        %v7189 = vpop.trf.xlu0
        %v7190 = vpop.trf.xlu0
        %v7191 = vpop.trf.xlu0
        %v7192 = vpop.trf.xlu0
        %v7193 = vpop.trf.xlu0
        %v7194 = vpop.trf.xlu0
        %v7195 = vpop.trf.xlu0
        %v7196 = vpop.trf.xlu0
        %v7197 = vpop.trf.xlu0
        %v7198 = vpop.trf.xlu0
        %v7199 = vpop.trf.xlu0
        %v7200 = vpop.trf.xlu0
        %7201 = vxpose.xlu0.b32.start [1/16] %v7091, 128
        %7202 = vxpose.xlu0.b32.cont [2/16] %v7096, 128
        %7203 = vxpose.xlu0.b32.cont [3/16] %v7101, 128
        %7204 = vxpose.xlu0.b32.cont [4/16] %v7106, 128
        %7205 = vxpose.xlu0.b32.cont [5/16] %v7111, 128
        %7206 = vxpose.xlu0.b32.cont [6/16] %v7116, 128
        %7207 = vxpose.xlu0.b32.cont [7/16] %v7121, 128
        %7208 = vxpose.xlu0.b32.cont [8/16] %v7126, 128
        %7209 = vxpose.xlu0.b32.cont [9/16] %v7131, 128
        %7210 = vxpose.xlu0.b32.cont [10/16] %v7136, 128
        %7211 = vxpose.xlu0.b32.cont [11/16] %v7141, 128
        %7212 = vxpose.xlu0.b32.cont [12/16] %v7146, 128
        %7213 = vxpose.xlu0.b32.cont [13/16] %v7151, 128
        %7214 = vxpose.xlu0.b32.cont [14/16] %v7156, 128
        %7215 = vxpose.xlu0.b32.cont [15/16] %v7161, 128
        %7216 = vxpose.xlu0.b32.end [16/16] %v7166, 128
        %v7217 = vpop.trf.xlu0
        %v7218 = vpop.trf.xlu0
        %v7219 = vpop.trf.xlu0
        %v7220 = vpop.trf.xlu0
        %v7221 = vpop.trf.xlu0
        %v7222 = vpop.trf.xlu0
        %v7223 = vpop.trf.xlu0
        %v7224 = vpop.trf.xlu0
        %v7225 = vpop.trf.xlu0
        %v7226 = vpop.trf.xlu0
        %v7227 = vpop.trf.xlu0
        %v7228 = vpop.trf.xlu0
        %v7229 = vpop.trf.xlu0
        %v7230 = vpop.trf.xlu0
        %v7231 = vpop.trf.xlu0
        %v7232 = vpop.trf.xlu0
        %7233 = vst [vmem:[%s332] sm:$0xff] %v7185
        %7234 = vst [vmem:[%s332 + $0x8] sm:$0xff] %v7217
        %s7235 = sand.u32 %s186, 1
        %s7236 = scalar_lea.sflag [#allocation4], %s7235
        %s7237 = sand.u32 %s186, 1
        %s7238 = smul.addr %s7237, 16
        %s7239 = scalar_lea.vmem [#allocation10], %s7238
        // Predicated region
        $region65: #{tpu_custom_call.1} parent=47 // pred_check
          %p7240 = pneg %p196
        $region66: #{tpu_custom_call.1} parent=47 // pred_check_branch
          %7242 = sbr.rel (%p7240) target = $region68
        $region67: #{tpu_custom_call.1} parent=47 // pred_region
          %s7244 = ssub.s32 256, 256
          %7245 = vsyncadd %s7236, %s7244
          %s7246 = smul.addr %s26, 2
          %s7247 = smul.addr %s7246, 128
          %s7248 = scalar_lea.hbm %s7, %s7247
          %s7250 = sshll.u32 %s7239, 4
          %s7251 = int_to_ptr.vmem [resolvable:$true] %s7250
          %7253 = dma.vmem_to_hbm [thread:$0]  %s7251, 256, %s7248, %s7236
        $region68: #{tpu_custom_call.1} parent=47 // pred_fallthru
          _
      $region48: #{tpu_custom_call.1} parent=5 // pred_fallthru
        _
      %p7254 = scmp.le.s32.totalorder 2, %s21
      // Predicated region
      $region69: #{tpu_custom_call.1} parent=5 // pred_check
        %p7255 = pneg %p7254
      $region70: #{tpu_custom_call.1} parent=5 // pred_check_branch
        %7257 = sbr.rel (%p7255) target = $region72
      $region71: #{tpu_custom_call.1} parent=5 // pred_region
        %s7258 = ssub.s32 %s21, 2
        // Predicated region
        $region73: #{tpu_custom_call.1} parent=71 // pred_check
          %p7259 = pneg %p202
        $region74: #{tpu_custom_call.1} parent=71 // pred_check_branch
          %7261 = sbr.rel (%p7259) target = $region76
        $region75: #{tpu_custom_call.1} parent=71 // pred_region
          %s7262 = sand.u32 %s187, 1
          %s7263 = scalar_lea.sflag [#allocation4], %s7262
          %s7264 = sand.u32 %s187, 1
          %s7265 = smul.addr %s7264, 16
          %s7266 = scalar_lea.vmem [#allocation10], %s7265
          %7267 = dma.done %s7263, 256
        $region76: #{tpu_custom_call.1} parent=71 // pred_fallthru
          _
      $region72: #{tpu_custom_call.1} parent=5 // pred_fallthru
        _
    $region6: #{tpu_custom_call.1} parent=1 // loop_footer
      %s25 = sadd.s32 1, %s21
    $region7: #{tpu_custom_call.1} parent=1 // loop_footer_branch
      %20 = sbr.rel target = $region3
    $region8: #{tpu_custom_call.1} parent=1 // loop_exit
      _
    %7268 = vsyncpa [#allocation3], 1
    %s7269 = scalar_lea.sflag [#allocation3], 1
    %7270 = vsyncpa %s7269, 1
    %7271 = vsyncpa [#allocation6], 1
    %7272 = vsyncpa [#allocation9], 1
    %7273 = vsyncpa [#allocation4], 1
    %s7274 = scalar_lea.sflag [#allocation4], 1
    %7275 = vsyncpa %s7274, 1

</llo_original>
